<compile_context>
chip_gen: v7x
topology: tpu7x:2x2x1
jax: 0.10.0
libtpu: 0.0.40
codegen_flags: <defaults>
</compile_context>

<pallas_src>
import numpy as np
import jax
import jax.numpy as jnp
from jax.experimental import pallas as pl
from jax.experimental.pallas import tpu as pltpu

# ----------------------------- config (small, TPU-friendly) ------------------
X_DIM = 768           # must be 768: forward adds old_x (x_dim) to 768-d output
GRAPH_EMB_DIM = 256   # args.graph_emb_dim (spec default 512; 256 fills the
                      # 256-wide MXU on v6e/v7x while keeping the demo small)
NUM_LAYERS = 3        # args.num_layers (kernel below is specialized to 3)
OUT_DIM = 768         # hard-coded in output_layer

NODE_PAD = 128        # pad node rows to a multiple of this (MXU-sized M)
GRAPH_PAD = 8         # pad pooled-graph rows to a multiple of this (sublane)


# ----------------------------- fused Pallas kernel ----------------------------
def _gcn_fused_kernel(x2_ref, oldx_ref, adj_ref, pool_ref,
                      hw_ref, hb_ref,
                      c0w_ref, c0b_ref, c1w_ref, c1b_ref, c2w_ref, c2b_ref,
                      o1w_ref, o1b_ref, o2w_ref, o2b_ref,
                      embn_ref, embg_ref,
                      cat_ref):
    f32 = jnp.float32
    bf16 = jnp.bfloat16
    G = GRAPH_EMB_DIM

    adj = adj_ref[...]                                            # [Np,Np] bf16

    # additional_head: relu(x2 @ Wh + bh)
    h = jnp.dot(x2_ref[...], hw_ref[...], preferred_element_type=f32)
    h = jnp.maximum(h + hb_ref[...], 0.0)                         # [Np,768] f32

    # GCNConv stack: h_l = relu(adj_hat @ (h_{l-1} @ Wl) + bl).
    # Each layer's activations land in a lane-aligned 256-lane slab of cat_ref
    # so output_layer part 1 becomes ONE K=3G matmul (no concat shuffle, no
    # partial-matmul accumulator merges).
    for l, (w_ref, b_ref) in enumerate(((c0w_ref, c0b_ref),
                                        (c1w_ref, c1b_ref),
                                        (c2w_ref, c2b_ref))):
        xw = jnp.dot(h.astype(bf16), w_ref[...], preferred_element_type=f32)
        h = jnp.dot(adj, xw.astype(bf16), preferred_element_type=f32)
        h = jnp.maximum(h + b_ref[...], 0.0)                      # [Np,G] f32
        cat_ref[:, l * G:(l + 1) * G] = h.astype(bf16)

    # output_layer part 1: relu(concat(xs) @ W1 + b1) — single [Np,3G]@[3G,G]
    e = jnp.dot(cat_ref[...], o1w_ref[...], preferred_element_type=f32)
    e = jnp.maximum(e + o1b_ref[...], 0.0)                        # [Np,G] f32

    # output_layer part 2
    emb_n = jnp.dot(e.astype(bf16), o2w_ref[...],
                    preferred_element_type=f32) + o2b_ref[...]    # [Np,768] f32

    # global_mean_pool on the pre-residual embeddings (torch ordering);
    # bf16 operands, f32 accumulation.
    embg_ref[...] = jnp.dot(pool_ref[...], emb_n.astype(bf16),
                            preferred_element_type=f32).astype(embg_ref.dtype)

    # residual add (node_feat == 'labeldes')
    embn_ref[...] = (emb_n + oldx_ref[...]).astype(embn_ref.dtype)


def gcn_fused(params, x2_bf16, old_x, adj_bf16, pool_bf16, n_pad, g_pad):
    """One pallas_call for the whole GCN stack; everything resident in VMEM."""
    bf16 = jnp.bfloat16
    vmem = pl.BlockSpec(memory_space=pltpu.MemorySpace.VMEM)

    def wb(w):
        return w.astype(bf16)

    def b2(b):
        return b.reshape(1, -1)

    inputs = (
        x2_bf16, old_x, adj_bf16, pool_bf16,
        wb(params["head_w"]), b2(params["head_b"]),
        wb(params["conv_w"][0]), b2(params["conv_b"][0]),
        wb(params["conv_w"][1]), b2(params["conv_b"][1]),
        wb(params["conv_w"][2]), b2(params["conv_b"][2]),
        wb(params["out1_w"]), b2(params["out1_b"]),
        wb(params["out2_w"]), b2(params["out2_b"]),
    )
    # Resident footprint at the demo sizes is ~6 MiB; a 32 MiB scoped VMEM
    # limit is safe on every generation.  For larger N, raise toward ~100 MiB
    # on v5e/v6e (128 MiB physical) but re-derive <= ~48 MiB on v7x (64 MiB
    # physical) before falling back to the row-tiled path (see TODO above).
    return pl.pallas_call(
        _gcn_fused_kernel,
        out_shape=(jax.ShapeDtypeStruct((n_pad, OUT_DIM), jnp.float32),
                   jax.ShapeDtypeStruct((g_pad, OUT_DIM), jnp.float32)),
        in_specs=[vmem] * len(inputs),
        out_specs=(vmem, vmem),
        scratch_shapes=[pltpu.VMEM((n_pad, NUM_LAYERS * GRAPH_EMB_DIM),
                                   jnp.bfloat16)],
        compiler_params=pltpu.CompilerParams(vmem_limit_bytes=32 * 1024 * 1024),
    )(*inputs)


# ----------------------------- parameter init (deterministic) ----------------
def xavier_uniform(key, fan_in, fan_out):
    bound = float(np.sqrt(6.0 / (fan_in + fan_out)))
    # stored as [in, out] == W^T of the torch Linear weight [out, in]
    return jax.random.uniform(key, (fan_in, fan_out), jnp.float32, -bound, bound)


def init_params(key):
    keys = jax.random.split(key, 8)
    p = {}
    # additional_head: Linear(x_dim*2, x_dim) + ReLU
    p["head_w"] = xavier_uniform(keys[0], 2 * X_DIM, X_DIM)
    p["head_b"] = jnp.zeros((X_DIM,), jnp.float32)
    # GCNConv layers
    p["conv_w"] = []
    p["conv_b"] = []
    in_dim = X_DIM
    for i in range(NUM_LAYERS):
        p["conv_w"].append(xavier_uniform(keys[1 + i], in_dim, GRAPH_EMB_DIM))
        p["conv_b"].append(jnp.zeros((GRAPH_EMB_DIM,), jnp.float32))
        in_dim = GRAPH_EMB_DIM
    # output_layer: Linear(gdim*L, gdim) -> ReLU -> Linear(gdim, 768)
    p["out1_w"] = xavier_uniform(keys[5], GRAPH_EMB_DIM * NUM_LAYERS, GRAPH_EMB_DIM)
    p["out1_b"] = jnp.zeros((GRAPH_EMB_DIM,), jnp.float32)
    p["out2_w"] = xavier_uniform(keys[6], GRAPH_EMB_DIM, OUT_DIM)
    p["out2_b"] = jnp.zeros((OUT_DIM,), jnp.float32)
    return p


# ----------------------------- glue (plain JAX) -------------------------------
def gcn_norm_adj(edge_index, num_nodes):
    """Dense A_hat = D^-1/2 (A + I) D^-1/2, PyG gcn_norm semantics (src->dst)."""
    src, dst = edge_index[0], edge_index[1]
    A = jnp.zeros((num_nodes, num_nodes), jnp.float32).at[dst, src].add(1.0)
    A = A + jnp.eye(num_nodes, dtype=jnp.float32)             # self loops
    deg = A.sum(axis=1)                                        # in-degree (+1)
    dis = jnp.where(deg > 0, 1.0 / jnp.sqrt(deg), 0.0)
    return dis[:, None] * A * dis[None, :]


def flatten_pad(batch, emb_n, num_graphs, max_len):
    """graph_flatten: pad per-graph node lists to max_len, build mask."""
    onehot_n = (batch[:, None] == jnp.arange(num_graphs)[None, :]).astype(jnp.int32)
    excl_cum = jnp.cumsum(onehot_n, axis=0) - onehot_n         # exclusive cumsum
    pos = (excl_cum * onehot_n).sum(axis=1)                    # position in graph
    padded = jnp.zeros((num_graphs, max_len, emb_n.shape[-1]), emb_n.dtype)
    padded = padded.at[batch, pos].set(emb_n)
    # same (fragile) sum!=0 heuristic as the torch code; int32 instead of long
    mask = (padded.sum(-1) != 0).astype(jnp.int32)
    return padded, mask


def _round_up(v, m):
    return ((v + m - 1) // m) * m


def gcn_forward(params, x, edge_index, batch, num_graphs, max_len):
    """Mirrors GCN.forward for args.node_feat == 'labeldes'."""
    N = x.shape[0]
    old_x = x[:, 0, :]                                         # [N, x_dim] f32
    x2 = x.reshape(N, -1)                                      # [N, 2*x_dim]
    adj = gcn_norm_adj(edge_index, N)                          # [N, N] f32

    # global_mean_pool as a matmul: rows of pool_mat are 1/count per graph
    onehot = (batch[None, :] == jnp.arange(num_graphs)[:, None]).astype(jnp.float32)
    counts = onehot.sum(axis=1, keepdims=True)
    pool_mat = onehot / jnp.maximum(counts, 1.0)               # [B, N]

    # Pad node rows to an MXU-sized M and pooled rows to a full sublane group.
    # Padded adjacency rows/cols and pool columns are zero, so real-node math
    # is unchanged; padded output rows are sliced off below.
    n_pad = _round_up(N, NODE_PAD)
    g_pad = _round_up(num_graphs, GRAPH_PAD)
    x2_p = jnp.pad(x2, ((0, n_pad - N), (0, 0))).astype(jnp.bfloat16)
    oldx_p = jnp.pad(old_x, ((0, n_pad - N), (0, 0)))
    adj_p = jnp.pad(adj, ((0, n_pad - N), (0, n_pad - N))).astype(jnp.bfloat16)
    pool_p = jnp.pad(pool_mat, ((0, g_pad - num_graphs),
                                (0, n_pad - N))).astype(jnp.bfloat16)

    # fused head + convs + output_layer + mean_pool + residual add
    embn_p, embg_p = gcn_fused(params, x2_p, oldx_p, adj_p, pool_p, n_pad, g_pad)
    embeddings_n = embn_p[:N]
    embeddings_g = embg_p[:num_graphs]

    padded, mask = flatten_pad(batch, embeddings_n, num_graphs, max_len)
    return embeddings_g[:, None, :], padded, mask


gcn_forward_jit = jax.jit(gcn_forward, static_argnums=(4, 5))


# ----------------------------- f32 pure-JAX reference -------------------------
def gcn_reference(params, x, edge_index, batch, num_graphs, max_len):
    N = x.shape[0]
    old_x = x[:, 0, :]
    h = x.reshape(N, -1)
    adj = gcn_norm_adj(edge_index, N)
    h = jax.nn.relu(h @ params["head_w"] + params["head_b"])
    xs = []
    for i in range(NUM_LAYERS):
        h = jax.nn.relu(adj @ (h @ params["conv_w"][i]) + params["conv_b"][i])
        xs.append(h)
    e = jax.nn.relu(jnp.concatenate(xs, axis=1) @ params["out1_w"]
                    + params["out1_b"])
    emb_n = e @ params["out2_w"] + params["out2_b"]
    onehot = (batch[None, :] == jnp.arange(num_graphs)[:, None]).astype(jnp.float32)
    emb_g = (onehot @ emb_n) / jnp.maximum(onehot.sum(1, keepdims=True), 1.0)
    emb_n = emb_n + old_x
    padded, mask = flatten_pad(batch, emb_n, num_graphs, max_len)
    return emb_g[:, None, :], padded, mask


# ----------------------------- main -------------------------------------------
if __name__ == "__main__":
    key = jax.random.PRNGKey(0)
    k_param, k_x = jax.random.split(key)

    params = init_params(k_param)

    # small synthetic graph batch: 2 graphs, 8 nodes total (3 + 5)
    N = 8
    batch_np = np.array([0, 0, 0, 1, 1, 1, 1, 1], dtype=np.int32)
    edge_index_np = np.array(
        [[0, 1, 1, 2, 3, 4, 4, 5, 6, 7],     # src
         [1, 0, 2, 1, 4, 3, 5, 6, 7, 3]],    # dst
        dtype=np.int32)
    num_graphs = int(batch_np.max()) + 1
    max_len = int(np.bincount(batch_np).max())                # static pad length

    x = jax.random.normal(k_x, (N, 2, X_DIM), jnp.float32)    # data.x
    edge_index = jnp.asarray(edge_index_np)
    batch = jnp.asarray(batch_np)

    emb_g, emb_n, mask = gcn_forward_jit(params, x, edge_index, batch,
                                         num_graphs, max_len)
    jax.block_until_ready((emb_g, emb_n, mask))

    assert emb_g.shape == (num_graphs, 1, OUT_DIM)
    assert emb_n.shape == (num_graphs, max_len, OUT_DIM)
    assert mask.shape == (num_graphs, max_len)
    assert bool(jnp.all(jnp.isfinite(emb_g))) and bool(jnp.all(jnp.isfinite(emb_n)))

    # Validate the bf16-operand kernel path against an f32 reference.
    # Tolerance covers bf16 quantization of inputs/weights/adjacency through
    # ~8 stacked matmuls (all accumulations are f32).
    ref_g, ref_n, _ = jax.jit(gcn_reference, static_argnums=(4, 5))(
        params, x, edge_index, batch, num_graphs, max_len)

    def rel_err(a, b):
        return float(jnp.max(jnp.abs(a - b)) / (jnp.max(jnp.abs(b)) + 1e-6))

    assert rel_err(emb_g, ref_g) < 8e-2, f"emb_g rel err {rel_err(emb_g, ref_g)}"
    assert rel_err(emb_n, ref_n) < 8e-2, f"emb_n rel err {rel_err(emb_n, ref_n)}"

    print("KERNEL_OK")
</pallas_src>

<mosaic_0001>
module attributes {stable_mosaic.version = 11 : i64} {
  func.func @_gcn_fused_kernel(%arg0: memref<128x1536xbf16, #tpu.memory_space<vmem>>, %arg1: memref<128x768xf32, #tpu.memory_space<vmem>>, %arg2: memref<128x128xbf16, #tpu.memory_space<vmem>>, %arg3: memref<8x128xbf16, #tpu.memory_space<vmem>>, %arg4: memref<1536x768xbf16, #tpu.memory_space<vmem>>, %arg5: memref<1x768xf32, #tpu.memory_space<vmem>>, %arg6: memref<768x256xbf16, #tpu.memory_space<vmem>>, %arg7: memref<1x256xf32, #tpu.memory_space<vmem>>, %arg8: memref<256x256xbf16, #tpu.memory_space<vmem>>, %arg9: memref<1x256xf32, #tpu.memory_space<vmem>>, %arg10: memref<256x256xbf16, #tpu.memory_space<vmem>>, %arg11: memref<1x256xf32, #tpu.memory_space<vmem>>, %arg12: memref<768x256xbf16, #tpu.memory_space<vmem>>, %arg13: memref<1x256xf32, #tpu.memory_space<vmem>>, %arg14: memref<256x768xbf16, #tpu.memory_space<vmem>>, %arg15: memref<1x768xf32, #tpu.memory_space<vmem>>, %arg16: memref<128x768xf32, #tpu.memory_space<vmem>>, %arg17: memref<8x768xf32, #tpu.memory_space<vmem>>, %arg18: memref<128x768xbf16, #tpu.memory_space<vmem>>) attributes {dimension_semantics = [], scalar_prefetch = 0 : i64, scratch_operands = 1 : i64, tpu.core_type = #tpu.core_type<tc>} {
    %c0 = arith.constant 0 : index
    %c0_0 = arith.constant 0 : index
    %0 = vector.load %arg2[%c0, %c0_0] : memref<128x128xbf16, #tpu.memory_space<vmem>>, vector<128x128xbf16>
    %c0_1 = arith.constant 0 : index
    %c0_2 = arith.constant 0 : index
    %1 = vector.load %arg0[%c0_1, %c0_2] : memref<128x1536xbf16, #tpu.memory_space<vmem>>, vector<128x1536xbf16>
    %c0_3 = arith.constant 0 : index
    %c0_4 = arith.constant 0 : index
    %2 = vector.load %arg4[%c0_3, %c0_4] : memref<1536x768xbf16, #tpu.memory_space<vmem>>, vector<1536x768xbf16>
    %cst = arith.constant dense<0.000000e+00> : vector<128x768xf32>
    %3 = tpu.matmul %1, %2, %cst {dimension_numbers = #tpu.dot_dimension_numbers<[1], [0], [0], [1], [0, 0, 1, 1], [], []>} : vector<128x1536xbf16>, vector<1536x768xbf16>, vector<128x768xf32> -> vector<128x768xf32>
    %c0_5 = arith.constant 0 : index
    %c0_6 = arith.constant 0 : index
    %4 = vector.load %arg5[%c0_5, %c0_6] : memref<1x768xf32, #tpu.memory_space<vmem>>, vector<1x768xf32>
    %5 = vector.broadcast %4 : vector<1x768xf32> to vector<128x768xf32>
    %6 = arith.addf %3, %5 : vector<128x768xf32>
    %cst_7 = arith.constant 0.000000e+00 : f32
    %7 = vector.broadcast %cst_7 : f32 to vector<128x768xf32>
    %8 = arith.maximumf %6, %7 : vector<128x768xf32>
    %9 = arith.truncf %8 : vector<128x768xf32> to vector<128x768xbf16>
    %c0_8 = arith.constant 0 : index
    %c0_9 = arith.constant 0 : index
    %10 = vector.load %arg6[%c0_8, %c0_9] : memref<768x256xbf16, #tpu.memory_space<vmem>>, vector<768x256xbf16>
    %cst_10 = arith.constant dense<0.000000e+00> : vector<128x256xf32>
    %11 = tpu.matmul %9, %10, %cst_10 {dimension_numbers = #tpu.dot_dimension_numbers<[1], [0], [0], [1], [0, 0, 1, 1], [], []>} : vector<128x768xbf16>, vector<768x256xbf16>, vector<128x256xf32> -> vector<128x256xf32>
    %12 = arith.truncf %11 : vector<128x256xf32> to vector<128x256xbf16>
    %cst_11 = arith.constant dense<0.000000e+00> : vector<128x256xf32>
    %13 = tpu.matmul %0, %12, %cst_11 {dimension_numbers = #tpu.dot_dimension_numbers<[1], [0], [0], [1], [0, 0, 1, 1], [], []>} : vector<128x128xbf16>, vector<128x256xbf16>, vector<128x256xf32> -> vector<128x256xf32>
    %c0_12 = arith.constant 0 : index
    %c0_13 = arith.constant 0 : index
    %14 = vector.load %arg7[%c0_12, %c0_13] : memref<1x256xf32, #tpu.memory_space<vmem>>, vector<1x256xf32>
    %15 = vector.broadcast %14 : vector<1x256xf32> to vector<128x256xf32>
    %16 = arith.addf %13, %15 : vector<128x256xf32>
    %cst_14 = arith.constant 0.000000e+00 : f32
    %17 = vector.broadcast %cst_14 : f32 to vector<128x256xf32>
    %18 = arith.maximumf %16, %17 : vector<128x256xf32>
    %19 = arith.truncf %18 : vector<128x256xf32> to vector<128x256xbf16>
    %c0_15 = arith.constant 0 : index
    %c0_16 = arith.constant 0 : index
    %20 = vector.load %arg18[%c0_15, %c0_16] : memref<128x768xbf16, #tpu.memory_space<vmem>>, vector<128x256xbf16>
    tpu.vector_store %arg18[%c0_15, %c0_16], %19 {strides = array<i32>} : memref<128x768xbf16, #tpu.memory_space<vmem>>, vector<128x256xbf16>,
    %21 = arith.truncf %18 : vector<128x256xf32> to vector<128x256xbf16>
    %c0_17 = arith.constant 0 : index
    %c0_18 = arith.constant 0 : index
    %22 = vector.load %arg8[%c0_17, %c0_18] : memref<256x256xbf16, #tpu.memory_space<vmem>>, vector<256x256xbf16>
    %cst_19 = arith.constant dense<0.000000e+00> : vector<128x256xf32>
    %23 = tpu.matmul %21, %22, %cst_19 {dimension_numbers = #tpu.dot_dimension_numbers<[1], [0], [0], [1], [0, 0, 1, 1], [], []>} : vector<128x256xbf16>, vector<256x256xbf16>, vector<128x256xf32> -> vector<128x256xf32>
    %24 = arith.truncf %23 : vector<128x256xf32> to vector<128x256xbf16>
    %cst_20 = arith.constant dense<0.000000e+00> : vector<128x256xf32>
    %25 = tpu.matmul %0, %24, %cst_20 {dimension_numbers = #tpu.dot_dimension_numbers<[1], [0], [0], [1], [0, 0, 1, 1], [], []>} : vector<128x128xbf16>, vector<128x256xbf16>, vector<128x256xf32> -> vector<128x256xf32>
    %c0_21 = arith.constant 0 : index
    %c0_22 = arith.constant 0 : index
    %26 = vector.load %arg9[%c0_21, %c0_22] : memref<1x256xf32, #tpu.memory_space<vmem>>, vector<1x256xf32>
    %27 = vector.broadcast %26 : vector<1x256xf32> to vector<128x256xf32>
    %28 = arith.addf %25, %27 : vector<128x256xf32>
    %cst_23 = arith.constant 0.000000e+00 : f32
    %29 = vector.broadcast %cst_23 : f32 to vector<128x256xf32>
    %30 = arith.maximumf %28, %29 : vector<128x256xf32>
    %31 = arith.truncf %30 : vector<128x256xf32> to vector<128x256xbf16>
    %c0_24 = arith.constant 0 : index
    %c256 = arith.constant 256 : index
    %32 = vector.load %arg18[%c0_24, %c256] : memref<128x768xbf16, #tpu.memory_space<vmem>>, vector<128x256xbf16>
    tpu.vector_store %arg18[%c0_24, %c256], %31 {strides = array<i32>} : memref<128x768xbf16, #tpu.memory_space<vmem>>, vector<128x256xbf16>,
    %33 = arith.truncf %30 : vector<128x256xf32> to vector<128x256xbf16>
    %c0_25 = arith.constant 0 : index
    %c0_26 = arith.constant 0 : index
    %34 = vector.load %arg10[%c0_25, %c0_26] : memref<256x256xbf16, #tpu.memory_space<vmem>>, vector<256x256xbf16>
    %cst_27 = arith.constant dense<0.000000e+00> : vector<128x256xf32>
    %35 = tpu.matmul %33, %34, %cst_27 {dimension_numbers = #tpu.dot_dimension_numbers<[1], [0], [0], [1], [0, 0, 1, 1], [], []>} : vector<128x256xbf16>, vector<256x256xbf16>, vector<128x256xf32> -> vector<128x256xf32>
    %36 = arith.truncf %35 : vector<128x256xf32> to vector<128x256xbf16>
    %cst_28 = arith.constant dense<0.000000e+00> : vector<128x256xf32>
    %37 = tpu.matmul %0, %36, %cst_28 {dimension_numbers = #tpu.dot_dimension_numbers<[1], [0], [0], [1], [0, 0, 1, 1], [], []>} : vector<128x128xbf16>, vector<128x256xbf16>, vector<128x256xf32> -> vector<128x256xf32>
    %c0_29 = arith.constant 0 : index
    %c0_30 = arith.constant 0 : index
    %38 = vector.load %arg11[%c0_29, %c0_30] : memref<1x256xf32, #tpu.memory_space<vmem>>, vector<1x256xf32>
    %39 = vector.broadcast %38 : vector<1x256xf32> to vector<128x256xf32>
    %40 = arith.addf %37, %39 : vector<128x256xf32>
    %cst_31 = arith.constant 0.000000e+00 : f32
    %41 = vector.broadcast %cst_31 : f32 to vector<128x256xf32>
    %42 = arith.maximumf %40, %41 : vector<128x256xf32>
    %43 = arith.truncf %42 : vector<128x256xf32> to vector<128x256xbf16>
    %c0_32 = arith.constant 0 : index
    %c512 = arith.constant 512 : index
    %44 = vector.load %arg18[%c0_32, %c512] : memref<128x768xbf16, #tpu.memory_space<vmem>>, vector<128x256xbf16>
    tpu.vector_store %arg18[%c0_32, %c512], %43 {strides = array<i32>} : memref<128x768xbf16, #tpu.memory_space<vmem>>, vector<128x256xbf16>,
    %c0_33 = arith.constant 0 : index
    %c0_34 = arith.constant 0 : index
    %45 = vector.load %arg18[%c0_33, %c0_34] : memref<128x768xbf16, #tpu.memory_space<vmem>>, vector<128x768xbf16>
    %c0_35 = arith.constant 0 : index
    %c0_36 = arith.constant 0 : index
    %46 = vector.load %arg12[%c0_35, %c0_36] : memref<768x256xbf16, #tpu.memory_space<vmem>>, vector<768x256xbf16>
    %cst_37 = arith.constant dense<0.000000e+00> : vector<128x256xf32>
    %47 = tpu.matmul %45, %46, %cst_37 {dimension_numbers = #tpu.dot_dimension_numbers<[1], [0], [0], [1], [0, 0, 1, 1], [], []>} : vector<128x768xbf16>, vector<768x256xbf16>, vector<128x256xf32> -> vector<128x256xf32>
    %c0_38 = arith.constant 0 : index
    %c0_39 = arith.constant 0 : index
    %48 = vector.load %arg13[%c0_38, %c0_39] : memref<1x256xf32, #tpu.memory_space<vmem>>, vector<1x256xf32>
    %49 = vector.broadcast %48 : vector<1x256xf32> to vector<128x256xf32>
    %50 = arith.addf %47, %49 : vector<128x256xf32>
    %cst_40 = arith.constant 0.000000e+00 : f32
    %51 = vector.broadcast %cst_40 : f32 to vector<128x256xf32>
    %52 = arith.maximumf %50, %51 : vector<128x256xf32>
    %53 = arith.truncf %52 : vector<128x256xf32> to vector<128x256xbf16>
    %c0_41 = arith.constant 0 : index
    %c0_42 = arith.constant 0 : index
    %54 = vector.load %arg14[%c0_41, %c0_42] : memref<256x768xbf16, #tpu.memory_space<vmem>>, vector<256x768xbf16>
    %cst_43 = arith.constant dense<0.000000e+00> : vector<128x768xf32>
    %55 = tpu.matmul %53, %54, %cst_43 {dimension_numbers = #tpu.dot_dimension_numbers<[1], [0], [0], [1], [0, 0, 1, 1], [], []>} : vector<128x256xbf16>, vector<256x768xbf16>, vector<128x768xf32> -> vector<128x768xf32>
    %c0_44 = arith.constant 0 : index
    %c0_45 = arith.constant 0 : index
    %56 = vector.load %arg15[%c0_44, %c0_45] : memref<1x768xf32, #tpu.memory_space<vmem>>, vector<1x768xf32>
    %57 = vector.broadcast %56 : vector<1x768xf32> to vector<128x768xf32>
    %58 = arith.addf %55, %57 : vector<128x768xf32>
    %c0_46 = arith.constant 0 : index
    %c0_47 = arith.constant 0 : index
    %59 = vector.load %arg3[%c0_46, %c0_47] : memref<8x128xbf16, #tpu.memory_space<vmem>>, vector<8x128xbf16>
    %60 = arith.truncf %58 : vector<128x768xf32> to vector<128x768xbf16>
    %cst_48 = arith.constant dense<0.000000e+00> : vector<8x768xf32>
    %61 = tpu.matmul %59, %60, %cst_48 {dimension_numbers = #tpu.dot_dimension_numbers<[1], [0], [0], [1], [0, 0, 1, 1], [], []>} : vector<8x128xbf16>, vector<128x768xbf16>, vector<8x768xf32> -> vector<8x768xf32>
    %c0_49 = arith.constant 0 : index
    %c0_50 = arith.constant 0 : index
    %62 = vector.load %arg17[%c0_49, %c0_50] : memref<8x768xf32, #tpu.memory_space<vmem>>, vector<8x768xf32>
    tpu.vector_store %arg17[%c0_49, %c0_50], %61 {strides = array<i32>} : memref<8x768xf32, #tpu.memory_space<vmem>>, vector<8x768xf32>,
    %c0_51 = arith.constant 0 : index
    %c0_52 = arith.constant 0 : index
    %63 = vector.load %arg1[%c0_51, %c0_52] : memref<128x768xf32, #tpu.memory_space<vmem>>, vector<128x768xf32>
    %64 = arith.addf %58, %63 : vector<128x768xf32>
    %c0_53 = arith.constant 0 : index
    %c0_54 = arith.constant 0 : index
    %65 = vector.load %arg16[%c0_53, %c0_54] : memref<128x768xf32, #tpu.memory_space<vmem>>, vector<128x768xf32>
    tpu.vector_store %arg16[%c0_53, %c0_54], %64 {strides = array<i32>} : memref<128x768xf32, #tpu.memory_space<vmem>>, vector<128x768xf32>,
    return
  }
}

</mosaic_0001>

<llo_original>
// kernel: gcn_forward.1
$region0: #{gcn_forward.1}
  #allocation0 [shape = 'u32[]', space=smem, size = 0x4, offset = 0x4, fixed_abs, tag = 'smem constant byte address 0x4 - core index']
  #allocation1 [shape = 'u32[144,128]{1,0:T(1,128)}', space=vmem, size = 0x12000, scoped, tag = 'internal scratch']
  #allocation2 [shape = 'bf16[128,768]{1,0:T(16,128)(2,1)}', space=vmem, size = 0x30000, scoped, tag = 'scratch operand']
  %s0 = inlined_call_operand.vmem [shape: bf16[128,1536], index: 0, kind: input, shape index: {}]
  %s1 = inlined_call_operand.vmem [shape: f32[128,768], index: 1, kind: input, shape index: {}]
  %s2 = inlined_call_operand.vmem [shape: bf16[128,128], index: 2, kind: input, shape index: {}]
  %s3 = inlined_call_operand.vmem [shape: bf16[8,128], index: 3, kind: input, shape index: {}]
  %s4 = inlined_call_operand.vmem [shape: bf16[1536,768], index: 4, kind: input, shape index: {}]
  %s5 = inlined_call_operand.vmem [shape: f32[1,768], index: 5, kind: input, shape index: {}]
  %s6 = inlined_call_operand.vmem [shape: bf16[768,256], index: 6, kind: input, shape index: {}]
  %s7 = inlined_call_operand.vmem [shape: f32[1,256], index: 7, kind: input, shape index: {}]
  %s8 = inlined_call_operand.vmem [shape: bf16[256,256], index: 8, kind: input, shape index: {}]
  %s9 = inlined_call_operand.vmem [shape: f32[1,256], index: 9, kind: input, shape index: {}]
  %s10 = inlined_call_operand.vmem [shape: bf16[256,256], index: 10, kind: input, shape index: {}]
  %s11 = inlined_call_operand.vmem [shape: f32[1,256], index: 11, kind: input, shape index: {}]
  %s12 = inlined_call_operand.vmem [shape: bf16[768,256], index: 12, kind: input, shape index: {}]
  %s13 = inlined_call_operand.vmem [shape: f32[1,256], index: 13, kind: input, shape index: {}]
  %s14 = inlined_call_operand.vmem [shape: bf16[256,768], index: 14, kind: input, shape index: {}]
  %s15 = inlined_call_operand.vmem [shape: f32[1,768], index: 15, kind: input, shape index: {}]
  %s16 = inlined_call_operand.vmem [shape: f32[128,768], index: 16, kind: output, shape index: {0}]
  %s17 = inlined_call_operand.vmem [shape: f32[8,768], index: 17, kind: output, shape index: {1}]
  %18 = xla_tuple %s16, %s17
  %s19 = sld [smem:[#allocation0]]
  $region82: #{gcn_forward.1} parent=0
    _
  %s21 = ssub.s32 1, %s19
  %s22 = scalar_select 0, %s21, %s19
  // Predicated region
  $region2: #{gcn_forward.1} parent=0 // pred_check
    _
  $region3: #{gcn_forward.1} parent=0 // pred_check_branch
    %24 = sbr.rel (0) target = $region5
  $region4: #{gcn_forward.1} parent=0 // pred_region
    _
  $region5: #{gcn_forward.1} parent=0 // pred_fallthru
    _
  // Predicated region
  $region6: #{gcn_forward.1} parent=0 // pred_check
    _
  $region7: #{gcn_forward.1} parent=0 // pred_check_branch
    %26 = sbr.rel (0) target = $region9
  $region8: #{gcn_forward.1} parent=0 // pred_region
    _
  $region9: #{gcn_forward.1} parent=0 // pred_fallthru
    _
  // Predicated region
  $region10: #{gcn_forward.1} parent=0 // pred_check
    _
  $region11: #{gcn_forward.1} parent=0 // pred_check_branch
    %28 = sbr.rel (0) target = $region13
  $region12: #{gcn_forward.1} parent=0 // pred_region
    _
  $region13: #{gcn_forward.1} parent=0 // pred_fallthru
    _
  // Predicated region
  $region14: #{gcn_forward.1} parent=0 // pred_check
    _
  $region15: #{gcn_forward.1} parent=0 // pred_check_branch
    %30 = sbr.rel (0) target = $region17
  $region16: #{gcn_forward.1} parent=0 // pred_region
    _
  $region17: #{gcn_forward.1} parent=0 // pred_fallthru
    _
  // Predicated region
  $region18: #{gcn_forward.1} parent=0 // pred_check
    _
  $region19: #{gcn_forward.1} parent=0 // pred_check_branch
    %32 = sbr.rel (0) target = $region21
  $region20: #{gcn_forward.1} parent=0 // pred_region
    _
  $region21: #{gcn_forward.1} parent=0 // pred_fallthru
    _
  // Predicated region
  $region22: #{gcn_forward.1} parent=0 // pred_check
    _
  $region23: #{gcn_forward.1} parent=0 // pred_check_branch
    %34 = sbr.rel (0) target = $region25
  $region24: #{gcn_forward.1} parent=0 // pred_region
    _
  $region25: #{gcn_forward.1} parent=0 // pred_fallthru
    _
  // Predicated region
  $region26: #{gcn_forward.1} parent=0 // pred_check
    _
  $region27: #{gcn_forward.1} parent=0 // pred_check_branch
    %36 = sbr.rel (0) target = $region29
  $region28: #{gcn_forward.1} parent=0 // pred_region
    _
  $region29: #{gcn_forward.1} parent=0 // pred_fallthru
    _
  // Predicated region
  $region30: #{gcn_forward.1} parent=0 // pred_check
    _
  $region31: #{gcn_forward.1} parent=0 // pred_check_branch
    %38 = sbr.rel (0) target = $region33
  $region32: #{gcn_forward.1} parent=0 // pred_region
    _
  $region33: #{gcn_forward.1} parent=0 // pred_fallthru
    _
  // Predicated region
  $region34: #{gcn_forward.1} parent=0 // pred_check
    _
  $region35: #{gcn_forward.1} parent=0 // pred_check_branch
    %40 = sbr.rel (0) target = $region37
  $region36: #{gcn_forward.1} parent=0 // pred_region
    _
  $region37: #{gcn_forward.1} parent=0 // pred_fallthru
    _
  // Predicated region
  $region38: #{gcn_forward.1} parent=0 // pred_check
    _
  $region39: #{gcn_forward.1} parent=0 // pred_check_branch
    %42 = sbr.rel (0) target = $region41
  $region40: #{gcn_forward.1} parent=0 // pred_region
    _
  $region41: #{gcn_forward.1} parent=0 // pred_fallthru
    _
  // Predicated region
  $region42: #{gcn_forward.1} parent=0 // pred_check
    _
  $region43: #{gcn_forward.1} parent=0 // pred_check_branch
    %44 = sbr.rel (0) target = $region45
  $region44: #{gcn_forward.1} parent=0 // pred_region
    _
  $region45: #{gcn_forward.1} parent=0 // pred_fallthru
    _
  // Predicated region
  $region46: #{gcn_forward.1} parent=0 // pred_check
    _
  $region47: #{gcn_forward.1} parent=0 // pred_check_branch
    %46 = sbr.rel (0) target = $region49
  $region48: #{gcn_forward.1} parent=0 // pred_region
    _
  $region49: #{gcn_forward.1} parent=0 // pred_fallthru
    _
  // Predicated region
  $region50: #{gcn_forward.1} parent=0 // pred_check
    _
  $region51: #{gcn_forward.1} parent=0 // pred_check_branch
    %48 = sbr.rel (0) target = $region53
  $region52: #{gcn_forward.1} parent=0 // pred_region
    _
  $region53: #{gcn_forward.1} parent=0 // pred_fallthru
    _
  // Predicated region
  $region54: #{gcn_forward.1} parent=0 // pred_check
    _
  $region55: #{gcn_forward.1} parent=0 // pred_check_branch
    %50 = sbr.rel (0) target = $region57
  $region56: #{gcn_forward.1} parent=0 // pred_region
    _
  $region57: #{gcn_forward.1} parent=0 // pred_fallthru
    _
  // Predicated region
  $region58: #{gcn_forward.1} parent=0 // pred_check
    _
  $region59: #{gcn_forward.1} parent=0 // pred_check_branch
    %52 = sbr.rel (0) target = $region61
  $region60: #{gcn_forward.1} parent=0 // pred_region
    _
  $region61: #{gcn_forward.1} parent=0 // pred_fallthru
    _
  // Predicated region
  $region62: #{gcn_forward.1} parent=0 // pred_check
    _
  $region63: #{gcn_forward.1} parent=0 // pred_check_branch
    %54 = sbr.rel (0) target = $region65
  $region64: #{gcn_forward.1} parent=0 // pred_region
    _
  $region65: #{gcn_forward.1} parent=0 // pred_fallthru
    _
  %v56 = vld [vmem:[%s2] sm:$0xf]
  %v57 = vld [vmem:[%s2 + $0x4] sm:$0xf]
  %v58 = vld [vmem:[%s2 + $0x8] sm:$0xf]
  %v59 = vld [vmem:[%s2 + $0xc] sm:$0xf]
  %v60 = vld [vmem:[%s2 + $0x10] sm:$0xf]
  %v61 = vld [vmem:[%s2 + $0x14] sm:$0xf]
  %v62 = vld [vmem:[%s2 + $0x18] sm:$0xf]
  %v63 = vld [vmem:[%s2 + $0x1c] sm:$0xf]
  %v64 = vld [vmem:[%s2 + $0x20] sm:$0xf]
  %v65 = vld [vmem:[%s2 + $0x24] sm:$0xf]
  %v66 = vld [vmem:[%s2 + $0x28] sm:$0xf]
  %v67 = vld [vmem:[%s2 + $0x2c] sm:$0xf]
  %v68 = vld [vmem:[%s2 + $0x30] sm:$0xf]
  %v69 = vld [vmem:[%s2 + $0x34] sm:$0xf]
  %v70 = vld [vmem:[%s2 + $0x38] sm:$0xf]
  %v71 = vld [vmem:[%s2 + $0x3c] sm:$0xf]
  %v72 = vld [vmem:[%s0] sm:$0xff]
  %v73 = vld [vmem:[%s0 + $0x8] sm:$0xff]
  %v74 = vld [vmem:[%s0 + $0x10] sm:$0xff]
  %v75 = vld [vmem:[%s0 + $0x18] sm:$0xff]
  %v76 = vld [vmem:[%s0 + $0x20] sm:$0xff]
  %v77 = vld [vmem:[%s0 + $0x28] sm:$0xff]
  %v78 = vld [vmem:[%s0 + $0x30] sm:$0xff]
  %v79 = vld [vmem:[%s0 + $0x38] sm:$0xff]
  %v80 = vld [vmem:[%s0 + $0x40] sm:$0xff]
  %v81 = vld [vmem:[%s0 + $0x48] sm:$0xff]
  %v82 = vld [vmem:[%s0 + $0x50] sm:$0xff]
  %v83 = vld [vmem:[%s0 + $0x58] sm:$0xff]
  %v84 = vld [vmem:[%s0 + $0x60] sm:$0xff]
  %v85 = vld [vmem:[%s0 + $0x68] sm:$0xff]
  %v86 = vld [vmem:[%s0 + $0x70] sm:$0xff]
  %v87 = vld [vmem:[%s0 + $0x78] sm:$0xff]
  %v88 = vld [vmem:[%s0 + $0x80] sm:$0xff]
  %v89 = vld [vmem:[%s0 + $0x88] sm:$0xff]
  %v90 = vld [vmem:[%s0 + $0x90] sm:$0xff]
  %v91 = vld [vmem:[%s0 + $0x98] sm:$0xff]
  %v92 = vld [vmem:[%s0 + $0xa0] sm:$0xff]
  %v93 = vld [vmem:[%s0 + $0xa8] sm:$0xff]
  %v94 = vld [vmem:[%s0 + $0xb0] sm:$0xff]
  %v95 = vld [vmem:[%s0 + $0xb8] sm:$0xff]
  %v96 = vld [vmem:[%s0 + $0xc0] sm:$0xff]
  %v97 = vld [vmem:[%s0 + $0xc8] sm:$0xff]
  %v98 = vld [vmem:[%s0 + $0xd0] sm:$0xff]
  %v99 = vld [vmem:[%s0 + $0xd8] sm:$0xff]
  %v100 = vld [vmem:[%s0 + $0xe0] sm:$0xff]
  %v101 = vld [vmem:[%s0 + $0xe8] sm:$0xff]
  %v102 = vld [vmem:[%s0 + $0xf0] sm:$0xff]
  %v103 = vld [vmem:[%s0 + $0xf8] sm:$0xff]
  %v104 = vld [vmem:[%s0 + $0x100] sm:$0xff]
  %v105 = vld [vmem:[%s0 + $0x108] sm:$0xff]
  %v106 = vld [vmem:[%s0 + $0x110] sm:$0xff]
  %v107 = vld [vmem:[%s0 + $0x118] sm:$0xff]
  %v108 = vld [vmem:[%s0 + $0x120] sm:$0xff]
  %v109 = vld [vmem:[%s0 + $0x128] sm:$0xff]
  %v110 = vld [vmem:[%s0 + $0x130] sm:$0xff]
  %v111 = vld [vmem:[%s0 + $0x138] sm:$0xff]
  %v112 = vld [vmem:[%s0 + $0x140] sm:$0xff]
  %v113 = vld [vmem:[%s0 + $0x148] sm:$0xff]
  %v114 = vld [vmem:[%s0 + $0x150] sm:$0xff]
  %v115 = vld [vmem:[%s0 + $0x158] sm:$0xff]
  %v116 = vld [vmem:[%s0 + $0x160] sm:$0xff]
  %v117 = vld [vmem:[%s0 + $0x168] sm:$0xff]
  %v118 = vld [vmem:[%s0 + $0x170] sm:$0xff]
  %v119 = vld [vmem:[%s0 + $0x178] sm:$0xff]
  %v120 = vld [vmem:[%s0 + $0x180] sm:$0xff]
  %v121 = vld [vmem:[%s0 + $0x188] sm:$0xff]
  %v122 = vld [vmem:[%s0 + $0x190] sm:$0xff]
  %v123 = vld [vmem:[%s0 + $0x198] sm:$0xff]
  %v124 = vld [vmem:[%s0 + $0x1a0] sm:$0xff]
  %v125 = vld [vmem:[%s0 + $0x1a8] sm:$0xff]
  %v126 = vld [vmem:[%s0 + $0x1b0] sm:$0xff]
  %v127 = vld [vmem:[%s0 + $0x1b8] sm:$0xff]
  %v128 = vld [vmem:[%s0 + $0x1c0] sm:$0xff]
  %v129 = vld [vmem:[%s0 + $0x1c8] sm:$0xff]
  %v130 = vld [vmem:[%s0 + $0x1d0] sm:$0xff]
  %v131 = vld [vmem:[%s0 + $0x1d8] sm:$0xff]
  %v132 = vld [vmem:[%s0 + $0x1e0] sm:$0xff]
  %v133 = vld [vmem:[%s0 + $0x1e8] sm:$0xff]
  %v134 = vld [vmem:[%s0 + $0x1f0] sm:$0xff]
  %v135 = vld [vmem:[%s0 + $0x1f8] sm:$0xff]
  %v136 = vld [vmem:[%s0 + $0x200] sm:$0xff]
  %v137 = vld [vmem:[%s0 + $0x208] sm:$0xff]
  %v138 = vld [vmem:[%s0 + $0x210] sm:$0xff]
  %v139 = vld [vmem:[%s0 + $0x218] sm:$0xff]
  %v140 = vld [vmem:[%s0 + $0x220] sm:$0xff]
  %v141 = vld [vmem:[%s0 + $0x228] sm:$0xff]
  %v142 = vld [vmem:[%s0 + $0x230] sm:$0xff]
  %v143 = vld [vmem:[%s0 + $0x238] sm:$0xff]
  %v144 = vld [vmem:[%s0 + $0x240] sm:$0xff]
  %v145 = vld [vmem:[%s0 + $0x248] sm:$0xff]
  %v146 = vld [vmem:[%s0 + $0x250] sm:$0xff]
  %v147 = vld [vmem:[%s0 + $0x258] sm:$0xff]
  %v148 = vld [vmem:[%s0 + $0x260] sm:$0xff]
  %v149 = vld [vmem:[%s0 + $0x268] sm:$0xff]
  %v150 = vld [vmem:[%s0 + $0x270] sm:$0xff]
  %v151 = vld [vmem:[%s0 + $0x278] sm:$0xff]
  %v152 = vld [vmem:[%s0 + $0x280] sm:$0xff]
  %v153 = vld [vmem:[%s0 + $0x288] sm:$0xff]
  %v154 = vld [vmem:[%s0 + $0x290] sm:$0xff]
  %v155 = vld [vmem:[%s0 + $0x298] sm:$0xff]
  %v156 = vld [vmem:[%s0 + $0x2a0] sm:$0xff]
  %v157 = vld [vmem:[%s0 + $0x2a8] sm:$0xff]
  %v158 = vld [vmem:[%s0 + $0x2b0] sm:$0xff]
  %v159 = vld [vmem:[%s0 + $0x2b8] sm:$0xff]
  %v160 = vld [vmem:[%s0 + $0x2c0] sm:$0xff]
  %v161 = vld [vmem:[%s0 + $0x2c8] sm:$0xff]
  %v162 = vld [vmem:[%s0 + $0x2d0] sm:$0xff]
  %v163 = vld [vmem:[%s0 + $0x2d8] sm:$0xff]
  %v164 = vld [vmem:[%s0 + $0x2e0] sm:$0xff]
  %v165 = vld [vmem:[%s0 + $0x2e8] sm:$0xff]
  %v166 = vld [vmem:[%s0 + $0x2f0] sm:$0xff]
  %v167 = vld [vmem:[%s0 + $0x2f8] sm:$0xff]
  %v168 = vld [vmem:[%s4] sm:$0xff]
  %v169 = vld [vmem:[%s4 + $0x8] sm:$0xff]
  %v170 = vld [vmem:[%s4 + $0x10] sm:$0xff]
  %v171 = vld [vmem:[%s4 + $0x18] sm:$0xff]
  %v172 = vld [vmem:[%s4 + $0x20] sm:$0xff]
  %v173 = vld [vmem:[%s4 + $0x28] sm:$0xff]
  %v174 = vld [vmem:[%s4 + $0x30] sm:$0xff]
  %v175 = vld [vmem:[%s4 + $0x38] sm:$0xff]
  %v176 = vld [vmem:[%s4 + $0x40] sm:$0xff]
  %v177 = vld [vmem:[%s4 + $0x48] sm:$0xff]
  %v178 = vld [vmem:[%s4 + $0x50] sm:$0xff]
  %v179 = vld [vmem:[%s4 + $0x58] sm:$0xff]
  %v180 = vld [vmem:[%s4 + $0x60] sm:$0xff]
  %v181 = vld [vmem:[%s4 + $0x68] sm:$0xff]
  %v182 = vld [vmem:[%s4 + $0x70] sm:$0xff]
  %v183 = vld [vmem:[%s4 + $0x78] sm:$0xff]
  %v184 = vld [vmem:[%s4 + $0x80] sm:$0xff]
  %v185 = vld [vmem:[%s4 + $0x88] sm:$0xff]
  %v186 = vld [vmem:[%s4 + $0x90] sm:$0xff]
  %v187 = vld [vmem:[%s4 + $0x98] sm:$0xff]
  %v188 = vld [vmem:[%s4 + $0xa0] sm:$0xff]
  %v189 = vld [vmem:[%s4 + $0xa8] sm:$0xff]
  %v190 = vld [vmem:[%s4 + $0xb0] sm:$0xff]
  %v191 = vld [vmem:[%s4 + $0xb8] sm:$0xff]
  %v192 = vld [vmem:[%s4 + $0xc0] sm:$0xff]
  %v193 = vld [vmem:[%s4 + $0xc8] sm:$0xff]
  %v194 = vld [vmem:[%s4 + $0xd0] sm:$0xff]
  %v195 = vld [vmem:[%s4 + $0xd8] sm:$0xff]
  %v196 = vld [vmem:[%s4 + $0xe0] sm:$0xff]
  %v197 = vld [vmem:[%s4 + $0xe8] sm:$0xff]
  %v198 = vld [vmem:[%s4 + $0xf0] sm:$0xff]
  %v199 = vld [vmem:[%s4 + $0xf8] sm:$0xff]
  %v200 = vld [vmem:[%s4 + $0x100] sm:$0xff]
  %v201 = vld [vmem:[%s4 + $0x108] sm:$0xff]
  %v202 = vld [vmem:[%s4 + $0x110] sm:$0xff]
  %v203 = vld [vmem:[%s4 + $0x118] sm:$0xff]
  %v204 = vld [vmem:[%s4 + $0x120] sm:$0xff]
  %v205 = vld [vmem:[%s4 + $0x128] sm:$0xff]
  %v206 = vld [vmem:[%s4 + $0x130] sm:$0xff]
  %v207 = vld [vmem:[%s4 + $0x138] sm:$0xff]
  %v208 = vld [vmem:[%s4 + $0x140] sm:$0xff]
  %v209 = vld [vmem:[%s4 + $0x148] sm:$0xff]
  %v210 = vld [vmem:[%s4 + $0x150] sm:$0xff]
  %v211 = vld [vmem:[%s4 + $0x158] sm:$0xff]
  %v212 = vld [vmem:[%s4 + $0x160] sm:$0xff]
  %v213 = vld [vmem:[%s4 + $0x168] sm:$0xff]
  %v214 = vld [vmem:[%s4 + $0x170] sm:$0xff]
  %v215 = vld [vmem:[%s4 + $0x178] sm:$0xff]
  %v216 = vld [vmem:[%s4 + $0x180] sm:$0xff]
  %v217 = vld [vmem:[%s4 + $0x188] sm:$0xff]
  %v218 = vld [vmem:[%s4 + $0x190] sm:$0xff]
  %v219 = vld [vmem:[%s4 + $0x198] sm:$0xff]
  %v220 = vld [vmem:[%s4 + $0x1a0] sm:$0xff]
  %v221 = vld [vmem:[%s4 + $0x1a8] sm:$0xff]
  %v222 = vld [vmem:[%s4 + $0x1b0] sm:$0xff]
  %v223 = vld [vmem:[%s4 + $0x1b8] sm:$0xff]
  %v224 = vld [vmem:[%s4 + $0x1c0] sm:$0xff]
  %v225 = vld [vmem:[%s4 + $0x1c8] sm:$0xff]
  %v226 = vld [vmem:[%s4 + $0x1d0] sm:$0xff]
  %v227 = vld [vmem:[%s4 + $0x1d8] sm:$0xff]
  %v228 = vld [vmem:[%s4 + $0x1e0] sm:$0xff]
  %v229 = vld [vmem:[%s4 + $0x1e8] sm:$0xff]
  %v230 = vld [vmem:[%s4 + $0x1f0] sm:$0xff]
  %v231 = vld [vmem:[%s4 + $0x1f8] sm:$0xff]
  %v232 = vld [vmem:[%s4 + $0x200] sm:$0xff]
  %v233 = vld [vmem:[%s4 + $0x208] sm:$0xff]
  %v234 = vld [vmem:[%s4 + $0x210] sm:$0xff]
  %v235 = vld [vmem:[%s4 + $0x218] sm:$0xff]
  %v236 = vld [vmem:[%s4 + $0x220] sm:$0xff]
  %v237 = vld [vmem:[%s4 + $0x228] sm:$0xff]
  %v238 = vld [vmem:[%s4 + $0x230] sm:$0xff]
  %v239 = vld [vmem:[%s4 + $0x238] sm:$0xff]
  %v240 = vld [vmem:[%s4 + $0x240] sm:$0xff]
  %v241 = vld [vmem:[%s4 + $0x248] sm:$0xff]
  %v242 = vld [vmem:[%s4 + $0x250] sm:$0xff]
  %v243 = vld [vmem:[%s4 + $0x258] sm:$0xff]
  %v244 = vld [vmem:[%s4 + $0x260] sm:$0xff]
  %v245 = vld [vmem:[%s4 + $0x268] sm:$0xff]
  %v246 = vld [vmem:[%s4 + $0x270] sm:$0xff]
  %v247 = vld [vmem:[%s4 + $0x278] sm:$0xff]
  %v248 = vld [vmem:[%s4 + $0x280] sm:$0xff]
  %v249 = vld [vmem:[%s4 + $0x288] sm:$0xff]
  %v250 = vld [vmem:[%s4 + $0x290] sm:$0xff]
  %v251 = vld [vmem:[%s4 + $0x298] sm:$0xff]
  %v252 = vld [vmem:[%s4 + $0x2a0] sm:$0xff]
  %v253 = vld [vmem:[%s4 + $0x2a8] sm:$0xff]
  %v254 = vld [vmem:[%s4 + $0x2b0] sm:$0xff]
  %v255 = vld [vmem:[%s4 + $0x2b8] sm:$0xff]
  %v256 = vld [vmem:[%s4 + $0x2c0] sm:$0xff]
  %v257 = vld [vmem:[%s4 + $0x2c8] sm:$0xff]
  %v258 = vld [vmem:[%s4 + $0x2d0] sm:$0xff]
  %v259 = vld [vmem:[%s4 + $0x2d8] sm:$0xff]
  %v260 = vld [vmem:[%s4 + $0x2e0] sm:$0xff]
  %v261 = vld [vmem:[%s4 + $0x2e8] sm:$0xff]
  %v262 = vld [vmem:[%s4 + $0x2f0] sm:$0xff]
  %v263 = vld [vmem:[%s4 + $0x2f8] sm:$0xff]
  %v264 = vld [vmem:[%s4 + $0x300] sm:$0xff]
  %v265 = vld [vmem:[%s4 + $0x308] sm:$0xff]
  %v266 = vld [vmem:[%s4 + $0x310] sm:$0xff]
  %v267 = vld [vmem:[%s4 + $0x318] sm:$0xff]
  %v268 = vld [vmem:[%s4 + $0x320] sm:$0xff]
  %v269 = vld [vmem:[%s4 + $0x328] sm:$0xff]
  %v270 = vld [vmem:[%s4 + $0x330] sm:$0xff]
  %v271 = vld [vmem:[%s4 + $0x338] sm:$0xff]
  %v272 = vld [vmem:[%s4 + $0x340] sm:$0xff]
  %v273 = vld [vmem:[%s4 + $0x348] sm:$0xff]
  %v274 = vld [vmem:[%s4 + $0x350] sm:$0xff]
  %v275 = vld [vmem:[%s4 + $0x358] sm:$0xff]
  %v276 = vld [vmem:[%s4 + $0x360] sm:$0xff]
  %v277 = vld [vmem:[%s4 + $0x368] sm:$0xff]
  %v278 = vld [vmem:[%s4 + $0x370] sm:$0xff]
  %v279 = vld [vmem:[%s4 + $0x378] sm:$0xff]
  %v280 = vld [vmem:[%s4 + $0x380] sm:$0xff]
  %v281 = vld [vmem:[%s4 + $0x388] sm:$0xff]
  %v282 = vld [vmem:[%s4 + $0x390] sm:$0xff]
  %v283 = vld [vmem:[%s4 + $0x398] sm:$0xff]
  %v284 = vld [vmem:[%s4 + $0x3a0] sm:$0xff]
  %v285 = vld [vmem:[%s4 + $0x3a8] sm:$0xff]
  %v286 = vld [vmem:[%s4 + $0x3b0] sm:$0xff]
  %v287 = vld [vmem:[%s4 + $0x3b8] sm:$0xff]
  %v288 = vld [vmem:[%s4 + $0x3c0] sm:$0xff]
  %v289 = vld [vmem:[%s4 + $0x3c8] sm:$0xff]
  %v290 = vld [vmem:[%s4 + $0x3d0] sm:$0xff]
  %v291 = vld [vmem:[%s4 + $0x3d8] sm:$0xff]
  %v292 = vld [vmem:[%s4 + $0x3e0] sm:$0xff]
  %v293 = vld [vmem:[%s4 + $0x3e8] sm:$0xff]
  %v294 = vld [vmem:[%s4 + $0x3f0] sm:$0xff]
  %v295 = vld [vmem:[%s4 + $0x3f8] sm:$0xff]
  %v296 = vld [vmem:[%s4 + $0x400] sm:$0xff]
  %v297 = vld [vmem:[%s4 + $0x408] sm:$0xff]
  %v298 = vld [vmem:[%s4 + $0x410] sm:$0xff]
  %v299 = vld [vmem:[%s4 + $0x418] sm:$0xff]
  %v300 = vld [vmem:[%s4 + $0x420] sm:$0xff]
  %v301 = vld [vmem:[%s4 + $0x428] sm:$0xff]
  %v302 = vld [vmem:[%s4 + $0x430] sm:$0xff]
  %v303 = vld [vmem:[%s4 + $0x438] sm:$0xff]
  %v304 = vld [vmem:[%s4 + $0x440] sm:$0xff]
  %v305 = vld [vmem:[%s4 + $0x448] sm:$0xff]
  %v306 = vld [vmem:[%s4 + $0x450] sm:$0xff]
  %v307 = vld [vmem:[%s4 + $0x458] sm:$0xff]
  %v308 = vld [vmem:[%s4 + $0x460] sm:$0xff]
  %v309 = vld [vmem:[%s4 + $0x468] sm:$0xff]
  %v310 = vld [vmem:[%s4 + $0x470] sm:$0xff]
  %v311 = vld [vmem:[%s4 + $0x478] sm:$0xff]
  %v312 = vld [vmem:[%s4 + $0x480] sm:$0xff]
  %v313 = vld [vmem:[%s4 + $0x488] sm:$0xff]
  %v314 = vld [vmem:[%s4 + $0x490] sm:$0xff]
  %v315 = vld [vmem:[%s4 + $0x498] sm:$0xff]
  %v316 = vld [vmem:[%s4 + $0x4a0] sm:$0xff]
  %v317 = vld [vmem:[%s4 + $0x4a8] sm:$0xff]
  %v318 = vld [vmem:[%s4 + $0x4b0] sm:$0xff]
  %v319 = vld [vmem:[%s4 + $0x4b8] sm:$0xff]
  %v320 = vld [vmem:[%s4 + $0x4c0] sm:$0xff]
  %v321 = vld [vmem:[%s4 + $0x4c8] sm:$0xff]
  %v322 = vld [vmem:[%s4 + $0x4d0] sm:$0xff]
  %v323 = vld [vmem:[%s4 + $0x4d8] sm:$0xff]
  %v324 = vld [vmem:[%s4 + $0x4e0] sm:$0xff]
  %v325 = vld [vmem:[%s4 + $0x4e8] sm:$0xff]
  %v326 = vld [vmem:[%s4 + $0x4f0] sm:$0xff]
  %v327 = vld [vmem:[%s4 + $0x4f8] sm:$0xff]
  %v328 = vld [vmem:[%s4 + $0x500] sm:$0xff]
  %v329 = vld [vmem:[%s4 + $0x508] sm:$0xff]
  %v330 = vld [vmem:[%s4 + $0x510] sm:$0xff]
  %v331 = vld [vmem:[%s4 + $0x518] sm:$0xff]
  %v332 = vld [vmem:[%s4 + $0x520] sm:$0xff]
  %v333 = vld [vmem:[%s4 + $0x528] sm:$0xff]
  %v334 = vld [vmem:[%s4 + $0x530] sm:$0xff]
  %v335 = vld [vmem:[%s4 + $0x538] sm:$0xff]
  %v336 = vld [vmem:[%s4 + $0x540] sm:$0xff]
  %v337 = vld [vmem:[%s4 + $0x548] sm:$0xff]
  %v338 = vld [vmem:[%s4 + $0x550] sm:$0xff]
  %v339 = vld [vmem:[%s4 + $0x558] sm:$0xff]
  %v340 = vld [vmem:[%s4 + $0x560] sm:$0xff]
  %v341 = vld [vmem:[%s4 + $0x568] sm:$0xff]
  %v342 = vld [vmem:[%s4 + $0x570] sm:$0xff]
  %v343 = vld [vmem:[%s4 + $0x578] sm:$0xff]
  %v344 = vld [vmem:[%s4 + $0x580] sm:$0xff]
  %v345 = vld [vmem:[%s4 + $0x588] sm:$0xff]
  %v346 = vld [vmem:[%s4 + $0x590] sm:$0xff]
  %v347 = vld [vmem:[%s4 + $0x598] sm:$0xff]
  %v348 = vld [vmem:[%s4 + $0x5a0] sm:$0xff]
  %v349 = vld [vmem:[%s4 + $0x5a8] sm:$0xff]
  %v350 = vld [vmem:[%s4 + $0x5b0] sm:$0xff]
  %v351 = vld [vmem:[%s4 + $0x5b8] sm:$0xff]
  %v352 = vld [vmem:[%s4 + $0x5c0] sm:$0xff]
  %v353 = vld [vmem:[%s4 + $0x5c8] sm:$0xff]
  %v354 = vld [vmem:[%s4 + $0x5d0] sm:$0xff]
  %v355 = vld [vmem:[%s4 + $0x5d8] sm:$0xff]
  %v356 = vld [vmem:[%s4 + $0x5e0] sm:$0xff]
  %v357 = vld [vmem:[%s4 + $0x5e8] sm:$0xff]
  %v358 = vld [vmem:[%s4 + $0x5f0] sm:$0xff]
  %v359 = vld [vmem:[%s4 + $0x5f8] sm:$0xff]
  %v360 = vld [vmem:[%s4 + $0x600] sm:$0xff]
  %v361 = vld [vmem:[%s4 + $0x608] sm:$0xff]
  %v362 = vld [vmem:[%s4 + $0x610] sm:$0xff]
  %v363 = vld [vmem:[%s4 + $0x618] sm:$0xff]
  %v364 = vld [vmem:[%s4 + $0x620] sm:$0xff]
  %v365 = vld [vmem:[%s4 + $0x628] sm:$0xff]
  %v366 = vld [vmem:[%s4 + $0x630] sm:$0xff]
  %v367 = vld [vmem:[%s4 + $0x638] sm:$0xff]
  %v368 = vld [vmem:[%s4 + $0x640] sm:$0xff]
  %v369 = vld [vmem:[%s4 + $0x648] sm:$0xff]
  %v370 = vld [vmem:[%s4 + $0x650] sm:$0xff]
  %v371 = vld [vmem:[%s4 + $0x658] sm:$0xff]
  %v372 = vld [vmem:[%s4 + $0x660] sm:$0xff]
  %v373 = vld [vmem:[%s4 + $0x668] sm:$0xff]
  %v374 = vld [vmem:[%s4 + $0x670] sm:$0xff]
  %v375 = vld [vmem:[%s4 + $0x678] sm:$0xff]
  %v376 = vld [vmem:[%s4 + $0x680] sm:$0xff]
  %v377 = vld [vmem:[%s4 + $0x688] sm:$0xff]
  %v378 = vld [vmem:[%s4 + $0x690] sm:$0xff]
  %v379 = vld [vmem:[%s4 + $0x698] sm:$0xff]
  %v380 = vld [vmem:[%s4 + $0x6a0] sm:$0xff]
  %v381 = vld [vmem:[%s4 + $0x6a8] sm:$0xff]
  %v382 = vld [vmem:[%s4 + $0x6b0] sm:$0xff]
  %v383 = vld [vmem:[%s4 + $0x6b8] sm:$0xff]
  %v384 = vld [vmem:[%s4 + $0x6c0] sm:$0xff]
  %v385 = vld [vmem:[%s4 + $0x6c8] sm:$0xff]
  %v386 = vld [vmem:[%s4 + $0x6d0] sm:$0xff]
  %v387 = vld [vmem:[%s4 + $0x6d8] sm:$0xff]
  %v388 = vld [vmem:[%s4 + $0x6e0] sm:$0xff]
  %v389 = vld [vmem:[%s4 + $0x6e8] sm:$0xff]
  %v390 = vld [vmem:[%s4 + $0x6f0] sm:$0xff]
  %v391 = vld [vmem:[%s4 + $0x6f8] sm:$0xff]
  %v392 = vld [vmem:[%s4 + $0x700] sm:$0xff]
  %v393 = vld [vmem:[%s4 + $0x708] sm:$0xff]
  %v394 = vld [vmem:[%s4 + $0x710] sm:$0xff]
  %v395 = vld [vmem:[%s4 + $0x718] sm:$0xff]
  %v396 = vld [vmem:[%s4 + $0x720] sm:$0xff]
  %v397 = vld [vmem:[%s4 + $0x728] sm:$0xff]
  %v398 = vld [vmem:[%s4 + $0x730] sm:$0xff]
  %v399 = vld [vmem:[%s4 + $0x738] sm:$0xff]
  %v400 = vld [vmem:[%s4 + $0x740] sm:$0xff]
  %v401 = vld [vmem:[%s4 + $0x748] sm:$0xff]
  %v402 = vld [vmem:[%s4 + $0x750] sm:$0xff]
  %v403 = vld [vmem:[%s4 + $0x758] sm:$0xff]
  %v404 = vld [vmem:[%s4 + $0x760] sm:$0xff]
  %v405 = vld [vmem:[%s4 + $0x768] sm:$0xff]
  %v406 = vld [vmem:[%s4 + $0x770] sm:$0xff]
  %v407 = vld [vmem:[%s4 + $0x778] sm:$0xff]
  %v408 = vld [vmem:[%s4 + $0x780] sm:$0xff]
  %v409 = vld [vmem:[%s4 + $0x788] sm:$0xff]
  %v410 = vld [vmem:[%s4 + $0x790] sm:$0xff]
  %v411 = vld [vmem:[%s4 + $0x798] sm:$0xff]
  %v412 = vld [vmem:[%s4 + $0x7a0] sm:$0xff]
  %v413 = vld [vmem:[%s4 + $0x7a8] sm:$0xff]
  %v414 = vld [vmem:[%s4 + $0x7b0] sm:$0xff]
  %v415 = vld [vmem:[%s4 + $0x7b8] sm:$0xff]
  %v416 = vld [vmem:[%s4 + $0x7c0] sm:$0xff]
  %v417 = vld [vmem:[%s4 + $0x7c8] sm:$0xff]
  %v418 = vld [vmem:[%s4 + $0x7d0] sm:$0xff]
  %v419 = vld [vmem:[%s4 + $0x7d8] sm:$0xff]
  %v420 = vld [vmem:[%s4 + $0x7e0] sm:$0xff]
  %v421 = vld [vmem:[%s4 + $0x7e8] sm:$0xff]
  %v422 = vld [vmem:[%s4 + $0x7f0] sm:$0xff]
  %v423 = vld [vmem:[%s4 + $0x7f8] sm:$0xff]
  %v424 = vld [vmem:[%s4 + $0x800] sm:$0xff]
  %v425 = vld [vmem:[%s4 + $0x808] sm:$0xff]
  %v426 = vld [vmem:[%s4 + $0x810] sm:$0xff]
  %v427 = vld [vmem:[%s4 + $0x818] sm:$0xff]
  %v428 = vld [vmem:[%s4 + $0x820] sm:$0xff]
  %v429 = vld [vmem:[%s4 + $0x828] sm:$0xff]
  %v430 = vld [vmem:[%s4 + $0x830] sm:$0xff]
  %v431 = vld [vmem:[%s4 + $0x838] sm:$0xff]
  %v432 = vld [vmem:[%s4 + $0x840] sm:$0xff]
  %v433 = vld [vmem:[%s4 + $0x848] sm:$0xff]
  %v434 = vld [vmem:[%s4 + $0x850] sm:$0xff]
  %v435 = vld [vmem:[%s4 + $0x858] sm:$0xff]
  %v436 = vld [vmem:[%s4 + $0x860] sm:$0xff]
  %v437 = vld [vmem:[%s4 + $0x868] sm:$0xff]
  %v438 = vld [vmem:[%s4 + $0x870] sm:$0xff]
  %v439 = vld [vmem:[%s4 + $0x878] sm:$0xff]
  %v440 = vld [vmem:[%s4 + $0x880] sm:$0xff]
  %v441 = vld [vmem:[%s4 + $0x888] sm:$0xff]
  %v442 = vld [vmem:[%s4 + $0x890] sm:$0xff]
  %v443 = vld [vmem:[%s4 + $0x898] sm:$0xff]
  %v444 = vld [vmem:[%s4 + $0x8a0] sm:$0xff]
  %v445 = vld [vmem:[%s4 + $0x8a8] sm:$0xff]
  %v446 = vld [vmem:[%s4 + $0x8b0] sm:$0xff]
  %v447 = vld [vmem:[%s4 + $0x8b8] sm:$0xff]
  %v448 = vld [vmem:[%s4 + $0x8c0] sm:$0xff]
  %v449 = vld [vmem:[%s4 + $0x8c8] sm:$0xff]
  %v450 = vld [vmem:[%s4 + $0x8d0] sm:$0xff]
  %v451 = vld [vmem:[%s4 + $0x8d8] sm:$0xff]
  %v452 = vld [vmem:[%s4 + $0x8e0] sm:$0xff]
  %v453 = vld [vmem:[%s4 + $0x8e8] sm:$0xff]
  %v454 = vld [vmem:[%s4 + $0x8f0] sm:$0xff]
  %v455 = vld [vmem:[%s4 + $0x8f8] sm:$0xff]
  %v456 = vld [vmem:[%s4 + $0x900] sm:$0xff]
  %v457 = vld [vmem:[%s4 + $0x908] sm:$0xff]
  %v458 = vld [vmem:[%s4 + $0x910] sm:$0xff]
  %v459 = vld [vmem:[%s4 + $0x918] sm:$0xff]
  %v460 = vld [vmem:[%s4 + $0x920] sm:$0xff]
  %v461 = vld [vmem:[%s4 + $0x928] sm:$0xff]
  %v462 = vld [vmem:[%s4 + $0x930] sm:$0xff]
  %v463 = vld [vmem:[%s4 + $0x938] sm:$0xff]
  %v464 = vld [vmem:[%s4 + $0x940] sm:$0xff]
  %v465 = vld [vmem:[%s4 + $0x948] sm:$0xff]
  %v466 = vld [vmem:[%s4 + $0x950] sm:$0xff]
  %v467 = vld [vmem:[%s4 + $0x958] sm:$0xff]
  %v468 = vld [vmem:[%s4 + $0x960] sm:$0xff]
  %v469 = vld [vmem:[%s4 + $0x968] sm:$0xff]
  %v470 = vld [vmem:[%s4 + $0x970] sm:$0xff]
  %v471 = vld [vmem:[%s4 + $0x978] sm:$0xff]
  %v472 = vld [vmem:[%s4 + $0x980] sm:$0xff]
  %v473 = vld [vmem:[%s4 + $0x988] sm:$0xff]
  %v474 = vld [vmem:[%s4 + $0x990] sm:$0xff]
  %v475 = vld [vmem:[%s4 + $0x998] sm:$0xff]
  %v476 = vld [vmem:[%s4 + $0x9a0] sm:$0xff]
  %v477 = vld [vmem:[%s4 + $0x9a8] sm:$0xff]
  %v478 = vld [vmem:[%s4 + $0x9b0] sm:$0xff]
  %v479 = vld [vmem:[%s4 + $0x9b8] sm:$0xff]
  %v480 = vld [vmem:[%s4 + $0x9c0] sm:$0xff]
  %v481 = vld [vmem:[%s4 + $0x9c8] sm:$0xff]
  %v482 = vld [vmem:[%s4 + $0x9d0] sm:$0xff]
  %v483 = vld [vmem:[%s4 + $0x9d8] sm:$0xff]
  %v484 = vld [vmem:[%s4 + $0x9e0] sm:$0xff]
  %v485 = vld [vmem:[%s4 + $0x9e8] sm:$0xff]
  %v486 = vld [vmem:[%s4 + $0x9f0] sm:$0xff]
  %v487 = vld [vmem:[%s4 + $0x9f8] sm:$0xff]
  %v488 = vld [vmem:[%s4 + $0xa00] sm:$0xff]
  %v489 = vld [vmem:[%s4 + $0xa08] sm:$0xff]
  %v490 = vld [vmem:[%s4 + $0xa10] sm:$0xff]
  %v491 = vld [vmem:[%s4 + $0xa18] sm:$0xff]
  %v492 = vld [vmem:[%s4 + $0xa20] sm:$0xff]
  %v493 = vld [vmem:[%s4 + $0xa28] sm:$0xff]
  %v494 = vld [vmem:[%s4 + $0xa30] sm:$0xff]
  %v495 = vld [vmem:[%s4 + $0xa38] sm:$0xff]
  %v496 = vld [vmem:[%s4 + $0xa40] sm:$0xff]
  %v497 = vld [vmem:[%s4 + $0xa48] sm:$0xff]
  %v498 = vld [vmem:[%s4 + $0xa50] sm:$0xff]
  %v499 = vld [vmem:[%s4 + $0xa58] sm:$0xff]
  %v500 = vld [vmem:[%s4 + $0xa60] sm:$0xff]
  %v501 = vld [vmem:[%s4 + $0xa68] sm:$0xff]
  %v502 = vld [vmem:[%s4 + $0xa70] sm:$0xff]
  %v503 = vld [vmem:[%s4 + $0xa78] sm:$0xff]
  %v504 = vld [vmem:[%s4 + $0xa80] sm:$0xff]
  %v505 = vld [vmem:[%s4 + $0xa88] sm:$0xff]
  %v506 = vld [vmem:[%s4 + $0xa90] sm:$0xff]
  %v507 = vld [vmem:[%s4 + $0xa98] sm:$0xff]
  %v508 = vld [vmem:[%s4 + $0xaa0] sm:$0xff]
  %v509 = vld [vmem:[%s4 + $0xaa8] sm:$0xff]
  %v510 = vld [vmem:[%s4 + $0xab0] sm:$0xff]
  %v511 = vld [vmem:[%s4 + $0xab8] sm:$0xff]
  %v512 = vld [vmem:[%s4 + $0xac0] sm:$0xff]
  %v513 = vld [vmem:[%s4 + $0xac8] sm:$0xff]
  %v514 = vld [vmem:[%s4 + $0xad0] sm:$0xff]
  %v515 = vld [vmem:[%s4 + $0xad8] sm:$0xff]
  %v516 = vld [vmem:[%s4 + $0xae0] sm:$0xff]
  %v517 = vld [vmem:[%s4 + $0xae8] sm:$0xff]
  %v518 = vld [vmem:[%s4 + $0xaf0] sm:$0xff]
  %v519 = vld [vmem:[%s4 + $0xaf8] sm:$0xff]
  %v520 = vld [vmem:[%s4 + $0xb00] sm:$0xff]
  %v521 = vld [vmem:[%s4 + $0xb08] sm:$0xff]
  %v522 = vld [vmem:[%s4 + $0xb10] sm:$0xff]
  %v523 = vld [vmem:[%s4 + $0xb18] sm:$0xff]
  %v524 = vld [vmem:[%s4 + $0xb20] sm:$0xff]
  %v525 = vld [vmem:[%s4 + $0xb28] sm:$0xff]
  %v526 = vld [vmem:[%s4 + $0xb30] sm:$0xff]
  %v527 = vld [vmem:[%s4 + $0xb38] sm:$0xff]
  %v528 = vld [vmem:[%s4 + $0xb40] sm:$0xff]
  %v529 = vld [vmem:[%s4 + $0xb48] sm:$0xff]
  %v530 = vld [vmem:[%s4 + $0xb50] sm:$0xff]
  %v531 = vld [vmem:[%s4 + $0xb58] sm:$0xff]
  %v532 = vld [vmem:[%s4 + $0xb60] sm:$0xff]
  %v533 = vld [vmem:[%s4 + $0xb68] sm:$0xff]
  %v534 = vld [vmem:[%s4 + $0xb70] sm:$0xff]
  %v535 = vld [vmem:[%s4 + $0xb78] sm:$0xff]
  %v536 = vld [vmem:[%s4 + $0xb80] sm:$0xff]
  %v537 = vld [vmem:[%s4 + $0xb88] sm:$0xff]
  %v538 = vld [vmem:[%s4 + $0xb90] sm:$0xff]
  %v539 = vld [vmem:[%s4 + $0xb98] sm:$0xff]
  %v540 = vld [vmem:[%s4 + $0xba0] sm:$0xff]
  %v541 = vld [vmem:[%s4 + $0xba8] sm:$0xff]
  %v542 = vld [vmem:[%s4 + $0xbb0] sm:$0xff]
  %v543 = vld [vmem:[%s4 + $0xbb8] sm:$0xff]
  %v544 = vld [vmem:[%s4 + $0xbc0] sm:$0xff]
  %v545 = vld [vmem:[%s4 + $0xbc8] sm:$0xff]
  %v546 = vld [vmem:[%s4 + $0xbd0] sm:$0xff]
  %v547 = vld [vmem:[%s4 + $0xbd8] sm:$0xff]
  %v548 = vld [vmem:[%s4 + $0xbe0] sm:$0xff]
  %v549 = vld [vmem:[%s4 + $0xbe8] sm:$0xff]
  %v550 = vld [vmem:[%s4 + $0xbf0] sm:$0xff]
  %v551 = vld [vmem:[%s4 + $0xbf8] sm:$0xff]
  %v552 = vld [vmem:[%s4 + $0xc00] sm:$0xff]
  %v553 = vld [vmem:[%s4 + $0xc08] sm:$0xff]
  %v554 = vld [vmem:[%s4 + $0xc10] sm:$0xff]
  %v555 = vld [vmem:[%s4 + $0xc18] sm:$0xff]
  %v556 = vld [vmem:[%s4 + $0xc20] sm:$0xff]
  %v557 = vld [vmem:[%s4 + $0xc28] sm:$0xff]
  %v558 = vld [vmem:[%s4 + $0xc30] sm:$0xff]
  %v559 = vld [vmem:[%s4 + $0xc38] sm:$0xff]
  %v560 = vld [vmem:[%s4 + $0xc40] sm:$0xff]
  %v561 = vld [vmem:[%s4 + $0xc48] sm:$0xff]
  %v562 = vld [vmem:[%s4 + $0xc50] sm:$0xff]
  %v563 = vld [vmem:[%s4 + $0xc58] sm:$0xff]
  %v564 = vld [vmem:[%s4 + $0xc60] sm:$0xff]
  %v565 = vld [vmem:[%s4 + $0xc68] sm:$0xff]
  %v566 = vld [vmem:[%s4 + $0xc70] sm:$0xff]
  %v567 = vld [vmem:[%s4 + $0xc78] sm:$0xff]
  %v568 = vld [vmem:[%s4 + $0xc80] sm:$0xff]
  %v569 = vld [vmem:[%s4 + $0xc88] sm:$0xff]
  %v570 = vld [vmem:[%s4 + $0xc90] sm:$0xff]
  %v571 = vld [vmem:[%s4 + $0xc98] sm:$0xff]
  %v572 = vld [vmem:[%s4 + $0xca0] sm:$0xff]
  %v573 = vld [vmem:[%s4 + $0xca8] sm:$0xff]
  %v574 = vld [vmem:[%s4 + $0xcb0] sm:$0xff]
  %v575 = vld [vmem:[%s4 + $0xcb8] sm:$0xff]
  %v576 = vld [vmem:[%s4 + $0xcc0] sm:$0xff]
  %v577 = vld [vmem:[%s4 + $0xcc8] sm:$0xff]
  %v578 = vld [vmem:[%s4 + $0xcd0] sm:$0xff]
  %v579 = vld [vmem:[%s4 + $0xcd8] sm:$0xff]
  %v580 = vld [vmem:[%s4 + $0xce0] sm:$0xff]
  %v581 = vld [vmem:[%s4 + $0xce8] sm:$0xff]
  %v582 = vld [vmem:[%s4 + $0xcf0] sm:$0xff]
  %v583 = vld [vmem:[%s4 + $0xcf8] sm:$0xff]
  %v584 = vld [vmem:[%s4 + $0xd00] sm:$0xff]
  %v585 = vld [vmem:[%s4 + $0xd08] sm:$0xff]
  %v586 = vld [vmem:[%s4 + $0xd10] sm:$0xff]
  %v587 = vld [vmem:[%s4 + $0xd18] sm:$0xff]
  %v588 = vld [vmem:[%s4 + $0xd20] sm:$0xff]
  %v589 = vld [vmem:[%s4 + $0xd28] sm:$0xff]
  %v590 = vld [vmem:[%s4 + $0xd30] sm:$0xff]
  %v591 = vld [vmem:[%s4 + $0xd38] sm:$0xff]
  %v592 = vld [vmem:[%s4 + $0xd40] sm:$0xff]
  %v593 = vld [vmem:[%s4 + $0xd48] sm:$0xff]
  %v594 = vld [vmem:[%s4 + $0xd50] sm:$0xff]
  %v595 = vld [vmem:[%s4 + $0xd58] sm:$0xff]
  %v596 = vld [vmem:[%s4 + $0xd60] sm:$0xff]
  %v597 = vld [vmem:[%s4 + $0xd68] sm:$0xff]
  %v598 = vld [vmem:[%s4 + $0xd70] sm:$0xff]
  %v599 = vld [vmem:[%s4 + $0xd78] sm:$0xff]
  %v600 = vld [vmem:[%s4 + $0xd80] sm:$0xff]
  %v601 = vld [vmem:[%s4 + $0xd88] sm:$0xff]
  %v602 = vld [vmem:[%s4 + $0xd90] sm:$0xff]
  %v603 = vld [vmem:[%s4 + $0xd98] sm:$0xff]
  %v604 = vld [vmem:[%s4 + $0xda0] sm:$0xff]
  %v605 = vld [vmem:[%s4 + $0xda8] sm:$0xff]
  %v606 = vld [vmem:[%s4 + $0xdb0] sm:$0xff]
  %v607 = vld [vmem:[%s4 + $0xdb8] sm:$0xff]
  %v608 = vld [vmem:[%s4 + $0xdc0] sm:$0xff]
  %v609 = vld [vmem:[%s4 + $0xdc8] sm:$0xff]
  %v610 = vld [vmem:[%s4 + $0xdd0] sm:$0xff]
  %v611 = vld [vmem:[%s4 + $0xdd8] sm:$0xff]
  %v612 = vld [vmem:[%s4 + $0xde0] sm:$0xff]
  %v613 = vld [vmem:[%s4 + $0xde8] sm:$0xff]
  %v614 = vld [vmem:[%s4 + $0xdf0] sm:$0xff]
  %v615 = vld [vmem:[%s4 + $0xdf8] sm:$0xff]
  %v616 = vld [vmem:[%s4 + $0xe00] sm:$0xff]
  %v617 = vld [vmem:[%s4 + $0xe08] sm:$0xff]
  %v618 = vld [vmem:[%s4 + $0xe10] sm:$0xff]
  %v619 = vld [vmem:[%s4 + $0xe18] sm:$0xff]
  %v620 = vld [vmem:[%s4 + $0xe20] sm:$0xff]
  %v621 = vld [vmem:[%s4 + $0xe28] sm:$0xff]
  %v622 = vld [vmem:[%s4 + $0xe30] sm:$0xff]
  %v623 = vld [vmem:[%s4 + $0xe38] sm:$0xff]
  %v624 = vld [vmem:[%s4 + $0xe40] sm:$0xff]
  %v625 = vld [vmem:[%s4 + $0xe48] sm:$0xff]
  %v626 = vld [vmem:[%s4 + $0xe50] sm:$0xff]
  %v627 = vld [vmem:[%s4 + $0xe58] sm:$0xff]
  %v628 = vld [vmem:[%s4 + $0xe60] sm:$0xff]
  %v629 = vld [vmem:[%s4 + $0xe68] sm:$0xff]
  %v630 = vld [vmem:[%s4 + $0xe70] sm:$0xff]
  %v631 = vld [vmem:[%s4 + $0xe78] sm:$0xff]
  %v632 = vld [vmem:[%s4 + $0xe80] sm:$0xff]
  %v633 = vld [vmem:[%s4 + $0xe88] sm:$0xff]
  %v634 = vld [vmem:[%s4 + $0xe90] sm:$0xff]
  %v635 = vld [vmem:[%s4 + $0xe98] sm:$0xff]
  %v636 = vld [vmem:[%s4 + $0xea0] sm:$0xff]
  %v637 = vld [vmem:[%s4 + $0xea8] sm:$0xff]
  %v638 = vld [vmem:[%s4 + $0xeb0] sm:$0xff]
  %v639 = vld [vmem:[%s4 + $0xeb8] sm:$0xff]
  %v640 = vld [vmem:[%s4 + $0xec0] sm:$0xff]
  %v641 = vld [vmem:[%s4 + $0xec8] sm:$0xff]
  %v642 = vld [vmem:[%s4 + $0xed0] sm:$0xff]
  %v643 = vld [vmem:[%s4 + $0xed8] sm:$0xff]
  %v644 = vld [vmem:[%s4 + $0xee0] sm:$0xff]
  %v645 = vld [vmem:[%s4 + $0xee8] sm:$0xff]
  %v646 = vld [vmem:[%s4 + $0xef0] sm:$0xff]
  %v647 = vld [vmem:[%s4 + $0xef8] sm:$0xff]
  %v648 = vld [vmem:[%s4 + $0xf00] sm:$0xff]
  %v649 = vld [vmem:[%s4 + $0xf08] sm:$0xff]
  %v650 = vld [vmem:[%s4 + $0xf10] sm:$0xff]
  %v651 = vld [vmem:[%s4 + $0xf18] sm:$0xff]
  %v652 = vld [vmem:[%s4 + $0xf20] sm:$0xff]
  %v653 = vld [vmem:[%s4 + $0xf28] sm:$0xff]
  %v654 = vld [vmem:[%s4 + $0xf30] sm:$0xff]
  %v655 = vld [vmem:[%s4 + $0xf38] sm:$0xff]
  %v656 = vld [vmem:[%s4 + $0xf40] sm:$0xff]
  %v657 = vld [vmem:[%s4 + $0xf48] sm:$0xff]
  %v658 = vld [vmem:[%s4 + $0xf50] sm:$0xff]
  %v659 = vld [vmem:[%s4 + $0xf58] sm:$0xff]
  %v660 = vld [vmem:[%s4 + $0xf60] sm:$0xff]
  %v661 = vld [vmem:[%s4 + $0xf68] sm:$0xff]
  %v662 = vld [vmem:[%s4 + $0xf70] sm:$0xff]
  %v663 = vld [vmem:[%s4 + $0xf78] sm:$0xff]
  %v664 = vld [vmem:[%s4 + $0xf80] sm:$0xff]
  %v665 = vld [vmem:[%s4 + $0xf88] sm:$0xff]
  %v666 = vld [vmem:[%s4 + $0xf90] sm:$0xff]
  %v667 = vld [vmem:[%s4 + $0xf98] sm:$0xff]
  %v668 = vld [vmem:[%s4 + $0xfa0] sm:$0xff]
  %v669 = vld [vmem:[%s4 + $0xfa8] sm:$0xff]
  %v670 = vld [vmem:[%s4 + $0xfb0] sm:$0xff]
  %v671 = vld [vmem:[%s4 + $0xfb8] sm:$0xff]
  %v672 = vld [vmem:[%s4 + $0xfc0] sm:$0xff]
  %v673 = vld [vmem:[%s4 + $0xfc8] sm:$0xff]
  %v674 = vld [vmem:[%s4 + $0xfd0] sm:$0xff]
  %v675 = vld [vmem:[%s4 + $0xfd8] sm:$0xff]
  %v676 = vld [vmem:[%s4 + $0xfe0] sm:$0xff]
  %v677 = vld [vmem:[%s4 + $0xfe8] sm:$0xff]
  %v678 = vld [vmem:[%s4 + $0xff0] sm:$0xff]
  %v679 = vld [vmem:[%s4 + $0xff8] sm:$0xff]
  %v680 = vld [vmem:[%s4 + $0x1000] sm:$0xff]
  %v681 = vld [vmem:[%s4 + $0x1008] sm:$0xff]
  %v682 = vld [vmem:[%s4 + $0x1010] sm:$0xff]
  %v683 = vld [vmem:[%s4 + $0x1018] sm:$0xff]
  %v684 = vld [vmem:[%s4 + $0x1020] sm:$0xff]
  %v685 = vld [vmem:[%s4 + $0x1028] sm:$0xff]
  %v686 = vld [vmem:[%s4 + $0x1030] sm:$0xff]
  %v687 = vld [vmem:[%s4 + $0x1038] sm:$0xff]
  %v688 = vld [vmem:[%s4 + $0x1040] sm:$0xff]
  %v689 = vld [vmem:[%s4 + $0x1048] sm:$0xff]
  %v690 = vld [vmem:[%s4 + $0x1050] sm:$0xff]
  %v691 = vld [vmem:[%s4 + $0x1058] sm:$0xff]
  %v692 = vld [vmem:[%s4 + $0x1060] sm:$0xff]
  %v693 = vld [vmem:[%s4 + $0x1068] sm:$0xff]
  %v694 = vld [vmem:[%s4 + $0x1070] sm:$0xff]
  %v695 = vld [vmem:[%s4 + $0x1078] sm:$0xff]
  %v696 = vld [vmem:[%s4 + $0x1080] sm:$0xff]
  %v697 = vld [vmem:[%s4 + $0x1088] sm:$0xff]
  %v698 = vld [vmem:[%s4 + $0x1090] sm:$0xff]
  %v699 = vld [vmem:[%s4 + $0x1098] sm:$0xff]
  %v700 = vld [vmem:[%s4 + $0x10a0] sm:$0xff]
  %v701 = vld [vmem:[%s4 + $0x10a8] sm:$0xff]
  %v702 = vld [vmem:[%s4 + $0x10b0] sm:$0xff]
  %v703 = vld [vmem:[%s4 + $0x10b8] sm:$0xff]
  %v704 = vld [vmem:[%s4 + $0x10c0] sm:$0xff]
  %v705 = vld [vmem:[%s4 + $0x10c8] sm:$0xff]
  %v706 = vld [vmem:[%s4 + $0x10d0] sm:$0xff]
  %v707 = vld [vmem:[%s4 + $0x10d8] sm:$0xff]
  %v708 = vld [vmem:[%s4 + $0x10e0] sm:$0xff]
  %v709 = vld [vmem:[%s4 + $0x10e8] sm:$0xff]
  %v710 = vld [vmem:[%s4 + $0x10f0] sm:$0xff]
  %v711 = vld [vmem:[%s4 + $0x10f8] sm:$0xff]
  %v712 = vld [vmem:[%s4 + $0x1100] sm:$0xff]
  %v713 = vld [vmem:[%s4 + $0x1108] sm:$0xff]
  %v714 = vld [vmem:[%s4 + $0x1110] sm:$0xff]
  %v715 = vld [vmem:[%s4 + $0x1118] sm:$0xff]
  %v716 = vld [vmem:[%s4 + $0x1120] sm:$0xff]
  %v717 = vld [vmem:[%s4 + $0x1128] sm:$0xff]
  %v718 = vld [vmem:[%s4 + $0x1130] sm:$0xff]
  %v719 = vld [vmem:[%s4 + $0x1138] sm:$0xff]
  %v720 = vld [vmem:[%s4 + $0x1140] sm:$0xff]
  %v721 = vld [vmem:[%s4 + $0x1148] sm:$0xff]
  %v722 = vld [vmem:[%s4 + $0x1150] sm:$0xff]
  %v723 = vld [vmem:[%s4 + $0x1158] sm:$0xff]
  %v724 = vld [vmem:[%s4 + $0x1160] sm:$0xff]
  %v725 = vld [vmem:[%s4 + $0x1168] sm:$0xff]
  %v726 = vld [vmem:[%s4 + $0x1170] sm:$0xff]
  %v727 = vld [vmem:[%s4 + $0x1178] sm:$0xff]
  %v728 = vld [vmem:[%s4 + $0x1180] sm:$0xff]
  %v729 = vld [vmem:[%s4 + $0x1188] sm:$0xff]
  %v730 = vld [vmem:[%s4 + $0x1190] sm:$0xff]
  %v731 = vld [vmem:[%s4 + $0x1198] sm:$0xff]
  %v732 = vld [vmem:[%s4 + $0x11a0] sm:$0xff]
  %v733 = vld [vmem:[%s4 + $0x11a8] sm:$0xff]
  %v734 = vld [vmem:[%s4 + $0x11b0] sm:$0xff]
  %v735 = vld [vmem:[%s4 + $0x11b8] sm:$0xff]
  %v736 = vld [vmem:[%s4 + $0x11c0] sm:$0xff]
  %v737 = vld [vmem:[%s4 + $0x11c8] sm:$0xff]
  %v738 = vld [vmem:[%s4 + $0x11d0] sm:$0xff]
  %v739 = vld [vmem:[%s4 + $0x11d8] sm:$0xff]
  %v740 = vld [vmem:[%s4 + $0x11e0] sm:$0xff]
  %v741 = vld [vmem:[%s4 + $0x11e8] sm:$0xff]
  %v742 = vld [vmem:[%s4 + $0x11f0] sm:$0xff]
  %v743 = vld [vmem:[%s4 + $0x11f8] sm:$0xff]
  %v744 = vld [vmem:[%s5] sm:$0x3f]
  %v746 = vlaneseq
  %v747 = vshrl.u32 %v746, 7
  %v748 = vsub.s32 0, %v747
  %v749 = vrot.slane %v744, %v748
  %v750 = vlaneseq
  %v751 = vshrl.u32 %v750, 7
  %v752 = vsub.s32 1, %v751
  %v753 = vrot.slane %v744, %v752
  %v754 = vlaneseq
  %v755 = vshrl.u32 %v754, 7
  %v756 = vsub.s32 2, %v755
  %v757 = vrot.slane %v744, %v756
  %v758 = vlaneseq
  %v759 = vshrl.u32 %v758, 7
  %v760 = vsub.s32 3, %v759
  %v761 = vrot.slane %v744, %v760
  %v762 = vlaneseq
  %v763 = vshrl.u32 %v762, 7
  %v764 = vsub.s32 4, %v763
  %v765 = vrot.slane %v744, %v764
  %v766 = vlaneseq
  %v767 = vshrl.u32 %v766, 7
  %v768 = vsub.s32 5, %v767
  %v769 = vrot.slane %v744, %v768
  %v872 = vunpack.c.l.b16 %v72
  %v873 = vunpack.c.h.b16 %v72
  %v874 = vunpack.c.l.b16 %v73
  %v875 = vunpack.c.h.b16 %v73
  %v876 = vunpack.c.l.b16 %v74
  %v877 = vunpack.c.h.b16 %v74
  %v878 = vunpack.c.l.b16 %v75
  %v879 = vunpack.c.h.b16 %v75
  %v880 = vunpack.c.l.b16 %v76
  %v881 = vunpack.c.h.b16 %v76
  %v882 = vunpack.c.l.b16 %v77
  %v883 = vunpack.c.h.b16 %v77
  %v884 = vunpack.c.l.b16 %v78
  %v885 = vunpack.c.h.b16 %v78
  %v886 = vunpack.c.l.b16 %v79
  %v887 = vunpack.c.h.b16 %v79
  %v888 = vunpack.c.l.b16 %v80
  %v889 = vunpack.c.h.b16 %v80
  %v890 = vunpack.c.l.b16 %v81
  %v891 = vunpack.c.h.b16 %v81
  %v892 = vunpack.c.l.b16 %v82
  %v893 = vunpack.c.h.b16 %v82
  %v894 = vunpack.c.l.b16 %v83
  %v895 = vunpack.c.h.b16 %v83
  %v896 = vunpack.c.l.b16 %v84
  %v897 = vunpack.c.h.b16 %v84
  %v898 = vunpack.c.l.b16 %v85
  %v899 = vunpack.c.h.b16 %v85
  %v900 = vunpack.c.l.b16 %v86
  %v901 = vunpack.c.h.b16 %v86
  %v902 = vunpack.c.l.b16 %v87
  %v903 = vunpack.c.h.b16 %v87
  %v904 = vunpack.c.l.b16 %v88
  %v905 = vunpack.c.h.b16 %v88
  %v906 = vunpack.c.l.b16 %v89
  %v907 = vunpack.c.h.b16 %v89
  %v908 = vunpack.c.l.b16 %v90
  %v909 = vunpack.c.h.b16 %v90
  %v910 = vunpack.c.l.b16 %v91
  %v911 = vunpack.c.h.b16 %v91
  %v912 = vunpack.c.l.b16 %v92
  %v913 = vunpack.c.h.b16 %v92
  %v914 = vunpack.c.l.b16 %v93
  %v915 = vunpack.c.h.b16 %v93
  %v916 = vunpack.c.l.b16 %v94
  %v917 = vunpack.c.h.b16 %v94
  %v918 = vunpack.c.l.b16 %v95
  %v919 = vunpack.c.h.b16 %v95
  %v920 = vunpack.c.l.b16 %v96
  %v921 = vunpack.c.h.b16 %v96
  %v922 = vunpack.c.l.b16 %v97
  %v923 = vunpack.c.h.b16 %v97
  %v924 = vunpack.c.l.b16 %v98
  %v925 = vunpack.c.h.b16 %v98
  %v926 = vunpack.c.l.b16 %v99
  %v927 = vunpack.c.h.b16 %v99
  %v928 = vunpack.c.l.b16 %v100
  %v929 = vunpack.c.h.b16 %v100
  %v930 = vunpack.c.l.b16 %v101
  %v931 = vunpack.c.h.b16 %v101
  %v932 = vunpack.c.l.b16 %v102
  %v933 = vunpack.c.h.b16 %v102
  %v934 = vunpack.c.l.b16 %v103
  %v935 = vunpack.c.h.b16 %v103
  %v936 = vunpack.c.l.b16 %v104
  %v937 = vunpack.c.h.b16 %v104
  %v938 = vunpack.c.l.b16 %v105
  %v939 = vunpack.c.h.b16 %v105
  %v940 = vunpack.c.l.b16 %v106
  %v941 = vunpack.c.h.b16 %v106
  %v942 = vunpack.c.l.b16 %v107
  %v943 = vunpack.c.h.b16 %v107
  %v944 = vunpack.c.l.b16 %v108
  %v945 = vunpack.c.h.b16 %v108
  %v946 = vunpack.c.l.b16 %v109
  %v947 = vunpack.c.h.b16 %v109
  %v948 = vunpack.c.l.b16 %v110
  %v949 = vunpack.c.h.b16 %v110
  %v950 = vunpack.c.l.b16 %v111
  %v951 = vunpack.c.h.b16 %v111
  %v952 = vunpack.c.l.b16 %v112
  %v953 = vunpack.c.h.b16 %v112
  %v954 = vunpack.c.l.b16 %v113
  %v955 = vunpack.c.h.b16 %v113
  %v956 = vunpack.c.l.b16 %v114
  %v957 = vunpack.c.h.b16 %v114
  %v958 = vunpack.c.l.b16 %v115
  %v959 = vunpack.c.h.b16 %v115
  %v960 = vunpack.c.l.b16 %v116
  %v961 = vunpack.c.h.b16 %v116
  %v962 = vunpack.c.l.b16 %v117
  %v963 = vunpack.c.h.b16 %v117
  %v964 = vunpack.c.l.b16 %v118
  %v965 = vunpack.c.h.b16 %v118
  %v966 = vunpack.c.l.b16 %v119
  %v967 = vunpack.c.h.b16 %v119
  %v968 = vunpack.c.l.b16 %v120
  %v969 = vunpack.c.h.b16 %v120
  %v970 = vunpack.c.l.b16 %v121
  %v971 = vunpack.c.h.b16 %v121
  %v972 = vunpack.c.l.b16 %v122
  %v973 = vunpack.c.h.b16 %v122
  %v974 = vunpack.c.l.b16 %v123
  %v975 = vunpack.c.h.b16 %v123
  %v976 = vunpack.c.l.b16 %v124
  %v977 = vunpack.c.h.b16 %v124
  %v978 = vunpack.c.l.b16 %v125
  %v979 = vunpack.c.h.b16 %v125
  %v980 = vunpack.c.l.b16 %v126
  %v981 = vunpack.c.h.b16 %v126
  %v982 = vunpack.c.l.b16 %v127
  %v983 = vunpack.c.h.b16 %v127
  %v984 = vunpack.c.l.b16 %v128
  %v985 = vunpack.c.h.b16 %v128
  %v986 = vunpack.c.l.b16 %v129
  %v987 = vunpack.c.h.b16 %v129
  %v988 = vunpack.c.l.b16 %v130
  %v989 = vunpack.c.h.b16 %v130
  %v990 = vunpack.c.l.b16 %v131
  %v991 = vunpack.c.h.b16 %v131
  %v992 = vunpack.c.l.b16 %v132
  %v993 = vunpack.c.h.b16 %v132
  %v994 = vunpack.c.l.b16 %v133
  %v995 = vunpack.c.h.b16 %v133
  %v996 = vunpack.c.l.b16 %v134
  %v997 = vunpack.c.h.b16 %v134
  %v998 = vunpack.c.l.b16 %v135
  %v999 = vunpack.c.h.b16 %v135
  %v1000 = vunpack.c.l.b16 %v136
  %v1001 = vunpack.c.h.b16 %v136
  %v1002 = vunpack.c.l.b16 %v137
  %v1003 = vunpack.c.h.b16 %v137
  %v1004 = vunpack.c.l.b16 %v138
  %v1005 = vunpack.c.h.b16 %v138
  %v1006 = vunpack.c.l.b16 %v139
  %v1007 = vunpack.c.h.b16 %v139
  %v1008 = vunpack.c.l.b16 %v140
  %v1009 = vunpack.c.h.b16 %v140
  %v1010 = vunpack.c.l.b16 %v141
  %v1011 = vunpack.c.h.b16 %v141
  %v1012 = vunpack.c.l.b16 %v142
  %v1013 = vunpack.c.h.b16 %v142
  %v1014 = vunpack.c.l.b16 %v143
  %v1015 = vunpack.c.h.b16 %v143
  %v1016 = vunpack.c.l.b16 %v144
  %v1017 = vunpack.c.h.b16 %v144
  %v1018 = vunpack.c.l.b16 %v145
  %v1019 = vunpack.c.h.b16 %v145
  %v1020 = vunpack.c.l.b16 %v146
  %v1021 = vunpack.c.h.b16 %v146
  %v1022 = vunpack.c.l.b16 %v147
  %v1023 = vunpack.c.h.b16 %v147
  %v1024 = vunpack.c.l.b16 %v148
  %v1025 = vunpack.c.h.b16 %v148
  %v1026 = vunpack.c.l.b16 %v149
  %v1027 = vunpack.c.h.b16 %v149
  %v1028 = vunpack.c.l.b16 %v150
  %v1029 = vunpack.c.h.b16 %v150
  %v1030 = vunpack.c.l.b16 %v151
  %v1031 = vunpack.c.h.b16 %v151
  %v1032 = vunpack.c.l.b16 %v152
  %v1033 = vunpack.c.h.b16 %v152
  %v1034 = vunpack.c.l.b16 %v153
  %v1035 = vunpack.c.h.b16 %v153
  %v1036 = vunpack.c.l.b16 %v154
  %v1037 = vunpack.c.h.b16 %v154
  %v1038 = vunpack.c.l.b16 %v155
  %v1039 = vunpack.c.h.b16 %v155
  %v1040 = vunpack.c.l.b16 %v156
  %v1041 = vunpack.c.h.b16 %v156
  %v1042 = vunpack.c.l.b16 %v157
  %v1043 = vunpack.c.h.b16 %v157
  %v1044 = vunpack.c.l.b16 %v158
  %v1045 = vunpack.c.h.b16 %v158
  %v1046 = vunpack.c.l.b16 %v159
  %v1047 = vunpack.c.h.b16 %v159
  %v1048 = vunpack.c.l.b16 %v160
  %v1049 = vunpack.c.h.b16 %v160
  %v1050 = vunpack.c.l.b16 %v161
  %v1051 = vunpack.c.h.b16 %v161
  %v1052 = vunpack.c.l.b16 %v162
  %v1053 = vunpack.c.h.b16 %v162
  %v1054 = vunpack.c.l.b16 %v163
  %v1055 = vunpack.c.h.b16 %v163
  %v1056 = vunpack.c.l.b16 %v164
  %v1057 = vunpack.c.h.b16 %v164
  %v1058 = vunpack.c.l.b16 %v165
  %v1059 = vunpack.c.h.b16 %v165
  %v1060 = vunpack.c.l.b16 %v166
  %v1061 = vunpack.c.h.b16 %v166
  %v1062 = vunpack.c.l.b16 %v167
  %v1063 = vunpack.c.h.b16 %v167
  %v1064 = vpack.c.b16 %v884, %v872
  %v1065 = vpack.c.b16 %v885, %v873
  %v1066 = vpack.c.b16 %v886, %v874
  %v1067 = vpack.c.b16 %v887, %v875
  %v1068 = vpack.c.b16 %v888, %v876
  %v1069 = vpack.c.b16 %v889, %v877
  %v1070 = vpack.c.b16 %v890, %v878
  %v1071 = vpack.c.b16 %v891, %v879
  %v1072 = vpack.c.b16 %v892, %v880
  %v1073 = vpack.c.b16 %v893, %v881
  %v1074 = vpack.c.b16 %v894, %v882
  %v1075 = vpack.c.b16 %v895, %v883
  %v1076 = vpack.c.b16 %v908, %v896
  %v1077 = vpack.c.b16 %v909, %v897
  %v1078 = vpack.c.b16 %v910, %v898
  %v1079 = vpack.c.b16 %v911, %v899
  %v1080 = vpack.c.b16 %v912, %v900
  %v1081 = vpack.c.b16 %v913, %v901
  %v1082 = vpack.c.b16 %v914, %v902
  %v1083 = vpack.c.b16 %v915, %v903
  %v1084 = vpack.c.b16 %v916, %v904
  %v1085 = vpack.c.b16 %v917, %v905
  %v1086 = vpack.c.b16 %v918, %v906
  %v1087 = vpack.c.b16 %v919, %v907
  %v1088 = vpack.c.b16 %v932, %v920
  %v1089 = vpack.c.b16 %v933, %v921
  %v1090 = vpack.c.b16 %v934, %v922
  %v1091 = vpack.c.b16 %v935, %v923
  %v1092 = vpack.c.b16 %v936, %v924
  %v1093 = vpack.c.b16 %v937, %v925
  %v1094 = vpack.c.b16 %v938, %v926
  %v1095 = vpack.c.b16 %v939, %v927
  %v1096 = vpack.c.b16 %v940, %v928
  %v1097 = vpack.c.b16 %v941, %v929
  %v1098 = vpack.c.b16 %v942, %v930
  %v1099 = vpack.c.b16 %v943, %v931
  %v1100 = vpack.c.b16 %v956, %v944
  %v1101 = vpack.c.b16 %v957, %v945
  %v1102 = vpack.c.b16 %v958, %v946
  %v1103 = vpack.c.b16 %v959, %v947
  %v1104 = vpack.c.b16 %v960, %v948
  %v1105 = vpack.c.b16 %v961, %v949
  %v1106 = vpack.c.b16 %v962, %v950
  %v1107 = vpack.c.b16 %v963, %v951
  %v1108 = vpack.c.b16 %v964, %v952
  %v1109 = vpack.c.b16 %v965, %v953
  %v1110 = vpack.c.b16 %v966, %v954
  %v1111 = vpack.c.b16 %v967, %v955
  %v1112 = vpack.c.b16 %v980, %v968
  %v1113 = vpack.c.b16 %v981, %v969
  %v1114 = vpack.c.b16 %v982, %v970
  %v1115 = vpack.c.b16 %v983, %v971
  %v1116 = vpack.c.b16 %v984, %v972
  %v1117 = vpack.c.b16 %v985, %v973
  %v1118 = vpack.c.b16 %v986, %v974
  %v1119 = vpack.c.b16 %v987, %v975
  %v1120 = vpack.c.b16 %v988, %v976
  %v1121 = vpack.c.b16 %v989, %v977
  %v1122 = vpack.c.b16 %v990, %v978
  %v1123 = vpack.c.b16 %v991, %v979
  %v1124 = vpack.c.b16 %v1004, %v992
  %v1125 = vpack.c.b16 %v1005, %v993
  %v1126 = vpack.c.b16 %v1006, %v994
  %v1127 = vpack.c.b16 %v1007, %v995
  %v1128 = vpack.c.b16 %v1008, %v996
  %v1129 = vpack.c.b16 %v1009, %v997
  %v1130 = vpack.c.b16 %v1010, %v998
  %v1131 = vpack.c.b16 %v1011, %v999
  %v1132 = vpack.c.b16 %v1012, %v1000
  %v1133 = vpack.c.b16 %v1013, %v1001
  %v1134 = vpack.c.b16 %v1014, %v1002
  %v1135 = vpack.c.b16 %v1015, %v1003
  %v1136 = vpack.c.b16 %v1028, %v1016
  %v1137 = vpack.c.b16 %v1029, %v1017
  %v1138 = vpack.c.b16 %v1030, %v1018
  %v1139 = vpack.c.b16 %v1031, %v1019
  %v1140 = vpack.c.b16 %v1032, %v1020
  %v1141 = vpack.c.b16 %v1033, %v1021
  %v1142 = vpack.c.b16 %v1034, %v1022
  %v1143 = vpack.c.b16 %v1035, %v1023
  %v1144 = vpack.c.b16 %v1036, %v1024
  %v1145 = vpack.c.b16 %v1037, %v1025
  %v1146 = vpack.c.b16 %v1038, %v1026
  %v1147 = vpack.c.b16 %v1039, %v1027
  %v1148 = vpack.c.b16 %v1052, %v1040
  %v1149 = vpack.c.b16 %v1053, %v1041
  %v1150 = vpack.c.b16 %v1054, %v1042
  %v1151 = vpack.c.b16 %v1055, %v1043
  %v1152 = vpack.c.b16 %v1056, %v1044
  %v1153 = vpack.c.b16 %v1057, %v1045
  %v1154 = vpack.c.b16 %v1058, %v1046
  %v1155 = vpack.c.b16 %v1059, %v1047
  %v1156 = vpack.c.b16 %v1060, %v1048
  %v1157 = vpack.c.b16 %v1061, %v1049
  %v1158 = vpack.c.b16 %v1062, %v1050
  %v1159 = vpack.c.b16 %v1063, %v1051
  %v1832 = vunpack.c.l.b16 %v168
  %v1833 = vunpack.c.h.b16 %v168
  %v1834 = vunpack.c.l.b16 %v169
  %v1835 = vunpack.c.h.b16 %v169
  %v1836 = vunpack.c.l.b16 %v170
  %v1837 = vunpack.c.h.b16 %v170
  %v1838 = vunpack.c.l.b16 %v171
  %v1839 = vunpack.c.h.b16 %v171
  %v1840 = vunpack.c.l.b16 %v172
  %v1841 = vunpack.c.h.b16 %v172
  %v1842 = vunpack.c.l.b16 %v173
  %v1843 = vunpack.c.h.b16 %v173
  %v1844 = vunpack.c.l.b16 %v174
  %v1845 = vunpack.c.h.b16 %v174
  %v1846 = vunpack.c.l.b16 %v175
  %v1847 = vunpack.c.h.b16 %v175
  %v1848 = vunpack.c.l.b16 %v176
  %v1849 = vunpack.c.h.b16 %v176
  %v1850 = vunpack.c.l.b16 %v177
  %v1851 = vunpack.c.h.b16 %v177
  %v1852 = vunpack.c.l.b16 %v178
  %v1853 = vunpack.c.h.b16 %v178
  %v1854 = vunpack.c.l.b16 %v179
  %v1855 = vunpack.c.h.b16 %v179
  %v1856 = vunpack.c.l.b16 %v180
  %v1857 = vunpack.c.h.b16 %v180
  %v1858 = vunpack.c.l.b16 %v181
  %v1859 = vunpack.c.h.b16 %v181
  %v1860 = vunpack.c.l.b16 %v182
  %v1861 = vunpack.c.h.b16 %v182
  %v1862 = vunpack.c.l.b16 %v183
  %v1863 = vunpack.c.h.b16 %v183
  %v1864 = vunpack.c.l.b16 %v184
  %v1865 = vunpack.c.h.b16 %v184
  %v1866 = vunpack.c.l.b16 %v185
  %v1867 = vunpack.c.h.b16 %v185
  %v1868 = vunpack.c.l.b16 %v186
  %v1869 = vunpack.c.h.b16 %v186
  %v1870 = vunpack.c.l.b16 %v187
  %v1871 = vunpack.c.h.b16 %v187
  %v1872 = vunpack.c.l.b16 %v188
  %v1873 = vunpack.c.h.b16 %v188
  %v1874 = vunpack.c.l.b16 %v189
  %v1875 = vunpack.c.h.b16 %v189
  %v1876 = vunpack.c.l.b16 %v190
  %v1877 = vunpack.c.h.b16 %v190
  %v1878 = vunpack.c.l.b16 %v191
  %v1879 = vunpack.c.h.b16 %v191
  %v1880 = vunpack.c.l.b16 %v192
  %v1881 = vunpack.c.h.b16 %v192
  %v1882 = vunpack.c.l.b16 %v193
  %v1883 = vunpack.c.h.b16 %v193
  %v1884 = vunpack.c.l.b16 %v194
  %v1885 = vunpack.c.h.b16 %v194
  %v1886 = vunpack.c.l.b16 %v195
  %v1887 = vunpack.c.h.b16 %v195
  %v1888 = vunpack.c.l.b16 %v196
  %v1889 = vunpack.c.h.b16 %v196
  %v1890 = vunpack.c.l.b16 %v197
  %v1891 = vunpack.c.h.b16 %v197
  %v1892 = vunpack.c.l.b16 %v198
  %v1893 = vunpack.c.h.b16 %v198
  %v1894 = vunpack.c.l.b16 %v199
  %v1895 = vunpack.c.h.b16 %v199
  %v1896 = vunpack.c.l.b16 %v200
  %v1897 = vunpack.c.h.b16 %v200
  %v1898 = vunpack.c.l.b16 %v201
  %v1899 = vunpack.c.h.b16 %v201
  %v1900 = vunpack.c.l.b16 %v202
  %v1901 = vunpack.c.h.b16 %v202
  %v1902 = vunpack.c.l.b16 %v203
  %v1903 = vunpack.c.h.b16 %v203
  %v1904 = vunpack.c.l.b16 %v204
  %v1905 = vunpack.c.h.b16 %v204
  %v1906 = vunpack.c.l.b16 %v205
  %v1907 = vunpack.c.h.b16 %v205
  %v1908 = vunpack.c.l.b16 %v206
  %v1909 = vunpack.c.h.b16 %v206
  %v1910 = vunpack.c.l.b16 %v207
  %v1911 = vunpack.c.h.b16 %v207
  %v1912 = vunpack.c.l.b16 %v208
  %v1913 = vunpack.c.h.b16 %v208
  %v1914 = vunpack.c.l.b16 %v209
  %v1915 = vunpack.c.h.b16 %v209
  %v1916 = vunpack.c.l.b16 %v210
  %v1917 = vunpack.c.h.b16 %v210
  %v1918 = vunpack.c.l.b16 %v211
  %v1919 = vunpack.c.h.b16 %v211
  %v1920 = vunpack.c.l.b16 %v212
  %v1921 = vunpack.c.h.b16 %v212
  %v1922 = vunpack.c.l.b16 %v213
  %v1923 = vunpack.c.h.b16 %v213
  %v1924 = vunpack.c.l.b16 %v214
  %v1925 = vunpack.c.h.b16 %v214
  %v1926 = vunpack.c.l.b16 %v215
  %v1927 = vunpack.c.h.b16 %v215
  %v1928 = vunpack.c.l.b16 %v216
  %v1929 = vunpack.c.h.b16 %v216
  %v1930 = vunpack.c.l.b16 %v217
  %v1931 = vunpack.c.h.b16 %v217
  %v1932 = vunpack.c.l.b16 %v218
  %v1933 = vunpack.c.h.b16 %v218
  %v1934 = vunpack.c.l.b16 %v219
  %v1935 = vunpack.c.h.b16 %v219
  %v1936 = vunpack.c.l.b16 %v220
  %v1937 = vunpack.c.h.b16 %v220
  %v1938 = vunpack.c.l.b16 %v221
  %v1939 = vunpack.c.h.b16 %v221
  %v1940 = vunpack.c.l.b16 %v222
  %v1941 = vunpack.c.h.b16 %v222
  %v1942 = vunpack.c.l.b16 %v223
  %v1943 = vunpack.c.h.b16 %v223
  %v1944 = vunpack.c.l.b16 %v224
  %v1945 = vunpack.c.h.b16 %v224
  %v1946 = vunpack.c.l.b16 %v225
  %v1947 = vunpack.c.h.b16 %v225
  %v1948 = vunpack.c.l.b16 %v226
  %v1949 = vunpack.c.h.b16 %v226
  %v1950 = vunpack.c.l.b16 %v227
  %v1951 = vunpack.c.h.b16 %v227
  %v1952 = vunpack.c.l.b16 %v228
  %v1953 = vunpack.c.h.b16 %v228
  %v1954 = vunpack.c.l.b16 %v229
  %v1955 = vunpack.c.h.b16 %v229
  %v1956 = vunpack.c.l.b16 %v230
  %v1957 = vunpack.c.h.b16 %v230
  %v1958 = vunpack.c.l.b16 %v231
  %v1959 = vunpack.c.h.b16 %v231
  %v1960 = vunpack.c.l.b16 %v232
  %v1961 = vunpack.c.h.b16 %v232
  %v1962 = vunpack.c.l.b16 %v233
  %v1963 = vunpack.c.h.b16 %v233
  %v1964 = vunpack.c.l.b16 %v234
  %v1965 = vunpack.c.h.b16 %v234
  %v1966 = vunpack.c.l.b16 %v235
  %v1967 = vunpack.c.h.b16 %v235
  %v1968 = vunpack.c.l.b16 %v236
  %v1969 = vunpack.c.h.b16 %v236
  %v1970 = vunpack.c.l.b16 %v237
  %v1971 = vunpack.c.h.b16 %v237
  %v1972 = vunpack.c.l.b16 %v238
  %v1973 = vunpack.c.h.b16 %v238
  %v1974 = vunpack.c.l.b16 %v239
  %v1975 = vunpack.c.h.b16 %v239
  %v1976 = vunpack.c.l.b16 %v240
  %v1977 = vunpack.c.h.b16 %v240
  %v1978 = vunpack.c.l.b16 %v241
  %v1979 = vunpack.c.h.b16 %v241
  %v1980 = vunpack.c.l.b16 %v242
  %v1981 = vunpack.c.h.b16 %v242
  %v1982 = vunpack.c.l.b16 %v243
  %v1983 = vunpack.c.h.b16 %v243
  %v1984 = vunpack.c.l.b16 %v244
  %v1985 = vunpack.c.h.b16 %v244
  %v1986 = vunpack.c.l.b16 %v245
  %v1987 = vunpack.c.h.b16 %v245
  %v1988 = vunpack.c.l.b16 %v246
  %v1989 = vunpack.c.h.b16 %v246
  %v1990 = vunpack.c.l.b16 %v247
  %v1991 = vunpack.c.h.b16 %v247
  %v1992 = vunpack.c.l.b16 %v248
  %v1993 = vunpack.c.h.b16 %v248
  %v1994 = vunpack.c.l.b16 %v249
  %v1995 = vunpack.c.h.b16 %v249
  %v1996 = vunpack.c.l.b16 %v250
  %v1997 = vunpack.c.h.b16 %v250
  %v1998 = vunpack.c.l.b16 %v251
  %v1999 = vunpack.c.h.b16 %v251
  %v2000 = vunpack.c.l.b16 %v252
  %v2001 = vunpack.c.h.b16 %v252
  %v2002 = vunpack.c.l.b16 %v253
  %v2003 = vunpack.c.h.b16 %v253
  %v2004 = vunpack.c.l.b16 %v254
  %v2005 = vunpack.c.h.b16 %v254
  %v2006 = vunpack.c.l.b16 %v255
  %v2007 = vunpack.c.h.b16 %v255
  %v2008 = vunpack.c.l.b16 %v256
  %v2009 = vunpack.c.h.b16 %v256
  %v2010 = vunpack.c.l.b16 %v257
  %v2011 = vunpack.c.h.b16 %v257
  %v2012 = vunpack.c.l.b16 %v258
  %v2013 = vunpack.c.h.b16 %v258
  %v2014 = vunpack.c.l.b16 %v259
  %v2015 = vunpack.c.h.b16 %v259
  %v2016 = vunpack.c.l.b16 %v260
  %v2017 = vunpack.c.h.b16 %v260
  %v2018 = vunpack.c.l.b16 %v261
  %v2019 = vunpack.c.h.b16 %v261
  %v2020 = vunpack.c.l.b16 %v262
  %v2021 = vunpack.c.h.b16 %v262
  %v2022 = vunpack.c.l.b16 %v263
  %v2023 = vunpack.c.h.b16 %v263
  %v2024 = vunpack.c.l.b16 %v264
  %v2025 = vunpack.c.h.b16 %v264
  %v2026 = vunpack.c.l.b16 %v265
  %v2027 = vunpack.c.h.b16 %v265
  %v2028 = vunpack.c.l.b16 %v266
  %v2029 = vunpack.c.h.b16 %v266
  %v2030 = vunpack.c.l.b16 %v267
  %v2031 = vunpack.c.h.b16 %v267
  %v2032 = vunpack.c.l.b16 %v268
  %v2033 = vunpack.c.h.b16 %v268
  %v2034 = vunpack.c.l.b16 %v269
  %v2035 = vunpack.c.h.b16 %v269
  %v2036 = vunpack.c.l.b16 %v270
  %v2037 = vunpack.c.h.b16 %v270
  %v2038 = vunpack.c.l.b16 %v271
  %v2039 = vunpack.c.h.b16 %v271
  %v2040 = vunpack.c.l.b16 %v272
  %v2041 = vunpack.c.h.b16 %v272
  %v2042 = vunpack.c.l.b16 %v273
  %v2043 = vunpack.c.h.b16 %v273
  %v2044 = vunpack.c.l.b16 %v274
  %v2045 = vunpack.c.h.b16 %v274
  %v2046 = vunpack.c.l.b16 %v275
  %v2047 = vunpack.c.h.b16 %v275
  %v2048 = vunpack.c.l.b16 %v276
  %v2049 = vunpack.c.h.b16 %v276
  %v2050 = vunpack.c.l.b16 %v277
  %v2051 = vunpack.c.h.b16 %v277
  %v2052 = vunpack.c.l.b16 %v278
  %v2053 = vunpack.c.h.b16 %v278
  %v2054 = vunpack.c.l.b16 %v279
  %v2055 = vunpack.c.h.b16 %v279
  %v2056 = vunpack.c.l.b16 %v280
  %v2057 = vunpack.c.h.b16 %v280
  %v2058 = vunpack.c.l.b16 %v281
  %v2059 = vunpack.c.h.b16 %v281
  %v2060 = vunpack.c.l.b16 %v282
  %v2061 = vunpack.c.h.b16 %v282
  %v2062 = vunpack.c.l.b16 %v283
  %v2063 = vunpack.c.h.b16 %v283
  %v2064 = vunpack.c.l.b16 %v284
  %v2065 = vunpack.c.h.b16 %v284
  %v2066 = vunpack.c.l.b16 %v285
  %v2067 = vunpack.c.h.b16 %v285
  %v2068 = vunpack.c.l.b16 %v286
  %v2069 = vunpack.c.h.b16 %v286
  %v2070 = vunpack.c.l.b16 %v287
  %v2071 = vunpack.c.h.b16 %v287
  %v2072 = vunpack.c.l.b16 %v288
  %v2073 = vunpack.c.h.b16 %v288
  %v2074 = vunpack.c.l.b16 %v289
  %v2075 = vunpack.c.h.b16 %v289
  %v2076 = vunpack.c.l.b16 %v290
  %v2077 = vunpack.c.h.b16 %v290
  %v2078 = vunpack.c.l.b16 %v291
  %v2079 = vunpack.c.h.b16 %v291
  %v2080 = vunpack.c.l.b16 %v292
  %v2081 = vunpack.c.h.b16 %v292
  %v2082 = vunpack.c.l.b16 %v293
  %v2083 = vunpack.c.h.b16 %v293
  %v2084 = vunpack.c.l.b16 %v294
  %v2085 = vunpack.c.h.b16 %v294
  %v2086 = vunpack.c.l.b16 %v295
  %v2087 = vunpack.c.h.b16 %v295
  %v2088 = vunpack.c.l.b16 %v296
  %v2089 = vunpack.c.h.b16 %v296
  %v2090 = vunpack.c.l.b16 %v297
  %v2091 = vunpack.c.h.b16 %v297
  %v2092 = vunpack.c.l.b16 %v298
  %v2093 = vunpack.c.h.b16 %v298
  %v2094 = vunpack.c.l.b16 %v299
  %v2095 = vunpack.c.h.b16 %v299
  %v2096 = vunpack.c.l.b16 %v300
  %v2097 = vunpack.c.h.b16 %v300
  %v2098 = vunpack.c.l.b16 %v301
  %v2099 = vunpack.c.h.b16 %v301
  %v2100 = vunpack.c.l.b16 %v302
  %v2101 = vunpack.c.h.b16 %v302
  %v2102 = vunpack.c.l.b16 %v303
  %v2103 = vunpack.c.h.b16 %v303
  %v2104 = vunpack.c.l.b16 %v304
  %v2105 = vunpack.c.h.b16 %v304
  %v2106 = vunpack.c.l.b16 %v305
  %v2107 = vunpack.c.h.b16 %v305
  %v2108 = vunpack.c.l.b16 %v306
  %v2109 = vunpack.c.h.b16 %v306
  %v2110 = vunpack.c.l.b16 %v307
  %v2111 = vunpack.c.h.b16 %v307
  %v2112 = vunpack.c.l.b16 %v308
  %v2113 = vunpack.c.h.b16 %v308
  %v2114 = vunpack.c.l.b16 %v309
  %v2115 = vunpack.c.h.b16 %v309
  %v2116 = vunpack.c.l.b16 %v310
  %v2117 = vunpack.c.h.b16 %v310
  %v2118 = vunpack.c.l.b16 %v311
  %v2119 = vunpack.c.h.b16 %v311
  %v2120 = vunpack.c.l.b16 %v312
  %v2121 = vunpack.c.h.b16 %v312
  %v2122 = vunpack.c.l.b16 %v313
  %v2123 = vunpack.c.h.b16 %v313
  %v2124 = vunpack.c.l.b16 %v314
  %v2125 = vunpack.c.h.b16 %v314
  %v2126 = vunpack.c.l.b16 %v315
  %v2127 = vunpack.c.h.b16 %v315
  %v2128 = vunpack.c.l.b16 %v316
  %v2129 = vunpack.c.h.b16 %v316
  %v2130 = vunpack.c.l.b16 %v317
  %v2131 = vunpack.c.h.b16 %v317
  %v2132 = vunpack.c.l.b16 %v318
  %v2133 = vunpack.c.h.b16 %v318
  %v2134 = vunpack.c.l.b16 %v319
  %v2135 = vunpack.c.h.b16 %v319
  %v2136 = vunpack.c.l.b16 %v320
  %v2137 = vunpack.c.h.b16 %v320
  %v2138 = vunpack.c.l.b16 %v321
  %v2139 = vunpack.c.h.b16 %v321
  %v2140 = vunpack.c.l.b16 %v322
  %v2141 = vunpack.c.h.b16 %v322
  %v2142 = vunpack.c.l.b16 %v323
  %v2143 = vunpack.c.h.b16 %v323
  %v2144 = vunpack.c.l.b16 %v324
  %v2145 = vunpack.c.h.b16 %v324
  %v2146 = vunpack.c.l.b16 %v325
  %v2147 = vunpack.c.h.b16 %v325
  %v2148 = vunpack.c.l.b16 %v326
  %v2149 = vunpack.c.h.b16 %v326
  %v2150 = vunpack.c.l.b16 %v327
  %v2151 = vunpack.c.h.b16 %v327
  %v2152 = vunpack.c.l.b16 %v328
  %v2153 = vunpack.c.h.b16 %v328
  %v2154 = vunpack.c.l.b16 %v329
  %v2155 = vunpack.c.h.b16 %v329
  %v2156 = vunpack.c.l.b16 %v330
  %v2157 = vunpack.c.h.b16 %v330
  %v2158 = vunpack.c.l.b16 %v331
  %v2159 = vunpack.c.h.b16 %v331
  %v2160 = vunpack.c.l.b16 %v332
  %v2161 = vunpack.c.h.b16 %v332
  %v2162 = vunpack.c.l.b16 %v333
  %v2163 = vunpack.c.h.b16 %v333
  %v2164 = vunpack.c.l.b16 %v334
  %v2165 = vunpack.c.h.b16 %v334
  %v2166 = vunpack.c.l.b16 %v335
  %v2167 = vunpack.c.h.b16 %v335
  %v2168 = vunpack.c.l.b16 %v336
  %v2169 = vunpack.c.h.b16 %v336
  %v2170 = vunpack.c.l.b16 %v337
  %v2171 = vunpack.c.h.b16 %v337
  %v2172 = vunpack.c.l.b16 %v338
  %v2173 = vunpack.c.h.b16 %v338
  %v2174 = vunpack.c.l.b16 %v339
  %v2175 = vunpack.c.h.b16 %v339
  %v2176 = vunpack.c.l.b16 %v340
  %v2177 = vunpack.c.h.b16 %v340
  %v2178 = vunpack.c.l.b16 %v341
  %v2179 = vunpack.c.h.b16 %v341
  %v2180 = vunpack.c.l.b16 %v342
  %v2181 = vunpack.c.h.b16 %v342
  %v2182 = vunpack.c.l.b16 %v343
  %v2183 = vunpack.c.h.b16 %v343
  %v2184 = vunpack.c.l.b16 %v344
  %v2185 = vunpack.c.h.b16 %v344
  %v2186 = vunpack.c.l.b16 %v345
  %v2187 = vunpack.c.h.b16 %v345
  %v2188 = vunpack.c.l.b16 %v346
  %v2189 = vunpack.c.h.b16 %v346
  %v2190 = vunpack.c.l.b16 %v347
  %v2191 = vunpack.c.h.b16 %v347
  %v2192 = vunpack.c.l.b16 %v348
  %v2193 = vunpack.c.h.b16 %v348
  %v2194 = vunpack.c.l.b16 %v349
  %v2195 = vunpack.c.h.b16 %v349
  %v2196 = vunpack.c.l.b16 %v350
  %v2197 = vunpack.c.h.b16 %v350
  %v2198 = vunpack.c.l.b16 %v351
  %v2199 = vunpack.c.h.b16 %v351
  %v2200 = vunpack.c.l.b16 %v352
  %v2201 = vunpack.c.h.b16 %v352
  %v2202 = vunpack.c.l.b16 %v353
  %v2203 = vunpack.c.h.b16 %v353
  %v2204 = vunpack.c.l.b16 %v354
  %v2205 = vunpack.c.h.b16 %v354
  %v2206 = vunpack.c.l.b16 %v355
  %v2207 = vunpack.c.h.b16 %v355
  %v2208 = vunpack.c.l.b16 %v356
  %v2209 = vunpack.c.h.b16 %v356
  %v2210 = vunpack.c.l.b16 %v357
  %v2211 = vunpack.c.h.b16 %v357
  %v2212 = vunpack.c.l.b16 %v358
  %v2213 = vunpack.c.h.b16 %v358
  %v2214 = vunpack.c.l.b16 %v359
  %v2215 = vunpack.c.h.b16 %v359
  %v2216 = vunpack.c.l.b16 %v360
  %v2217 = vunpack.c.h.b16 %v360
  %v2218 = vunpack.c.l.b16 %v361
  %v2219 = vunpack.c.h.b16 %v361
  %v2220 = vunpack.c.l.b16 %v362
  %v2221 = vunpack.c.h.b16 %v362
  %v2222 = vunpack.c.l.b16 %v363
  %v2223 = vunpack.c.h.b16 %v363
  %v2224 = vunpack.c.l.b16 %v364
  %v2225 = vunpack.c.h.b16 %v364
  %v2226 = vunpack.c.l.b16 %v365
  %v2227 = vunpack.c.h.b16 %v365
  %v2228 = vunpack.c.l.b16 %v366
  %v2229 = vunpack.c.h.b16 %v366
  %v2230 = vunpack.c.l.b16 %v367
  %v2231 = vunpack.c.h.b16 %v367
  %v2232 = vunpack.c.l.b16 %v368
  %v2233 = vunpack.c.h.b16 %v368
  %v2234 = vunpack.c.l.b16 %v369
  %v2235 = vunpack.c.h.b16 %v369
  %v2236 = vunpack.c.l.b16 %v370
  %v2237 = vunpack.c.h.b16 %v370
  %v2238 = vunpack.c.l.b16 %v371
  %v2239 = vunpack.c.h.b16 %v371
  %v2240 = vunpack.c.l.b16 %v372
  %v2241 = vunpack.c.h.b16 %v372
  %v2242 = vunpack.c.l.b16 %v373
  %v2243 = vunpack.c.h.b16 %v373
  %v2244 = vunpack.c.l.b16 %v374
  %v2245 = vunpack.c.h.b16 %v374
  %v2246 = vunpack.c.l.b16 %v375
  %v2247 = vunpack.c.h.b16 %v375
  %v2248 = vunpack.c.l.b16 %v376
  %v2249 = vunpack.c.h.b16 %v376
  %v2250 = vunpack.c.l.b16 %v377
  %v2251 = vunpack.c.h.b16 %v377
  %v2252 = vunpack.c.l.b16 %v378
  %v2253 = vunpack.c.h.b16 %v378
  %v2254 = vunpack.c.l.b16 %v379
  %v2255 = vunpack.c.h.b16 %v379
  %v2256 = vunpack.c.l.b16 %v380
  %v2257 = vunpack.c.h.b16 %v380
  %v2258 = vunpack.c.l.b16 %v381
  %v2259 = vunpack.c.h.b16 %v381
  %v2260 = vunpack.c.l.b16 %v382
  %v2261 = vunpack.c.h.b16 %v382
  %v2262 = vunpack.c.l.b16 %v383
  %v2263 = vunpack.c.h.b16 %v383
  %v2264 = vunpack.c.l.b16 %v384
  %v2265 = vunpack.c.h.b16 %v384
  %v2266 = vunpack.c.l.b16 %v385
  %v2267 = vunpack.c.h.b16 %v385
  %v2268 = vunpack.c.l.b16 %v386
  %v2269 = vunpack.c.h.b16 %v386
  %v2270 = vunpack.c.l.b16 %v387
  %v2271 = vunpack.c.h.b16 %v387
  %v2272 = vunpack.c.l.b16 %v388
  %v2273 = vunpack.c.h.b16 %v388
  %v2274 = vunpack.c.l.b16 %v389
  %v2275 = vunpack.c.h.b16 %v389
  %v2276 = vunpack.c.l.b16 %v390
  %v2277 = vunpack.c.h.b16 %v390
  %v2278 = vunpack.c.l.b16 %v391
  %v2279 = vunpack.c.h.b16 %v391
  %v2280 = vunpack.c.l.b16 %v392
  %v2281 = vunpack.c.h.b16 %v392
  %v2282 = vunpack.c.l.b16 %v393
  %v2283 = vunpack.c.h.b16 %v393
  %v2284 = vunpack.c.l.b16 %v394
  %v2285 = vunpack.c.h.b16 %v394
  %v2286 = vunpack.c.l.b16 %v395
  %v2287 = vunpack.c.h.b16 %v395
  %v2288 = vunpack.c.l.b16 %v396
  %v2289 = vunpack.c.h.b16 %v396
  %v2290 = vunpack.c.l.b16 %v397
  %v2291 = vunpack.c.h.b16 %v397
  %v2292 = vunpack.c.l.b16 %v398
  %v2293 = vunpack.c.h.b16 %v398
  %v2294 = vunpack.c.l.b16 %v399
  %v2295 = vunpack.c.h.b16 %v399
  %v2296 = vunpack.c.l.b16 %v400
  %v2297 = vunpack.c.h.b16 %v400
  %v2298 = vunpack.c.l.b16 %v401
  %v2299 = vunpack.c.h.b16 %v401
  %v2300 = vunpack.c.l.b16 %v402
  %v2301 = vunpack.c.h.b16 %v402
  %v2302 = vunpack.c.l.b16 %v403
  %v2303 = vunpack.c.h.b16 %v403
  %v2304 = vunpack.c.l.b16 %v404
  %v2305 = vunpack.c.h.b16 %v404
  %v2306 = vunpack.c.l.b16 %v405
  %v2307 = vunpack.c.h.b16 %v405
  %v2308 = vunpack.c.l.b16 %v406
  %v2309 = vunpack.c.h.b16 %v406
  %v2310 = vunpack.c.l.b16 %v407
  %v2311 = vunpack.c.h.b16 %v407
  %v2312 = vunpack.c.l.b16 %v408
  %v2313 = vunpack.c.h.b16 %v408
  %v2314 = vunpack.c.l.b16 %v409
  %v2315 = vunpack.c.h.b16 %v409
  %v2316 = vunpack.c.l.b16 %v410
  %v2317 = vunpack.c.h.b16 %v410
  %v2318 = vunpack.c.l.b16 %v411
  %v2319 = vunpack.c.h.b16 %v411
  %v2320 = vunpack.c.l.b16 %v412
  %v2321 = vunpack.c.h.b16 %v412
  %v2322 = vunpack.c.l.b16 %v413
  %v2323 = vunpack.c.h.b16 %v413
  %v2324 = vunpack.c.l.b16 %v414
  %v2325 = vunpack.c.h.b16 %v414
  %v2326 = vunpack.c.l.b16 %v415
  %v2327 = vunpack.c.h.b16 %v415
  %v2328 = vunpack.c.l.b16 %v416
  %v2329 = vunpack.c.h.b16 %v416
  %v2330 = vunpack.c.l.b16 %v417
  %v2331 = vunpack.c.h.b16 %v417
  %v2332 = vunpack.c.l.b16 %v418
  %v2333 = vunpack.c.h.b16 %v418
  %v2334 = vunpack.c.l.b16 %v419
  %v2335 = vunpack.c.h.b16 %v419
  %v2336 = vunpack.c.l.b16 %v420
  %v2337 = vunpack.c.h.b16 %v420
  %v2338 = vunpack.c.l.b16 %v421
  %v2339 = vunpack.c.h.b16 %v421
  %v2340 = vunpack.c.l.b16 %v422
  %v2341 = vunpack.c.h.b16 %v422
  %v2342 = vunpack.c.l.b16 %v423
  %v2343 = vunpack.c.h.b16 %v423
  %v2344 = vunpack.c.l.b16 %v424
  %v2345 = vunpack.c.h.b16 %v424
  %v2346 = vunpack.c.l.b16 %v425
  %v2347 = vunpack.c.h.b16 %v425
  %v2348 = vunpack.c.l.b16 %v426
  %v2349 = vunpack.c.h.b16 %v426
  %v2350 = vunpack.c.l.b16 %v427
  %v2351 = vunpack.c.h.b16 %v427
  %v2352 = vunpack.c.l.b16 %v428
  %v2353 = vunpack.c.h.b16 %v428
  %v2354 = vunpack.c.l.b16 %v429
  %v2355 = vunpack.c.h.b16 %v429
  %v2356 = vunpack.c.l.b16 %v430
  %v2357 = vunpack.c.h.b16 %v430
  %v2358 = vunpack.c.l.b16 %v431
  %v2359 = vunpack.c.h.b16 %v431
  %v2360 = vunpack.c.l.b16 %v432
  %v2361 = vunpack.c.h.b16 %v432
  %v2362 = vunpack.c.l.b16 %v433
  %v2363 = vunpack.c.h.b16 %v433
  %v2364 = vunpack.c.l.b16 %v434
  %v2365 = vunpack.c.h.b16 %v434
  %v2366 = vunpack.c.l.b16 %v435
  %v2367 = vunpack.c.h.b16 %v435
  %v2368 = vunpack.c.l.b16 %v436
  %v2369 = vunpack.c.h.b16 %v436
  %v2370 = vunpack.c.l.b16 %v437
  %v2371 = vunpack.c.h.b16 %v437
  %v2372 = vunpack.c.l.b16 %v438
  %v2373 = vunpack.c.h.b16 %v438
  %v2374 = vunpack.c.l.b16 %v439
  %v2375 = vunpack.c.h.b16 %v439
  %v2376 = vunpack.c.l.b16 %v440
  %v2377 = vunpack.c.h.b16 %v440
  %v2378 = vunpack.c.l.b16 %v441
  %v2379 = vunpack.c.h.b16 %v441
  %v2380 = vunpack.c.l.b16 %v442
  %v2381 = vunpack.c.h.b16 %v442
  %v2382 = vunpack.c.l.b16 %v443
  %v2383 = vunpack.c.h.b16 %v443
  %v2384 = vunpack.c.l.b16 %v444
  %v2385 = vunpack.c.h.b16 %v444
  %v2386 = vunpack.c.l.b16 %v445
  %v2387 = vunpack.c.h.b16 %v445
  %v2388 = vunpack.c.l.b16 %v446
  %v2389 = vunpack.c.h.b16 %v446
  %v2390 = vunpack.c.l.b16 %v447
  %v2391 = vunpack.c.h.b16 %v447
  %v2392 = vunpack.c.l.b16 %v448
  %v2393 = vunpack.c.h.b16 %v448
  %v2394 = vunpack.c.l.b16 %v449
  %v2395 = vunpack.c.h.b16 %v449
  %v2396 = vunpack.c.l.b16 %v450
  %v2397 = vunpack.c.h.b16 %v450
  %v2398 = vunpack.c.l.b16 %v451
  %v2399 = vunpack.c.h.b16 %v451
  %v2400 = vunpack.c.l.b16 %v452
  %v2401 = vunpack.c.h.b16 %v452
  %v2402 = vunpack.c.l.b16 %v453
  %v2403 = vunpack.c.h.b16 %v453
  %v2404 = vunpack.c.l.b16 %v454
  %v2405 = vunpack.c.h.b16 %v454
  %v2406 = vunpack.c.l.b16 %v455
  %v2407 = vunpack.c.h.b16 %v455
  %v2408 = vunpack.c.l.b16 %v456
  %v2409 = vunpack.c.h.b16 %v456
  %v2410 = vunpack.c.l.b16 %v457
  %v2411 = vunpack.c.h.b16 %v457
  %v2412 = vunpack.c.l.b16 %v458
  %v2413 = vunpack.c.h.b16 %v458
  %v2414 = vunpack.c.l.b16 %v459
  %v2415 = vunpack.c.h.b16 %v459
  %v2416 = vunpack.c.l.b16 %v460
  %v2417 = vunpack.c.h.b16 %v460
  %v2418 = vunpack.c.l.b16 %v461
  %v2419 = vunpack.c.h.b16 %v461
  %v2420 = vunpack.c.l.b16 %v462
  %v2421 = vunpack.c.h.b16 %v462
  %v2422 = vunpack.c.l.b16 %v463
  %v2423 = vunpack.c.h.b16 %v463
  %v2424 = vunpack.c.l.b16 %v464
  %v2425 = vunpack.c.h.b16 %v464
  %v2426 = vunpack.c.l.b16 %v465
  %v2427 = vunpack.c.h.b16 %v465
  %v2428 = vunpack.c.l.b16 %v466
  %v2429 = vunpack.c.h.b16 %v466
  %v2430 = vunpack.c.l.b16 %v467
  %v2431 = vunpack.c.h.b16 %v467
  %v2432 = vunpack.c.l.b16 %v468
  %v2433 = vunpack.c.h.b16 %v468
  %v2434 = vunpack.c.l.b16 %v469
  %v2435 = vunpack.c.h.b16 %v469
  %v2436 = vunpack.c.l.b16 %v470
  %v2437 = vunpack.c.h.b16 %v470
  %v2438 = vunpack.c.l.b16 %v471
  %v2439 = vunpack.c.h.b16 %v471
  %v2440 = vunpack.c.l.b16 %v472
  %v2441 = vunpack.c.h.b16 %v472
  %v2442 = vunpack.c.l.b16 %v473
  %v2443 = vunpack.c.h.b16 %v473
  %v2444 = vunpack.c.l.b16 %v474
  %v2445 = vunpack.c.h.b16 %v474
  %v2446 = vunpack.c.l.b16 %v475
  %v2447 = vunpack.c.h.b16 %v475
  %v2448 = vunpack.c.l.b16 %v476
  %v2449 = vunpack.c.h.b16 %v476
  %v2450 = vunpack.c.l.b16 %v477
  %v2451 = vunpack.c.h.b16 %v477
  %v2452 = vunpack.c.l.b16 %v478
  %v2453 = vunpack.c.h.b16 %v478
  %v2454 = vunpack.c.l.b16 %v479
  %v2455 = vunpack.c.h.b16 %v479
  %v2456 = vunpack.c.l.b16 %v480
  %v2457 = vunpack.c.h.b16 %v480
  %v2458 = vunpack.c.l.b16 %v481
  %v2459 = vunpack.c.h.b16 %v481
  %v2460 = vunpack.c.l.b16 %v482
  %v2461 = vunpack.c.h.b16 %v482
  %v2462 = vunpack.c.l.b16 %v483
  %v2463 = vunpack.c.h.b16 %v483
  %v2464 = vunpack.c.l.b16 %v484
  %v2465 = vunpack.c.h.b16 %v484
  %v2466 = vunpack.c.l.b16 %v485
  %v2467 = vunpack.c.h.b16 %v485
  %v2468 = vunpack.c.l.b16 %v486
  %v2469 = vunpack.c.h.b16 %v486
  %v2470 = vunpack.c.l.b16 %v487
  %v2471 = vunpack.c.h.b16 %v487
  %v2472 = vunpack.c.l.b16 %v488
  %v2473 = vunpack.c.h.b16 %v488
  %v2474 = vunpack.c.l.b16 %v489
  %v2475 = vunpack.c.h.b16 %v489
  %v2476 = vunpack.c.l.b16 %v490
  %v2477 = vunpack.c.h.b16 %v490
  %v2478 = vunpack.c.l.b16 %v491
  %v2479 = vunpack.c.h.b16 %v491
  %v2480 = vunpack.c.l.b16 %v492
  %v2481 = vunpack.c.h.b16 %v492
  %v2482 = vunpack.c.l.b16 %v493
  %v2483 = vunpack.c.h.b16 %v493
  %v2484 = vunpack.c.l.b16 %v494
  %v2485 = vunpack.c.h.b16 %v494
  %v2486 = vunpack.c.l.b16 %v495
  %v2487 = vunpack.c.h.b16 %v495
  %v2488 = vunpack.c.l.b16 %v496
  %v2489 = vunpack.c.h.b16 %v496
  %v2490 = vunpack.c.l.b16 %v497
  %v2491 = vunpack.c.h.b16 %v497
  %v2492 = vunpack.c.l.b16 %v498
  %v2493 = vunpack.c.h.b16 %v498
  %v2494 = vunpack.c.l.b16 %v499
  %v2495 = vunpack.c.h.b16 %v499
  %v2496 = vunpack.c.l.b16 %v500
  %v2497 = vunpack.c.h.b16 %v500
  %v2498 = vunpack.c.l.b16 %v501
  %v2499 = vunpack.c.h.b16 %v501
  %v2500 = vunpack.c.l.b16 %v502
  %v2501 = vunpack.c.h.b16 %v502
  %v2502 = vunpack.c.l.b16 %v503
  %v2503 = vunpack.c.h.b16 %v503
  %v2504 = vunpack.c.l.b16 %v504
  %v2505 = vunpack.c.h.b16 %v504
  %v2506 = vunpack.c.l.b16 %v505
  %v2507 = vunpack.c.h.b16 %v505
  %v2508 = vunpack.c.l.b16 %v506
  %v2509 = vunpack.c.h.b16 %v506
  %v2510 = vunpack.c.l.b16 %v507
  %v2511 = vunpack.c.h.b16 %v507
  %v2512 = vunpack.c.l.b16 %v508
  %v2513 = vunpack.c.h.b16 %v508
  %v2514 = vunpack.c.l.b16 %v509
  %v2515 = vunpack.c.h.b16 %v509
  %v2516 = vunpack.c.l.b16 %v510
  %v2517 = vunpack.c.h.b16 %v510
  %v2518 = vunpack.c.l.b16 %v511
  %v2519 = vunpack.c.h.b16 %v511
  %v2520 = vunpack.c.l.b16 %v512
  %v2521 = vunpack.c.h.b16 %v512
  %v2522 = vunpack.c.l.b16 %v513
  %v2523 = vunpack.c.h.b16 %v513
  %v2524 = vunpack.c.l.b16 %v514
  %v2525 = vunpack.c.h.b16 %v514
  %v2526 = vunpack.c.l.b16 %v515
  %v2527 = vunpack.c.h.b16 %v515
  %v2528 = vunpack.c.l.b16 %v516
  %v2529 = vunpack.c.h.b16 %v516
  %v2530 = vunpack.c.l.b16 %v517
  %v2531 = vunpack.c.h.b16 %v517
  %v2532 = vunpack.c.l.b16 %v518
  %v2533 = vunpack.c.h.b16 %v518
  %v2534 = vunpack.c.l.b16 %v519
  %v2535 = vunpack.c.h.b16 %v519
  %v2536 = vunpack.c.l.b16 %v520
  %v2537 = vunpack.c.h.b16 %v520
  %v2538 = vunpack.c.l.b16 %v521
  %v2539 = vunpack.c.h.b16 %v521
  %v2540 = vunpack.c.l.b16 %v522
  %v2541 = vunpack.c.h.b16 %v522
  %v2542 = vunpack.c.l.b16 %v523
  %v2543 = vunpack.c.h.b16 %v523
  %v2544 = vunpack.c.l.b16 %v524
  %v2545 = vunpack.c.h.b16 %v524
  %v2546 = vunpack.c.l.b16 %v525
  %v2547 = vunpack.c.h.b16 %v525
  %v2548 = vunpack.c.l.b16 %v526
  %v2549 = vunpack.c.h.b16 %v526
  %v2550 = vunpack.c.l.b16 %v527
  %v2551 = vunpack.c.h.b16 %v527
  %v2552 = vunpack.c.l.b16 %v528
  %v2553 = vunpack.c.h.b16 %v528
  %v2554 = vunpack.c.l.b16 %v529
  %v2555 = vunpack.c.h.b16 %v529
  %v2556 = vunpack.c.l.b16 %v530
  %v2557 = vunpack.c.h.b16 %v530
  %v2558 = vunpack.c.l.b16 %v531
  %v2559 = vunpack.c.h.b16 %v531
  %v2560 = vunpack.c.l.b16 %v532
  %v2561 = vunpack.c.h.b16 %v532
  %v2562 = vunpack.c.l.b16 %v533
  %v2563 = vunpack.c.h.b16 %v533
  %v2564 = vunpack.c.l.b16 %v534
  %v2565 = vunpack.c.h.b16 %v534
  %v2566 = vunpack.c.l.b16 %v535
  %v2567 = vunpack.c.h.b16 %v535
  %v2568 = vunpack.c.l.b16 %v536
  %v2569 = vunpack.c.h.b16 %v536
  %v2570 = vunpack.c.l.b16 %v537
  %v2571 = vunpack.c.h.b16 %v537
  %v2572 = vunpack.c.l.b16 %v538
  %v2573 = vunpack.c.h.b16 %v538
  %v2574 = vunpack.c.l.b16 %v539
  %v2575 = vunpack.c.h.b16 %v539
  %v2576 = vunpack.c.l.b16 %v540
  %v2577 = vunpack.c.h.b16 %v540
  %v2578 = vunpack.c.l.b16 %v541
  %v2579 = vunpack.c.h.b16 %v541
  %v2580 = vunpack.c.l.b16 %v542
  %v2581 = vunpack.c.h.b16 %v542
  %v2582 = vunpack.c.l.b16 %v543
  %v2583 = vunpack.c.h.b16 %v543
  %v2584 = vunpack.c.l.b16 %v544
  %v2585 = vunpack.c.h.b16 %v544
  %v2586 = vunpack.c.l.b16 %v545
  %v2587 = vunpack.c.h.b16 %v545
  %v2588 = vunpack.c.l.b16 %v546
  %v2589 = vunpack.c.h.b16 %v546
  %v2590 = vunpack.c.l.b16 %v547
  %v2591 = vunpack.c.h.b16 %v547
  %v2592 = vunpack.c.l.b16 %v548
  %v2593 = vunpack.c.h.b16 %v548
  %v2594 = vunpack.c.l.b16 %v549
  %v2595 = vunpack.c.h.b16 %v549
  %v2596 = vunpack.c.l.b16 %v550
  %v2597 = vunpack.c.h.b16 %v550
  %v2598 = vunpack.c.l.b16 %v551
  %v2599 = vunpack.c.h.b16 %v551
  %v2600 = vunpack.c.l.b16 %v552
  %v2601 = vunpack.c.h.b16 %v552
  %v2602 = vunpack.c.l.b16 %v553
  %v2603 = vunpack.c.h.b16 %v553
  %v2604 = vunpack.c.l.b16 %v554
  %v2605 = vunpack.c.h.b16 %v554
  %v2606 = vunpack.c.l.b16 %v555
  %v2607 = vunpack.c.h.b16 %v555
  %v2608 = vunpack.c.l.b16 %v556
  %v2609 = vunpack.c.h.b16 %v556
  %v2610 = vunpack.c.l.b16 %v557
  %v2611 = vunpack.c.h.b16 %v557
  %v2612 = vunpack.c.l.b16 %v558
  %v2613 = vunpack.c.h.b16 %v558
  %v2614 = vunpack.c.l.b16 %v559
  %v2615 = vunpack.c.h.b16 %v559
  %v2616 = vunpack.c.l.b16 %v560
  %v2617 = vunpack.c.h.b16 %v560
  %v2618 = vunpack.c.l.b16 %v561
  %v2619 = vunpack.c.h.b16 %v561
  %v2620 = vunpack.c.l.b16 %v562
  %v2621 = vunpack.c.h.b16 %v562
  %v2622 = vunpack.c.l.b16 %v563
  %v2623 = vunpack.c.h.b16 %v563
  %v2624 = vunpack.c.l.b16 %v564
  %v2625 = vunpack.c.h.b16 %v564
  %v2626 = vunpack.c.l.b16 %v565
  %v2627 = vunpack.c.h.b16 %v565
  %v2628 = vunpack.c.l.b16 %v566
  %v2629 = vunpack.c.h.b16 %v566
  %v2630 = vunpack.c.l.b16 %v567
  %v2631 = vunpack.c.h.b16 %v567
  %v2632 = vunpack.c.l.b16 %v568
  %v2633 = vunpack.c.h.b16 %v568
  %v2634 = vunpack.c.l.b16 %v569
  %v2635 = vunpack.c.h.b16 %v569
  %v2636 = vunpack.c.l.b16 %v570
  %v2637 = vunpack.c.h.b16 %v570
  %v2638 = vunpack.c.l.b16 %v571
  %v2639 = vunpack.c.h.b16 %v571
  %v2640 = vunpack.c.l.b16 %v572
  %v2641 = vunpack.c.h.b16 %v572
  %v2642 = vunpack.c.l.b16 %v573
  %v2643 = vunpack.c.h.b16 %v573
  %v2644 = vunpack.c.l.b16 %v574
  %v2645 = vunpack.c.h.b16 %v574
  %v2646 = vunpack.c.l.b16 %v575
  %v2647 = vunpack.c.h.b16 %v575
  %v2648 = vunpack.c.l.b16 %v576
  %v2649 = vunpack.c.h.b16 %v576
  %v2650 = vunpack.c.l.b16 %v577
  %v2651 = vunpack.c.h.b16 %v577
  %v2652 = vunpack.c.l.b16 %v578
  %v2653 = vunpack.c.h.b16 %v578
  %v2654 = vunpack.c.l.b16 %v579
  %v2655 = vunpack.c.h.b16 %v579
  %v2656 = vunpack.c.l.b16 %v580
  %v2657 = vunpack.c.h.b16 %v580
  %v2658 = vunpack.c.l.b16 %v581
  %v2659 = vunpack.c.h.b16 %v581
  %v2660 = vunpack.c.l.b16 %v582
  %v2661 = vunpack.c.h.b16 %v582
  %v2662 = vunpack.c.l.b16 %v583
  %v2663 = vunpack.c.h.b16 %v583
  %v2664 = vunpack.c.l.b16 %v584
  %v2665 = vunpack.c.h.b16 %v584
  %v2666 = vunpack.c.l.b16 %v585
  %v2667 = vunpack.c.h.b16 %v585
  %v2668 = vunpack.c.l.b16 %v586
  %v2669 = vunpack.c.h.b16 %v586
  %v2670 = vunpack.c.l.b16 %v587
  %v2671 = vunpack.c.h.b16 %v587
  %v2672 = vunpack.c.l.b16 %v588
  %v2673 = vunpack.c.h.b16 %v588
  %v2674 = vunpack.c.l.b16 %v589
  %v2675 = vunpack.c.h.b16 %v589
  %v2676 = vunpack.c.l.b16 %v590
  %v2677 = vunpack.c.h.b16 %v590
  %v2678 = vunpack.c.l.b16 %v591
  %v2679 = vunpack.c.h.b16 %v591
  %v2680 = vunpack.c.l.b16 %v592
  %v2681 = vunpack.c.h.b16 %v592
  %v2682 = vunpack.c.l.b16 %v593
  %v2683 = vunpack.c.h.b16 %v593
  %v2684 = vunpack.c.l.b16 %v594
  %v2685 = vunpack.c.h.b16 %v594
  %v2686 = vunpack.c.l.b16 %v595
  %v2687 = vunpack.c.h.b16 %v595
  %v2688 = vunpack.c.l.b16 %v596
  %v2689 = vunpack.c.h.b16 %v596
  %v2690 = vunpack.c.l.b16 %v597
  %v2691 = vunpack.c.h.b16 %v597
  %v2692 = vunpack.c.l.b16 %v598
  %v2693 = vunpack.c.h.b16 %v598
  %v2694 = vunpack.c.l.b16 %v599
  %v2695 = vunpack.c.h.b16 %v599
  %v2696 = vunpack.c.l.b16 %v600
  %v2697 = vunpack.c.h.b16 %v600
  %v2698 = vunpack.c.l.b16 %v601
  %v2699 = vunpack.c.h.b16 %v601
  %v2700 = vunpack.c.l.b16 %v602
  %v2701 = vunpack.c.h.b16 %v602
  %v2702 = vunpack.c.l.b16 %v603
  %v2703 = vunpack.c.h.b16 %v603
  %v2704 = vunpack.c.l.b16 %v604
  %v2705 = vunpack.c.h.b16 %v604
  %v2706 = vunpack.c.l.b16 %v605
  %v2707 = vunpack.c.h.b16 %v605
  %v2708 = vunpack.c.l.b16 %v606
  %v2709 = vunpack.c.h.b16 %v606
  %v2710 = vunpack.c.l.b16 %v607
  %v2711 = vunpack.c.h.b16 %v607
  %v2712 = vunpack.c.l.b16 %v608
  %v2713 = vunpack.c.h.b16 %v608
  %v2714 = vunpack.c.l.b16 %v609
  %v2715 = vunpack.c.h.b16 %v609
  %v2716 = vunpack.c.l.b16 %v610
  %v2717 = vunpack.c.h.b16 %v610
  %v2718 = vunpack.c.l.b16 %v611
  %v2719 = vunpack.c.h.b16 %v611
  %v2720 = vunpack.c.l.b16 %v612
  %v2721 = vunpack.c.h.b16 %v612
  %v2722 = vunpack.c.l.b16 %v613
  %v2723 = vunpack.c.h.b16 %v613
  %v2724 = vunpack.c.l.b16 %v614
  %v2725 = vunpack.c.h.b16 %v614
  %v2726 = vunpack.c.l.b16 %v615
  %v2727 = vunpack.c.h.b16 %v615
  %v2728 = vunpack.c.l.b16 %v616
  %v2729 = vunpack.c.h.b16 %v616
  %v2730 = vunpack.c.l.b16 %v617
  %v2731 = vunpack.c.h.b16 %v617
  %v2732 = vunpack.c.l.b16 %v618
  %v2733 = vunpack.c.h.b16 %v618
  %v2734 = vunpack.c.l.b16 %v619
  %v2735 = vunpack.c.h.b16 %v619
  %v2736 = vunpack.c.l.b16 %v620
  %v2737 = vunpack.c.h.b16 %v620
  %v2738 = vunpack.c.l.b16 %v621
  %v2739 = vunpack.c.h.b16 %v621
  %v2740 = vunpack.c.l.b16 %v622
  %v2741 = vunpack.c.h.b16 %v622
  %v2742 = vunpack.c.l.b16 %v623
  %v2743 = vunpack.c.h.b16 %v623
  %v2744 = vunpack.c.l.b16 %v624
  %v2745 = vunpack.c.h.b16 %v624
  %v2746 = vunpack.c.l.b16 %v625
  %v2747 = vunpack.c.h.b16 %v625
  %v2748 = vunpack.c.l.b16 %v626
  %v2749 = vunpack.c.h.b16 %v626
  %v2750 = vunpack.c.l.b16 %v627
  %v2751 = vunpack.c.h.b16 %v627
  %v2752 = vunpack.c.l.b16 %v628
  %v2753 = vunpack.c.h.b16 %v628
  %v2754 = vunpack.c.l.b16 %v629
  %v2755 = vunpack.c.h.b16 %v629
  %v2756 = vunpack.c.l.b16 %v630
  %v2757 = vunpack.c.h.b16 %v630
  %v2758 = vunpack.c.l.b16 %v631
  %v2759 = vunpack.c.h.b16 %v631
  %v2760 = vunpack.c.l.b16 %v632
  %v2761 = vunpack.c.h.b16 %v632
  %v2762 = vunpack.c.l.b16 %v633
  %v2763 = vunpack.c.h.b16 %v633
  %v2764 = vunpack.c.l.b16 %v634
  %v2765 = vunpack.c.h.b16 %v634
  %v2766 = vunpack.c.l.b16 %v635
  %v2767 = vunpack.c.h.b16 %v635
  %v2768 = vunpack.c.l.b16 %v636
  %v2769 = vunpack.c.h.b16 %v636
  %v2770 = vunpack.c.l.b16 %v637
  %v2771 = vunpack.c.h.b16 %v637
  %v2772 = vunpack.c.l.b16 %v638
  %v2773 = vunpack.c.h.b16 %v638
  %v2774 = vunpack.c.l.b16 %v639
  %v2775 = vunpack.c.h.b16 %v639
  %v2776 = vunpack.c.l.b16 %v640
  %v2777 = vunpack.c.h.b16 %v640
  %v2778 = vunpack.c.l.b16 %v641
  %v2779 = vunpack.c.h.b16 %v641
  %v2780 = vunpack.c.l.b16 %v642
  %v2781 = vunpack.c.h.b16 %v642
  %v2782 = vunpack.c.l.b16 %v643
  %v2783 = vunpack.c.h.b16 %v643
  %v2784 = vunpack.c.l.b16 %v644
  %v2785 = vunpack.c.h.b16 %v644
  %v2786 = vunpack.c.l.b16 %v645
  %v2787 = vunpack.c.h.b16 %v645
  %v2788 = vunpack.c.l.b16 %v646
  %v2789 = vunpack.c.h.b16 %v646
  %v2790 = vunpack.c.l.b16 %v647
  %v2791 = vunpack.c.h.b16 %v647
  %v2792 = vunpack.c.l.b16 %v648
  %v2793 = vunpack.c.h.b16 %v648
  %v2794 = vunpack.c.l.b16 %v649
  %v2795 = vunpack.c.h.b16 %v649
  %v2796 = vunpack.c.l.b16 %v650
  %v2797 = vunpack.c.h.b16 %v650
  %v2798 = vunpack.c.l.b16 %v651
  %v2799 = vunpack.c.h.b16 %v651
  %v2800 = vunpack.c.l.b16 %v652
  %v2801 = vunpack.c.h.b16 %v652
  %v2802 = vunpack.c.l.b16 %v653
  %v2803 = vunpack.c.h.b16 %v653
  %v2804 = vunpack.c.l.b16 %v654
  %v2805 = vunpack.c.h.b16 %v654
  %v2806 = vunpack.c.l.b16 %v655
  %v2807 = vunpack.c.h.b16 %v655
  %v2808 = vunpack.c.l.b16 %v656
  %v2809 = vunpack.c.h.b16 %v656
  %v2810 = vunpack.c.l.b16 %v657
  %v2811 = vunpack.c.h.b16 %v657
  %v2812 = vunpack.c.l.b16 %v658
  %v2813 = vunpack.c.h.b16 %v658
  %v2814 = vunpack.c.l.b16 %v659
  %v2815 = vunpack.c.h.b16 %v659
  %v2816 = vunpack.c.l.b16 %v660
  %v2817 = vunpack.c.h.b16 %v660
  %v2818 = vunpack.c.l.b16 %v661
  %v2819 = vunpack.c.h.b16 %v661
  %v2820 = vunpack.c.l.b16 %v662
  %v2821 = vunpack.c.h.b16 %v662
  %v2822 = vunpack.c.l.b16 %v663
  %v2823 = vunpack.c.h.b16 %v663
  %v2824 = vunpack.c.l.b16 %v664
  %v2825 = vunpack.c.h.b16 %v664
  %v2826 = vunpack.c.l.b16 %v665
  %v2827 = vunpack.c.h.b16 %v665
  %v2828 = vunpack.c.l.b16 %v666
  %v2829 = vunpack.c.h.b16 %v666
  %v2830 = vunpack.c.l.b16 %v667
  %v2831 = vunpack.c.h.b16 %v667
  %v2832 = vunpack.c.l.b16 %v668
  %v2833 = vunpack.c.h.b16 %v668
  %v2834 = vunpack.c.l.b16 %v669
  %v2835 = vunpack.c.h.b16 %v669
  %v2836 = vunpack.c.l.b16 %v670
  %v2837 = vunpack.c.h.b16 %v670
  %v2838 = vunpack.c.l.b16 %v671
  %v2839 = vunpack.c.h.b16 %v671
  %v2840 = vunpack.c.l.b16 %v672
  %v2841 = vunpack.c.h.b16 %v672
  %v2842 = vunpack.c.l.b16 %v673
  %v2843 = vunpack.c.h.b16 %v673
  %v2844 = vunpack.c.l.b16 %v674
  %v2845 = vunpack.c.h.b16 %v674
  %v2846 = vunpack.c.l.b16 %v675
  %v2847 = vunpack.c.h.b16 %v675
  %v2848 = vunpack.c.l.b16 %v676
  %v2849 = vunpack.c.h.b16 %v676
  %v2850 = vunpack.c.l.b16 %v677
  %v2851 = vunpack.c.h.b16 %v677
  %v2852 = vunpack.c.l.b16 %v678
  %v2853 = vunpack.c.h.b16 %v678
  %v2854 = vunpack.c.l.b16 %v679
  %v2855 = vunpack.c.h.b16 %v679
  %v2856 = vunpack.c.l.b16 %v680
  %v2857 = vunpack.c.h.b16 %v680
  %v2858 = vunpack.c.l.b16 %v681
  %v2859 = vunpack.c.h.b16 %v681
  %v2860 = vunpack.c.l.b16 %v682
  %v2861 = vunpack.c.h.b16 %v682
  %v2862 = vunpack.c.l.b16 %v683
  %v2863 = vunpack.c.h.b16 %v683
  %v2864 = vunpack.c.l.b16 %v684
  %v2865 = vunpack.c.h.b16 %v684
  %v2866 = vunpack.c.l.b16 %v685
  %v2867 = vunpack.c.h.b16 %v685
  %v2868 = vunpack.c.l.b16 %v686
  %v2869 = vunpack.c.h.b16 %v686
  %v2870 = vunpack.c.l.b16 %v687
  %v2871 = vunpack.c.h.b16 %v687
  %v2872 = vunpack.c.l.b16 %v688
  %v2873 = vunpack.c.h.b16 %v688
  %v2874 = vunpack.c.l.b16 %v689
  %v2875 = vunpack.c.h.b16 %v689
  %v2876 = vunpack.c.l.b16 %v690
  %v2877 = vunpack.c.h.b16 %v690
  %v2878 = vunpack.c.l.b16 %v691
  %v2879 = vunpack.c.h.b16 %v691
  %v2880 = vunpack.c.l.b16 %v692
  %v2881 = vunpack.c.h.b16 %v692
  %v2882 = vunpack.c.l.b16 %v693
  %v2883 = vunpack.c.h.b16 %v693
  %v2884 = vunpack.c.l.b16 %v694
  %v2885 = vunpack.c.h.b16 %v694
  %v2886 = vunpack.c.l.b16 %v695
  %v2887 = vunpack.c.h.b16 %v695
  %v2888 = vunpack.c.l.b16 %v696
  %v2889 = vunpack.c.h.b16 %v696
  %v2890 = vunpack.c.l.b16 %v697
  %v2891 = vunpack.c.h.b16 %v697
  %v2892 = vunpack.c.l.b16 %v698
  %v2893 = vunpack.c.h.b16 %v698
  %v2894 = vunpack.c.l.b16 %v699
  %v2895 = vunpack.c.h.b16 %v699
  %v2896 = vunpack.c.l.b16 %v700
  %v2897 = vunpack.c.h.b16 %v700
  %v2898 = vunpack.c.l.b16 %v701
  %v2899 = vunpack.c.h.b16 %v701
  %v2900 = vunpack.c.l.b16 %v702
  %v2901 = vunpack.c.h.b16 %v702
  %v2902 = vunpack.c.l.b16 %v703
  %v2903 = vunpack.c.h.b16 %v703
  %v2904 = vunpack.c.l.b16 %v704
  %v2905 = vunpack.c.h.b16 %v704
  %v2906 = vunpack.c.l.b16 %v705
  %v2907 = vunpack.c.h.b16 %v705
  %v2908 = vunpack.c.l.b16 %v706
  %v2909 = vunpack.c.h.b16 %v706
  %v2910 = vunpack.c.l.b16 %v707
  %v2911 = vunpack.c.h.b16 %v707
  %v2912 = vunpack.c.l.b16 %v708
  %v2913 = vunpack.c.h.b16 %v708
  %v2914 = vunpack.c.l.b16 %v709
  %v2915 = vunpack.c.h.b16 %v709
  %v2916 = vunpack.c.l.b16 %v710
  %v2917 = vunpack.c.h.b16 %v710
  %v2918 = vunpack.c.l.b16 %v711
  %v2919 = vunpack.c.h.b16 %v711
  %v2920 = vunpack.c.l.b16 %v712
  %v2921 = vunpack.c.h.b16 %v712
  %v2922 = vunpack.c.l.b16 %v713
  %v2923 = vunpack.c.h.b16 %v713
  %v2924 = vunpack.c.l.b16 %v714
  %v2925 = vunpack.c.h.b16 %v714
  %v2926 = vunpack.c.l.b16 %v715
  %v2927 = vunpack.c.h.b16 %v715
  %v2928 = vunpack.c.l.b16 %v716
  %v2929 = vunpack.c.h.b16 %v716
  %v2930 = vunpack.c.l.b16 %v717
  %v2931 = vunpack.c.h.b16 %v717
  %v2932 = vunpack.c.l.b16 %v718
  %v2933 = vunpack.c.h.b16 %v718
  %v2934 = vunpack.c.l.b16 %v719
  %v2935 = vunpack.c.h.b16 %v719
  %v2936 = vunpack.c.l.b16 %v720
  %v2937 = vunpack.c.h.b16 %v720
  %v2938 = vunpack.c.l.b16 %v721
  %v2939 = vunpack.c.h.b16 %v721
  %v2940 = vunpack.c.l.b16 %v722
  %v2941 = vunpack.c.h.b16 %v722
  %v2942 = vunpack.c.l.b16 %v723
  %v2943 = vunpack.c.h.b16 %v723
  %v2944 = vunpack.c.l.b16 %v724
  %v2945 = vunpack.c.h.b16 %v724
  %v2946 = vunpack.c.l.b16 %v725
  %v2947 = vunpack.c.h.b16 %v725
  %v2948 = vunpack.c.l.b16 %v726
  %v2949 = vunpack.c.h.b16 %v726
  %v2950 = vunpack.c.l.b16 %v727
  %v2951 = vunpack.c.h.b16 %v727
  %v2952 = vunpack.c.l.b16 %v728
  %v2953 = vunpack.c.h.b16 %v728
  %v2954 = vunpack.c.l.b16 %v729
  %v2955 = vunpack.c.h.b16 %v729
  %v2956 = vunpack.c.l.b16 %v730
  %v2957 = vunpack.c.h.b16 %v730
  %v2958 = vunpack.c.l.b16 %v731
  %v2959 = vunpack.c.h.b16 %v731
  %v2960 = vunpack.c.l.b16 %v732
  %v2961 = vunpack.c.h.b16 %v732
  %v2962 = vunpack.c.l.b16 %v733
  %v2963 = vunpack.c.h.b16 %v733
  %v2964 = vunpack.c.l.b16 %v734
  %v2965 = vunpack.c.h.b16 %v734
  %v2966 = vunpack.c.l.b16 %v735
  %v2967 = vunpack.c.h.b16 %v735
  %v2968 = vunpack.c.l.b16 %v736
  %v2969 = vunpack.c.h.b16 %v736
  %v2970 = vunpack.c.l.b16 %v737
  %v2971 = vunpack.c.h.b16 %v737
  %v2972 = vunpack.c.l.b16 %v738
  %v2973 = vunpack.c.h.b16 %v738
  %v2974 = vunpack.c.l.b16 %v739
  %v2975 = vunpack.c.h.b16 %v739
  %v2976 = vunpack.c.l.b16 %v740
  %v2977 = vunpack.c.h.b16 %v740
  %v2978 = vunpack.c.l.b16 %v741
  %v2979 = vunpack.c.h.b16 %v741
  %v2980 = vunpack.c.l.b16 %v742
  %v2981 = vunpack.c.h.b16 %v742
  %v2982 = vunpack.c.l.b16 %v743
  %v2983 = vunpack.c.h.b16 %v743
  %v2984 = vpack.c.b16 %v1838, %v1832
  %v2985 = vpack.c.b16 %v1839, %v1833
  %v2986 = vpack.c.b16 %v1840, %v1834
  %v2987 = vpack.c.b16 %v1841, %v1835
  %v2988 = vpack.c.b16 %v1842, %v1836
  %v2989 = vpack.c.b16 %v1843, %v1837
  %v2990 = vpack.c.b16 %v1850, %v1844
  %v2991 = vpack.c.b16 %v1851, %v1845
  %v2992 = vpack.c.b16 %v1852, %v1846
  %v2993 = vpack.c.b16 %v1853, %v1847
  %v2994 = vpack.c.b16 %v1854, %v1848
  %v2995 = vpack.c.b16 %v1855, %v1849
  %v2996 = vpack.c.b16 %v1862, %v1856
  %v2997 = vpack.c.b16 %v1863, %v1857
  %v2998 = vpack.c.b16 %v1864, %v1858
  %v2999 = vpack.c.b16 %v1865, %v1859
  %v3000 = vpack.c.b16 %v1866, %v1860
  %v3001 = vpack.c.b16 %v1867, %v1861
  %v3002 = vpack.c.b16 %v1874, %v1868
  %v3003 = vpack.c.b16 %v1875, %v1869
  %v3004 = vpack.c.b16 %v1876, %v1870
  %v3005 = vpack.c.b16 %v1877, %v1871
  %v3006 = vpack.c.b16 %v1878, %v1872
  %v3007 = vpack.c.b16 %v1879, %v1873
  %v3008 = vpack.c.b16 %v1886, %v1880
  %v3009 = vpack.c.b16 %v1887, %v1881
  %v3010 = vpack.c.b16 %v1888, %v1882
  %v3011 = vpack.c.b16 %v1889, %v1883
  %v3012 = vpack.c.b16 %v1890, %v1884
  %v3013 = vpack.c.b16 %v1891, %v1885
  %v3014 = vpack.c.b16 %v1898, %v1892
  %v3015 = vpack.c.b16 %v1899, %v1893
  %v3016 = vpack.c.b16 %v1900, %v1894
  %v3017 = vpack.c.b16 %v1901, %v1895
  %v3018 = vpack.c.b16 %v1902, %v1896
  %v3019 = vpack.c.b16 %v1903, %v1897
  %v3020 = vpack.c.b16 %v1910, %v1904
  %v3021 = vpack.c.b16 %v1911, %v1905
  %v3022 = vpack.c.b16 %v1912, %v1906
  %v3023 = vpack.c.b16 %v1913, %v1907
  %v3024 = vpack.c.b16 %v1914, %v1908
  %v3025 = vpack.c.b16 %v1915, %v1909
  %v3026 = vpack.c.b16 %v1922, %v1916
  %v3027 = vpack.c.b16 %v1923, %v1917
  %v3028 = vpack.c.b16 %v1924, %v1918
  %v3029 = vpack.c.b16 %v1925, %v1919
  %v3030 = vpack.c.b16 %v1926, %v1920
  %v3031 = vpack.c.b16 %v1927, %v1921
  %v3032 = vpack.c.b16 %v1934, %v1928
  %v3033 = vpack.c.b16 %v1935, %v1929
  %v3034 = vpack.c.b16 %v1936, %v1930
  %v3035 = vpack.c.b16 %v1937, %v1931
  %v3036 = vpack.c.b16 %v1938, %v1932
  %v3037 = vpack.c.b16 %v1939, %v1933
  %v3038 = vpack.c.b16 %v1946, %v1940
  %v3039 = vpack.c.b16 %v1947, %v1941
  %v3040 = vpack.c.b16 %v1948, %v1942
  %v3041 = vpack.c.b16 %v1949, %v1943
  %v3042 = vpack.c.b16 %v1950, %v1944
  %v3043 = vpack.c.b16 %v1951, %v1945
  %v3044 = vpack.c.b16 %v1958, %v1952
  %v3045 = vpack.c.b16 %v1959, %v1953
  %v3046 = vpack.c.b16 %v1960, %v1954
  %v3047 = vpack.c.b16 %v1961, %v1955
  %v3048 = vpack.c.b16 %v1962, %v1956
  %v3049 = vpack.c.b16 %v1963, %v1957
  %v3050 = vpack.c.b16 %v1970, %v1964
  %v3051 = vpack.c.b16 %v1971, %v1965
  %v3052 = vpack.c.b16 %v1972, %v1966
  %v3053 = vpack.c.b16 %v1973, %v1967
  %v3054 = vpack.c.b16 %v1974, %v1968
  %v3055 = vpack.c.b16 %v1975, %v1969
  %v3056 = vpack.c.b16 %v1982, %v1976
  %v3057 = vpack.c.b16 %v1983, %v1977
  %v3058 = vpack.c.b16 %v1984, %v1978
  %v3059 = vpack.c.b16 %v1985, %v1979
  %v3060 = vpack.c.b16 %v1986, %v1980
  %v3061 = vpack.c.b16 %v1987, %v1981
  %v3062 = vpack.c.b16 %v1994, %v1988
  %v3063 = vpack.c.b16 %v1995, %v1989
  %v3064 = vpack.c.b16 %v1996, %v1990
  %v3065 = vpack.c.b16 %v1997, %v1991
  %v3066 = vpack.c.b16 %v1998, %v1992
  %v3067 = vpack.c.b16 %v1999, %v1993
  %v3068 = vpack.c.b16 %v2006, %v2000
  %v3069 = vpack.c.b16 %v2007, %v2001
  %v3070 = vpack.c.b16 %v2008, %v2002
  %v3071 = vpack.c.b16 %v2009, %v2003
  %v3072 = vpack.c.b16 %v2010, %v2004
  %v3073 = vpack.c.b16 %v2011, %v2005
  %v3074 = vpack.c.b16 %v2018, %v2012
  %v3075 = vpack.c.b16 %v2019, %v2013
  %v3076 = vpack.c.b16 %v2020, %v2014
  %v3077 = vpack.c.b16 %v2021, %v2015
  %v3078 = vpack.c.b16 %v2022, %v2016
  %v3079 = vpack.c.b16 %v2023, %v2017
  %v3080 = vpack.c.b16 %v2030, %v2024
  %v3081 = vpack.c.b16 %v2031, %v2025
  %v3082 = vpack.c.b16 %v2032, %v2026
  %v3083 = vpack.c.b16 %v2033, %v2027
  %v3084 = vpack.c.b16 %v2034, %v2028
  %v3085 = vpack.c.b16 %v2035, %v2029
  %v3086 = vpack.c.b16 %v2042, %v2036
  %v3087 = vpack.c.b16 %v2043, %v2037
  %v3088 = vpack.c.b16 %v2044, %v2038
  %v3089 = vpack.c.b16 %v2045, %v2039
  %v3090 = vpack.c.b16 %v2046, %v2040
  %v3091 = vpack.c.b16 %v2047, %v2041
  %v3092 = vpack.c.b16 %v2054, %v2048
  %v3093 = vpack.c.b16 %v2055, %v2049
  %v3094 = vpack.c.b16 %v2056, %v2050
  %v3095 = vpack.c.b16 %v2057, %v2051
  %v3096 = vpack.c.b16 %v2058, %v2052
  %v3097 = vpack.c.b16 %v2059, %v2053
  %v3098 = vpack.c.b16 %v2066, %v2060
  %v3099 = vpack.c.b16 %v2067, %v2061
  %v3100 = vpack.c.b16 %v2068, %v2062
  %v3101 = vpack.c.b16 %v2069, %v2063
  %v3102 = vpack.c.b16 %v2070, %v2064
  %v3103 = vpack.c.b16 %v2071, %v2065
  %v3104 = vpack.c.b16 %v2078, %v2072
  %v3105 = vpack.c.b16 %v2079, %v2073
  %v3106 = vpack.c.b16 %v2080, %v2074
  %v3107 = vpack.c.b16 %v2081, %v2075
  %v3108 = vpack.c.b16 %v2082, %v2076
  %v3109 = vpack.c.b16 %v2083, %v2077
  %v3110 = vpack.c.b16 %v2090, %v2084
  %v3111 = vpack.c.b16 %v2091, %v2085
  %v3112 = vpack.c.b16 %v2092, %v2086
  %v3113 = vpack.c.b16 %v2093, %v2087
  %v3114 = vpack.c.b16 %v2094, %v2088
  %v3115 = vpack.c.b16 %v2095, %v2089
  %v3116 = vpack.c.b16 %v2102, %v2096
  %v3117 = vpack.c.b16 %v2103, %v2097
  %v3118 = vpack.c.b16 %v2104, %v2098
  %v3119 = vpack.c.b16 %v2105, %v2099
  %v3120 = vpack.c.b16 %v2106, %v2100
  %v3121 = vpack.c.b16 %v2107, %v2101
  %v3122 = vpack.c.b16 %v2114, %v2108
  %v3123 = vpack.c.b16 %v2115, %v2109
  %v3124 = vpack.c.b16 %v2116, %v2110
  %v3125 = vpack.c.b16 %v2117, %v2111
  %v3126 = vpack.c.b16 %v2118, %v2112
  %v3127 = vpack.c.b16 %v2119, %v2113
  %v3128 = vpack.c.b16 %v2126, %v2120
  %v3129 = vpack.c.b16 %v2127, %v2121
  %v3130 = vpack.c.b16 %v2128, %v2122
  %v3131 = vpack.c.b16 %v2129, %v2123
  %v3132 = vpack.c.b16 %v2130, %v2124
  %v3133 = vpack.c.b16 %v2131, %v2125
  %v3134 = vpack.c.b16 %v2138, %v2132
  %v3135 = vpack.c.b16 %v2139, %v2133
  %v3136 = vpack.c.b16 %v2140, %v2134
  %v3137 = vpack.c.b16 %v2141, %v2135
  %v3138 = vpack.c.b16 %v2142, %v2136
  %v3139 = vpack.c.b16 %v2143, %v2137
  %v3140 = vpack.c.b16 %v2150, %v2144
  %v3141 = vpack.c.b16 %v2151, %v2145
  %v3142 = vpack.c.b16 %v2152, %v2146
  %v3143 = vpack.c.b16 %v2153, %v2147
  %v3144 = vpack.c.b16 %v2154, %v2148
  %v3145 = vpack.c.b16 %v2155, %v2149
  %v3146 = vpack.c.b16 %v2162, %v2156
  %v3147 = vpack.c.b16 %v2163, %v2157
  %v3148 = vpack.c.b16 %v2164, %v2158
  %v3149 = vpack.c.b16 %v2165, %v2159
  %v3150 = vpack.c.b16 %v2166, %v2160
  %v3151 = vpack.c.b16 %v2167, %v2161
  %v3152 = vpack.c.b16 %v2174, %v2168
  %v3153 = vpack.c.b16 %v2175, %v2169
  %v3154 = vpack.c.b16 %v2176, %v2170
  %v3155 = vpack.c.b16 %v2177, %v2171
  %v3156 = vpack.c.b16 %v2178, %v2172
  %v3157 = vpack.c.b16 %v2179, %v2173
  %v3158 = vpack.c.b16 %v2186, %v2180
  %v3159 = vpack.c.b16 %v2187, %v2181
  %v3160 = vpack.c.b16 %v2188, %v2182
  %v3161 = vpack.c.b16 %v2189, %v2183
  %v3162 = vpack.c.b16 %v2190, %v2184
  %v3163 = vpack.c.b16 %v2191, %v2185
  %v3164 = vpack.c.b16 %v2198, %v2192
  %v3165 = vpack.c.b16 %v2199, %v2193
  %v3166 = vpack.c.b16 %v2200, %v2194
  %v3167 = vpack.c.b16 %v2201, %v2195
  %v3168 = vpack.c.b16 %v2202, %v2196
  %v3169 = vpack.c.b16 %v2203, %v2197
  %v3170 = vpack.c.b16 %v2210, %v2204
  %v3171 = vpack.c.b16 %v2211, %v2205
  %v3172 = vpack.c.b16 %v2212, %v2206
  %v3173 = vpack.c.b16 %v2213, %v2207
  %v3174 = vpack.c.b16 %v2214, %v2208
  %v3175 = vpack.c.b16 %v2215, %v2209
  %v3176 = vpack.c.b16 %v2222, %v2216
  %v3177 = vpack.c.b16 %v2223, %v2217
  %v3178 = vpack.c.b16 %v2224, %v2218
  %v3179 = vpack.c.b16 %v2225, %v2219
  %v3180 = vpack.c.b16 %v2226, %v2220
  %v3181 = vpack.c.b16 %v2227, %v2221
  %v3182 = vpack.c.b16 %v2234, %v2228
  %v3183 = vpack.c.b16 %v2235, %v2229
  %v3184 = vpack.c.b16 %v2236, %v2230
  %v3185 = vpack.c.b16 %v2237, %v2231
  %v3186 = vpack.c.b16 %v2238, %v2232
  %v3187 = vpack.c.b16 %v2239, %v2233
  %v3188 = vpack.c.b16 %v2246, %v2240
  %v3189 = vpack.c.b16 %v2247, %v2241
  %v3190 = vpack.c.b16 %v2248, %v2242
  %v3191 = vpack.c.b16 %v2249, %v2243
  %v3192 = vpack.c.b16 %v2250, %v2244
  %v3193 = vpack.c.b16 %v2251, %v2245
  %v3194 = vpack.c.b16 %v2258, %v2252
  %v3195 = vpack.c.b16 %v2259, %v2253
  %v3196 = vpack.c.b16 %v2260, %v2254
  %v3197 = vpack.c.b16 %v2261, %v2255
  %v3198 = vpack.c.b16 %v2262, %v2256
  %v3199 = vpack.c.b16 %v2263, %v2257
  %v3200 = vpack.c.b16 %v2270, %v2264
  %v3201 = vpack.c.b16 %v2271, %v2265
  %v3202 = vpack.c.b16 %v2272, %v2266
  %v3203 = vpack.c.b16 %v2273, %v2267
  %v3204 = vpack.c.b16 %v2274, %v2268
  %v3205 = vpack.c.b16 %v2275, %v2269
  %v3206 = vpack.c.b16 %v2282, %v2276
  %v3207 = vpack.c.b16 %v2283, %v2277
  %v3208 = vpack.c.b16 %v2284, %v2278
  %v3209 = vpack.c.b16 %v2285, %v2279
  %v3210 = vpack.c.b16 %v2286, %v2280
  %v3211 = vpack.c.b16 %v2287, %v2281
  %v3212 = vpack.c.b16 %v2294, %v2288
  %v3213 = vpack.c.b16 %v2295, %v2289
  %v3214 = vpack.c.b16 %v2296, %v2290
  %v3215 = vpack.c.b16 %v2297, %v2291
  %v3216 = vpack.c.b16 %v2298, %v2292
  %v3217 = vpack.c.b16 %v2299, %v2293
  %v3218 = vpack.c.b16 %v2306, %v2300
  %v3219 = vpack.c.b16 %v2307, %v2301
  %v3220 = vpack.c.b16 %v2308, %v2302
  %v3221 = vpack.c.b16 %v2309, %v2303
  %v3222 = vpack.c.b16 %v2310, %v2304
  %v3223 = vpack.c.b16 %v2311, %v2305
  %v3224 = vpack.c.b16 %v2318, %v2312
  %v3225 = vpack.c.b16 %v2319, %v2313
  %v3226 = vpack.c.b16 %v2320, %v2314
  %v3227 = vpack.c.b16 %v2321, %v2315
  %v3228 = vpack.c.b16 %v2322, %v2316
  %v3229 = vpack.c.b16 %v2323, %v2317
  %v3230 = vpack.c.b16 %v2330, %v2324
  %v3231 = vpack.c.b16 %v2331, %v2325
  %v3232 = vpack.c.b16 %v2332, %v2326
  %v3233 = vpack.c.b16 %v2333, %v2327
  %v3234 = vpack.c.b16 %v2334, %v2328
  %v3235 = vpack.c.b16 %v2335, %v2329
  %v3236 = vpack.c.b16 %v2342, %v2336
  %v3237 = vpack.c.b16 %v2343, %v2337
  %v3238 = vpack.c.b16 %v2344, %v2338
  %v3239 = vpack.c.b16 %v2345, %v2339
  %v3240 = vpack.c.b16 %v2346, %v2340
  %v3241 = vpack.c.b16 %v2347, %v2341
  %v3242 = vpack.c.b16 %v2354, %v2348
  %v3243 = vpack.c.b16 %v2355, %v2349
  %v3244 = vpack.c.b16 %v2356, %v2350
  %v3245 = vpack.c.b16 %v2357, %v2351
  %v3246 = vpack.c.b16 %v2358, %v2352
  %v3247 = vpack.c.b16 %v2359, %v2353
  %v3248 = vpack.c.b16 %v2366, %v2360
  %v3249 = vpack.c.b16 %v2367, %v2361
  %v3250 = vpack.c.b16 %v2368, %v2362
  %v3251 = vpack.c.b16 %v2369, %v2363
  %v3252 = vpack.c.b16 %v2370, %v2364
  %v3253 = vpack.c.b16 %v2371, %v2365
  %v3254 = vpack.c.b16 %v2378, %v2372
  %v3255 = vpack.c.b16 %v2379, %v2373
  %v3256 = vpack.c.b16 %v2380, %v2374
  %v3257 = vpack.c.b16 %v2381, %v2375
  %v3258 = vpack.c.b16 %v2382, %v2376
  %v3259 = vpack.c.b16 %v2383, %v2377
  %v3260 = vpack.c.b16 %v2390, %v2384
  %v3261 = vpack.c.b16 %v2391, %v2385
  %v3262 = vpack.c.b16 %v2392, %v2386
  %v3263 = vpack.c.b16 %v2393, %v2387
  %v3264 = vpack.c.b16 %v2394, %v2388
  %v3265 = vpack.c.b16 %v2395, %v2389
  %v3266 = vpack.c.b16 %v2402, %v2396
  %v3267 = vpack.c.b16 %v2403, %v2397
  %v3268 = vpack.c.b16 %v2404, %v2398
  %v3269 = vpack.c.b16 %v2405, %v2399
  %v3270 = vpack.c.b16 %v2406, %v2400
  %v3271 = vpack.c.b16 %v2407, %v2401
  %v3272 = vpack.c.b16 %v2414, %v2408
  %v3273 = vpack.c.b16 %v2415, %v2409
  %v3274 = vpack.c.b16 %v2416, %v2410
  %v3275 = vpack.c.b16 %v2417, %v2411
  %v3276 = vpack.c.b16 %v2418, %v2412
  %v3277 = vpack.c.b16 %v2419, %v2413
  %v3278 = vpack.c.b16 %v2426, %v2420
  %v3279 = vpack.c.b16 %v2427, %v2421
  %v3280 = vpack.c.b16 %v2428, %v2422
  %v3281 = vpack.c.b16 %v2429, %v2423
  %v3282 = vpack.c.b16 %v2430, %v2424
  %v3283 = vpack.c.b16 %v2431, %v2425
  %v3284 = vpack.c.b16 %v2438, %v2432
  %v3285 = vpack.c.b16 %v2439, %v2433
  %v3286 = vpack.c.b16 %v2440, %v2434
  %v3287 = vpack.c.b16 %v2441, %v2435
  %v3288 = vpack.c.b16 %v2442, %v2436
  %v3289 = vpack.c.b16 %v2443, %v2437
  %v3290 = vpack.c.b16 %v2450, %v2444
  %v3291 = vpack.c.b16 %v2451, %v2445
  %v3292 = vpack.c.b16 %v2452, %v2446
  %v3293 = vpack.c.b16 %v2453, %v2447
  %v3294 = vpack.c.b16 %v2454, %v2448
  %v3295 = vpack.c.b16 %v2455, %v2449
  %v3296 = vpack.c.b16 %v2462, %v2456
  %v3297 = vpack.c.b16 %v2463, %v2457
  %v3298 = vpack.c.b16 %v2464, %v2458
  %v3299 = vpack.c.b16 %v2465, %v2459
  %v3300 = vpack.c.b16 %v2466, %v2460
  %v3301 = vpack.c.b16 %v2467, %v2461
  %v3302 = vpack.c.b16 %v2474, %v2468
  %v3303 = vpack.c.b16 %v2475, %v2469
  %v3304 = vpack.c.b16 %v2476, %v2470
  %v3305 = vpack.c.b16 %v2477, %v2471
  %v3306 = vpack.c.b16 %v2478, %v2472
  %v3307 = vpack.c.b16 %v2479, %v2473
  %v3308 = vpack.c.b16 %v2486, %v2480
  %v3309 = vpack.c.b16 %v2487, %v2481
  %v3310 = vpack.c.b16 %v2488, %v2482
  %v3311 = vpack.c.b16 %v2489, %v2483
  %v3312 = vpack.c.b16 %v2490, %v2484
  %v3313 = vpack.c.b16 %v2491, %v2485
  %v3314 = vpack.c.b16 %v2498, %v2492
  %v3315 = vpack.c.b16 %v2499, %v2493
  %v3316 = vpack.c.b16 %v2500, %v2494
  %v3317 = vpack.c.b16 %v2501, %v2495
  %v3318 = vpack.c.b16 %v2502, %v2496
  %v3319 = vpack.c.b16 %v2503, %v2497
  %v3320 = vpack.c.b16 %v2510, %v2504
  %v3321 = vpack.c.b16 %v2511, %v2505
  %v3322 = vpack.c.b16 %v2512, %v2506
  %v3323 = vpack.c.b16 %v2513, %v2507
  %v3324 = vpack.c.b16 %v2514, %v2508
  %v3325 = vpack.c.b16 %v2515, %v2509
  %v3326 = vpack.c.b16 %v2522, %v2516
  %v3327 = vpack.c.b16 %v2523, %v2517
  %v3328 = vpack.c.b16 %v2524, %v2518
  %v3329 = vpack.c.b16 %v2525, %v2519
  %v3330 = vpack.c.b16 %v2526, %v2520
  %v3331 = vpack.c.b16 %v2527, %v2521
  %v3332 = vpack.c.b16 %v2534, %v2528
  %v3333 = vpack.c.b16 %v2535, %v2529
  %v3334 = vpack.c.b16 %v2536, %v2530
  %v3335 = vpack.c.b16 %v2537, %v2531
  %v3336 = vpack.c.b16 %v2538, %v2532
  %v3337 = vpack.c.b16 %v2539, %v2533
  %v3338 = vpack.c.b16 %v2546, %v2540
  %v3339 = vpack.c.b16 %v2547, %v2541
  %v3340 = vpack.c.b16 %v2548, %v2542
  %v3341 = vpack.c.b16 %v2549, %v2543
  %v3342 = vpack.c.b16 %v2550, %v2544
  %v3343 = vpack.c.b16 %v2551, %v2545
  %v3344 = vpack.c.b16 %v2558, %v2552
  %v3345 = vpack.c.b16 %v2559, %v2553
  %v3346 = vpack.c.b16 %v2560, %v2554
  %v3347 = vpack.c.b16 %v2561, %v2555
  %v3348 = vpack.c.b16 %v2562, %v2556
  %v3349 = vpack.c.b16 %v2563, %v2557
  %v3350 = vpack.c.b16 %v2570, %v2564
  %v3351 = vpack.c.b16 %v2571, %v2565
  %v3352 = vpack.c.b16 %v2572, %v2566
  %v3353 = vpack.c.b16 %v2573, %v2567
  %v3354 = vpack.c.b16 %v2574, %v2568
  %v3355 = vpack.c.b16 %v2575, %v2569
  %v3356 = vpack.c.b16 %v2582, %v2576
  %v3357 = vpack.c.b16 %v2583, %v2577
  %v3358 = vpack.c.b16 %v2584, %v2578
  %v3359 = vpack.c.b16 %v2585, %v2579
  %v3360 = vpack.c.b16 %v2586, %v2580
  %v3361 = vpack.c.b16 %v2587, %v2581
  %v3362 = vpack.c.b16 %v2594, %v2588
  %v3363 = vpack.c.b16 %v2595, %v2589
  %v3364 = vpack.c.b16 %v2596, %v2590
  %v3365 = vpack.c.b16 %v2597, %v2591
  %v3366 = vpack.c.b16 %v2598, %v2592
  %v3367 = vpack.c.b16 %v2599, %v2593
  %v3368 = vpack.c.b16 %v2606, %v2600
  %v3369 = vpack.c.b16 %v2607, %v2601
  %v3370 = vpack.c.b16 %v2608, %v2602
  %v3371 = vpack.c.b16 %v2609, %v2603
  %v3372 = vpack.c.b16 %v2610, %v2604
  %v3373 = vpack.c.b16 %v2611, %v2605
  %v3374 = vpack.c.b16 %v2618, %v2612
  %v3375 = vpack.c.b16 %v2619, %v2613
  %v3376 = vpack.c.b16 %v2620, %v2614
  %v3377 = vpack.c.b16 %v2621, %v2615
  %v3378 = vpack.c.b16 %v2622, %v2616
  %v3379 = vpack.c.b16 %v2623, %v2617
  %v3380 = vpack.c.b16 %v2630, %v2624
  %v3381 = vpack.c.b16 %v2631, %v2625
  %v3382 = vpack.c.b16 %v2632, %v2626
  %v3383 = vpack.c.b16 %v2633, %v2627
  %v3384 = vpack.c.b16 %v2634, %v2628
  %v3385 = vpack.c.b16 %v2635, %v2629
  %v3386 = vpack.c.b16 %v2642, %v2636
  %v3387 = vpack.c.b16 %v2643, %v2637
  %v3388 = vpack.c.b16 %v2644, %v2638
  %v3389 = vpack.c.b16 %v2645, %v2639
  %v3390 = vpack.c.b16 %v2646, %v2640
  %v3391 = vpack.c.b16 %v2647, %v2641
  %v3392 = vpack.c.b16 %v2654, %v2648
  %v3393 = vpack.c.b16 %v2655, %v2649
  %v3394 = vpack.c.b16 %v2656, %v2650
  %v3395 = vpack.c.b16 %v2657, %v2651
  %v3396 = vpack.c.b16 %v2658, %v2652
  %v3397 = vpack.c.b16 %v2659, %v2653
  %v3398 = vpack.c.b16 %v2666, %v2660
  %v3399 = vpack.c.b16 %v2667, %v2661
  %v3400 = vpack.c.b16 %v2668, %v2662
  %v3401 = vpack.c.b16 %v2669, %v2663
  %v3402 = vpack.c.b16 %v2670, %v2664
  %v3403 = vpack.c.b16 %v2671, %v2665
  %v3404 = vpack.c.b16 %v2678, %v2672
  %v3405 = vpack.c.b16 %v2679, %v2673
  %v3406 = vpack.c.b16 %v2680, %v2674
  %v3407 = vpack.c.b16 %v2681, %v2675
  %v3408 = vpack.c.b16 %v2682, %v2676
  %v3409 = vpack.c.b16 %v2683, %v2677
  %v3410 = vpack.c.b16 %v2690, %v2684
  %v3411 = vpack.c.b16 %v2691, %v2685
  %v3412 = vpack.c.b16 %v2692, %v2686
  %v3413 = vpack.c.b16 %v2693, %v2687
  %v3414 = vpack.c.b16 %v2694, %v2688
  %v3415 = vpack.c.b16 %v2695, %v2689
  %v3416 = vpack.c.b16 %v2702, %v2696
  %v3417 = vpack.c.b16 %v2703, %v2697
  %v3418 = vpack.c.b16 %v2704, %v2698
  %v3419 = vpack.c.b16 %v2705, %v2699
  %v3420 = vpack.c.b16 %v2706, %v2700
  %v3421 = vpack.c.b16 %v2707, %v2701
  %v3422 = vpack.c.b16 %v2714, %v2708
  %v3423 = vpack.c.b16 %v2715, %v2709
  %v3424 = vpack.c.b16 %v2716, %v2710
  %v3425 = vpack.c.b16 %v2717, %v2711
  %v3426 = vpack.c.b16 %v2718, %v2712
  %v3427 = vpack.c.b16 %v2719, %v2713
  %v3428 = vpack.c.b16 %v2726, %v2720
  %v3429 = vpack.c.b16 %v2727, %v2721
  %v3430 = vpack.c.b16 %v2728, %v2722
  %v3431 = vpack.c.b16 %v2729, %v2723
  %v3432 = vpack.c.b16 %v2730, %v2724
  %v3433 = vpack.c.b16 %v2731, %v2725
  %v3434 = vpack.c.b16 %v2738, %v2732
  %v3435 = vpack.c.b16 %v2739, %v2733
  %v3436 = vpack.c.b16 %v2740, %v2734
  %v3437 = vpack.c.b16 %v2741, %v2735
  %v3438 = vpack.c.b16 %v2742, %v2736
  %v3439 = vpack.c.b16 %v2743, %v2737
  %v3440 = vpack.c.b16 %v2750, %v2744
  %v3441 = vpack.c.b16 %v2751, %v2745
  %v3442 = vpack.c.b16 %v2752, %v2746
  %v3443 = vpack.c.b16 %v2753, %v2747
  %v3444 = vpack.c.b16 %v2754, %v2748
  %v3445 = vpack.c.b16 %v2755, %v2749
  %v3446 = vpack.c.b16 %v2762, %v2756
  %v3447 = vpack.c.b16 %v2763, %v2757
  %v3448 = vpack.c.b16 %v2764, %v2758
  %v3449 = vpack.c.b16 %v2765, %v2759
  %v3450 = vpack.c.b16 %v2766, %v2760
  %v3451 = vpack.c.b16 %v2767, %v2761
  %v3452 = vpack.c.b16 %v2774, %v2768
  %v3453 = vpack.c.b16 %v2775, %v2769
  %v3454 = vpack.c.b16 %v2776, %v2770
  %v3455 = vpack.c.b16 %v2777, %v2771
  %v3456 = vpack.c.b16 %v2778, %v2772
  %v3457 = vpack.c.b16 %v2779, %v2773
  %v3458 = vpack.c.b16 %v2786, %v2780
  %v3459 = vpack.c.b16 %v2787, %v2781
  %v3460 = vpack.c.b16 %v2788, %v2782
  %v3461 = vpack.c.b16 %v2789, %v2783
  %v3462 = vpack.c.b16 %v2790, %v2784
  %v3463 = vpack.c.b16 %v2791, %v2785
  %v3464 = vpack.c.b16 %v2798, %v2792
  %v3465 = vpack.c.b16 %v2799, %v2793
  %v3466 = vpack.c.b16 %v2800, %v2794
  %v3467 = vpack.c.b16 %v2801, %v2795
  %v3468 = vpack.c.b16 %v2802, %v2796
  %v3469 = vpack.c.b16 %v2803, %v2797
  %v3470 = vpack.c.b16 %v2810, %v2804
  %v3471 = vpack.c.b16 %v2811, %v2805
  %v3472 = vpack.c.b16 %v2812, %v2806
  %v3473 = vpack.c.b16 %v2813, %v2807
  %v3474 = vpack.c.b16 %v2814, %v2808
  %v3475 = vpack.c.b16 %v2815, %v2809
  %v3476 = vpack.c.b16 %v2822, %v2816
  %v3477 = vpack.c.b16 %v2823, %v2817
  %v3478 = vpack.c.b16 %v2824, %v2818
  %v3479 = vpack.c.b16 %v2825, %v2819
  %v3480 = vpack.c.b16 %v2826, %v2820
  %v3481 = vpack.c.b16 %v2827, %v2821
  %v3482 = vpack.c.b16 %v2834, %v2828
  %v3483 = vpack.c.b16 %v2835, %v2829
  %v3484 = vpack.c.b16 %v2836, %v2830
  %v3485 = vpack.c.b16 %v2837, %v2831
  %v3486 = vpack.c.b16 %v2838, %v2832
  %v3487 = vpack.c.b16 %v2839, %v2833
  %v3488 = vpack.c.b16 %v2846, %v2840
  %v3489 = vpack.c.b16 %v2847, %v2841
  %v3490 = vpack.c.b16 %v2848, %v2842
  %v3491 = vpack.c.b16 %v2849, %v2843
  %v3492 = vpack.c.b16 %v2850, %v2844
  %v3493 = vpack.c.b16 %v2851, %v2845
  %v3494 = vpack.c.b16 %v2858, %v2852
  %v3495 = vpack.c.b16 %v2859, %v2853
  %v3496 = vpack.c.b16 %v2860, %v2854
  %v3497 = vpack.c.b16 %v2861, %v2855
  %v3498 = vpack.c.b16 %v2862, %v2856
  %v3499 = vpack.c.b16 %v2863, %v2857
  %v3500 = vpack.c.b16 %v2870, %v2864
  %v3501 = vpack.c.b16 %v2871, %v2865
  %v3502 = vpack.c.b16 %v2872, %v2866
  %v3503 = vpack.c.b16 %v2873, %v2867
  %v3504 = vpack.c.b16 %v2874, %v2868
  %v3505 = vpack.c.b16 %v2875, %v2869
  %v3506 = vpack.c.b16 %v2882, %v2876
  %v3507 = vpack.c.b16 %v2883, %v2877
  %v3508 = vpack.c.b16 %v2884, %v2878
  %v3509 = vpack.c.b16 %v2885, %v2879
  %v3510 = vpack.c.b16 %v2886, %v2880
  %v3511 = vpack.c.b16 %v2887, %v2881
  %v3512 = vpack.c.b16 %v2894, %v2888
  %v3513 = vpack.c.b16 %v2895, %v2889
  %v3514 = vpack.c.b16 %v2896, %v2890
  %v3515 = vpack.c.b16 %v2897, %v2891
  %v3516 = vpack.c.b16 %v2898, %v2892
  %v3517 = vpack.c.b16 %v2899, %v2893
  %v3518 = vpack.c.b16 %v2906, %v2900
  %v3519 = vpack.c.b16 %v2907, %v2901
  %v3520 = vpack.c.b16 %v2908, %v2902
  %v3521 = vpack.c.b16 %v2909, %v2903
  %v3522 = vpack.c.b16 %v2910, %v2904
  %v3523 = vpack.c.b16 %v2911, %v2905
  %v3524 = vpack.c.b16 %v2918, %v2912
  %v3525 = vpack.c.b16 %v2919, %v2913
  %v3526 = vpack.c.b16 %v2920, %v2914
  %v3527 = vpack.c.b16 %v2921, %v2915
  %v3528 = vpack.c.b16 %v2922, %v2916
  %v3529 = vpack.c.b16 %v2923, %v2917
  %v3530 = vpack.c.b16 %v2930, %v2924
  %v3531 = vpack.c.b16 %v2931, %v2925
  %v3532 = vpack.c.b16 %v2932, %v2926
  %v3533 = vpack.c.b16 %v2933, %v2927
  %v3534 = vpack.c.b16 %v2934, %v2928
  %v3535 = vpack.c.b16 %v2935, %v2929
  %v3536 = vpack.c.b16 %v2942, %v2936
  %v3537 = vpack.c.b16 %v2943, %v2937
  %v3538 = vpack.c.b16 %v2944, %v2938
  %v3539 = vpack.c.b16 %v2945, %v2939
  %v3540 = vpack.c.b16 %v2946, %v2940
  %v3541 = vpack.c.b16 %v2947, %v2941
  %v3542 = vpack.c.b16 %v2954, %v2948
  %v3543 = vpack.c.b16 %v2955, %v2949
  %v3544 = vpack.c.b16 %v2956, %v2950
  %v3545 = vpack.c.b16 %v2957, %v2951
  %v3546 = vpack.c.b16 %v2958, %v2952
  %v3547 = vpack.c.b16 %v2959, %v2953
  %v3548 = vpack.c.b16 %v2966, %v2960
  %v3549 = vpack.c.b16 %v2967, %v2961
  %v3550 = vpack.c.b16 %v2968, %v2962
  %v3551 = vpack.c.b16 %v2969, %v2963
  %v3552 = vpack.c.b16 %v2970, %v2964
  %v3553 = vpack.c.b16 %v2971, %v2965
  %v3554 = vpack.c.b16 %v2978, %v2972
  %v3555 = vpack.c.b16 %v2979, %v2973
  %v3556 = vpack.c.b16 %v2980, %v2974
  %v3557 = vpack.c.b16 %v2981, %v2975
  %v3558 = vpack.c.b16 %v2982, %v2976
  %v3559 = vpack.c.b16 %v2983, %v2977
  %4136 = vmatprep.subr.bf16.mxu0 %v2985
  %4137 = vmatpush1.bf16.msra.mxu0 %v2984
  %4138 = vmatprep.subr.bf16.mxu0 %v2991
  %4139 = vmatpush1.bf16.msra.mxu0 %v2990
  %4140 = vmatprep.subr.bf16.mxu0 %v2997
  %4141 = vmatpush1.bf16.msra.mxu0 %v2996
  %4142 = vmatprep.subr.bf16.mxu0 %v3003
  %4143 = vmatpush1.bf16.msra.mxu0 %v3002
  %4144 = vmatprep.subr.bf16.mxu0 %v3009
  %4145 = vmatpush1.bf16.msra.mxu0 %v3008
  %4146 = vmatprep.subr.bf16.mxu0 %v3015
  %4147 = vmatpush1.bf16.msra.mxu0 %v3014
  %4148 = vmatprep.subr.bf16.mxu0 %v3021
  %4149 = vmatpush1.bf16.msra.mxu0 %v3020
  %4150 = vmatprep.subr.bf16.mxu0 %v3027
  %4151 = vmatpush1.bf16.msra.mxu0 %v3026
  %4152 = vmatprep.subr.bf16.mxu0 %v3033
  %4153 = vmatpush1.bf16.msra.mxu0 %v3032
  %4154 = vmatprep.subr.bf16.mxu0 %v3039
  %4155 = vmatpush1.bf16.msra.mxu0 %v3038
  %4156 = vmatprep.subr.bf16.mxu0 %v3045
  %4157 = vmatpush1.bf16.msra.mxu0 %v3044
  %4158 = vmatprep.subr.bf16.mxu0 %v3051
  %4159 = vmatpush1.bf16.msra.mxu0 %v3050
  %4160 = vmatprep.subr.bf16.mxu0 %v3057
  %4161 = vmatpush1.bf16.msra.mxu0 %v3056
  %4162 = vmatprep.subr.bf16.mxu0 %v3063
  %4163 = vmatpush1.bf16.msra.mxu0 %v3062
  %4164 = vmatprep.subr.bf16.mxu0 %v3069
  %4165 = vmatpush1.bf16.msra.mxu0 %v3068
  %4166 = vmatprep.subr.bf16.mxu0 %v3075
  %4167 = vmatpush1.bf16.msra.mxu0 %v3074
  %4168 = vmatprep.mubr.bf16.mxu0 %v1065
  %4169 = vmatmul.mubr.bf16.gmra.mrb[0].mxu0 %v1064
  %v4170 = vpop.f32.mrb[0].mxu0
  %v4171 = vadd.f32 %v749, %v4170
  %v4172 = vpop.f32.mrb[0].mxu0
  %v4173 = vadd.f32 %v753, %v4172
  %v4174 = vpop.f32.mrb[0].mxu0
  %v4175 = vadd.f32 %v749, %v4174
  %v4176 = vpop.f32.mrb[0].mxu0
  %v4177 = vadd.f32 %v753, %v4176
  %4178 = vmatprep.mubr.bf16.mxu0 %v1077
  %4179 = vmatmul.mubr.bf16.gmra.mrb[0].mxu0 %v1076
  %v4180 = vpop.f32.mrb[0].mxu0
  %v4181 = vadd.f32 %v749, %v4180
  %v4182 = vpop.f32.mrb[0].mxu0
  %v4183 = vadd.f32 %v753, %v4182
  %v4184 = vpop.f32.mrb[0].mxu0
  %v4185 = vadd.f32 %v749, %v4184
  %v4186 = vpop.f32.mrb[0].mxu0
  %v4187 = vadd.f32 %v753, %v4186
  %4188 = vmatprep.mubr.bf16.mxu0 %v1089
  %4189 = vmatmul.mubr.bf16.gmra.mrb[0].mxu0 %v1088
  %v4190 = vpop.f32.mrb[0].mxu0
  %v4191 = vadd.f32 %v749, %v4190
  %v4192 = vpop.f32.mrb[0].mxu0
  %v4193 = vadd.f32 %v753, %v4192
  %v4194 = vpop.f32.mrb[0].mxu0
  %v4195 = vadd.f32 %v749, %v4194
  %v4196 = vpop.f32.mrb[0].mxu0
  %v4197 = vadd.f32 %v753, %v4196
  %4198 = vmatprep.mubr.bf16.mxu0 %v1101
  %4199 = vmatmul.mubr.bf16.gmra.mrb[0].mxu0 %v1100
  %v4200 = vpop.f32.mrb[0].mxu0
  %v4201 = vadd.f32 %v749, %v4200
  %v4202 = vpop.f32.mrb[0].mxu0
  %v4203 = vadd.f32 %v753, %v4202
  %v4204 = vpop.f32.mrb[0].mxu0
  %v4205 = vadd.f32 %v749, %v4204
  %v4206 = vpop.f32.mrb[0].mxu0
  %v4207 = vadd.f32 %v753, %v4206
  %4208 = vmatprep.mubr.bf16.mxu0 %v1113
  %4209 = vmatmul.mubr.bf16.gmra.mrb[0].mxu0 %v1112
  %v4210 = vpop.f32.mrb[0].mxu0
  %v4211 = vadd.f32 %v749, %v4210
  %v4212 = vpop.f32.mrb[0].mxu0
  %v4213 = vadd.f32 %v753, %v4212
  %v4214 = vpop.f32.mrb[0].mxu0
  %v4215 = vadd.f32 %v749, %v4214
  %v4216 = vpop.f32.mrb[0].mxu0
  %v4217 = vadd.f32 %v753, %v4216
  %4218 = vmatprep.mubr.bf16.mxu0 %v1125
  %4219 = vmatmul.mubr.bf16.gmra.mrb[0].mxu0 %v1124
  %v4220 = vpop.f32.mrb[0].mxu0
  %v4221 = vadd.f32 %v749, %v4220
  %v4222 = vpop.f32.mrb[0].mxu0
  %v4223 = vadd.f32 %v753, %v4222
  %v4224 = vpop.f32.mrb[0].mxu0
  %v4225 = vadd.f32 %v749, %v4224
  %v4226 = vpop.f32.mrb[0].mxu0
  %v4227 = vadd.f32 %v753, %v4226
  %4228 = vmatprep.mubr.bf16.mxu0 %v1137
  %4229 = vmatmul.mubr.bf16.gmra.mrb[0].mxu0 %v1136
  %v4230 = vpop.f32.mrb[0].mxu0
  %v4231 = vadd.f32 %v749, %v4230
  %v4232 = vpop.f32.mrb[0].mxu0
  %v4233 = vadd.f32 %v753, %v4232
  %v4234 = vpop.f32.mrb[0].mxu0
  %v4235 = vadd.f32 %v749, %v4234
  %v4236 = vpop.f32.mrb[0].mxu0
  %v4237 = vadd.f32 %v753, %v4236
  %4238 = vmatprep.mubr.bf16.mxu0 %v1149
  %4239 = vmatmul.mubr.bf16.gmra.mrb[0].mxu0 %v1148
  %v4240 = vpop.f32.mrb[0].mxu0
  %v4241 = vadd.f32 %v749, %v4240
  %v4242 = vpop.f32.mrb[0].mxu0
  %v4243 = vadd.f32 %v753, %v4242
  %v4244 = vpop.f32.mrb[0].mxu0
  %v4245 = vadd.f32 %v749, %v4244
  %v4246 = vpop.f32.mrb[0].mxu0
  %v4247 = vadd.f32 %v753, %v4246
  %4248 = vdwg.mxu0
  %4249 = vmatprep.subr.bf16.mxu0 %v3081
  %4250 = vmatpush1.bf16.msra.mxu0 %v3080
  %4251 = vmatprep.subr.bf16.mxu0 %v3087
  %4252 = vmatpush1.bf16.msra.mxu0 %v3086
  %4253 = vmatprep.subr.bf16.mxu0 %v3093
  %4254 = vmatpush1.bf16.msra.mxu0 %v3092
  %4255 = vmatprep.subr.bf16.mxu0 %v3099
  %4256 = vmatpush1.bf16.msra.mxu0 %v3098
  %4257 = vmatprep.subr.bf16.mxu0 %v3105
  %4258 = vmatpush1.bf16.msra.mxu0 %v3104
  %4259 = vmatprep.subr.bf16.mxu0 %v3111
  %4260 = vmatpush1.bf16.msra.mxu0 %v3110
  %4261 = vmatprep.subr.bf16.mxu0 %v3117
  %4262 = vmatpush1.bf16.msra.mxu0 %v3116
  %4263 = vmatprep.subr.bf16.mxu0 %v3123
  %4264 = vmatpush1.bf16.msra.mxu0 %v3122
  %4265 = vmatprep.subr.bf16.mxu0 %v3129
  %4266 = vmatpush1.bf16.msra.mxu0 %v3128
  %4267 = vmatprep.subr.bf16.mxu0 %v3135
  %4268 = vmatpush1.bf16.msra.mxu0 %v3134
  %4269 = vmatprep.subr.bf16.mxu0 %v3141
  %4270 = vmatpush1.bf16.msra.mxu0 %v3140
  %4271 = vmatprep.subr.bf16.mxu0 %v3147
  %4272 = vmatpush1.bf16.msra.mxu0 %v3146
  %4273 = vmatprep.subr.bf16.mxu0 %v3153
  %4274 = vmatpush1.bf16.msra.mxu0 %v3152
  %4275 = vmatprep.subr.bf16.mxu0 %v3159
  %4276 = vmatpush1.bf16.msra.mxu0 %v3158
  %4277 = vmatprep.subr.bf16.mxu0 %v3165
  %4278 = vmatpush1.bf16.msra.mxu0 %v3164
  %4279 = vmatprep.subr.bf16.mxu0 %v3171
  %4280 = vmatpush1.bf16.msra.mxu0 %v3170
  %4281 = vmatprep.mubr.bf16.mxu0 %v1067
  %4282 = vmatmul.mubr.bf16.gmra.mrb[0].mxu0 %v1066
  %v4283 = vpop.f32.mrb[0].mxu0
  %v4284 = vadd.f32 %v4171, %v4283
  %v4285 = vpop.f32.mrb[0].mxu0
  %v4286 = vadd.f32 %v4173, %v4285
  %v4287 = vpop.f32.mrb[0].mxu0
  %v4288 = vadd.f32 %v4175, %v4287
  %v4289 = vpop.f32.mrb[0].mxu0
  %v4290 = vadd.f32 %v4177, %v4289
  %4291 = vmatprep.mubr.bf16.mxu0 %v1079
  %4292 = vmatmul.mubr.bf16.gmra.mrb[0].mxu0 %v1078
  %v4293 = vpop.f32.mrb[0].mxu0
  %v4294 = vadd.f32 %v4181, %v4293
  %v4295 = vpop.f32.mrb[0].mxu0
  %v4296 = vadd.f32 %v4183, %v4295
  %v4297 = vpop.f32.mrb[0].mxu0
  %v4298 = vadd.f32 %v4185, %v4297
  %v4299 = vpop.f32.mrb[0].mxu0
  %v4300 = vadd.f32 %v4187, %v4299
  %4301 = vmatprep.mubr.bf16.mxu0 %v1091
  %4302 = vmatmul.mubr.bf16.gmra.mrb[0].mxu0 %v1090
  %v4303 = vpop.f32.mrb[0].mxu0
  %v4304 = vadd.f32 %v4191, %v4303
  %v4305 = vpop.f32.mrb[0].mxu0
  %v4306 = vadd.f32 %v4193, %v4305
  %v4307 = vpop.f32.mrb[0].mxu0
  %v4308 = vadd.f32 %v4195, %v4307
  %v4309 = vpop.f32.mrb[0].mxu0
  %v4310 = vadd.f32 %v4197, %v4309
  %4311 = vmatprep.mubr.bf16.mxu0 %v1103
  %4312 = vmatmul.mubr.bf16.gmra.mrb[0].mxu0 %v1102
  %v4313 = vpop.f32.mrb[0].mxu0
  %v4314 = vadd.f32 %v4201, %v4313
  %v4315 = vpop.f32.mrb[0].mxu0
  %v4316 = vadd.f32 %v4203, %v4315
  %v4317 = vpop.f32.mrb[0].mxu0
  %v4318 = vadd.f32 %v4205, %v4317
  %v4319 = vpop.f32.mrb[0].mxu0
  %v4320 = vadd.f32 %v4207, %v4319
  %4321 = vmatprep.mubr.bf16.mxu0 %v1115
  %4322 = vmatmul.mubr.bf16.gmra.mrb[0].mxu0 %v1114
  %v4323 = vpop.f32.mrb[0].mxu0
  %v4324 = vadd.f32 %v4211, %v4323
  %v4325 = vpop.f32.mrb[0].mxu0
  %v4326 = vadd.f32 %v4213, %v4325
  %v4327 = vpop.f32.mrb[0].mxu0
  %v4328 = vadd.f32 %v4215, %v4327
  %v4329 = vpop.f32.mrb[0].mxu0
  %v4330 = vadd.f32 %v4217, %v4329
  %4331 = vmatprep.mubr.bf16.mxu0 %v1127
  %4332 = vmatmul.mubr.bf16.gmra.mrb[0].mxu0 %v1126
  %v4333 = vpop.f32.mrb[0].mxu0
  %v4334 = vadd.f32 %v4221, %v4333
  %v4335 = vpop.f32.mrb[0].mxu0
  %v4336 = vadd.f32 %v4223, %v4335
  %v4337 = vpop.f32.mrb[0].mxu0
  %v4338 = vadd.f32 %v4225, %v4337
  %v4339 = vpop.f32.mrb[0].mxu0
  %v4340 = vadd.f32 %v4227, %v4339
  %4341 = vmatprep.mubr.bf16.mxu0 %v1139
  %4342 = vmatmul.mubr.bf16.gmra.mrb[0].mxu0 %v1138
  %v4343 = vpop.f32.mrb[0].mxu0
  %v4344 = vadd.f32 %v4231, %v4343
  %v4345 = vpop.f32.mrb[0].mxu0
  %v4346 = vadd.f32 %v4233, %v4345
  %v4347 = vpop.f32.mrb[0].mxu0
  %v4348 = vadd.f32 %v4235, %v4347
  %v4349 = vpop.f32.mrb[0].mxu0
  %v4350 = vadd.f32 %v4237, %v4349
  %4351 = vmatprep.mubr.bf16.mxu0 %v1151
  %4352 = vmatmul.mubr.bf16.gmra.mrb[0].mxu0 %v1150
  %v4353 = vpop.f32.mrb[0].mxu0
  %v4354 = vadd.f32 %v4241, %v4353
  %v4355 = vpop.f32.mrb[0].mxu0
  %v4356 = vadd.f32 %v4243, %v4355
  %v4357 = vpop.f32.mrb[0].mxu0
  %v4358 = vadd.f32 %v4245, %v4357
  %v4359 = vpop.f32.mrb[0].mxu0
  %v4360 = vadd.f32 %v4247, %v4359
  %4361 = vdwg.mxu0
  %4362 = vmatprep.subr.bf16.mxu0 %v3177
  %4363 = vmatpush1.bf16.msra.mxu0 %v3176
  %4364 = vmatprep.subr.bf16.mxu0 %v3183
  %4365 = vmatpush1.bf16.msra.mxu0 %v3182
  %4366 = vmatprep.subr.bf16.mxu0 %v3189
  %4367 = vmatpush1.bf16.msra.mxu0 %v3188
  %4368 = vmatprep.subr.bf16.mxu0 %v3195
  %4369 = vmatpush1.bf16.msra.mxu0 %v3194
  %4370 = vmatprep.subr.bf16.mxu0 %v3201
  %4371 = vmatpush1.bf16.msra.mxu0 %v3200
  %4372 = vmatprep.subr.bf16.mxu0 %v3207
  %4373 = vmatpush1.bf16.msra.mxu0 %v3206
  %4374 = vmatprep.subr.bf16.mxu0 %v3213
  %4375 = vmatpush1.bf16.msra.mxu0 %v3212
  %4376 = vmatprep.subr.bf16.mxu0 %v3219
  %4377 = vmatpush1.bf16.msra.mxu0 %v3218
  %4378 = vmatprep.subr.bf16.mxu0 %v3225
  %4379 = vmatpush1.bf16.msra.mxu0 %v3224
  %4380 = vmatprep.subr.bf16.mxu0 %v3231
  %4381 = vmatpush1.bf16.msra.mxu0 %v3230
  %4382 = vmatprep.subr.bf16.mxu0 %v3237
  %4383 = vmatpush1.bf16.msra.mxu0 %v3236
  %4384 = vmatprep.subr.bf16.mxu0 %v3243
  %4385 = vmatpush1.bf16.msra.mxu0 %v3242
  %4386 = vmatprep.subr.bf16.mxu0 %v3249
  %4387 = vmatpush1.bf16.msra.mxu0 %v3248
  %4388 = vmatprep.subr.bf16.mxu0 %v3255
  %4389 = vmatpush1.bf16.msra.mxu0 %v3254
  %4390 = vmatprep.subr.bf16.mxu0 %v3261
  %4391 = vmatpush1.bf16.msra.mxu0 %v3260
  %4392 = vmatprep.subr.bf16.mxu0 %v3267
  %4393 = vmatpush1.bf16.msra.mxu0 %v3266
  %4394 = vmatprep.mubr.bf16.mxu0 %v1069
  %4395 = vmatmul.mubr.bf16.gmra.mrb[0].mxu0 %v1068
  %v4396 = vpop.f32.mrb[0].mxu0
  %v4397 = vadd.f32 %v4284, %v4396
  %v4398 = vpop.f32.mrb[0].mxu0
  %v4399 = vadd.f32 %v4286, %v4398
  %v4400 = vpop.f32.mrb[0].mxu0
  %v4401 = vadd.f32 %v4288, %v4400
  %v4402 = vpop.f32.mrb[0].mxu0
  %v4403 = vadd.f32 %v4290, %v4402
  %4404 = vmatprep.mubr.bf16.mxu0 %v1081
  %4405 = vmatmul.mubr.bf16.gmra.mrb[0].mxu0 %v1080
  %v4406 = vpop.f32.mrb[0].mxu0
  %v4407 = vadd.f32 %v4294, %v4406
  %v4408 = vpop.f32.mrb[0].mxu0
  %v4409 = vadd.f32 %v4296, %v4408
  %v4410 = vpop.f32.mrb[0].mxu0
  %v4411 = vadd.f32 %v4298, %v4410
  %v4412 = vpop.f32.mrb[0].mxu0
  %v4413 = vadd.f32 %v4300, %v4412
  %4414 = vmatprep.mubr.bf16.mxu0 %v1093
  %4415 = vmatmul.mubr.bf16.gmra.mrb[0].mxu0 %v1092
  %v4416 = vpop.f32.mrb[0].mxu0
  %v4417 = vadd.f32 %v4304, %v4416
  %v4418 = vpop.f32.mrb[0].mxu0
  %v4419 = vadd.f32 %v4306, %v4418
  %v4420 = vpop.f32.mrb[0].mxu0
  %v4421 = vadd.f32 %v4308, %v4420
  %v4422 = vpop.f32.mrb[0].mxu0
  %v4423 = vadd.f32 %v4310, %v4422
  %4424 = vmatprep.mubr.bf16.mxu0 %v1105
  %4425 = vmatmul.mubr.bf16.gmra.mrb[0].mxu0 %v1104
  %v4426 = vpop.f32.mrb[0].mxu0
  %v4427 = vadd.f32 %v4314, %v4426
  %v4428 = vpop.f32.mrb[0].mxu0
  %v4429 = vadd.f32 %v4316, %v4428
  %v4430 = vpop.f32.mrb[0].mxu0
  %v4431 = vadd.f32 %v4318, %v4430
  %v4432 = vpop.f32.mrb[0].mxu0
  %v4433 = vadd.f32 %v4320, %v4432
  %4434 = vmatprep.mubr.bf16.mxu0 %v1117
  %4435 = vmatmul.mubr.bf16.gmra.mrb[0].mxu0 %v1116
  %v4436 = vpop.f32.mrb[0].mxu0
  %v4437 = vadd.f32 %v4324, %v4436
  %v4438 = vpop.f32.mrb[0].mxu0
  %v4439 = vadd.f32 %v4326, %v4438
  %v4440 = vpop.f32.mrb[0].mxu0
  %v4441 = vadd.f32 %v4328, %v4440
  %v4442 = vpop.f32.mrb[0].mxu0
  %v4443 = vadd.f32 %v4330, %v4442
  %4444 = vmatprep.mubr.bf16.mxu0 %v1129
  %4445 = vmatmul.mubr.bf16.gmra.mrb[0].mxu0 %v1128
  %v4446 = vpop.f32.mrb[0].mxu0
  %v4447 = vadd.f32 %v4334, %v4446
  %v4448 = vpop.f32.mrb[0].mxu0
  %v4449 = vadd.f32 %v4336, %v4448
  %v4450 = vpop.f32.mrb[0].mxu0
  %v4451 = vadd.f32 %v4338, %v4450
  %v4452 = vpop.f32.mrb[0].mxu0
  %v4453 = vadd.f32 %v4340, %v4452
  %4454 = vmatprep.mubr.bf16.mxu0 %v1141
  %4455 = vmatmul.mubr.bf16.gmra.mrb[0].mxu0 %v1140
  %v4456 = vpop.f32.mrb[0].mxu0
  %v4457 = vadd.f32 %v4344, %v4456
  %v4458 = vpop.f32.mrb[0].mxu0
  %v4459 = vadd.f32 %v4346, %v4458
  %v4460 = vpop.f32.mrb[0].mxu0
  %v4461 = vadd.f32 %v4348, %v4460
  %v4462 = vpop.f32.mrb[0].mxu0
  %v4463 = vadd.f32 %v4350, %v4462
  %4464 = vmatprep.mubr.bf16.mxu0 %v1153
  %4465 = vmatmul.mubr.bf16.gmra.mrb[0].mxu0 %v1152
  %v4466 = vpop.f32.mrb[0].mxu0
  %v4467 = vadd.f32 %v4354, %v4466
  %v4468 = vpop.f32.mrb[0].mxu0
  %v4469 = vadd.f32 %v4356, %v4468
  %v4470 = vpop.f32.mrb[0].mxu0
  %v4471 = vadd.f32 %v4358, %v4470
  %v4472 = vpop.f32.mrb[0].mxu0
  %v4473 = vadd.f32 %v4360, %v4472
  %4474 = vdwg.mxu0
  %4475 = vmatprep.subr.bf16.mxu0 %v3273
  %4476 = vmatpush1.bf16.msra.mxu0 %v3272
  %4477 = vmatprep.subr.bf16.mxu0 %v3279
  %4478 = vmatpush1.bf16.msra.mxu0 %v3278
  %4479 = vmatprep.subr.bf16.mxu0 %v3285
  %4480 = vmatpush1.bf16.msra.mxu0 %v3284
  %4481 = vmatprep.subr.bf16.mxu0 %v3291
  %4482 = vmatpush1.bf16.msra.mxu0 %v3290
  %4483 = vmatprep.subr.bf16.mxu0 %v3297
  %4484 = vmatpush1.bf16.msra.mxu0 %v3296
  %4485 = vmatprep.subr.bf16.mxu0 %v3303
  %4486 = vmatpush1.bf16.msra.mxu0 %v3302
  %4487 = vmatprep.subr.bf16.mxu0 %v3309
  %4488 = vmatpush1.bf16.msra.mxu0 %v3308
  %4489 = vmatprep.subr.bf16.mxu0 %v3315
  %4490 = vmatpush1.bf16.msra.mxu0 %v3314
  %4491 = vmatprep.subr.bf16.mxu0 %v3321
  %4492 = vmatpush1.bf16.msra.mxu0 %v3320
  %4493 = vmatprep.subr.bf16.mxu0 %v3327
  %4494 = vmatpush1.bf16.msra.mxu0 %v3326
  %4495 = vmatprep.subr.bf16.mxu0 %v3333
  %4496 = vmatpush1.bf16.msra.mxu0 %v3332
  %4497 = vmatprep.subr.bf16.mxu0 %v3339
  %4498 = vmatpush1.bf16.msra.mxu0 %v3338
  %4499 = vmatprep.subr.bf16.mxu0 %v3345
  %4500 = vmatpush1.bf16.msra.mxu0 %v3344
  %4501 = vmatprep.subr.bf16.mxu0 %v3351
  %4502 = vmatpush1.bf16.msra.mxu0 %v3350
  %4503 = vmatprep.subr.bf16.mxu0 %v3357
  %4504 = vmatpush1.bf16.msra.mxu0 %v3356
  %4505 = vmatprep.subr.bf16.mxu0 %v3363
  %4506 = vmatpush1.bf16.msra.mxu0 %v3362
  %4507 = vmatprep.mubr.bf16.mxu0 %v1071
  %4508 = vmatmul.mubr.bf16.gmra.mrb[0].mxu0 %v1070
  %v4509 = vpop.f32.mrb[0].mxu0
  %v4510 = vadd.f32 %v4397, %v4509
  %v4511 = vpop.f32.mrb[0].mxu0
  %v4512 = vadd.f32 %v4399, %v4511
  %v4513 = vpop.f32.mrb[0].mxu0
  %v4514 = vadd.f32 %v4401, %v4513
  %v4515 = vpop.f32.mrb[0].mxu0
  %v4516 = vadd.f32 %v4403, %v4515
  %4517 = vmatprep.mubr.bf16.mxu0 %v1083
  %4518 = vmatmul.mubr.bf16.gmra.mrb[0].mxu0 %v1082
  %v4519 = vpop.f32.mrb[0].mxu0
  %v4520 = vadd.f32 %v4407, %v4519
  %v4521 = vpop.f32.mrb[0].mxu0
  %v4522 = vadd.f32 %v4409, %v4521
  %v4523 = vpop.f32.mrb[0].mxu0
  %v4524 = vadd.f32 %v4411, %v4523
  %v4525 = vpop.f32.mrb[0].mxu0
  %v4526 = vadd.f32 %v4413, %v4525
  %4527 = vmatprep.mubr.bf16.mxu0 %v1095
  %4528 = vmatmul.mubr.bf16.gmra.mrb[0].mxu0 %v1094
  %v4529 = vpop.f32.mrb[0].mxu0
  %v4530 = vadd.f32 %v4417, %v4529
  %v4531 = vpop.f32.mrb[0].mxu0
  %v4532 = vadd.f32 %v4419, %v4531
  %v4533 = vpop.f32.mrb[0].mxu0
  %v4534 = vadd.f32 %v4421, %v4533
  %v4535 = vpop.f32.mrb[0].mxu0
  %v4536 = vadd.f32 %v4423, %v4535
  %4537 = vmatprep.mubr.bf16.mxu0 %v1107
  %4538 = vmatmul.mubr.bf16.gmra.mrb[0].mxu0 %v1106
  %v4539 = vpop.f32.mrb[0].mxu0
  %v4540 = vadd.f32 %v4427, %v4539
  %v4541 = vpop.f32.mrb[0].mxu0
  %v4542 = vadd.f32 %v4429, %v4541
  %v4543 = vpop.f32.mrb[0].mxu0
  %v4544 = vadd.f32 %v4431, %v4543
  %v4545 = vpop.f32.mrb[0].mxu0
  %v4546 = vadd.f32 %v4433, %v4545
  %4547 = vmatprep.mubr.bf16.mxu0 %v1119
  %4548 = vmatmul.mubr.bf16.gmra.mrb[0].mxu0 %v1118
  %v4549 = vpop.f32.mrb[0].mxu0
  %v4550 = vadd.f32 %v4437, %v4549
  %v4551 = vpop.f32.mrb[0].mxu0
  %v4552 = vadd.f32 %v4439, %v4551
  %v4553 = vpop.f32.mrb[0].mxu0
  %v4554 = vadd.f32 %v4441, %v4553
  %v4555 = vpop.f32.mrb[0].mxu0
  %v4556 = vadd.f32 %v4443, %v4555
  %4557 = vmatprep.mubr.bf16.mxu0 %v1131
  %4558 = vmatmul.mubr.bf16.gmra.mrb[0].mxu0 %v1130
  %v4559 = vpop.f32.mrb[0].mxu0
  %v4560 = vadd.f32 %v4447, %v4559
  %v4561 = vpop.f32.mrb[0].mxu0
  %v4562 = vadd.f32 %v4449, %v4561
  %v4563 = vpop.f32.mrb[0].mxu0
  %v4564 = vadd.f32 %v4451, %v4563
  %v4565 = vpop.f32.mrb[0].mxu0
  %v4566 = vadd.f32 %v4453, %v4565
  %4567 = vmatprep.mubr.bf16.mxu0 %v1143
  %4568 = vmatmul.mubr.bf16.gmra.mrb[0].mxu0 %v1142
  %v4569 = vpop.f32.mrb[0].mxu0
  %v4570 = vadd.f32 %v4457, %v4569
  %v4571 = vpop.f32.mrb[0].mxu0
  %v4572 = vadd.f32 %v4459, %v4571
  %v4573 = vpop.f32.mrb[0].mxu0
  %v4574 = vadd.f32 %v4461, %v4573
  %v4575 = vpop.f32.mrb[0].mxu0
  %v4576 = vadd.f32 %v4463, %v4575
  %4577 = vmatprep.mubr.bf16.mxu0 %v1155
  %4578 = vmatmul.mubr.bf16.gmra.mrb[0].mxu0 %v1154
  %v4579 = vpop.f32.mrb[0].mxu0
  %v4580 = vadd.f32 %v4467, %v4579
  %v4581 = vpop.f32.mrb[0].mxu0
  %v4582 = vadd.f32 %v4469, %v4581
  %v4583 = vpop.f32.mrb[0].mxu0
  %v4584 = vadd.f32 %v4471, %v4583
  %v4585 = vpop.f32.mrb[0].mxu0
  %v4586 = vadd.f32 %v4473, %v4585
  %4587 = vdwg.mxu0
  %4588 = vmatprep.subr.bf16.mxu0 %v3369
  %4589 = vmatpush1.bf16.msra.mxu0 %v3368
  %4590 = vmatprep.subr.bf16.mxu0 %v3375
  %4591 = vmatpush1.bf16.msra.mxu0 %v3374
  %4592 = vmatprep.subr.bf16.mxu0 %v3381
  %4593 = vmatpush1.bf16.msra.mxu0 %v3380
  %4594 = vmatprep.subr.bf16.mxu0 %v3387
  %4595 = vmatpush1.bf16.msra.mxu0 %v3386
  %4596 = vmatprep.subr.bf16.mxu0 %v3393
  %4597 = vmatpush1.bf16.msra.mxu0 %v3392
  %4598 = vmatprep.subr.bf16.mxu0 %v3399
  %4599 = vmatpush1.bf16.msra.mxu0 %v3398
  %4600 = vmatprep.subr.bf16.mxu0 %v3405
  %4601 = vmatpush1.bf16.msra.mxu0 %v3404
  %4602 = vmatprep.subr.bf16.mxu0 %v3411
  %4603 = vmatpush1.bf16.msra.mxu0 %v3410
  %4604 = vmatprep.subr.bf16.mxu0 %v3417
  %4605 = vmatpush1.bf16.msra.mxu0 %v3416
  %4606 = vmatprep.subr.bf16.mxu0 %v3423
  %4607 = vmatpush1.bf16.msra.mxu0 %v3422
  %4608 = vmatprep.subr.bf16.mxu0 %v3429
  %4609 = vmatpush1.bf16.msra.mxu0 %v3428
  %4610 = vmatprep.subr.bf16.mxu0 %v3435
  %4611 = vmatpush1.bf16.msra.mxu0 %v3434
  %4612 = vmatprep.subr.bf16.mxu0 %v3441
  %4613 = vmatpush1.bf16.msra.mxu0 %v3440
  %4614 = vmatprep.subr.bf16.mxu0 %v3447
  %4615 = vmatpush1.bf16.msra.mxu0 %v3446
  %4616 = vmatprep.subr.bf16.mxu0 %v3453
  %4617 = vmatpush1.bf16.msra.mxu0 %v3452
  %4618 = vmatprep.subr.bf16.mxu0 %v3459
  %4619 = vmatpush1.bf16.msra.mxu0 %v3458
  %4620 = vmatprep.mubr.bf16.mxu0 %v1073
  %4621 = vmatmul.mubr.bf16.gmra.mrb[0].mxu0 %v1072
  %v4622 = vpop.f32.mrb[0].mxu0
  %v4623 = vadd.f32 %v4510, %v4622
  %v4624 = vpop.f32.mrb[0].mxu0
  %v4625 = vadd.f32 %v4512, %v4624
  %v4626 = vpop.f32.mrb[0].mxu0
  %v4627 = vadd.f32 %v4514, %v4626
  %v4628 = vpop.f32.mrb[0].mxu0
  %v4629 = vadd.f32 %v4516, %v4628
  %4630 = vmatprep.mubr.bf16.mxu0 %v1085
  %4631 = vmatmul.mubr.bf16.gmra.mrb[0].mxu0 %v1084
  %v4632 = vpop.f32.mrb[0].mxu0
  %v4633 = vadd.f32 %v4520, %v4632
  %v4634 = vpop.f32.mrb[0].mxu0
  %v4635 = vadd.f32 %v4522, %v4634
  %v4636 = vpop.f32.mrb[0].mxu0
  %v4637 = vadd.f32 %v4524, %v4636
  %v4638 = vpop.f32.mrb[0].mxu0
  %v4639 = vadd.f32 %v4526, %v4638
  %4640 = vmatprep.mubr.bf16.mxu0 %v1097
  %4641 = vmatmul.mubr.bf16.gmra.mrb[0].mxu0 %v1096
  %v4642 = vpop.f32.mrb[0].mxu0
  %v4643 = vadd.f32 %v4530, %v4642
  %v4644 = vpop.f32.mrb[0].mxu0
  %v4645 = vadd.f32 %v4532, %v4644
  %v4646 = vpop.f32.mrb[0].mxu0
  %v4647 = vadd.f32 %v4534, %v4646
  %v4648 = vpop.f32.mrb[0].mxu0
  %v4649 = vadd.f32 %v4536, %v4648
  %4650 = vmatprep.mubr.bf16.mxu0 %v1109
  %4651 = vmatmul.mubr.bf16.gmra.mrb[0].mxu0 %v1108
  %v4652 = vpop.f32.mrb[0].mxu0
  %v4653 = vadd.f32 %v4540, %v4652
  %v4654 = vpop.f32.mrb[0].mxu0
  %v4655 = vadd.f32 %v4542, %v4654
  %v4656 = vpop.f32.mrb[0].mxu0
  %v4657 = vadd.f32 %v4544, %v4656
  %v4658 = vpop.f32.mrb[0].mxu0
  %v4659 = vadd.f32 %v4546, %v4658
  %4660 = vmatprep.mubr.bf16.mxu0 %v1121
  %4661 = vmatmul.mubr.bf16.gmra.mrb[0].mxu0 %v1120
  %v4662 = vpop.f32.mrb[0].mxu0
  %v4663 = vadd.f32 %v4550, %v4662
  %v4664 = vpop.f32.mrb[0].mxu0
  %v4665 = vadd.f32 %v4552, %v4664
  %v4666 = vpop.f32.mrb[0].mxu0
  %v4667 = vadd.f32 %v4554, %v4666
  %v4668 = vpop.f32.mrb[0].mxu0
  %v4669 = vadd.f32 %v4556, %v4668
  %4670 = vmatprep.mubr.bf16.mxu0 %v1133
  %4671 = vmatmul.mubr.bf16.gmra.mrb[0].mxu0 %v1132
  %v4672 = vpop.f32.mrb[0].mxu0
  %v4673 = vadd.f32 %v4560, %v4672
  %v4674 = vpop.f32.mrb[0].mxu0
  %v4675 = vadd.f32 %v4562, %v4674
  %v4676 = vpop.f32.mrb[0].mxu0
  %v4677 = vadd.f32 %v4564, %v4676
  %v4678 = vpop.f32.mrb[0].mxu0
  %v4679 = vadd.f32 %v4566, %v4678
  %4680 = vmatprep.mubr.bf16.mxu0 %v1145
  %4681 = vmatmul.mubr.bf16.gmra.mrb[0].mxu0 %v1144
  %v4682 = vpop.f32.mrb[0].mxu0
  %v4683 = vadd.f32 %v4570, %v4682
  %v4684 = vpop.f32.mrb[0].mxu0
  %v4685 = vadd.f32 %v4572, %v4684
  %v4686 = vpop.f32.mrb[0].mxu0
  %v4687 = vadd.f32 %v4574, %v4686
  %v4688 = vpop.f32.mrb[0].mxu0
  %v4689 = vadd.f32 %v4576, %v4688
  %4690 = vmatprep.mubr.bf16.mxu0 %v1157
  %4691 = vmatmul.mubr.bf16.gmra.mrb[0].mxu0 %v1156
  %v4692 = vpop.f32.mrb[0].mxu0
  %v4693 = vadd.f32 %v4580, %v4692
  %v4694 = vpop.f32.mrb[0].mxu0
  %v4695 = vadd.f32 %v4582, %v4694
  %v4696 = vpop.f32.mrb[0].mxu0
  %v4697 = vadd.f32 %v4584, %v4696
  %v4698 = vpop.f32.mrb[0].mxu0
  %v4699 = vadd.f32 %v4586, %v4698
  %4700 = vdwg.mxu0
  %4701 = vmatprep.subr.bf16.mxu0 %v3465
  %4702 = vmatpush1.bf16.msra.mxu0 %v3464
  %4703 = vmatprep.subr.bf16.mxu0 %v3471
  %4704 = vmatpush1.bf16.msra.mxu0 %v3470
  %4705 = vmatprep.subr.bf16.mxu0 %v3477
  %4706 = vmatpush1.bf16.msra.mxu0 %v3476
  %4707 = vmatprep.subr.bf16.mxu0 %v3483
  %4708 = vmatpush1.bf16.msra.mxu0 %v3482
  %4709 = vmatprep.subr.bf16.mxu0 %v3489
  %4710 = vmatpush1.bf16.msra.mxu0 %v3488
  %4711 = vmatprep.subr.bf16.mxu0 %v3495
  %4712 = vmatpush1.bf16.msra.mxu0 %v3494
  %4713 = vmatprep.subr.bf16.mxu0 %v3501
  %4714 = vmatpush1.bf16.msra.mxu0 %v3500
  %4715 = vmatprep.subr.bf16.mxu0 %v3507
  %4716 = vmatpush1.bf16.msra.mxu0 %v3506
  %4717 = vmatprep.subr.bf16.mxu0 %v3513
  %4718 = vmatpush1.bf16.msra.mxu0 %v3512
  %4719 = vmatprep.subr.bf16.mxu0 %v3519
  %4720 = vmatpush1.bf16.msra.mxu0 %v3518
  %4721 = vmatprep.subr.bf16.mxu0 %v3525
  %4722 = vmatpush1.bf16.msra.mxu0 %v3524
  %4723 = vmatprep.subr.bf16.mxu0 %v3531
  %4724 = vmatpush1.bf16.msra.mxu0 %v3530
  %4725 = vmatprep.subr.bf16.mxu0 %v3537
  %4726 = vmatpush1.bf16.msra.mxu0 %v3536
  %4727 = vmatprep.subr.bf16.mxu0 %v3543
  %4728 = vmatpush1.bf16.msra.mxu0 %v3542
  %4729 = vmatprep.subr.bf16.mxu0 %v3549
  %4730 = vmatpush1.bf16.msra.mxu0 %v3548
  %4731 = vmatprep.subr.bf16.mxu0 %v3555
  %4732 = vmatpush1.bf16.msra.mxu0 %v3554
  %4733 = vmatprep.mubr.bf16.mxu0 %v1075
  %4734 = vmatmul.mubr.bf16.gmra.mrb[0].mxu0 %v1074
  %v4735 = vpop.f32.mrb[0].mxu0
  %v4736 = vadd.f32 %v4623, %v4735
  %v4737 = vpop.f32.mrb[0].mxu0
  %v4738 = vadd.f32 %v4625, %v4737
  %v4739 = vpop.f32.mrb[0].mxu0
  %v4740 = vadd.f32 %v4627, %v4739
  %v4741 = vpop.f32.mrb[0].mxu0
  %v4742 = vadd.f32 %v4629, %v4741
  %4743 = vmatprep.mubr.bf16.mxu0 %v1087
  %4744 = vmatmul.mubr.bf16.gmra.mrb[0].mxu0 %v1086
  %v4745 = vpop.f32.mrb[0].mxu0
  %v4746 = vadd.f32 %v4633, %v4745
  %v4747 = vpop.f32.mrb[0].mxu0
  %v4748 = vadd.f32 %v4635, %v4747
  %v4749 = vpop.f32.mrb[0].mxu0
  %v4750 = vadd.f32 %v4637, %v4749
  %v4751 = vpop.f32.mrb[0].mxu0
  %v4752 = vadd.f32 %v4639, %v4751
  %4753 = vmatprep.mubr.bf16.mxu0 %v1099
  %4754 = vmatmul.mubr.bf16.gmra.mrb[0].mxu0 %v1098
  %v4755 = vpop.f32.mrb[0].mxu0
  %v4756 = vadd.f32 %v4643, %v4755
  %v4757 = vpop.f32.mrb[0].mxu0
  %v4758 = vadd.f32 %v4645, %v4757
  %v4759 = vpop.f32.mrb[0].mxu0
  %v4760 = vadd.f32 %v4647, %v4759
  %v4761 = vpop.f32.mrb[0].mxu0
  %v4762 = vadd.f32 %v4649, %v4761
  %4763 = vmatprep.mubr.bf16.mxu0 %v1111
  %4764 = vmatmul.mubr.bf16.gmra.mrb[0].mxu0 %v1110
  %v4765 = vpop.f32.mrb[0].mxu0
  %v4766 = vadd.f32 %v4653, %v4765
  %v4767 = vpop.f32.mrb[0].mxu0
  %v4768 = vadd.f32 %v4655, %v4767
  %v4769 = vpop.f32.mrb[0].mxu0
  %v4770 = vadd.f32 %v4657, %v4769
  %v4771 = vpop.f32.mrb[0].mxu0
  %v4772 = vadd.f32 %v4659, %v4771
  %4773 = vmatprep.mubr.bf16.mxu0 %v1123
  %4774 = vmatmul.mubr.bf16.gmra.mrb[0].mxu0 %v1122
  %v4775 = vpop.f32.mrb[0].mxu0
  %v4776 = vadd.f32 %v4663, %v4775
  %v4777 = vpop.f32.mrb[0].mxu0
  %v4778 = vadd.f32 %v4665, %v4777
  %v4779 = vpop.f32.mrb[0].mxu0
  %v4780 = vadd.f32 %v4667, %v4779
  %v4781 = vpop.f32.mrb[0].mxu0
  %v4782 = vadd.f32 %v4669, %v4781
  %4783 = vmatprep.mubr.bf16.mxu0 %v1135
  %4784 = vmatmul.mubr.bf16.gmra.mrb[0].mxu0 %v1134
  %v4785 = vpop.f32.mrb[0].mxu0
  %v4786 = vadd.f32 %v4673, %v4785
  %v4787 = vpop.f32.mrb[0].mxu0
  %v4788 = vadd.f32 %v4675, %v4787
  %v4789 = vpop.f32.mrb[0].mxu0
  %v4790 = vadd.f32 %v4677, %v4789
  %v4791 = vpop.f32.mrb[0].mxu0
  %v4792 = vadd.f32 %v4679, %v4791
  %4793 = vmatprep.mubr.bf16.mxu0 %v1147
  %4794 = vmatmul.mubr.bf16.gmra.mrb[0].mxu0 %v1146
  %v4795 = vpop.f32.mrb[0].mxu0
  %v4796 = vadd.f32 %v4683, %v4795
  %v4797 = vpop.f32.mrb[0].mxu0
  %v4798 = vadd.f32 %v4685, %v4797
  %v4799 = vpop.f32.mrb[0].mxu0
  %v4800 = vadd.f32 %v4687, %v4799
  %v4801 = vpop.f32.mrb[0].mxu0
  %v4802 = vadd.f32 %v4689, %v4801
  %4803 = vmatprep.mubr.bf16.mxu0 %v1159
  %4804 = vmatmul.mubr.bf16.gmra.mrb[0].mxu0 %v1158
  %v4805 = vpop.f32.mrb[0].mxu0
  %v4806 = vadd.f32 %v4693, %v4805
  %v4807 = vpop.f32.mrb[0].mxu0
  %v4808 = vadd.f32 %v4695, %v4807
  %v4809 = vpop.f32.mrb[0].mxu0
  %v4810 = vadd.f32 %v4697, %v4809
  %v4811 = vpop.f32.mrb[0].mxu0
  %v4812 = vadd.f32 %v4699, %v4811
  %4813 = vdwg.mxu0
  %4814 = vmatprep.subr.bf16.mxu0 %v2987
  %4815 = vmatpush1.bf16.msra.mxu0 %v2986
  %4816 = vmatprep.subr.bf16.mxu0 %v2993
  %4817 = vmatpush1.bf16.msra.mxu0 %v2992
  %4818 = vmatprep.subr.bf16.mxu0 %v2999
  %4819 = vmatpush1.bf16.msra.mxu0 %v2998
  %4820 = vmatprep.subr.bf16.mxu0 %v3005
  %4821 = vmatpush1.bf16.msra.mxu0 %v3004
  %4822 = vmatprep.subr.bf16.mxu0 %v3011
  %4823 = vmatpush1.bf16.msra.mxu0 %v3010
  %4824 = vmatprep.subr.bf16.mxu0 %v3017
  %4825 = vmatpush1.bf16.msra.mxu0 %v3016
  %4826 = vmatprep.subr.bf16.mxu0 %v3023
  %4827 = vmatpush1.bf16.msra.mxu0 %v3022
  %4828 = vmatprep.subr.bf16.mxu0 %v3029
  %4829 = vmatpush1.bf16.msra.mxu0 %v3028
  %4830 = vmatprep.subr.bf16.mxu0 %v3035
  %4831 = vmatpush1.bf16.msra.mxu0 %v3034
  %4832 = vmatprep.subr.bf16.mxu0 %v3041
  %4833 = vmatpush1.bf16.msra.mxu0 %v3040
  %4834 = vmatprep.subr.bf16.mxu0 %v3047
  %4835 = vmatpush1.bf16.msra.mxu0 %v3046
  %4836 = vmatprep.subr.bf16.mxu0 %v3053
  %4837 = vmatpush1.bf16.msra.mxu0 %v3052
  %4838 = vmatprep.subr.bf16.mxu0 %v3059
  %4839 = vmatpush1.bf16.msra.mxu0 %v3058
  %4840 = vmatprep.subr.bf16.mxu0 %v3065
  %4841 = vmatpush1.bf16.msra.mxu0 %v3064
  %4842 = vmatprep.subr.bf16.mxu0 %v3071
  %4843 = vmatpush1.bf16.msra.mxu0 %v3070
  %4844 = vmatprep.subr.bf16.mxu0 %v3077
  %4845 = vmatpush1.bf16.msra.mxu0 %v3076
  %4846 = vmatprep.mubr.bf16.mxu0 %v1065
  %4847 = vmatmul.mubr.bf16.gmra.mrb[0].mxu0 %v1064
  %v4848 = vpop.f32.mrb[0].mxu0
  %v4849 = vadd.f32 %v757, %v4848
  %v4850 = vpop.f32.mrb[0].mxu0
  %v4851 = vadd.f32 %v761, %v4850
  %v4852 = vpop.f32.mrb[0].mxu0
  %v4853 = vadd.f32 %v757, %v4852
  %v4854 = vpop.f32.mrb[0].mxu0
  %v4855 = vadd.f32 %v761, %v4854
  %4856 = vmatprep.mubr.bf16.mxu0 %v1077
  %4857 = vmatmul.mubr.bf16.gmra.mrb[0].mxu0 %v1076
  %v4858 = vpop.f32.mrb[0].mxu0
  %v4859 = vadd.f32 %v757, %v4858
  %v4860 = vpop.f32.mrb[0].mxu0
  %v4861 = vadd.f32 %v761, %v4860
  %v4862 = vpop.f32.mrb[0].mxu0
  %v4863 = vadd.f32 %v757, %v4862
  %v4864 = vpop.f32.mrb[0].mxu0
  %v4865 = vadd.f32 %v761, %v4864
  %4866 = vmatprep.mubr.bf16.mxu0 %v1089
  %4867 = vmatmul.mubr.bf16.gmra.mrb[0].mxu0 %v1088
  %v4868 = vpop.f32.mrb[0].mxu0
  %v4869 = vadd.f32 %v757, %v4868
  %v4870 = vpop.f32.mrb[0].mxu0
  %v4871 = vadd.f32 %v761, %v4870
  %v4872 = vpop.f32.mrb[0].mxu0
  %v4873 = vadd.f32 %v757, %v4872
  %v4874 = vpop.f32.mrb[0].mxu0
  %v4875 = vadd.f32 %v761, %v4874
  %4876 = vmatprep.mubr.bf16.mxu0 %v1101
  %4877 = vmatmul.mubr.bf16.gmra.mrb[0].mxu0 %v1100
  %v4878 = vpop.f32.mrb[0].mxu0
  %v4879 = vadd.f32 %v757, %v4878
  %v4880 = vpop.f32.mrb[0].mxu0
  %v4881 = vadd.f32 %v761, %v4880
  %v4882 = vpop.f32.mrb[0].mxu0
  %v4883 = vadd.f32 %v757, %v4882
  %v4884 = vpop.f32.mrb[0].mxu0
  %v4885 = vadd.f32 %v761, %v4884
  %4886 = vmatprep.mubr.bf16.mxu0 %v1113
  %4887 = vmatmul.mubr.bf16.gmra.mrb[0].mxu0 %v1112
  %v4888 = vpop.f32.mrb[0].mxu0
  %v4889 = vadd.f32 %v757, %v4888
  %v4890 = vpop.f32.mrb[0].mxu0
  %v4891 = vadd.f32 %v761, %v4890
  %v4892 = vpop.f32.mrb[0].mxu0
  %v4893 = vadd.f32 %v757, %v4892
  %v4894 = vpop.f32.mrb[0].mxu0
  %v4895 = vadd.f32 %v761, %v4894
  %4896 = vmatprep.mubr.bf16.mxu0 %v1125
  %4897 = vmatmul.mubr.bf16.gmra.mrb[0].mxu0 %v1124
  %v4898 = vpop.f32.mrb[0].mxu0
  %v4899 = vadd.f32 %v757, %v4898
  %v4900 = vpop.f32.mrb[0].mxu0
  %v4901 = vadd.f32 %v761, %v4900
  %v4902 = vpop.f32.mrb[0].mxu0
  %v4903 = vadd.f32 %v757, %v4902
  %v4904 = vpop.f32.mrb[0].mxu0
  %v4905 = vadd.f32 %v761, %v4904
  %4906 = vmatprep.mubr.bf16.mxu0 %v1137
  %4907 = vmatmul.mubr.bf16.gmra.mrb[0].mxu0 %v1136
  %v4908 = vpop.f32.mrb[0].mxu0
  %v4909 = vadd.f32 %v757, %v4908
  %v4910 = vpop.f32.mrb[0].mxu0
  %v4911 = vadd.f32 %v761, %v4910
  %v4912 = vpop.f32.mrb[0].mxu0
  %v4913 = vadd.f32 %v757, %v4912
  %v4914 = vpop.f32.mrb[0].mxu0
  %v4915 = vadd.f32 %v761, %v4914
  %4916 = vmatprep.mubr.bf16.mxu0 %v1149
  %4917 = vmatmul.mubr.bf16.gmra.mrb[0].mxu0 %v1148
  %v4918 = vpop.f32.mrb[0].mxu0
  %v4919 = vadd.f32 %v757, %v4918
  %v4920 = vpop.f32.mrb[0].mxu0
  %v4921 = vadd.f32 %v761, %v4920
  %v4922 = vpop.f32.mrb[0].mxu0
  %v4923 = vadd.f32 %v757, %v4922
  %v4924 = vpop.f32.mrb[0].mxu0
  %v4925 = vadd.f32 %v761, %v4924
  %4926 = vdwg.mxu0
  %4927 = vmatprep.subr.bf16.mxu0 %v3083
  %4928 = vmatpush1.bf16.msra.mxu0 %v3082
  %4929 = vmatprep.subr.bf16.mxu0 %v3089
  %4930 = vmatpush1.bf16.msra.mxu0 %v3088
  %4931 = vmatprep.subr.bf16.mxu0 %v3095
  %4932 = vmatpush1.bf16.msra.mxu0 %v3094
  %4933 = vmatprep.subr.bf16.mxu0 %v3101
  %4934 = vmatpush1.bf16.msra.mxu0 %v3100
  %4935 = vmatprep.subr.bf16.mxu0 %v3107
  %4936 = vmatpush1.bf16.msra.mxu0 %v3106
  %4937 = vmatprep.subr.bf16.mxu0 %v3113
  %4938 = vmatpush1.bf16.msra.mxu0 %v3112
  %4939 = vmatprep.subr.bf16.mxu0 %v3119
  %4940 = vmatpush1.bf16.msra.mxu0 %v3118
  %4941 = vmatprep.subr.bf16.mxu0 %v3125
  %4942 = vmatpush1.bf16.msra.mxu0 %v3124
  %4943 = vmatprep.subr.bf16.mxu0 %v3131
  %4944 = vmatpush1.bf16.msra.mxu0 %v3130
  %4945 = vmatprep.subr.bf16.mxu0 %v3137
  %4946 = vmatpush1.bf16.msra.mxu0 %v3136
  %4947 = vmatprep.subr.bf16.mxu0 %v3143
  %4948 = vmatpush1.bf16.msra.mxu0 %v3142
  %4949 = vmatprep.subr.bf16.mxu0 %v3149
  %4950 = vmatpush1.bf16.msra.mxu0 %v3148
  %4951 = vmatprep.subr.bf16.mxu0 %v3155
  %4952 = vmatpush1.bf16.msra.mxu0 %v3154
  %4953 = vmatprep.subr.bf16.mxu0 %v3161
  %4954 = vmatpush1.bf16.msra.mxu0 %v3160
  %4955 = vmatprep.subr.bf16.mxu0 %v3167
  %4956 = vmatpush1.bf16.msra.mxu0 %v3166
  %4957 = vmatprep.subr.bf16.mxu0 %v3173
  %4958 = vmatpush1.bf16.msra.mxu0 %v3172
  %4959 = vmatprep.mubr.bf16.mxu0 %v1067
  %4960 = vmatmul.mubr.bf16.gmra.mrb[0].mxu0 %v1066
  %v4961 = vpop.f32.mrb[0].mxu0
  %v4962 = vadd.f32 %v4849, %v4961
  %v4963 = vpop.f32.mrb[0].mxu0
  %v4964 = vadd.f32 %v4851, %v4963
  %v4965 = vpop.f32.mrb[0].mxu0
  %v4966 = vadd.f32 %v4853, %v4965
  %v4967 = vpop.f32.mrb[0].mxu0
  %v4968 = vadd.f32 %v4855, %v4967
  %4969 = vmatprep.mubr.bf16.mxu0 %v1079
  %4970 = vmatmul.mubr.bf16.gmra.mrb[0].mxu0 %v1078
  %v4971 = vpop.f32.mrb[0].mxu0
  %v4972 = vadd.f32 %v4859, %v4971
  %v4973 = vpop.f32.mrb[0].mxu0
  %v4974 = vadd.f32 %v4861, %v4973
  %v4975 = vpop.f32.mrb[0].mxu0
  %v4976 = vadd.f32 %v4863, %v4975
  %v4977 = vpop.f32.mrb[0].mxu0
  %v4978 = vadd.f32 %v4865, %v4977
  %4979 = vmatprep.mubr.bf16.mxu0 %v1091
  %4980 = vmatmul.mubr.bf16.gmra.mrb[0].mxu0 %v1090
  %v4981 = vpop.f32.mrb[0].mxu0
  %v4982 = vadd.f32 %v4869, %v4981
  %v4983 = vpop.f32.mrb[0].mxu0
  %v4984 = vadd.f32 %v4871, %v4983
  %v4985 = vpop.f32.mrb[0].mxu0
  %v4986 = vadd.f32 %v4873, %v4985
  %v4987 = vpop.f32.mrb[0].mxu0
  %v4988 = vadd.f32 %v4875, %v4987
  %4989 = vmatprep.mubr.bf16.mxu0 %v1103
  %4990 = vmatmul.mubr.bf16.gmra.mrb[0].mxu0 %v1102
  %v4991 = vpop.f32.mrb[0].mxu0
  %v4992 = vadd.f32 %v4879, %v4991
  %v4993 = vpop.f32.mrb[0].mxu0
  %v4994 = vadd.f32 %v4881, %v4993
  %v4995 = vpop.f32.mrb[0].mxu0
  %v4996 = vadd.f32 %v4883, %v4995
  %v4997 = vpop.f32.mrb[0].mxu0
  %v4998 = vadd.f32 %v4885, %v4997
  %4999 = vmatprep.mubr.bf16.mxu0 %v1115
  %5000 = vmatmul.mubr.bf16.gmra.mrb[0].mxu0 %v1114
  %v5001 = vpop.f32.mrb[0].mxu0
  %v5002 = vadd.f32 %v4889, %v5001
  %v5003 = vpop.f32.mrb[0].mxu0
  %v5004 = vadd.f32 %v4891, %v5003
  %v5005 = vpop.f32.mrb[0].mxu0
  %v5006 = vadd.f32 %v4893, %v5005
  %v5007 = vpop.f32.mrb[0].mxu0
  %v5008 = vadd.f32 %v4895, %v5007
  %5009 = vmatprep.mubr.bf16.mxu0 %v1127
  %5010 = vmatmul.mubr.bf16.gmra.mrb[0].mxu0 %v1126
  %v5011 = vpop.f32.mrb[0].mxu0
  %v5012 = vadd.f32 %v4899, %v5011
  %v5013 = vpop.f32.mrb[0].mxu0
  %v5014 = vadd.f32 %v4901, %v5013
  %v5015 = vpop.f32.mrb[0].mxu0
  %v5016 = vadd.f32 %v4903, %v5015
  %v5017 = vpop.f32.mrb[0].mxu0
  %v5018 = vadd.f32 %v4905, %v5017
  %5019 = vmatprep.mubr.bf16.mxu0 %v1139
  %5020 = vmatmul.mubr.bf16.gmra.mrb[0].mxu0 %v1138
  %v5021 = vpop.f32.mrb[0].mxu0
  %v5022 = vadd.f32 %v4909, %v5021
  %v5023 = vpop.f32.mrb[0].mxu0
  %v5024 = vadd.f32 %v4911, %v5023
  %v5025 = vpop.f32.mrb[0].mxu0
  %v5026 = vadd.f32 %v4913, %v5025
  %v5027 = vpop.f32.mrb[0].mxu0
  %v5028 = vadd.f32 %v4915, %v5027
  %5029 = vmatprep.mubr.bf16.mxu0 %v1151
  %5030 = vmatmul.mubr.bf16.gmra.mrb[0].mxu0 %v1150
  %v5031 = vpop.f32.mrb[0].mxu0
  %v5032 = vadd.f32 %v4919, %v5031
  %v5033 = vpop.f32.mrb[0].mxu0
  %v5034 = vadd.f32 %v4921, %v5033
  %v5035 = vpop.f32.mrb[0].mxu0
  %v5036 = vadd.f32 %v4923, %v5035
  %v5037 = vpop.f32.mrb[0].mxu0
  %v5038 = vadd.f32 %v4925, %v5037
  %5039 = vdwg.mxu0
  %5040 = vmatprep.subr.bf16.mxu0 %v3179
  %5041 = vmatpush1.bf16.msra.mxu0 %v3178
  %5042 = vmatprep.subr.bf16.mxu0 %v3185
  %5043 = vmatpush1.bf16.msra.mxu0 %v3184
  %5044 = vmatprep.subr.bf16.mxu0 %v3191
  %5045 = vmatpush1.bf16.msra.mxu0 %v3190
  %5046 = vmatprep.subr.bf16.mxu0 %v3197
  %5047 = vmatpush1.bf16.msra.mxu0 %v3196
  %5048 = vmatprep.subr.bf16.mxu0 %v3203
  %5049 = vmatpush1.bf16.msra.mxu0 %v3202
  %5050 = vmatprep.subr.bf16.mxu0 %v3209
  %5051 = vmatpush1.bf16.msra.mxu0 %v3208
  %5052 = vmatprep.subr.bf16.mxu0 %v3215
  %5053 = vmatpush1.bf16.msra.mxu0 %v3214
  %5054 = vmatprep.subr.bf16.mxu0 %v3221
  %5055 = vmatpush1.bf16.msra.mxu0 %v3220
  %5056 = vmatprep.subr.bf16.mxu0 %v3227
  %5057 = vmatpush1.bf16.msra.mxu0 %v3226
  %5058 = vmatprep.subr.bf16.mxu0 %v3233
  %5059 = vmatpush1.bf16.msra.mxu0 %v3232
  %5060 = vmatprep.subr.bf16.mxu0 %v3239
  %5061 = vmatpush1.bf16.msra.mxu0 %v3238
  %5062 = vmatprep.subr.bf16.mxu0 %v3245
  %5063 = vmatpush1.bf16.msra.mxu0 %v3244
  %5064 = vmatprep.subr.bf16.mxu0 %v3251
  %5065 = vmatpush1.bf16.msra.mxu0 %v3250
  %5066 = vmatprep.subr.bf16.mxu0 %v3257
  %5067 = vmatpush1.bf16.msra.mxu0 %v3256
  %5068 = vmatprep.subr.bf16.mxu0 %v3263
  %5069 = vmatpush1.bf16.msra.mxu0 %v3262
  %5070 = vmatprep.subr.bf16.mxu0 %v3269
  %5071 = vmatpush1.bf16.msra.mxu0 %v3268
  %5072 = vmatprep.mubr.bf16.mxu0 %v1069
  %5073 = vmatmul.mubr.bf16.gmra.mrb[0].mxu0 %v1068
  %v5074 = vpop.f32.mrb[0].mxu0
  %v5075 = vadd.f32 %v4962, %v5074
  %v5076 = vpop.f32.mrb[0].mxu0
  %v5077 = vadd.f32 %v4964, %v5076
  %v5078 = vpop.f32.mrb[0].mxu0
  %v5079 = vadd.f32 %v4966, %v5078
  %v5080 = vpop.f32.mrb[0].mxu0
  %v5081 = vadd.f32 %v4968, %v5080
  %5082 = vmatprep.mubr.bf16.mxu0 %v1081
  %5083 = vmatmul.mubr.bf16.gmra.mrb[0].mxu0 %v1080
  %v5084 = vpop.f32.mrb[0].mxu0
  %v5085 = vadd.f32 %v4972, %v5084
  %v5086 = vpop.f32.mrb[0].mxu0
  %v5087 = vadd.f32 %v4974, %v5086
  %v5088 = vpop.f32.mrb[0].mxu0
  %v5089 = vadd.f32 %v4976, %v5088
  %v5090 = vpop.f32.mrb[0].mxu0
  %v5091 = vadd.f32 %v4978, %v5090
  %5092 = vmatprep.mubr.bf16.mxu0 %v1093
  %5093 = vmatmul.mubr.bf16.gmra.mrb[0].mxu0 %v1092
  %v5094 = vpop.f32.mrb[0].mxu0
  %v5095 = vadd.f32 %v4982, %v5094
  %v5096 = vpop.f32.mrb[0].mxu0
  %v5097 = vadd.f32 %v4984, %v5096
  %v5098 = vpop.f32.mrb[0].mxu0
  %v5099 = vadd.f32 %v4986, %v5098
  %v5100 = vpop.f32.mrb[0].mxu0
  %v5101 = vadd.f32 %v4988, %v5100
  %5102 = vmatprep.mubr.bf16.mxu0 %v1105
  %5103 = vmatmul.mubr.bf16.gmra.mrb[0].mxu0 %v1104
  %v5104 = vpop.f32.mrb[0].mxu0
  %v5105 = vadd.f32 %v4992, %v5104
  %v5106 = vpop.f32.mrb[0].mxu0
  %v5107 = vadd.f32 %v4994, %v5106
  %v5108 = vpop.f32.mrb[0].mxu0
  %v5109 = vadd.f32 %v4996, %v5108
  %v5110 = vpop.f32.mrb[0].mxu0
  %v5111 = vadd.f32 %v4998, %v5110
  %5112 = vmatprep.mubr.bf16.mxu0 %v1117
  %5113 = vmatmul.mubr.bf16.gmra.mrb[0].mxu0 %v1116
  %v5114 = vpop.f32.mrb[0].mxu0
  %v5115 = vadd.f32 %v5002, %v5114
  %v5116 = vpop.f32.mrb[0].mxu0
  %v5117 = vadd.f32 %v5004, %v5116
  %v5118 = vpop.f32.mrb[0].mxu0
  %v5119 = vadd.f32 %v5006, %v5118
  %v5120 = vpop.f32.mrb[0].mxu0
  %v5121 = vadd.f32 %v5008, %v5120
  %5122 = vmatprep.mubr.bf16.mxu0 %v1129
  %5123 = vmatmul.mubr.bf16.gmra.mrb[0].mxu0 %v1128
  %v5124 = vpop.f32.mrb[0].mxu0
  %v5125 = vadd.f32 %v5012, %v5124
  %v5126 = vpop.f32.mrb[0].mxu0
  %v5127 = vadd.f32 %v5014, %v5126
  %v5128 = vpop.f32.mrb[0].mxu0
  %v5129 = vadd.f32 %v5016, %v5128
  %v5130 = vpop.f32.mrb[0].mxu0
  %v5131 = vadd.f32 %v5018, %v5130
  %5132 = vmatprep.mubr.bf16.mxu0 %v1141
  %5133 = vmatmul.mubr.bf16.gmra.mrb[0].mxu0 %v1140
  %v5134 = vpop.f32.mrb[0].mxu0
  %v5135 = vadd.f32 %v5022, %v5134
  %v5136 = vpop.f32.mrb[0].mxu0
  %v5137 = vadd.f32 %v5024, %v5136
  %v5138 = vpop.f32.mrb[0].mxu0
  %v5139 = vadd.f32 %v5026, %v5138
  %v5140 = vpop.f32.mrb[0].mxu0
  %v5141 = vadd.f32 %v5028, %v5140
  %5142 = vmatprep.mubr.bf16.mxu0 %v1153
  %5143 = vmatmul.mubr.bf16.gmra.mrb[0].mxu0 %v1152
  %v5144 = vpop.f32.mrb[0].mxu0
  %v5145 = vadd.f32 %v5032, %v5144
  %v5146 = vpop.f32.mrb[0].mxu0
  %v5147 = vadd.f32 %v5034, %v5146
  %v5148 = vpop.f32.mrb[0].mxu0
  %v5149 = vadd.f32 %v5036, %v5148
  %v5150 = vpop.f32.mrb[0].mxu0
  %v5151 = vadd.f32 %v5038, %v5150
  %5152 = vdwg.mxu0
  %5153 = vmatprep.subr.bf16.mxu0 %v3275
  %5154 = vmatpush1.bf16.msra.mxu0 %v3274
  %5155 = vmatprep.subr.bf16.mxu0 %v3281
  %5156 = vmatpush1.bf16.msra.mxu0 %v3280
  %5157 = vmatprep.subr.bf16.mxu0 %v3287
  %5158 = vmatpush1.bf16.msra.mxu0 %v3286
  %5159 = vmatprep.subr.bf16.mxu0 %v3293
  %5160 = vmatpush1.bf16.msra.mxu0 %v3292
  %5161 = vmatprep.subr.bf16.mxu0 %v3299
  %5162 = vmatpush1.bf16.msra.mxu0 %v3298
  %5163 = vmatprep.subr.bf16.mxu0 %v3305
  %5164 = vmatpush1.bf16.msra.mxu0 %v3304
  %5165 = vmatprep.subr.bf16.mxu0 %v3311
  %5166 = vmatpush1.bf16.msra.mxu0 %v3310
  %5167 = vmatprep.subr.bf16.mxu0 %v3317
  %5168 = vmatpush1.bf16.msra.mxu0 %v3316
  %5169 = vmatprep.subr.bf16.mxu0 %v3323
  %5170 = vmatpush1.bf16.msra.mxu0 %v3322
  %5171 = vmatprep.subr.bf16.mxu0 %v3329
  %5172 = vmatpush1.bf16.msra.mxu0 %v3328
  %5173 = vmatprep.subr.bf16.mxu0 %v3335
  %5174 = vmatpush1.bf16.msra.mxu0 %v3334
  %5175 = vmatprep.subr.bf16.mxu0 %v3341
  %5176 = vmatpush1.bf16.msra.mxu0 %v3340
  %5177 = vmatprep.subr.bf16.mxu0 %v3347
  %5178 = vmatpush1.bf16.msra.mxu0 %v3346
  %5179 = vmatprep.subr.bf16.mxu0 %v3353
  %5180 = vmatpush1.bf16.msra.mxu0 %v3352
  %5181 = vmatprep.subr.bf16.mxu0 %v3359
  %5182 = vmatpush1.bf16.msra.mxu0 %v3358
  %5183 = vmatprep.subr.bf16.mxu0 %v3365
  %5184 = vmatpush1.bf16.msra.mxu0 %v3364
  %5185 = vmatprep.mubr.bf16.mxu0 %v1071
  %5186 = vmatmul.mubr.bf16.gmra.mrb[0].mxu0 %v1070
  %v5187 = vpop.f32.mrb[0].mxu0
  %v5188 = vadd.f32 %v5075, %v5187
  %v5189 = vpop.f32.mrb[0].mxu0
  %v5190 = vadd.f32 %v5077, %v5189
  %v5191 = vpop.f32.mrb[0].mxu0
  %v5192 = vadd.f32 %v5079, %v5191
  %v5193 = vpop.f32.mrb[0].mxu0
  %v5194 = vadd.f32 %v5081, %v5193
  %5195 = vmatprep.mubr.bf16.mxu0 %v1083
  %5196 = vmatmul.mubr.bf16.gmra.mrb[0].mxu0 %v1082
  %v5197 = vpop.f32.mrb[0].mxu0
  %v5198 = vadd.f32 %v5085, %v5197
  %v5199 = vpop.f32.mrb[0].mxu0
  %v5200 = vadd.f32 %v5087, %v5199
  %v5201 = vpop.f32.mrb[0].mxu0
  %v5202 = vadd.f32 %v5089, %v5201
  %v5203 = vpop.f32.mrb[0].mxu0
  %v5204 = vadd.f32 %v5091, %v5203
  %5205 = vmatprep.mubr.bf16.mxu0 %v1095
  %5206 = vmatmul.mubr.bf16.gmra.mrb[0].mxu0 %v1094
  %v5207 = vpop.f32.mrb[0].mxu0
  %v5208 = vadd.f32 %v5095, %v5207
  %v5209 = vpop.f32.mrb[0].mxu0
  %v5210 = vadd.f32 %v5097, %v5209
  %v5211 = vpop.f32.mrb[0].mxu0
  %v5212 = vadd.f32 %v5099, %v5211
  %v5213 = vpop.f32.mrb[0].mxu0
  %v5214 = vadd.f32 %v5101, %v5213
  %5215 = vmatprep.mubr.bf16.mxu0 %v1107
  %5216 = vmatmul.mubr.bf16.gmra.mrb[0].mxu0 %v1106
  %v5217 = vpop.f32.mrb[0].mxu0
  %v5218 = vadd.f32 %v5105, %v5217
  %v5219 = vpop.f32.mrb[0].mxu0
  %v5220 = vadd.f32 %v5107, %v5219
  %v5221 = vpop.f32.mrb[0].mxu0
  %v5222 = vadd.f32 %v5109, %v5221
  %v5223 = vpop.f32.mrb[0].mxu0
  %v5224 = vadd.f32 %v5111, %v5223
  %5225 = vmatprep.mubr.bf16.mxu0 %v1119
  %5226 = vmatmul.mubr.bf16.gmra.mrb[0].mxu0 %v1118
  %v5227 = vpop.f32.mrb[0].mxu0
  %v5228 = vadd.f32 %v5115, %v5227
  %v5229 = vpop.f32.mrb[0].mxu0
  %v5230 = vadd.f32 %v5117, %v5229
  %v5231 = vpop.f32.mrb[0].mxu0
  %v5232 = vadd.f32 %v5119, %v5231
  %v5233 = vpop.f32.mrb[0].mxu0
  %v5234 = vadd.f32 %v5121, %v5233
  %5235 = vmatprep.mubr.bf16.mxu0 %v1131
  %5236 = vmatmul.mubr.bf16.gmra.mrb[0].mxu0 %v1130
  %v5237 = vpop.f32.mrb[0].mxu0
  %v5238 = vadd.f32 %v5125, %v5237
  %v5239 = vpop.f32.mrb[0].mxu0
  %v5240 = vadd.f32 %v5127, %v5239
  %v5241 = vpop.f32.mrb[0].mxu0
  %v5242 = vadd.f32 %v5129, %v5241
  %v5243 = vpop.f32.mrb[0].mxu0
  %v5244 = vadd.f32 %v5131, %v5243
  %5245 = vmatprep.mubr.bf16.mxu0 %v1143
  %5246 = vmatmul.mubr.bf16.gmra.mrb[0].mxu0 %v1142
  %v5247 = vpop.f32.mrb[0].mxu0
  %v5248 = vadd.f32 %v5135, %v5247
  %v5249 = vpop.f32.mrb[0].mxu0
  %v5250 = vadd.f32 %v5137, %v5249
  %v5251 = vpop.f32.mrb[0].mxu0
  %v5252 = vadd.f32 %v5139, %v5251
  %v5253 = vpop.f32.mrb[0].mxu0
  %v5254 = vadd.f32 %v5141, %v5253
  %5255 = vmatprep.mubr.bf16.mxu0 %v1155
  %5256 = vmatmul.mubr.bf16.gmra.mrb[0].mxu0 %v1154
  %v5257 = vpop.f32.mrb[0].mxu0
  %v5258 = vadd.f32 %v5145, %v5257
  %v5259 = vpop.f32.mrb[0].mxu0
  %v5260 = vadd.f32 %v5147, %v5259
  %v5261 = vpop.f32.mrb[0].mxu0
  %v5262 = vadd.f32 %v5149, %v5261
  %v5263 = vpop.f32.mrb[0].mxu0
  %v5264 = vadd.f32 %v5151, %v5263
  %5265 = vdwg.mxu0
  %5266 = vmatprep.subr.bf16.mxu0 %v3371
  %5267 = vmatpush1.bf16.msra.mxu0 %v3370
  %5268 = vmatprep.subr.bf16.mxu0 %v3377
  %5269 = vmatpush1.bf16.msra.mxu0 %v3376
  %5270 = vmatprep.subr.bf16.mxu0 %v3383
  %5271 = vmatpush1.bf16.msra.mxu0 %v3382
  %5272 = vmatprep.subr.bf16.mxu0 %v3389
  %5273 = vmatpush1.bf16.msra.mxu0 %v3388
  %5274 = vmatprep.subr.bf16.mxu0 %v3395
  %5275 = vmatpush1.bf16.msra.mxu0 %v3394
  %5276 = vmatprep.subr.bf16.mxu0 %v3401
  %5277 = vmatpush1.bf16.msra.mxu0 %v3400
  %5278 = vmatprep.subr.bf16.mxu0 %v3407
  %5279 = vmatpush1.bf16.msra.mxu0 %v3406
  %5280 = vmatprep.subr.bf16.mxu0 %v3413
  %5281 = vmatpush1.bf16.msra.mxu0 %v3412
  %5282 = vmatprep.subr.bf16.mxu0 %v3419
  %5283 = vmatpush1.bf16.msra.mxu0 %v3418
  %5284 = vmatprep.subr.bf16.mxu0 %v3425
  %5285 = vmatpush1.bf16.msra.mxu0 %v3424
  %5286 = vmatprep.subr.bf16.mxu0 %v3431
  %5287 = vmatpush1.bf16.msra.mxu0 %v3430
  %5288 = vmatprep.subr.bf16.mxu0 %v3437
  %5289 = vmatpush1.bf16.msra.mxu0 %v3436
  %5290 = vmatprep.subr.bf16.mxu0 %v3443
  %5291 = vmatpush1.bf16.msra.mxu0 %v3442
  %5292 = vmatprep.subr.bf16.mxu0 %v3449
  %5293 = vmatpush1.bf16.msra.mxu0 %v3448
  %5294 = vmatprep.subr.bf16.mxu0 %v3455
  %5295 = vmatpush1.bf16.msra.mxu0 %v3454
  %5296 = vmatprep.subr.bf16.mxu0 %v3461
  %5297 = vmatpush1.bf16.msra.mxu0 %v3460
  %5298 = vmatprep.mubr.bf16.mxu0 %v1073
  %5299 = vmatmul.mubr.bf16.gmra.mrb[0].mxu0 %v1072
  %v5300 = vpop.f32.mrb[0].mxu0
  %v5301 = vadd.f32 %v5188, %v5300
  %v5302 = vpop.f32.mrb[0].mxu0
  %v5303 = vadd.f32 %v5190, %v5302
  %v5304 = vpop.f32.mrb[0].mxu0
  %v5305 = vadd.f32 %v5192, %v5304
  %v5306 = vpop.f32.mrb[0].mxu0
  %v5307 = vadd.f32 %v5194, %v5306
  %5308 = vmatprep.mubr.bf16.mxu0 %v1085
  %5309 = vmatmul.mubr.bf16.gmra.mrb[0].mxu0 %v1084
  %v5310 = vpop.f32.mrb[0].mxu0
  %v5311 = vadd.f32 %v5198, %v5310
  %v5312 = vpop.f32.mrb[0].mxu0
  %v5313 = vadd.f32 %v5200, %v5312
  %v5314 = vpop.f32.mrb[0].mxu0
  %v5315 = vadd.f32 %v5202, %v5314
  %v5316 = vpop.f32.mrb[0].mxu0
  %v5317 = vadd.f32 %v5204, %v5316
  %5318 = vmatprep.mubr.bf16.mxu0 %v1097
  %5319 = vmatmul.mubr.bf16.gmra.mrb[0].mxu0 %v1096
  %v5320 = vpop.f32.mrb[0].mxu0
  %v5321 = vadd.f32 %v5208, %v5320
  %v5322 = vpop.f32.mrb[0].mxu0
  %v5323 = vadd.f32 %v5210, %v5322
  %v5324 = vpop.f32.mrb[0].mxu0
  %v5325 = vadd.f32 %v5212, %v5324
  %v5326 = vpop.f32.mrb[0].mxu0
  %v5327 = vadd.f32 %v5214, %v5326
  %5328 = vmatprep.mubr.bf16.mxu0 %v1109
  %5329 = vmatmul.mubr.bf16.gmra.mrb[0].mxu0 %v1108
  %v5330 = vpop.f32.mrb[0].mxu0
  %v5331 = vadd.f32 %v5218, %v5330
  %v5332 = vpop.f32.mrb[0].mxu0
  %v5333 = vadd.f32 %v5220, %v5332
  %v5334 = vpop.f32.mrb[0].mxu0
  %v5335 = vadd.f32 %v5222, %v5334
  %v5336 = vpop.f32.mrb[0].mxu0
  %v5337 = vadd.f32 %v5224, %v5336
  %5338 = vmatprep.mubr.bf16.mxu0 %v1121
  %5339 = vmatmul.mubr.bf16.gmra.mrb[0].mxu0 %v1120
  %v5340 = vpop.f32.mrb[0].mxu0
  %v5341 = vadd.f32 %v5228, %v5340
  %v5342 = vpop.f32.mrb[0].mxu0
  %v5343 = vadd.f32 %v5230, %v5342
  %v5344 = vpop.f32.mrb[0].mxu0
  %v5345 = vadd.f32 %v5232, %v5344
  %v5346 = vpop.f32.mrb[0].mxu0
  %v5347 = vadd.f32 %v5234, %v5346
  %5348 = vmatprep.mubr.bf16.mxu0 %v1133
  %5349 = vmatmul.mubr.bf16.gmra.mrb[0].mxu0 %v1132
  %v5350 = vpop.f32.mrb[0].mxu0
  %v5351 = vadd.f32 %v5238, %v5350
  %v5352 = vpop.f32.mrb[0].mxu0
  %v5353 = vadd.f32 %v5240, %v5352
  %v5354 = vpop.f32.mrb[0].mxu0
  %v5355 = vadd.f32 %v5242, %v5354
  %v5356 = vpop.f32.mrb[0].mxu0
  %v5357 = vadd.f32 %v5244, %v5356
  %5358 = vmatprep.mubr.bf16.mxu0 %v1145
  %5359 = vmatmul.mubr.bf16.gmra.mrb[0].mxu0 %v1144
  %v5360 = vpop.f32.mrb[0].mxu0
  %v5361 = vadd.f32 %v5248, %v5360
  %v5362 = vpop.f32.mrb[0].mxu0
  %v5363 = vadd.f32 %v5250, %v5362
  %v5364 = vpop.f32.mrb[0].mxu0
  %v5365 = vadd.f32 %v5252, %v5364
  %v5366 = vpop.f32.mrb[0].mxu0
  %v5367 = vadd.f32 %v5254, %v5366
  %5368 = vmatprep.mubr.bf16.mxu0 %v1157
  %5369 = vmatmul.mubr.bf16.gmra.mrb[0].mxu0 %v1156
  %v5370 = vpop.f32.mrb[0].mxu0
  %v5371 = vadd.f32 %v5258, %v5370
  %v5372 = vpop.f32.mrb[0].mxu0
  %v5373 = vadd.f32 %v5260, %v5372
  %v5374 = vpop.f32.mrb[0].mxu0
  %v5375 = vadd.f32 %v5262, %v5374
  %v5376 = vpop.f32.mrb[0].mxu0
  %v5377 = vadd.f32 %v5264, %v5376
  %5378 = vdwg.mxu0
  %5379 = vmatprep.subr.bf16.mxu0 %v3467
  %5380 = vmatpush1.bf16.msra.mxu0 %v3466
  %5381 = vmatprep.subr.bf16.mxu0 %v3473
  %5382 = vmatpush1.bf16.msra.mxu0 %v3472
  %5383 = vmatprep.subr.bf16.mxu0 %v3479
  %5384 = vmatpush1.bf16.msra.mxu0 %v3478
  %5385 = vmatprep.subr.bf16.mxu0 %v3485
  %5386 = vmatpush1.bf16.msra.mxu0 %v3484
  %5387 = vmatprep.subr.bf16.mxu0 %v3491
  %5388 = vmatpush1.bf16.msra.mxu0 %v3490
  %5389 = vmatprep.subr.bf16.mxu0 %v3497
  %5390 = vmatpush1.bf16.msra.mxu0 %v3496
  %5391 = vmatprep.subr.bf16.mxu0 %v3503
  %5392 = vmatpush1.bf16.msra.mxu0 %v3502
  %5393 = vmatprep.subr.bf16.mxu0 %v3509
  %5394 = vmatpush1.bf16.msra.mxu0 %v3508
  %5395 = vmatprep.subr.bf16.mxu0 %v3515
  %5396 = vmatpush1.bf16.msra.mxu0 %v3514
  %5397 = vmatprep.subr.bf16.mxu0 %v3521
  %5398 = vmatpush1.bf16.msra.mxu0 %v3520
  %5399 = vmatprep.subr.bf16.mxu0 %v3527
  %5400 = vmatpush1.bf16.msra.mxu0 %v3526
  %5401 = vmatprep.subr.bf16.mxu0 %v3533
  %5402 = vmatpush1.bf16.msra.mxu0 %v3532
  %5403 = vmatprep.subr.bf16.mxu0 %v3539
  %5404 = vmatpush1.bf16.msra.mxu0 %v3538
  %5405 = vmatprep.subr.bf16.mxu0 %v3545
  %5406 = vmatpush1.bf16.msra.mxu0 %v3544
  %5407 = vmatprep.subr.bf16.mxu0 %v3551
  %5408 = vmatpush1.bf16.msra.mxu0 %v3550
  %5409 = vmatprep.subr.bf16.mxu0 %v3557
  %5410 = vmatpush1.bf16.msra.mxu0 %v3556
  %5411 = vmatprep.mubr.bf16.mxu0 %v1075
  %5412 = vmatmul.mubr.bf16.gmra.mrb[0].mxu0 %v1074
  %v5413 = vpop.f32.mrb[0].mxu0
  %v5414 = vadd.f32 %v5301, %v5413
  %v5415 = vpop.f32.mrb[0].mxu0
  %v5416 = vadd.f32 %v5303, %v5415
  %v5417 = vpop.f32.mrb[0].mxu0
  %v5418 = vadd.f32 %v5305, %v5417
  %v5419 = vpop.f32.mrb[0].mxu0
  %v5420 = vadd.f32 %v5307, %v5419
  %5421 = vmatprep.mubr.bf16.mxu0 %v1087
  %5422 = vmatmul.mubr.bf16.gmra.mrb[0].mxu0 %v1086
  %v5423 = vpop.f32.mrb[0].mxu0
  %v5424 = vadd.f32 %v5311, %v5423
  %v5425 = vpop.f32.mrb[0].mxu0
  %v5426 = vadd.f32 %v5313, %v5425
  %v5427 = vpop.f32.mrb[0].mxu0
  %v5428 = vadd.f32 %v5315, %v5427
  %v5429 = vpop.f32.mrb[0].mxu0
  %v5430 = vadd.f32 %v5317, %v5429
  %5431 = vmatprep.mubr.bf16.mxu0 %v1099
  %5432 = vmatmul.mubr.bf16.gmra.mrb[0].mxu0 %v1098
  %v5433 = vpop.f32.mrb[0].mxu0
  %v5434 = vadd.f32 %v5321, %v5433
  %v5435 = vpop.f32.mrb[0].mxu0
  %v5436 = vadd.f32 %v5323, %v5435
  %v5437 = vpop.f32.mrb[0].mxu0
  %v5438 = vadd.f32 %v5325, %v5437
  %v5439 = vpop.f32.mrb[0].mxu0
  %v5440 = vadd.f32 %v5327, %v5439
  %5441 = vmatprep.mubr.bf16.mxu0 %v1111
  %5442 = vmatmul.mubr.bf16.gmra.mrb[0].mxu0 %v1110
  %v5443 = vpop.f32.mrb[0].mxu0
  %v5444 = vadd.f32 %v5331, %v5443
  %v5445 = vpop.f32.mrb[0].mxu0
  %v5446 = vadd.f32 %v5333, %v5445
  %v5447 = vpop.f32.mrb[0].mxu0
  %v5448 = vadd.f32 %v5335, %v5447
  %v5449 = vpop.f32.mrb[0].mxu0
  %v5450 = vadd.f32 %v5337, %v5449
  %5451 = vmatprep.mubr.bf16.mxu0 %v1123
  %5452 = vmatmul.mubr.bf16.gmra.mrb[0].mxu0 %v1122
  %v5453 = vpop.f32.mrb[0].mxu0
  %v5454 = vadd.f32 %v5341, %v5453
  %v5455 = vpop.f32.mrb[0].mxu0
  %v5456 = vadd.f32 %v5343, %v5455
  %v5457 = vpop.f32.mrb[0].mxu0
  %v5458 = vadd.f32 %v5345, %v5457
  %v5459 = vpop.f32.mrb[0].mxu0
  %v5460 = vadd.f32 %v5347, %v5459
  %5461 = vmatprep.mubr.bf16.mxu0 %v1135
  %5462 = vmatmul.mubr.bf16.gmra.mrb[0].mxu0 %v1134
  %v5463 = vpop.f32.mrb[0].mxu0
  %v5464 = vadd.f32 %v5351, %v5463
  %v5465 = vpop.f32.mrb[0].mxu0
  %v5466 = vadd.f32 %v5353, %v5465
  %v5467 = vpop.f32.mrb[0].mxu0
  %v5468 = vadd.f32 %v5355, %v5467
  %v5469 = vpop.f32.mrb[0].mxu0
  %v5470 = vadd.f32 %v5357, %v5469
  %5471 = vmatprep.mubr.bf16.mxu0 %v1147
  %5472 = vmatmul.mubr.bf16.gmra.mrb[0].mxu0 %v1146
  %v5473 = vpop.f32.mrb[0].mxu0
  %v5474 = vadd.f32 %v5361, %v5473
  %v5475 = vpop.f32.mrb[0].mxu0
  %v5476 = vadd.f32 %v5363, %v5475
  %v5477 = vpop.f32.mrb[0].mxu0
  %v5478 = vadd.f32 %v5365, %v5477
  %v5479 = vpop.f32.mrb[0].mxu0
  %v5480 = vadd.f32 %v5367, %v5479
  %5481 = vmatprep.mubr.bf16.mxu0 %v1159
  %5482 = vmatmul.mubr.bf16.gmra.mrb[0].mxu0 %v1158
  %v5483 = vpop.f32.mrb[0].mxu0
  %v5484 = vadd.f32 %v5371, %v5483
  %v5485 = vpop.f32.mrb[0].mxu0
  %v5486 = vadd.f32 %v5373, %v5485
  %v5487 = vpop.f32.mrb[0].mxu0
  %v5488 = vadd.f32 %v5375, %v5487
  %v5489 = vpop.f32.mrb[0].mxu0
  %v5490 = vadd.f32 %v5377, %v5489
  %5491 = vdwg.mxu0
  %5492 = vmatprep.subr.bf16.mxu0 %v2989
  %5493 = vmatpush1.bf16.msra.mxu0 %v2988
  %5494 = vmatprep.subr.bf16.mxu0 %v2995
  %5495 = vmatpush1.bf16.msra.mxu0 %v2994
  %5496 = vmatprep.subr.bf16.mxu0 %v3001
  %5497 = vmatpush1.bf16.msra.mxu0 %v3000
  %5498 = vmatprep.subr.bf16.mxu0 %v3007
  %5499 = vmatpush1.bf16.msra.mxu0 %v3006
  %5500 = vmatprep.subr.bf16.mxu0 %v3013
  %5501 = vmatpush1.bf16.msra.mxu0 %v3012
  %5502 = vmatprep.subr.bf16.mxu0 %v3019
  %5503 = vmatpush1.bf16.msra.mxu0 %v3018
  %5504 = vmatprep.subr.bf16.mxu0 %v3025
  %5505 = vmatpush1.bf16.msra.mxu0 %v3024
  %5506 = vmatprep.subr.bf16.mxu0 %v3031
  %5507 = vmatpush1.bf16.msra.mxu0 %v3030
  %5508 = vmatprep.subr.bf16.mxu0 %v3037
  %5509 = vmatpush1.bf16.msra.mxu0 %v3036
  %5510 = vmatprep.subr.bf16.mxu0 %v3043
  %5511 = vmatpush1.bf16.msra.mxu0 %v3042
  %5512 = vmatprep.subr.bf16.mxu0 %v3049
  %5513 = vmatpush1.bf16.msra.mxu0 %v3048
  %5514 = vmatprep.subr.bf16.mxu0 %v3055
  %5515 = vmatpush1.bf16.msra.mxu0 %v3054
  %5516 = vmatprep.subr.bf16.mxu0 %v3061
  %5517 = vmatpush1.bf16.msra.mxu0 %v3060
  %5518 = vmatprep.subr.bf16.mxu0 %v3067
  %5519 = vmatpush1.bf16.msra.mxu0 %v3066
  %5520 = vmatprep.subr.bf16.mxu0 %v3073
  %5521 = vmatpush1.bf16.msra.mxu0 %v3072
  %5522 = vmatprep.subr.bf16.mxu0 %v3079
  %5523 = vmatpush1.bf16.msra.mxu0 %v3078
  %5524 = vmatprep.mubr.bf16.mxu0 %v1065
  %5525 = vmatmul.mubr.bf16.gmra.mrb[0].mxu0 %v1064
  %v5526 = vpop.f32.mrb[0].mxu0
  %v5527 = vadd.f32 %v765, %v5526
  %v5528 = vpop.f32.mrb[0].mxu0
  %v5529 = vadd.f32 %v769, %v5528
  %v5530 = vpop.f32.mrb[0].mxu0
  %v5531 = vadd.f32 %v765, %v5530
  %v5532 = vpop.f32.mrb[0].mxu0
  %v5533 = vadd.f32 %v769, %v5532
  %5534 = vmatprep.mubr.bf16.mxu0 %v1077
  %5535 = vmatmul.mubr.bf16.gmra.mrb[0].mxu0 %v1076
  %v5536 = vpop.f32.mrb[0].mxu0
  %v5537 = vadd.f32 %v765, %v5536
  %v5538 = vpop.f32.mrb[0].mxu0
  %v5539 = vadd.f32 %v769, %v5538
  %v5540 = vpop.f32.mrb[0].mxu0
  %v5541 = vadd.f32 %v765, %v5540
  %v5542 = vpop.f32.mrb[0].mxu0
  %v5543 = vadd.f32 %v769, %v5542
  %5544 = vmatprep.mubr.bf16.mxu0 %v1089
  %5545 = vmatmul.mubr.bf16.gmra.mrb[0].mxu0 %v1088
  %v5546 = vpop.f32.mrb[0].mxu0
  %v5547 = vadd.f32 %v765, %v5546
  %v5548 = vpop.f32.mrb[0].mxu0
  %v5549 = vadd.f32 %v769, %v5548
  %v5550 = vpop.f32.mrb[0].mxu0
  %v5551 = vadd.f32 %v765, %v5550
  %v5552 = vpop.f32.mrb[0].mxu0
  %v5553 = vadd.f32 %v769, %v5552
  %5554 = vmatprep.mubr.bf16.mxu0 %v1101
  %5555 = vmatmul.mubr.bf16.gmra.mrb[0].mxu0 %v1100
  %v5556 = vpop.f32.mrb[0].mxu0
  %v5557 = vadd.f32 %v765, %v5556
  %v5558 = vpop.f32.mrb[0].mxu0
  %v5559 = vadd.f32 %v769, %v5558
  %v5560 = vpop.f32.mrb[0].mxu0
  %v5561 = vadd.f32 %v765, %v5560
  %v5562 = vpop.f32.mrb[0].mxu0
  %v5563 = vadd.f32 %v769, %v5562
  %5564 = vmatprep.mubr.bf16.mxu0 %v1113
  %5565 = vmatmul.mubr.bf16.gmra.mrb[0].mxu0 %v1112
  %v5566 = vpop.f32.mrb[0].mxu0
  %v5567 = vadd.f32 %v765, %v5566
  %v5568 = vpop.f32.mrb[0].mxu0
  %v5569 = vadd.f32 %v769, %v5568
  %v5570 = vpop.f32.mrb[0].mxu0
  %v5571 = vadd.f32 %v765, %v5570
  %v5572 = vpop.f32.mrb[0].mxu0
  %v5573 = vadd.f32 %v769, %v5572
  %5574 = vmatprep.mubr.bf16.mxu0 %v1125
  %5575 = vmatmul.mubr.bf16.gmra.mrb[0].mxu0 %v1124
  %v5576 = vpop.f32.mrb[0].mxu0
  %v5577 = vadd.f32 %v765, %v5576
  %v5578 = vpop.f32.mrb[0].mxu0
  %v5579 = vadd.f32 %v769, %v5578
  %v5580 = vpop.f32.mrb[0].mxu0
  %v5581 = vadd.f32 %v765, %v5580
  %v5582 = vpop.f32.mrb[0].mxu0
  %v5583 = vadd.f32 %v769, %v5582
  %5584 = vmatprep.mubr.bf16.mxu0 %v1137
  %5585 = vmatmul.mubr.bf16.gmra.mrb[0].mxu0 %v1136
  %v5586 = vpop.f32.mrb[0].mxu0
  %v5587 = vadd.f32 %v765, %v5586
  %v5588 = vpop.f32.mrb[0].mxu0
  %v5589 = vadd.f32 %v769, %v5588
  %v5590 = vpop.f32.mrb[0].mxu0
  %v5591 = vadd.f32 %v765, %v5590
  %v5592 = vpop.f32.mrb[0].mxu0
  %v5593 = vadd.f32 %v769, %v5592
  %5594 = vmatprep.mubr.bf16.mxu0 %v1149
  %5595 = vmatmul.mubr.bf16.gmra.mrb[0].mxu0 %v1148
  %v5596 = vpop.f32.mrb[0].mxu0
  %v5597 = vadd.f32 %v765, %v5596
  %v5598 = vpop.f32.mrb[0].mxu0
  %v5599 = vadd.f32 %v769, %v5598
  %v5600 = vpop.f32.mrb[0].mxu0
  %v5601 = vadd.f32 %v765, %v5600
  %v5602 = vpop.f32.mrb[0].mxu0
  %v5603 = vadd.f32 %v769, %v5602
  %5604 = vdwg.mxu0
  %5605 = vmatprep.subr.bf16.mxu0 %v3085
  %5606 = vmatpush1.bf16.msra.mxu0 %v3084
  %5607 = vmatprep.subr.bf16.mxu0 %v3091
  %5608 = vmatpush1.bf16.msra.mxu0 %v3090
  %5609 = vmatprep.subr.bf16.mxu0 %v3097
  %5610 = vmatpush1.bf16.msra.mxu0 %v3096
  %5611 = vmatprep.subr.bf16.mxu0 %v3103
  %5612 = vmatpush1.bf16.msra.mxu0 %v3102
  %5613 = vmatprep.subr.bf16.mxu0 %v3109
  %5614 = vmatpush1.bf16.msra.mxu0 %v3108
  %5615 = vmatprep.subr.bf16.mxu0 %v3115
  %5616 = vmatpush1.bf16.msra.mxu0 %v3114
  %5617 = vmatprep.subr.bf16.mxu0 %v3121
  %5618 = vmatpush1.bf16.msra.mxu0 %v3120
  %5619 = vmatprep.subr.bf16.mxu0 %v3127
  %5620 = vmatpush1.bf16.msra.mxu0 %v3126
  %5621 = vmatprep.subr.bf16.mxu0 %v3133
  %5622 = vmatpush1.bf16.msra.mxu0 %v3132
  %5623 = vmatprep.subr.bf16.mxu0 %v3139
  %5624 = vmatpush1.bf16.msra.mxu0 %v3138
  %5625 = vmatprep.subr.bf16.mxu0 %v3145
  %5626 = vmatpush1.bf16.msra.mxu0 %v3144
  %5627 = vmatprep.subr.bf16.mxu0 %v3151
  %5628 = vmatpush1.bf16.msra.mxu0 %v3150
  %5629 = vmatprep.subr.bf16.mxu0 %v3157
  %5630 = vmatpush1.bf16.msra.mxu0 %v3156
  %5631 = vmatprep.subr.bf16.mxu0 %v3163
  %5632 = vmatpush1.bf16.msra.mxu0 %v3162
  %5633 = vmatprep.subr.bf16.mxu0 %v3169
  %5634 = vmatpush1.bf16.msra.mxu0 %v3168
  %5635 = vmatprep.subr.bf16.mxu0 %v3175
  %5636 = vmatpush1.bf16.msra.mxu0 %v3174
  %5637 = vmatprep.mubr.bf16.mxu0 %v1067
  %5638 = vmatmul.mubr.bf16.gmra.mrb[0].mxu0 %v1066
  %v5639 = vpop.f32.mrb[0].mxu0
  %v5640 = vadd.f32 %v5527, %v5639
  %v5641 = vpop.f32.mrb[0].mxu0
  %v5642 = vadd.f32 %v5529, %v5641
  %v5643 = vpop.f32.mrb[0].mxu0
  %v5644 = vadd.f32 %v5531, %v5643
  %v5645 = vpop.f32.mrb[0].mxu0
  %v5646 = vadd.f32 %v5533, %v5645
  %5647 = vmatprep.mubr.bf16.mxu0 %v1079
  %5648 = vmatmul.mubr.bf16.gmra.mrb[0].mxu0 %v1078
  %v5649 = vpop.f32.mrb[0].mxu0
  %v5650 = vadd.f32 %v5537, %v5649
  %v5651 = vpop.f32.mrb[0].mxu0
  %v5652 = vadd.f32 %v5539, %v5651
  %v5653 = vpop.f32.mrb[0].mxu0
  %v5654 = vadd.f32 %v5541, %v5653
  %v5655 = vpop.f32.mrb[0].mxu0
  %v5656 = vadd.f32 %v5543, %v5655
  %5657 = vmatprep.mubr.bf16.mxu0 %v1091
  %5658 = vmatmul.mubr.bf16.gmra.mrb[0].mxu0 %v1090
  %v5659 = vpop.f32.mrb[0].mxu0
  %v5660 = vadd.f32 %v5547, %v5659
  %v5661 = vpop.f32.mrb[0].mxu0
  %v5662 = vadd.f32 %v5549, %v5661
  %v5663 = vpop.f32.mrb[0].mxu0
  %v5664 = vadd.f32 %v5551, %v5663
  %v5665 = vpop.f32.mrb[0].mxu0
  %v5666 = vadd.f32 %v5553, %v5665
  %5667 = vmatprep.mubr.bf16.mxu0 %v1103
  %5668 = vmatmul.mubr.bf16.gmra.mrb[0].mxu0 %v1102
  %v5669 = vpop.f32.mrb[0].mxu0
  %v5670 = vadd.f32 %v5557, %v5669
  %v5671 = vpop.f32.mrb[0].mxu0
  %v5672 = vadd.f32 %v5559, %v5671
  %v5673 = vpop.f32.mrb[0].mxu0
  %v5674 = vadd.f32 %v5561, %v5673
  %v5675 = vpop.f32.mrb[0].mxu0
  %v5676 = vadd.f32 %v5563, %v5675
  %5677 = vmatprep.mubr.bf16.mxu0 %v1115
  %5678 = vmatmul.mubr.bf16.gmra.mrb[0].mxu0 %v1114
  %v5679 = vpop.f32.mrb[0].mxu0
  %v5680 = vadd.f32 %v5567, %v5679
  %v5681 = vpop.f32.mrb[0].mxu0
  %v5682 = vadd.f32 %v5569, %v5681
  %v5683 = vpop.f32.mrb[0].mxu0
  %v5684 = vadd.f32 %v5571, %v5683
  %v5685 = vpop.f32.mrb[0].mxu0
  %v5686 = vadd.f32 %v5573, %v5685
  %5687 = vmatprep.mubr.bf16.mxu0 %v1127
  %5688 = vmatmul.mubr.bf16.gmra.mrb[0].mxu0 %v1126
  %v5689 = vpop.f32.mrb[0].mxu0
  %v5690 = vadd.f32 %v5577, %v5689
  %v5691 = vpop.f32.mrb[0].mxu0
  %v5692 = vadd.f32 %v5579, %v5691
  %v5693 = vpop.f32.mrb[0].mxu0
  %v5694 = vadd.f32 %v5581, %v5693
  %v5695 = vpop.f32.mrb[0].mxu0
  %v5696 = vadd.f32 %v5583, %v5695
  %5697 = vmatprep.mubr.bf16.mxu0 %v1139
  %5698 = vmatmul.mubr.bf16.gmra.mrb[0].mxu0 %v1138
  %v5699 = vpop.f32.mrb[0].mxu0
  %v5700 = vadd.f32 %v5587, %v5699
  %v5701 = vpop.f32.mrb[0].mxu0
  %v5702 = vadd.f32 %v5589, %v5701
  %v5703 = vpop.f32.mrb[0].mxu0
  %v5704 = vadd.f32 %v5591, %v5703
  %v5705 = vpop.f32.mrb[0].mxu0
  %v5706 = vadd.f32 %v5593, %v5705
  %5707 = vmatprep.mubr.bf16.mxu0 %v1151
  %5708 = vmatmul.mubr.bf16.gmra.mrb[0].mxu0 %v1150
  %v5709 = vpop.f32.mrb[0].mxu0
  %v5710 = vadd.f32 %v5597, %v5709
  %v5711 = vpop.f32.mrb[0].mxu0
  %v5712 = vadd.f32 %v5599, %v5711
  %v5713 = vpop.f32.mrb[0].mxu0
  %v5714 = vadd.f32 %v5601, %v5713
  %v5715 = vpop.f32.mrb[0].mxu0
  %v5716 = vadd.f32 %v5603, %v5715
  %5717 = vdwg.mxu0
  %5718 = vmatprep.subr.bf16.mxu0 %v3181
  %5719 = vmatpush1.bf16.msra.mxu0 %v3180
  %5720 = vmatprep.subr.bf16.mxu0 %v3187
  %5721 = vmatpush1.bf16.msra.mxu0 %v3186
  %5722 = vmatprep.subr.bf16.mxu0 %v3193
  %5723 = vmatpush1.bf16.msra.mxu0 %v3192
  %5724 = vmatprep.subr.bf16.mxu0 %v3199
  %5725 = vmatpush1.bf16.msra.mxu0 %v3198
  %5726 = vmatprep.subr.bf16.mxu0 %v3205
  %5727 = vmatpush1.bf16.msra.mxu0 %v3204
  %5728 = vmatprep.subr.bf16.mxu0 %v3211
  %5729 = vmatpush1.bf16.msra.mxu0 %v3210
  %5730 = vmatprep.subr.bf16.mxu0 %v3217
  %5731 = vmatpush1.bf16.msra.mxu0 %v3216
  %5732 = vmatprep.subr.bf16.mxu0 %v3223
  %5733 = vmatpush1.bf16.msra.mxu0 %v3222
  %5734 = vmatprep.subr.bf16.mxu0 %v3229
  %5735 = vmatpush1.bf16.msra.mxu0 %v3228
  %5736 = vmatprep.subr.bf16.mxu0 %v3235
  %5737 = vmatpush1.bf16.msra.mxu0 %v3234
  %5738 = vmatprep.subr.bf16.mxu0 %v3241
  %5739 = vmatpush1.bf16.msra.mxu0 %v3240
  %5740 = vmatprep.subr.bf16.mxu0 %v3247
  %5741 = vmatpush1.bf16.msra.mxu0 %v3246
  %5742 = vmatprep.subr.bf16.mxu0 %v3253
  %5743 = vmatpush1.bf16.msra.mxu0 %v3252
  %5744 = vmatprep.subr.bf16.mxu0 %v3259
  %5745 = vmatpush1.bf16.msra.mxu0 %v3258
  %5746 = vmatprep.subr.bf16.mxu0 %v3265
  %5747 = vmatpush1.bf16.msra.mxu0 %v3264
  %5748 = vmatprep.subr.bf16.mxu0 %v3271
  %5749 = vmatpush1.bf16.msra.mxu0 %v3270
  %5750 = vmatprep.mubr.bf16.mxu0 %v1069
  %5751 = vmatmul.mubr.bf16.gmra.mrb[0].mxu0 %v1068
  %v5752 = vpop.f32.mrb[0].mxu0
  %v5753 = vadd.f32 %v5640, %v5752
  %v5754 = vpop.f32.mrb[0].mxu0
  %v5755 = vadd.f32 %v5642, %v5754
  %v5756 = vpop.f32.mrb[0].mxu0
  %v5757 = vadd.f32 %v5644, %v5756
  %v5758 = vpop.f32.mrb[0].mxu0
  %v5759 = vadd.f32 %v5646, %v5758
  %5760 = vmatprep.mubr.bf16.mxu0 %v1081
  %5761 = vmatmul.mubr.bf16.gmra.mrb[0].mxu0 %v1080
  %v5762 = vpop.f32.mrb[0].mxu0
  %v5763 = vadd.f32 %v5650, %v5762
  %v5764 = vpop.f32.mrb[0].mxu0
  %v5765 = vadd.f32 %v5652, %v5764
  %v5766 = vpop.f32.mrb[0].mxu0
  %v5767 = vadd.f32 %v5654, %v5766
  %v5768 = vpop.f32.mrb[0].mxu0
  %v5769 = vadd.f32 %v5656, %v5768
  %5770 = vmatprep.mubr.bf16.mxu0 %v1093
  %5771 = vmatmul.mubr.bf16.gmra.mrb[0].mxu0 %v1092
  %v5772 = vpop.f32.mrb[0].mxu0
  %v5773 = vadd.f32 %v5660, %v5772
  %v5774 = vpop.f32.mrb[0].mxu0
  %v5775 = vadd.f32 %v5662, %v5774
  %v5776 = vpop.f32.mrb[0].mxu0
  %v5777 = vadd.f32 %v5664, %v5776
  %v5778 = vpop.f32.mrb[0].mxu0
  %v5779 = vadd.f32 %v5666, %v5778
  %5780 = vmatprep.mubr.bf16.mxu0 %v1105
  %5781 = vmatmul.mubr.bf16.gmra.mrb[0].mxu0 %v1104
  %v5782 = vpop.f32.mrb[0].mxu0
  %v5783 = vadd.f32 %v5670, %v5782
  %v5784 = vpop.f32.mrb[0].mxu0
  %v5785 = vadd.f32 %v5672, %v5784
  %v5786 = vpop.f32.mrb[0].mxu0
  %v5787 = vadd.f32 %v5674, %v5786
  %v5788 = vpop.f32.mrb[0].mxu0
  %v5789 = vadd.f32 %v5676, %v5788
  %5790 = vmatprep.mubr.bf16.mxu0 %v1117
  %5791 = vmatmul.mubr.bf16.gmra.mrb[0].mxu0 %v1116
  %v5792 = vpop.f32.mrb[0].mxu0
  %v5793 = vadd.f32 %v5680, %v5792
  %v5794 = vpop.f32.mrb[0].mxu0
  %v5795 = vadd.f32 %v5682, %v5794
  %v5796 = vpop.f32.mrb[0].mxu0
  %v5797 = vadd.f32 %v5684, %v5796
  %v5798 = vpop.f32.mrb[0].mxu0
  %v5799 = vadd.f32 %v5686, %v5798
  %5800 = vmatprep.mubr.bf16.mxu0 %v1129
  %5801 = vmatmul.mubr.bf16.gmra.mrb[0].mxu0 %v1128
  %v5802 = vpop.f32.mrb[0].mxu0
  %v5803 = vadd.f32 %v5690, %v5802
  %v5804 = vpop.f32.mrb[0].mxu0
  %v5805 = vadd.f32 %v5692, %v5804
  %v5806 = vpop.f32.mrb[0].mxu0
  %v5807 = vadd.f32 %v5694, %v5806
  %v5808 = vpop.f32.mrb[0].mxu0
  %v5809 = vadd.f32 %v5696, %v5808
  %5810 = vmatprep.mubr.bf16.mxu0 %v1141
  %5811 = vmatmul.mubr.bf16.gmra.mrb[0].mxu0 %v1140
  %v5812 = vpop.f32.mrb[0].mxu0
  %v5813 = vadd.f32 %v5700, %v5812
  %v5814 = vpop.f32.mrb[0].mxu0
  %v5815 = vadd.f32 %v5702, %v5814
  %v5816 = vpop.f32.mrb[0].mxu0
  %v5817 = vadd.f32 %v5704, %v5816
  %v5818 = vpop.f32.mrb[0].mxu0
  %v5819 = vadd.f32 %v5706, %v5818
  %5820 = vmatprep.mubr.bf16.mxu0 %v1153
  %5821 = vmatmul.mubr.bf16.gmra.mrb[0].mxu0 %v1152
  %v5822 = vpop.f32.mrb[0].mxu0
  %v5823 = vadd.f32 %v5710, %v5822
  %v5824 = vpop.f32.mrb[0].mxu0
  %v5825 = vadd.f32 %v5712, %v5824
  %v5826 = vpop.f32.mrb[0].mxu0
  %v5827 = vadd.f32 %v5714, %v5826
  %v5828 = vpop.f32.mrb[0].mxu0
  %v5829 = vadd.f32 %v5716, %v5828
  %5830 = vdwg.mxu0
  %5831 = vmatprep.subr.bf16.mxu0 %v3277
  %5832 = vmatpush1.bf16.msra.mxu0 %v3276
  %5833 = vmatprep.subr.bf16.mxu0 %v3283
  %5834 = vmatpush1.bf16.msra.mxu0 %v3282
  %5835 = vmatprep.subr.bf16.mxu0 %v3289
  %5836 = vmatpush1.bf16.msra.mxu0 %v3288
  %5837 = vmatprep.subr.bf16.mxu0 %v3295
  %5838 = vmatpush1.bf16.msra.mxu0 %v3294
  %5839 = vmatprep.subr.bf16.mxu0 %v3301
  %5840 = vmatpush1.bf16.msra.mxu0 %v3300
  %5841 = vmatprep.subr.bf16.mxu0 %v3307
  %5842 = vmatpush1.bf16.msra.mxu0 %v3306
  %5843 = vmatprep.subr.bf16.mxu0 %v3313
  %5844 = vmatpush1.bf16.msra.mxu0 %v3312
  %5845 = vmatprep.subr.bf16.mxu0 %v3319
  %5846 = vmatpush1.bf16.msra.mxu0 %v3318
  %5847 = vmatprep.subr.bf16.mxu0 %v3325
  %5848 = vmatpush1.bf16.msra.mxu0 %v3324
  %5849 = vmatprep.subr.bf16.mxu0 %v3331
  %5850 = vmatpush1.bf16.msra.mxu0 %v3330
  %5851 = vmatprep.subr.bf16.mxu0 %v3337
  %5852 = vmatpush1.bf16.msra.mxu0 %v3336
  %5853 = vmatprep.subr.bf16.mxu0 %v3343
  %5854 = vmatpush1.bf16.msra.mxu0 %v3342
  %5855 = vmatprep.subr.bf16.mxu0 %v3349
  %5856 = vmatpush1.bf16.msra.mxu0 %v3348
  %5857 = vmatprep.subr.bf16.mxu0 %v3355
  %5858 = vmatpush1.bf16.msra.mxu0 %v3354
  %5859 = vmatprep.subr.bf16.mxu0 %v3361
  %5860 = vmatpush1.bf16.msra.mxu0 %v3360
  %5861 = vmatprep.subr.bf16.mxu0 %v3367
  %5862 = vmatpush1.bf16.msra.mxu0 %v3366
  %5863 = vmatprep.mubr.bf16.mxu0 %v1071
  %5864 = vmatmul.mubr.bf16.gmra.mrb[0].mxu0 %v1070
  %v5865 = vpop.f32.mrb[0].mxu0
  %v5866 = vadd.f32 %v5753, %v5865
  %v5867 = vpop.f32.mrb[0].mxu0
  %v5868 = vadd.f32 %v5755, %v5867
  %v5869 = vpop.f32.mrb[0].mxu0
  %v5870 = vadd.f32 %v5757, %v5869
  %v5871 = vpop.f32.mrb[0].mxu0
  %v5872 = vadd.f32 %v5759, %v5871
  %5873 = vmatprep.mubr.bf16.mxu0 %v1083
  %5874 = vmatmul.mubr.bf16.gmra.mrb[0].mxu0 %v1082
  %v5875 = vpop.f32.mrb[0].mxu0
  %v5876 = vadd.f32 %v5763, %v5875
  %v5877 = vpop.f32.mrb[0].mxu0
  %v5878 = vadd.f32 %v5765, %v5877
  %v5879 = vpop.f32.mrb[0].mxu0
  %v5880 = vadd.f32 %v5767, %v5879
  %v5881 = vpop.f32.mrb[0].mxu0
  %v5882 = vadd.f32 %v5769, %v5881
  %5883 = vmatprep.mubr.bf16.mxu0 %v1095
  %5884 = vmatmul.mubr.bf16.gmra.mrb[0].mxu0 %v1094
  %v5885 = vpop.f32.mrb[0].mxu0
  %v5886 = vadd.f32 %v5773, %v5885
  %v5887 = vpop.f32.mrb[0].mxu0
  %v5888 = vadd.f32 %v5775, %v5887
  %v5889 = vpop.f32.mrb[0].mxu0
  %v5890 = vadd.f32 %v5777, %v5889
  %v5891 = vpop.f32.mrb[0].mxu0
  %v5892 = vadd.f32 %v5779, %v5891
  %5893 = vmatprep.mubr.bf16.mxu0 %v1107
  %5894 = vmatmul.mubr.bf16.gmra.mrb[0].mxu0 %v1106
  %v5895 = vpop.f32.mrb[0].mxu0
  %v5896 = vadd.f32 %v5783, %v5895
  %v5897 = vpop.f32.mrb[0].mxu0
  %v5898 = vadd.f32 %v5785, %v5897
  %v5899 = vpop.f32.mrb[0].mxu0
  %v5900 = vadd.f32 %v5787, %v5899
  %v5901 = vpop.f32.mrb[0].mxu0
  %v5902 = vadd.f32 %v5789, %v5901
  %5903 = vmatprep.mubr.bf16.mxu0 %v1119
  %5904 = vmatmul.mubr.bf16.gmra.mrb[0].mxu0 %v1118
  %v5905 = vpop.f32.mrb[0].mxu0
  %v5906 = vadd.f32 %v5793, %v5905
  %v5907 = vpop.f32.mrb[0].mxu0
  %v5908 = vadd.f32 %v5795, %v5907
  %v5909 = vpop.f32.mrb[0].mxu0
  %v5910 = vadd.f32 %v5797, %v5909
  %v5911 = vpop.f32.mrb[0].mxu0
  %v5912 = vadd.f32 %v5799, %v5911
  %5913 = vmatprep.mubr.bf16.mxu0 %v1131
  %5914 = vmatmul.mubr.bf16.gmra.mrb[0].mxu0 %v1130
  %v5915 = vpop.f32.mrb[0].mxu0
  %v5916 = vadd.f32 %v5803, %v5915
  %v5917 = vpop.f32.mrb[0].mxu0
  %v5918 = vadd.f32 %v5805, %v5917
  %v5919 = vpop.f32.mrb[0].mxu0
  %v5920 = vadd.f32 %v5807, %v5919
  %v5921 = vpop.f32.mrb[0].mxu0
  %v5922 = vadd.f32 %v5809, %v5921
  %5923 = vmatprep.mubr.bf16.mxu0 %v1143
  %5924 = vmatmul.mubr.bf16.gmra.mrb[0].mxu0 %v1142
  %v5925 = vpop.f32.mrb[0].mxu0
  %v5926 = vadd.f32 %v5813, %v5925
  %v5927 = vpop.f32.mrb[0].mxu0
  %v5928 = vadd.f32 %v5815, %v5927
  %v5929 = vpop.f32.mrb[0].mxu0
  %v5930 = vadd.f32 %v5817, %v5929
  %v5931 = vpop.f32.mrb[0].mxu0
  %v5932 = vadd.f32 %v5819, %v5931
  %5933 = vmatprep.mubr.bf16.mxu0 %v1155
  %5934 = vmatmul.mubr.bf16.gmra.mrb[0].mxu0 %v1154
  %v5935 = vpop.f32.mrb[0].mxu0
  %v5936 = vadd.f32 %v5823, %v5935
  %v5937 = vpop.f32.mrb[0].mxu0
  %v5938 = vadd.f32 %v5825, %v5937
  %v5939 = vpop.f32.mrb[0].mxu0
  %v5940 = vadd.f32 %v5827, %v5939
  %v5941 = vpop.f32.mrb[0].mxu0
  %v5942 = vadd.f32 %v5829, %v5941
  %5943 = vdwg.mxu0
  %5944 = vmatprep.subr.bf16.mxu0 %v3373
  %5945 = vmatpush1.bf16.msra.mxu0 %v3372
  %5946 = vmatprep.subr.bf16.mxu0 %v3379
  %5947 = vmatpush1.bf16.msra.mxu0 %v3378
  %5948 = vmatprep.subr.bf16.mxu0 %v3385
  %5949 = vmatpush1.bf16.msra.mxu0 %v3384
  %5950 = vmatprep.subr.bf16.mxu0 %v3391
  %5951 = vmatpush1.bf16.msra.mxu0 %v3390
  %5952 = vmatprep.subr.bf16.mxu0 %v3397
  %5953 = vmatpush1.bf16.msra.mxu0 %v3396
  %5954 = vmatprep.subr.bf16.mxu0 %v3403
  %5955 = vmatpush1.bf16.msra.mxu0 %v3402
  %5956 = vmatprep.subr.bf16.mxu0 %v3409
  %5957 = vmatpush1.bf16.msra.mxu0 %v3408
  %5958 = vmatprep.subr.bf16.mxu0 %v3415
  %5959 = vmatpush1.bf16.msra.mxu0 %v3414
  %5960 = vmatprep.subr.bf16.mxu0 %v3421
  %5961 = vmatpush1.bf16.msra.mxu0 %v3420
  %5962 = vmatprep.subr.bf16.mxu0 %v3427
  %5963 = vmatpush1.bf16.msra.mxu0 %v3426
  %5964 = vmatprep.subr.bf16.mxu0 %v3433
  %5965 = vmatpush1.bf16.msra.mxu0 %v3432
  %5966 = vmatprep.subr.bf16.mxu0 %v3439
  %5967 = vmatpush1.bf16.msra.mxu0 %v3438
  %5968 = vmatprep.subr.bf16.mxu0 %v3445
  %5969 = vmatpush1.bf16.msra.mxu0 %v3444
  %5970 = vmatprep.subr.bf16.mxu0 %v3451
  %5971 = vmatpush1.bf16.msra.mxu0 %v3450
  %5972 = vmatprep.subr.bf16.mxu0 %v3457
  %5973 = vmatpush1.bf16.msra.mxu0 %v3456
  %5974 = vmatprep.subr.bf16.mxu0 %v3463
  %5975 = vmatpush1.bf16.msra.mxu0 %v3462
  %5976 = vmatprep.mubr.bf16.mxu0 %v1073
  %5977 = vmatmul.mubr.bf16.gmra.mrb[0].mxu0 %v1072
  %v5978 = vpop.f32.mrb[0].mxu0
  %v5979 = vadd.f32 %v5866, %v5978
  %v5980 = vpop.f32.mrb[0].mxu0
  %v5981 = vadd.f32 %v5868, %v5980
  %v5982 = vpop.f32.mrb[0].mxu0
  %v5983 = vadd.f32 %v5870, %v5982
  %v5984 = vpop.f32.mrb[0].mxu0
  %v5985 = vadd.f32 %v5872, %v5984
  %5986 = vmatprep.mubr.bf16.mxu0 %v1085
  %5987 = vmatmul.mubr.bf16.gmra.mrb[0].mxu0 %v1084
  %v5988 = vpop.f32.mrb[0].mxu0
  %v5989 = vadd.f32 %v5876, %v5988
  %v5990 = vpop.f32.mrb[0].mxu0
  %v5991 = vadd.f32 %v5878, %v5990
  %v5992 = vpop.f32.mrb[0].mxu0
  %v5993 = vadd.f32 %v5880, %v5992
  %v5994 = vpop.f32.mrb[0].mxu0
  %v5995 = vadd.f32 %v5882, %v5994
  %5996 = vmatprep.mubr.bf16.mxu0 %v1097
  %5997 = vmatmul.mubr.bf16.gmra.mrb[0].mxu0 %v1096
  %v5998 = vpop.f32.mrb[0].mxu0
  %v5999 = vadd.f32 %v5886, %v5998
  %v6000 = vpop.f32.mrb[0].mxu0
  %v6001 = vadd.f32 %v5888, %v6000
  %v6002 = vpop.f32.mrb[0].mxu0
  %v6003 = vadd.f32 %v5890, %v6002
  %v6004 = vpop.f32.mrb[0].mxu0
  %v6005 = vadd.f32 %v5892, %v6004
  %6006 = vmatprep.mubr.bf16.mxu0 %v1109
  %6007 = vmatmul.mubr.bf16.gmra.mrb[0].mxu0 %v1108
  %v6008 = vpop.f32.mrb[0].mxu0
  %v6009 = vadd.f32 %v5896, %v6008
  %v6010 = vpop.f32.mrb[0].mxu0
  %v6011 = vadd.f32 %v5898, %v6010
  %v6012 = vpop.f32.mrb[0].mxu0
  %v6013 = vadd.f32 %v5900, %v6012
  %v6014 = vpop.f32.mrb[0].mxu0
  %v6015 = vadd.f32 %v5902, %v6014
  %6016 = vmatprep.mubr.bf16.mxu0 %v1121
  %6017 = vmatmul.mubr.bf16.gmra.mrb[0].mxu0 %v1120
  %v6018 = vpop.f32.mrb[0].mxu0
  %v6019 = vadd.f32 %v5906, %v6018
  %v6020 = vpop.f32.mrb[0].mxu0
  %v6021 = vadd.f32 %v5908, %v6020
  %v6022 = vpop.f32.mrb[0].mxu0
  %v6023 = vadd.f32 %v5910, %v6022
  %v6024 = vpop.f32.mrb[0].mxu0
  %v6025 = vadd.f32 %v5912, %v6024
  %6026 = vmatprep.mubr.bf16.mxu0 %v1133
  %6027 = vmatmul.mubr.bf16.gmra.mrb[0].mxu0 %v1132
  %v6028 = vpop.f32.mrb[0].mxu0
  %v6029 = vadd.f32 %v5916, %v6028
  %v6030 = vpop.f32.mrb[0].mxu0
  %v6031 = vadd.f32 %v5918, %v6030
  %v6032 = vpop.f32.mrb[0].mxu0
  %v6033 = vadd.f32 %v5920, %v6032
  %v6034 = vpop.f32.mrb[0].mxu0
  %v6035 = vadd.f32 %v5922, %v6034
  %6036 = vmatprep.mubr.bf16.mxu0 %v1145
  %6037 = vmatmul.mubr.bf16.gmra.mrb[0].mxu0 %v1144
  %v6038 = vpop.f32.mrb[0].mxu0
  %v6039 = vadd.f32 %v5926, %v6038
  %v6040 = vpop.f32.mrb[0].mxu0
  %v6041 = vadd.f32 %v5928, %v6040
  %v6042 = vpop.f32.mrb[0].mxu0
  %v6043 = vadd.f32 %v5930, %v6042
  %v6044 = vpop.f32.mrb[0].mxu0
  %v6045 = vadd.f32 %v5932, %v6044
  %6046 = vmatprep.mubr.bf16.mxu0 %v1157
  %6047 = vmatmul.mubr.bf16.gmra.mrb[0].mxu0 %v1156
  %v6048 = vpop.f32.mrb[0].mxu0
  %v6049 = vadd.f32 %v5936, %v6048
  %v6050 = vpop.f32.mrb[0].mxu0
  %v6051 = vadd.f32 %v5938, %v6050
  %v6052 = vpop.f32.mrb[0].mxu0
  %v6053 = vadd.f32 %v5940, %v6052
  %v6054 = vpop.f32.mrb[0].mxu0
  %v6055 = vadd.f32 %v5942, %v6054
  %6056 = vdwg.mxu0
  %6057 = vmatprep.subr.bf16.mxu0 %v3469
  %6058 = vmatpush1.bf16.msra.mxu0 %v3468
  %6059 = vmatprep.subr.bf16.mxu0 %v3475
  %6060 = vmatpush1.bf16.msra.mxu0 %v3474
  %6061 = vmatprep.subr.bf16.mxu0 %v3481
  %6062 = vmatpush1.bf16.msra.mxu0 %v3480
  %6063 = vmatprep.subr.bf16.mxu0 %v3487
  %6064 = vmatpush1.bf16.msra.mxu0 %v3486
  %6065 = vmatprep.subr.bf16.mxu0 %v3493
  %6066 = vmatpush1.bf16.msra.mxu0 %v3492
  %6067 = vmatprep.subr.bf16.mxu0 %v3499
  %6068 = vmatpush1.bf16.msra.mxu0 %v3498
  %6069 = vmatprep.subr.bf16.mxu0 %v3505
  %6070 = vmatpush1.bf16.msra.mxu0 %v3504
  %6071 = vmatprep.subr.bf16.mxu0 %v3511
  %6072 = vmatpush1.bf16.msra.mxu0 %v3510
  %6073 = vmatprep.subr.bf16.mxu0 %v3517
  %6074 = vmatpush1.bf16.msra.mxu0 %v3516
  %6075 = vmatprep.subr.bf16.mxu0 %v3523
  %6076 = vmatpush1.bf16.msra.mxu0 %v3522
  %6077 = vmatprep.subr.bf16.mxu0 %v3529
  %6078 = vmatpush1.bf16.msra.mxu0 %v3528
  %6079 = vmatprep.subr.bf16.mxu0 %v3535
  %6080 = vmatpush1.bf16.msra.mxu0 %v3534
  %6081 = vmatprep.subr.bf16.mxu0 %v3541
  %6082 = vmatpush1.bf16.msra.mxu0 %v3540
  %6083 = vmatprep.subr.bf16.mxu0 %v3547
  %6084 = vmatpush1.bf16.msra.mxu0 %v3546
  %6085 = vmatprep.subr.bf16.mxu0 %v3553
  %6086 = vmatpush1.bf16.msra.mxu0 %v3552
  %6087 = vmatprep.subr.bf16.mxu0 %v3559
  %6088 = vmatpush1.bf16.msra.mxu0 %v3558
  %6089 = vmatprep.mubr.bf16.mxu0 %v1075
  %6090 = vmatmul.mubr.bf16.gmra.mrb[0].mxu0 %v1074
  %v6091 = vpop.f32.mrb[0].mxu0
  %v6092 = vadd.f32 %v5979, %v6091
  %v6093 = vpop.f32.mrb[0].mxu0
  %v6094 = vadd.f32 %v5981, %v6093
  %v6095 = vpop.f32.mrb[0].mxu0
  %v6096 = vadd.f32 %v5983, %v6095
  %v6097 = vpop.f32.mrb[0].mxu0
  %v6098 = vadd.f32 %v5985, %v6097
  %6099 = vmatprep.mubr.bf16.mxu0 %v1087
  %6100 = vmatmul.mubr.bf16.gmra.mrb[0].mxu0 %v1086
  %v6101 = vpop.f32.mrb[0].mxu0
  %v6102 = vadd.f32 %v5989, %v6101
  %v6103 = vpop.f32.mrb[0].mxu0
  %v6104 = vadd.f32 %v5991, %v6103
  %v6105 = vpop.f32.mrb[0].mxu0
  %v6106 = vadd.f32 %v5993, %v6105
  %v6107 = vpop.f32.mrb[0].mxu0
  %v6108 = vadd.f32 %v5995, %v6107
  %6109 = vmatprep.mubr.bf16.mxu0 %v1099
  %6110 = vmatmul.mubr.bf16.gmra.mrb[0].mxu0 %v1098
  %v6111 = vpop.f32.mrb[0].mxu0
  %v6112 = vadd.f32 %v5999, %v6111
  %v6113 = vpop.f32.mrb[0].mxu0
  %v6114 = vadd.f32 %v6001, %v6113
  %v6115 = vpop.f32.mrb[0].mxu0
  %v6116 = vadd.f32 %v6003, %v6115
  %v6117 = vpop.f32.mrb[0].mxu0
  %v6118 = vadd.f32 %v6005, %v6117
  %6119 = vmatprep.mubr.bf16.mxu0 %v1111
  %6120 = vmatmul.mubr.bf16.gmra.mrb[0].mxu0 %v1110
  %v6121 = vpop.f32.mrb[0].mxu0
  %v6122 = vadd.f32 %v6009, %v6121
  %v6123 = vpop.f32.mrb[0].mxu0
  %v6124 = vadd.f32 %v6011, %v6123
  %v6125 = vpop.f32.mrb[0].mxu0
  %v6126 = vadd.f32 %v6013, %v6125
  %v6127 = vpop.f32.mrb[0].mxu0
  %v6128 = vadd.f32 %v6015, %v6127
  %6129 = vmatprep.mubr.bf16.mxu0 %v1123
  %6130 = vmatmul.mubr.bf16.gmra.mrb[0].mxu0 %v1122
  %v6131 = vpop.f32.mrb[0].mxu0
  %v6132 = vadd.f32 %v6019, %v6131
  %v6133 = vpop.f32.mrb[0].mxu0
  %v6134 = vadd.f32 %v6021, %v6133
  %v6135 = vpop.f32.mrb[0].mxu0
  %v6136 = vadd.f32 %v6023, %v6135
  %v6137 = vpop.f32.mrb[0].mxu0
  %v6138 = vadd.f32 %v6025, %v6137
  %6139 = vmatprep.mubr.bf16.mxu0 %v1135
  %6140 = vmatmul.mubr.bf16.gmra.mrb[0].mxu0 %v1134
  %v6141 = vpop.f32.mrb[0].mxu0
  %v6142 = vadd.f32 %v6029, %v6141
  %v6143 = vpop.f32.mrb[0].mxu0
  %v6144 = vadd.f32 %v6031, %v6143
  %v6145 = vpop.f32.mrb[0].mxu0
  %v6146 = vadd.f32 %v6033, %v6145
  %v6147 = vpop.f32.mrb[0].mxu0
  %v6148 = vadd.f32 %v6035, %v6147
  %6149 = vmatprep.mubr.bf16.mxu0 %v1147
  %6150 = vmatmul.mubr.bf16.gmra.mrb[0].mxu0 %v1146
  %v6151 = vpop.f32.mrb[0].mxu0
  %v6152 = vadd.f32 %v6039, %v6151
  %v6153 = vpop.f32.mrb[0].mxu0
  %v6154 = vadd.f32 %v6041, %v6153
  %v6155 = vpop.f32.mrb[0].mxu0
  %v6156 = vadd.f32 %v6043, %v6155
  %v6157 = vpop.f32.mrb[0].mxu0
  %v6158 = vadd.f32 %v6045, %v6157
  %6159 = vmatprep.mubr.bf16.mxu0 %v1159
  %6160 = vmatmul.mubr.bf16.gmra.mrb[0].mxu0 %v1158
  %v6161 = vpop.f32.mrb[0].mxu0
  %v6162 = vadd.f32 %v6049, %v6161
  %v6163 = vpop.f32.mrb[0].mxu0
  %v6164 = vadd.f32 %v6051, %v6163
  %v6165 = vpop.f32.mrb[0].mxu0
  %v6166 = vadd.f32 %v6053, %v6165
  %v6167 = vpop.f32.mrb[0].mxu0
  %v6168 = vadd.f32 %v6055, %v6167
  %6169 = vdwg.mxu0
  %v6170 = vmax.f32 %v4736, 0.0
  %v6171 = vmax.f32 %v4738, 0.0
  %v6172 = vmax.f32 %v5414, 0.0
  %v6173 = vmax.f32 %v5416, 0.0
  %v6174 = vmax.f32 %v6092, 0.0
  %v6175 = vmax.f32 %v6094, 0.0
  %v6176 = vmax.f32 %v4740, 0.0
  %v6177 = vmax.f32 %v4742, 0.0
  %v6178 = vmax.f32 %v5418, 0.0
  %v6179 = vmax.f32 %v5420, 0.0
  %v6180 = vmax.f32 %v6096, 0.0
  %v6181 = vmax.f32 %v6098, 0.0
  %v6182 = vmax.f32 %v4746, 0.0
  %v6183 = vmax.f32 %v4748, 0.0
  %v6184 = vmax.f32 %v5424, 0.0
  %v6185 = vmax.f32 %v5426, 0.0
  %v6186 = vmax.f32 %v6102, 0.0
  %v6187 = vmax.f32 %v6104, 0.0
  %v6188 = vmax.f32 %v4750, 0.0
  %v6189 = vmax.f32 %v4752, 0.0
  %v6190 = vmax.f32 %v5428, 0.0
  %v6191 = vmax.f32 %v5430, 0.0
  %v6192 = vmax.f32 %v6106, 0.0
  %v6193 = vmax.f32 %v6108, 0.0
  %v6194 = vmax.f32 %v4756, 0.0
  %v6195 = vmax.f32 %v4758, 0.0
  %v6196 = vmax.f32 %v5434, 0.0
  %v6197 = vmax.f32 %v5436, 0.0
  %v6198 = vmax.f32 %v6112, 0.0
  %v6199 = vmax.f32 %v6114, 0.0
  %v6200 = vmax.f32 %v4760, 0.0
  %v6201 = vmax.f32 %v4762, 0.0
  %v6202 = vmax.f32 %v5438, 0.0
  %v6203 = vmax.f32 %v5440, 0.0
  %v6204 = vmax.f32 %v6116, 0.0
  %v6205 = vmax.f32 %v6118, 0.0
  %v6206 = vmax.f32 %v4766, 0.0
  %v6207 = vmax.f32 %v4768, 0.0
  %v6208 = vmax.f32 %v5444, 0.0
  %v6209 = vmax.f32 %v5446, 0.0
  %v6210 = vmax.f32 %v6122, 0.0
  %v6211 = vmax.f32 %v6124, 0.0
  %v6212 = vmax.f32 %v4770, 0.0
  %v6213 = vmax.f32 %v4772, 0.0
  %v6214 = vmax.f32 %v5448, 0.0
  %v6215 = vmax.f32 %v5450, 0.0
  %v6216 = vmax.f32 %v6126, 0.0
  %v6217 = vmax.f32 %v6128, 0.0
  %v6218 = vmax.f32 %v4776, 0.0
  %v6219 = vmax.f32 %v4778, 0.0
  %v6220 = vmax.f32 %v5454, 0.0
  %v6221 = vmax.f32 %v5456, 0.0
  %v6222 = vmax.f32 %v6132, 0.0
  %v6223 = vmax.f32 %v6134, 0.0
  %v6224 = vmax.f32 %v4780, 0.0
  %v6225 = vmax.f32 %v4782, 0.0
  %v6226 = vmax.f32 %v5458, 0.0
  %v6227 = vmax.f32 %v5460, 0.0
  %v6228 = vmax.f32 %v6136, 0.0
  %v6229 = vmax.f32 %v6138, 0.0
  %v6230 = vmax.f32 %v4786, 0.0
  %v6231 = vmax.f32 %v4788, 0.0
  %v6232 = vmax.f32 %v5464, 0.0
  %v6233 = vmax.f32 %v5466, 0.0
  %v6234 = vmax.f32 %v6142, 0.0
  %v6235 = vmax.f32 %v6144, 0.0
  %v6236 = vmax.f32 %v4790, 0.0
  %v6237 = vmax.f32 %v4792, 0.0
  %v6238 = vmax.f32 %v5468, 0.0
  %v6239 = vmax.f32 %v5470, 0.0
  %v6240 = vmax.f32 %v6146, 0.0
  %v6241 = vmax.f32 %v6148, 0.0
  %v6242 = vmax.f32 %v4796, 0.0
  %v6243 = vmax.f32 %v4798, 0.0
  %v6244 = vmax.f32 %v5474, 0.0
  %v6245 = vmax.f32 %v5476, 0.0
  %v6246 = vmax.f32 %v6152, 0.0
  %v6247 = vmax.f32 %v6154, 0.0
  %v6248 = vmax.f32 %v4800, 0.0
  %v6249 = vmax.f32 %v4802, 0.0
  %v6250 = vmax.f32 %v5478, 0.0
  %v6251 = vmax.f32 %v5480, 0.0
  %v6252 = vmax.f32 %v6156, 0.0
  %v6253 = vmax.f32 %v6158, 0.0
  %v6254 = vmax.f32 %v4806, 0.0
  %v6255 = vmax.f32 %v4808, 0.0
  %v6256 = vmax.f32 %v5484, 0.0
  %v6257 = vmax.f32 %v5486, 0.0
  %v6258 = vmax.f32 %v6162, 0.0
  %v6259 = vmax.f32 %v6164, 0.0
  %v6260 = vmax.f32 %v4810, 0.0
  %v6261 = vmax.f32 %v4812, 0.0
  %v6262 = vmax.f32 %v5488, 0.0
  %v6263 = vmax.f32 %v5490, 0.0
  %v6264 = vmax.f32 %v6166, 0.0
  %v6265 = vmax.f32 %v6168, 0.0
  %v6266 = vpack.c.bf16 %v6176, %v6170
  %v6267 = vpack.c.bf16 %v6177, %v6171
  %v6268 = vpack.c.bf16 %v6178, %v6172
  %v6269 = vpack.c.bf16 %v6179, %v6173
  %v6270 = vpack.c.bf16 %v6180, %v6174
  %v6271 = vpack.c.bf16 %v6181, %v6175
  %v6272 = vpack.c.bf16 %v6188, %v6182
  %v6273 = vpack.c.bf16 %v6189, %v6183
  %v6274 = vpack.c.bf16 %v6190, %v6184
  %v6275 = vpack.c.bf16 %v6191, %v6185
  %v6276 = vpack.c.bf16 %v6192, %v6186
  %v6277 = vpack.c.bf16 %v6193, %v6187
  %v6278 = vpack.c.bf16 %v6200, %v6194
  %v6279 = vpack.c.bf16 %v6201, %v6195
  %v6280 = vpack.c.bf16 %v6202, %v6196
  %v6281 = vpack.c.bf16 %v6203, %v6197
  %v6282 = vpack.c.bf16 %v6204, %v6198
  %v6283 = vpack.c.bf16 %v6205, %v6199
  %v6284 = vpack.c.bf16 %v6212, %v6206
  %v6285 = vpack.c.bf16 %v6213, %v6207
  %v6286 = vpack.c.bf16 %v6214, %v6208
  %v6287 = vpack.c.bf16 %v6215, %v6209
  %v6288 = vpack.c.bf16 %v6216, %v6210
  %v6289 = vpack.c.bf16 %v6217, %v6211
  %v6290 = vpack.c.bf16 %v6224, %v6218
  %v6291 = vpack.c.bf16 %v6225, %v6219
  %v6292 = vpack.c.bf16 %v6226, %v6220
  %v6293 = vpack.c.bf16 %v6227, %v6221
  %v6294 = vpack.c.bf16 %v6228, %v6222
  %v6295 = vpack.c.bf16 %v6229, %v6223
  %v6296 = vpack.c.bf16 %v6236, %v6230
  %v6297 = vpack.c.bf16 %v6237, %v6231
  %v6298 = vpack.c.bf16 %v6238, %v6232
  %v6299 = vpack.c.bf16 %v6239, %v6233
  %v6300 = vpack.c.bf16 %v6240, %v6234
  %v6301 = vpack.c.bf16 %v6241, %v6235
  %v6302 = vpack.c.bf16 %v6248, %v6242
  %v6303 = vpack.c.bf16 %v6249, %v6243
  %v6304 = vpack.c.bf16 %v6250, %v6244
  %v6305 = vpack.c.bf16 %v6251, %v6245
  %v6306 = vpack.c.bf16 %v6252, %v6246
  %v6307 = vpack.c.bf16 %v6253, %v6247
  %v6308 = vpack.c.bf16 %v6260, %v6254
  %v6309 = vpack.c.bf16 %v6261, %v6255
  %v6310 = vpack.c.bf16 %v6262, %v6256
  %v6311 = vpack.c.bf16 %v6263, %v6257
  %v6312 = vpack.c.bf16 %v6264, %v6258
  %v6313 = vpack.c.bf16 %v6265, %v6259
  %v6314 = vld [vmem:[%s6] sm:$0xff]
  %v6315 = vld [vmem:[%s6 + $0x8] sm:$0xff]
  %v6316 = vld [vmem:[%s6 + $0x10] sm:$0xff]
  %v6317 = vld [vmem:[%s6 + $0x18] sm:$0xff]
  %v6318 = vld [vmem:[%s6 + $0x20] sm:$0xff]
  %v6319 = vld [vmem:[%s6 + $0x28] sm:$0xff]
  %v6320 = vld [vmem:[%s6 + $0x30] sm:$0xff]
  %v6321 = vld [vmem:[%s6 + $0x38] sm:$0xff]
  %v6322 = vld [vmem:[%s6 + $0x40] sm:$0xff]
  %v6323 = vld [vmem:[%s6 + $0x48] sm:$0xff]
  %v6324 = vld [vmem:[%s6 + $0x50] sm:$0xff]
  %v6325 = vld [vmem:[%s6 + $0x58] sm:$0xff]
  %v6326 = vld [vmem:[%s6 + $0x60] sm:$0xff]
  %v6327 = vld [vmem:[%s6 + $0x68] sm:$0xff]
  %v6328 = vld [vmem:[%s6 + $0x70] sm:$0xff]
  %v6329 = vld [vmem:[%s6 + $0x78] sm:$0xff]
  %v6330 = vld [vmem:[%s6 + $0x80] sm:$0xff]
  %v6331 = vld [vmem:[%s6 + $0x88] sm:$0xff]
  %v6332 = vld [vmem:[%s6 + $0x90] sm:$0xff]
  %v6333 = vld [vmem:[%s6 + $0x98] sm:$0xff]
  %v6334 = vld [vmem:[%s6 + $0xa0] sm:$0xff]
  %v6335 = vld [vmem:[%s6 + $0xa8] sm:$0xff]
  %v6336 = vld [vmem:[%s6 + $0xb0] sm:$0xff]
  %v6337 = vld [vmem:[%s6 + $0xb8] sm:$0xff]
  %v6338 = vld [vmem:[%s6 + $0xc0] sm:$0xff]
  %v6339 = vld [vmem:[%s6 + $0xc8] sm:$0xff]
  %v6340 = vld [vmem:[%s6 + $0xd0] sm:$0xff]
  %v6341 = vld [vmem:[%s6 + $0xd8] sm:$0xff]
  %v6342 = vld [vmem:[%s6 + $0xe0] sm:$0xff]
  %v6343 = vld [vmem:[%s6 + $0xe8] sm:$0xff]
  %v6344 = vld [vmem:[%s6 + $0xf0] sm:$0xff]
  %v6345 = vld [vmem:[%s6 + $0xf8] sm:$0xff]
  %v6346 = vld [vmem:[%s6 + $0x100] sm:$0xff]
  %v6347 = vld [vmem:[%s6 + $0x108] sm:$0xff]
  %v6348 = vld [vmem:[%s6 + $0x110] sm:$0xff]
  %v6349 = vld [vmem:[%s6 + $0x118] sm:$0xff]
  %v6350 = vld [vmem:[%s6 + $0x120] sm:$0xff]
  %v6351 = vld [vmem:[%s6 + $0x128] sm:$0xff]
  %v6352 = vld [vmem:[%s6 + $0x130] sm:$0xff]
  %v6353 = vld [vmem:[%s6 + $0x138] sm:$0xff]
  %v6354 = vld [vmem:[%s6 + $0x140] sm:$0xff]
  %v6355 = vld [vmem:[%s6 + $0x148] sm:$0xff]
  %v6356 = vld [vmem:[%s6 + $0x150] sm:$0xff]
  %v6357 = vld [vmem:[%s6 + $0x158] sm:$0xff]
  %v6358 = vld [vmem:[%s6 + $0x160] sm:$0xff]
  %v6359 = vld [vmem:[%s6 + $0x168] sm:$0xff]
  %v6360 = vld [vmem:[%s6 + $0x170] sm:$0xff]
  %v6361 = vld [vmem:[%s6 + $0x178] sm:$0xff]
  %v6362 = vld [vmem:[%s6 + $0x180] sm:$0xff]
  %v6363 = vld [vmem:[%s6 + $0x188] sm:$0xff]
  %v6364 = vld [vmem:[%s6 + $0x190] sm:$0xff]
  %v6365 = vld [vmem:[%s6 + $0x198] sm:$0xff]
  %v6366 = vld [vmem:[%s6 + $0x1a0] sm:$0xff]
  %v6367 = vld [vmem:[%s6 + $0x1a8] sm:$0xff]
  %v6368 = vld [vmem:[%s6 + $0x1b0] sm:$0xff]
  %v6369 = vld [vmem:[%s6 + $0x1b8] sm:$0xff]
  %v6370 = vld [vmem:[%s6 + $0x1c0] sm:$0xff]
  %v6371 = vld [vmem:[%s6 + $0x1c8] sm:$0xff]
  %v6372 = vld [vmem:[%s6 + $0x1d0] sm:$0xff]
  %v6373 = vld [vmem:[%s6 + $0x1d8] sm:$0xff]
  %v6374 = vld [vmem:[%s6 + $0x1e0] sm:$0xff]
  %v6375 = vld [vmem:[%s6 + $0x1e8] sm:$0xff]
  %v6376 = vld [vmem:[%s6 + $0x1f0] sm:$0xff]
  %v6377 = vld [vmem:[%s6 + $0x1f8] sm:$0xff]
  %v6378 = vld [vmem:[%s6 + $0x200] sm:$0xff]
  %v6379 = vld [vmem:[%s6 + $0x208] sm:$0xff]
  %v6380 = vld [vmem:[%s6 + $0x210] sm:$0xff]
  %v6381 = vld [vmem:[%s6 + $0x218] sm:$0xff]
  %v6382 = vld [vmem:[%s6 + $0x220] sm:$0xff]
  %v6383 = vld [vmem:[%s6 + $0x228] sm:$0xff]
  %v6384 = vld [vmem:[%s6 + $0x230] sm:$0xff]
  %v6385 = vld [vmem:[%s6 + $0x238] sm:$0xff]
  %v6386 = vld [vmem:[%s6 + $0x240] sm:$0xff]
  %v6387 = vld [vmem:[%s6 + $0x248] sm:$0xff]
  %v6388 = vld [vmem:[%s6 + $0x250] sm:$0xff]
  %v6389 = vld [vmem:[%s6 + $0x258] sm:$0xff]
  %v6390 = vld [vmem:[%s6 + $0x260] sm:$0xff]
  %v6391 = vld [vmem:[%s6 + $0x268] sm:$0xff]
  %v6392 = vld [vmem:[%s6 + $0x270] sm:$0xff]
  %v6393 = vld [vmem:[%s6 + $0x278] sm:$0xff]
  %v6394 = vld [vmem:[%s6 + $0x280] sm:$0xff]
  %v6395 = vld [vmem:[%s6 + $0x288] sm:$0xff]
  %v6396 = vld [vmem:[%s6 + $0x290] sm:$0xff]
  %v6397 = vld [vmem:[%s6 + $0x298] sm:$0xff]
  %v6398 = vld [vmem:[%s6 + $0x2a0] sm:$0xff]
  %v6399 = vld [vmem:[%s6 + $0x2a8] sm:$0xff]
  %v6400 = vld [vmem:[%s6 + $0x2b0] sm:$0xff]
  %v6401 = vld [vmem:[%s6 + $0x2b8] sm:$0xff]
  %v6402 = vld [vmem:[%s6 + $0x2c0] sm:$0xff]
  %v6403 = vld [vmem:[%s6 + $0x2c8] sm:$0xff]
  %v6404 = vld [vmem:[%s6 + $0x2d0] sm:$0xff]
  %v6405 = vld [vmem:[%s6 + $0x2d8] sm:$0xff]
  %v6406 = vld [vmem:[%s6 + $0x2e0] sm:$0xff]
  %v6407 = vld [vmem:[%s6 + $0x2e8] sm:$0xff]
  %v6408 = vld [vmem:[%s6 + $0x2f0] sm:$0xff]
  %v6409 = vld [vmem:[%s6 + $0x2f8] sm:$0xff]
  %v6506 = vunpack.c.l.b16 %v6314
  %v6507 = vunpack.c.h.b16 %v6314
  %v6508 = vunpack.c.l.b16 %v6315
  %v6509 = vunpack.c.h.b16 %v6315
  %v6510 = vunpack.c.l.b16 %v6316
  %v6511 = vunpack.c.h.b16 %v6316
  %v6512 = vunpack.c.l.b16 %v6317
  %v6513 = vunpack.c.h.b16 %v6317
  %v6514 = vunpack.c.l.b16 %v6318
  %v6515 = vunpack.c.h.b16 %v6318
  %v6516 = vunpack.c.l.b16 %v6319
  %v6517 = vunpack.c.h.b16 %v6319
  %v6518 = vunpack.c.l.b16 %v6320
  %v6519 = vunpack.c.h.b16 %v6320
  %v6520 = vunpack.c.l.b16 %v6321
  %v6521 = vunpack.c.h.b16 %v6321
  %v6522 = vunpack.c.l.b16 %v6322
  %v6523 = vunpack.c.h.b16 %v6322
  %v6524 = vunpack.c.l.b16 %v6323
  %v6525 = vunpack.c.h.b16 %v6323
  %v6526 = vunpack.c.l.b16 %v6324
  %v6527 = vunpack.c.h.b16 %v6324
  %v6528 = vunpack.c.l.b16 %v6325
  %v6529 = vunpack.c.h.b16 %v6325
  %v6530 = vunpack.c.l.b16 %v6326
  %v6531 = vunpack.c.h.b16 %v6326
  %v6532 = vunpack.c.l.b16 %v6327
  %v6533 = vunpack.c.h.b16 %v6327
  %v6534 = vunpack.c.l.b16 %v6328
  %v6535 = vunpack.c.h.b16 %v6328
  %v6536 = vunpack.c.l.b16 %v6329
  %v6537 = vunpack.c.h.b16 %v6329
  %v6538 = vunpack.c.l.b16 %v6330
  %v6539 = vunpack.c.h.b16 %v6330
  %v6540 = vunpack.c.l.b16 %v6331
  %v6541 = vunpack.c.h.b16 %v6331
  %v6542 = vunpack.c.l.b16 %v6332
  %v6543 = vunpack.c.h.b16 %v6332
  %v6544 = vunpack.c.l.b16 %v6333
  %v6545 = vunpack.c.h.b16 %v6333
  %v6546 = vunpack.c.l.b16 %v6334
  %v6547 = vunpack.c.h.b16 %v6334
  %v6548 = vunpack.c.l.b16 %v6335
  %v6549 = vunpack.c.h.b16 %v6335
  %v6550 = vunpack.c.l.b16 %v6336
  %v6551 = vunpack.c.h.b16 %v6336
  %v6552 = vunpack.c.l.b16 %v6337
  %v6553 = vunpack.c.h.b16 %v6337
  %v6554 = vunpack.c.l.b16 %v6338
  %v6555 = vunpack.c.h.b16 %v6338
  %v6556 = vunpack.c.l.b16 %v6339
  %v6557 = vunpack.c.h.b16 %v6339
  %v6558 = vunpack.c.l.b16 %v6340
  %v6559 = vunpack.c.h.b16 %v6340
  %v6560 = vunpack.c.l.b16 %v6341
  %v6561 = vunpack.c.h.b16 %v6341
  %v6562 = vunpack.c.l.b16 %v6342
  %v6563 = vunpack.c.h.b16 %v6342
  %v6564 = vunpack.c.l.b16 %v6343
  %v6565 = vunpack.c.h.b16 %v6343
  %v6566 = vunpack.c.l.b16 %v6344
  %v6567 = vunpack.c.h.b16 %v6344
  %v6568 = vunpack.c.l.b16 %v6345
  %v6569 = vunpack.c.h.b16 %v6345
  %v6570 = vunpack.c.l.b16 %v6346
  %v6571 = vunpack.c.h.b16 %v6346
  %v6572 = vunpack.c.l.b16 %v6347
  %v6573 = vunpack.c.h.b16 %v6347
  %v6574 = vunpack.c.l.b16 %v6348
  %v6575 = vunpack.c.h.b16 %v6348
  %v6576 = vunpack.c.l.b16 %v6349
  %v6577 = vunpack.c.h.b16 %v6349
  %v6578 = vunpack.c.l.b16 %v6350
  %v6579 = vunpack.c.h.b16 %v6350
  %v6580 = vunpack.c.l.b16 %v6351
  %v6581 = vunpack.c.h.b16 %v6351
  %v6582 = vunpack.c.l.b16 %v6352
  %v6583 = vunpack.c.h.b16 %v6352
  %v6584 = vunpack.c.l.b16 %v6353
  %v6585 = vunpack.c.h.b16 %v6353
  %v6586 = vunpack.c.l.b16 %v6354
  %v6587 = vunpack.c.h.b16 %v6354
  %v6588 = vunpack.c.l.b16 %v6355
  %v6589 = vunpack.c.h.b16 %v6355
  %v6590 = vunpack.c.l.b16 %v6356
  %v6591 = vunpack.c.h.b16 %v6356
  %v6592 = vunpack.c.l.b16 %v6357
  %v6593 = vunpack.c.h.b16 %v6357
  %v6594 = vunpack.c.l.b16 %v6358
  %v6595 = vunpack.c.h.b16 %v6358
  %v6596 = vunpack.c.l.b16 %v6359
  %v6597 = vunpack.c.h.b16 %v6359
  %v6598 = vunpack.c.l.b16 %v6360
  %v6599 = vunpack.c.h.b16 %v6360
  %v6600 = vunpack.c.l.b16 %v6361
  %v6601 = vunpack.c.h.b16 %v6361
  %v6602 = vunpack.c.l.b16 %v6362
  %v6603 = vunpack.c.h.b16 %v6362
  %v6604 = vunpack.c.l.b16 %v6363
  %v6605 = vunpack.c.h.b16 %v6363
  %v6606 = vunpack.c.l.b16 %v6364
  %v6607 = vunpack.c.h.b16 %v6364
  %v6608 = vunpack.c.l.b16 %v6365
  %v6609 = vunpack.c.h.b16 %v6365
  %v6610 = vunpack.c.l.b16 %v6366
  %v6611 = vunpack.c.h.b16 %v6366
  %v6612 = vunpack.c.l.b16 %v6367
  %v6613 = vunpack.c.h.b16 %v6367
  %v6614 = vunpack.c.l.b16 %v6368
  %v6615 = vunpack.c.h.b16 %v6368
  %v6616 = vunpack.c.l.b16 %v6369
  %v6617 = vunpack.c.h.b16 %v6369
  %v6618 = vunpack.c.l.b16 %v6370
  %v6619 = vunpack.c.h.b16 %v6370
  %v6620 = vunpack.c.l.b16 %v6371
  %v6621 = vunpack.c.h.b16 %v6371
  %v6622 = vunpack.c.l.b16 %v6372
  %v6623 = vunpack.c.h.b16 %v6372
  %v6624 = vunpack.c.l.b16 %v6373
  %v6625 = vunpack.c.h.b16 %v6373
  %v6626 = vunpack.c.l.b16 %v6374
  %v6627 = vunpack.c.h.b16 %v6374
  %v6628 = vunpack.c.l.b16 %v6375
  %v6629 = vunpack.c.h.b16 %v6375
  %v6630 = vunpack.c.l.b16 %v6376
  %v6631 = vunpack.c.h.b16 %v6376
  %v6632 = vunpack.c.l.b16 %v6377
  %v6633 = vunpack.c.h.b16 %v6377
  %v6634 = vunpack.c.l.b16 %v6378
  %v6635 = vunpack.c.h.b16 %v6378
  %v6636 = vunpack.c.l.b16 %v6379
  %v6637 = vunpack.c.h.b16 %v6379
  %v6638 = vunpack.c.l.b16 %v6380
  %v6639 = vunpack.c.h.b16 %v6380
  %v6640 = vunpack.c.l.b16 %v6381
  %v6641 = vunpack.c.h.b16 %v6381
  %v6642 = vunpack.c.l.b16 %v6382
  %v6643 = vunpack.c.h.b16 %v6382
  %v6644 = vunpack.c.l.b16 %v6383
  %v6645 = vunpack.c.h.b16 %v6383
  %v6646 = vunpack.c.l.b16 %v6384
  %v6647 = vunpack.c.h.b16 %v6384
  %v6648 = vunpack.c.l.b16 %v6385
  %v6649 = vunpack.c.h.b16 %v6385
  %v6650 = vunpack.c.l.b16 %v6386
  %v6651 = vunpack.c.h.b16 %v6386
  %v6652 = vunpack.c.l.b16 %v6387
  %v6653 = vunpack.c.h.b16 %v6387
  %v6654 = vunpack.c.l.b16 %v6388
  %v6655 = vunpack.c.h.b16 %v6388
  %v6656 = vunpack.c.l.b16 %v6389
  %v6657 = vunpack.c.h.b16 %v6389
  %v6658 = vunpack.c.l.b16 %v6390
  %v6659 = vunpack.c.h.b16 %v6390
  %v6660 = vunpack.c.l.b16 %v6391
  %v6661 = vunpack.c.h.b16 %v6391
  %v6662 = vunpack.c.l.b16 %v6392
  %v6663 = vunpack.c.h.b16 %v6392
  %v6664 = vunpack.c.l.b16 %v6393
  %v6665 = vunpack.c.h.b16 %v6393
  %v6666 = vunpack.c.l.b16 %v6394
  %v6667 = vunpack.c.h.b16 %v6394
  %v6668 = vunpack.c.l.b16 %v6395
  %v6669 = vunpack.c.h.b16 %v6395
  %v6670 = vunpack.c.l.b16 %v6396
  %v6671 = vunpack.c.h.b16 %v6396
  %v6672 = vunpack.c.l.b16 %v6397
  %v6673 = vunpack.c.h.b16 %v6397
  %v6674 = vunpack.c.l.b16 %v6398
  %v6675 = vunpack.c.h.b16 %v6398
  %v6676 = vunpack.c.l.b16 %v6399
  %v6677 = vunpack.c.h.b16 %v6399
  %v6678 = vunpack.c.l.b16 %v6400
  %v6679 = vunpack.c.h.b16 %v6400
  %v6680 = vunpack.c.l.b16 %v6401
  %v6681 = vunpack.c.h.b16 %v6401
  %v6682 = vunpack.c.l.b16 %v6402
  %v6683 = vunpack.c.h.b16 %v6402
  %v6684 = vunpack.c.l.b16 %v6403
  %v6685 = vunpack.c.h.b16 %v6403
  %v6686 = vunpack.c.l.b16 %v6404
  %v6687 = vunpack.c.h.b16 %v6404
  %v6688 = vunpack.c.l.b16 %v6405
  %v6689 = vunpack.c.h.b16 %v6405
  %v6690 = vunpack.c.l.b16 %v6406
  %v6691 = vunpack.c.h.b16 %v6406
  %v6692 = vunpack.c.l.b16 %v6407
  %v6693 = vunpack.c.h.b16 %v6407
  %v6694 = vunpack.c.l.b16 %v6408
  %v6695 = vunpack.c.h.b16 %v6408
  %v6696 = vunpack.c.l.b16 %v6409
  %v6697 = vunpack.c.h.b16 %v6409
  %v6698 = vpack.c.b16 %v6508, %v6506
  %v6699 = vpack.c.b16 %v6509, %v6507
  %v6700 = vpack.c.b16 %v6512, %v6510
  %v6701 = vpack.c.b16 %v6513, %v6511
  %v6702 = vpack.c.b16 %v6516, %v6514
  %v6703 = vpack.c.b16 %v6517, %v6515
  %v6704 = vpack.c.b16 %v6520, %v6518
  %v6705 = vpack.c.b16 %v6521, %v6519
  %v6706 = vpack.c.b16 %v6524, %v6522
  %v6707 = vpack.c.b16 %v6525, %v6523
  %v6708 = vpack.c.b16 %v6528, %v6526
  %v6709 = vpack.c.b16 %v6529, %v6527
  %v6710 = vpack.c.b16 %v6532, %v6530
  %v6711 = vpack.c.b16 %v6533, %v6531
  %v6712 = vpack.c.b16 %v6536, %v6534
  %v6713 = vpack.c.b16 %v6537, %v6535
  %v6714 = vpack.c.b16 %v6540, %v6538
  %v6715 = vpack.c.b16 %v6541, %v6539
  %v6716 = vpack.c.b16 %v6544, %v6542
  %v6717 = vpack.c.b16 %v6545, %v6543
  %v6718 = vpack.c.b16 %v6548, %v6546
  %v6719 = vpack.c.b16 %v6549, %v6547
  %v6720 = vpack.c.b16 %v6552, %v6550
  %v6721 = vpack.c.b16 %v6553, %v6551
  %v6722 = vpack.c.b16 %v6556, %v6554
  %v6723 = vpack.c.b16 %v6557, %v6555
  %v6724 = vpack.c.b16 %v6560, %v6558
  %v6725 = vpack.c.b16 %v6561, %v6559
  %v6726 = vpack.c.b16 %v6564, %v6562
  %v6727 = vpack.c.b16 %v6565, %v6563
  %v6728 = vpack.c.b16 %v6568, %v6566
  %v6729 = vpack.c.b16 %v6569, %v6567
  %v6730 = vpack.c.b16 %v6572, %v6570
  %v6731 = vpack.c.b16 %v6573, %v6571
  %v6732 = vpack.c.b16 %v6576, %v6574
  %v6733 = vpack.c.b16 %v6577, %v6575
  %v6734 = vpack.c.b16 %v6580, %v6578
  %v6735 = vpack.c.b16 %v6581, %v6579
  %v6736 = vpack.c.b16 %v6584, %v6582
  %v6737 = vpack.c.b16 %v6585, %v6583
  %v6738 = vpack.c.b16 %v6588, %v6586
  %v6739 = vpack.c.b16 %v6589, %v6587
  %v6740 = vpack.c.b16 %v6592, %v6590
  %v6741 = vpack.c.b16 %v6593, %v6591
  %v6742 = vpack.c.b16 %v6596, %v6594
  %v6743 = vpack.c.b16 %v6597, %v6595
  %v6744 = vpack.c.b16 %v6600, %v6598
  %v6745 = vpack.c.b16 %v6601, %v6599
  %v6746 = vpack.c.b16 %v6604, %v6602
  %v6747 = vpack.c.b16 %v6605, %v6603
  %v6748 = vpack.c.b16 %v6608, %v6606
  %v6749 = vpack.c.b16 %v6609, %v6607
  %v6750 = vpack.c.b16 %v6612, %v6610
  %v6751 = vpack.c.b16 %v6613, %v6611
  %v6752 = vpack.c.b16 %v6616, %v6614
  %v6753 = vpack.c.b16 %v6617, %v6615
  %v6754 = vpack.c.b16 %v6620, %v6618
  %v6755 = vpack.c.b16 %v6621, %v6619
  %v6756 = vpack.c.b16 %v6624, %v6622
  %v6757 = vpack.c.b16 %v6625, %v6623
  %v6758 = vpack.c.b16 %v6628, %v6626
  %v6759 = vpack.c.b16 %v6629, %v6627
  %v6760 = vpack.c.b16 %v6632, %v6630
  %v6761 = vpack.c.b16 %v6633, %v6631
  %v6762 = vpack.c.b16 %v6636, %v6634
  %v6763 = vpack.c.b16 %v6637, %v6635
  %v6764 = vpack.c.b16 %v6640, %v6638
  %v6765 = vpack.c.b16 %v6641, %v6639
  %v6766 = vpack.c.b16 %v6644, %v6642
  %v6767 = vpack.c.b16 %v6645, %v6643
  %v6768 = vpack.c.b16 %v6648, %v6646
  %v6769 = vpack.c.b16 %v6649, %v6647
  %v6770 = vpack.c.b16 %v6652, %v6650
  %v6771 = vpack.c.b16 %v6653, %v6651
  %v6772 = vpack.c.b16 %v6656, %v6654
  %v6773 = vpack.c.b16 %v6657, %v6655
  %v6774 = vpack.c.b16 %v6660, %v6658
  %v6775 = vpack.c.b16 %v6661, %v6659
  %v6776 = vpack.c.b16 %v6664, %v6662
  %v6777 = vpack.c.b16 %v6665, %v6663
  %v6778 = vpack.c.b16 %v6668, %v6666
  %v6779 = vpack.c.b16 %v6669, %v6667
  %v6780 = vpack.c.b16 %v6672, %v6670
  %v6781 = vpack.c.b16 %v6673, %v6671
  %v6782 = vpack.c.b16 %v6676, %v6674
  %v6783 = vpack.c.b16 %v6677, %v6675
  %v6784 = vpack.c.b16 %v6680, %v6678
  %v6785 = vpack.c.b16 %v6681, %v6679
  %v6786 = vpack.c.b16 %v6684, %v6682
  %v6787 = vpack.c.b16 %v6685, %v6683
  %v6788 = vpack.c.b16 %v6688, %v6686
  %v6789 = vpack.c.b16 %v6689, %v6687
  %v6790 = vpack.c.b16 %v6692, %v6690
  %v6791 = vpack.c.b16 %v6693, %v6691
  %v6792 = vpack.c.b16 %v6696, %v6694
  %v6793 = vpack.c.b16 %v6697, %v6695
  %6890 = vmatprep.subr.bf16.mxu0 %v6699
  %6891 = vmatpush1.bf16.msra.mxu0 %v6698
  %6892 = vmatprep.subr.bf16.mxu0 %v6701
  %6893 = vmatpush1.bf16.msra.mxu0 %v6700
  %6894 = vmatprep.subr.bf16.mxu0 %v6703
  %6895 = vmatpush1.bf16.msra.mxu0 %v6702
  %6896 = vmatprep.subr.bf16.mxu0 %v6705
  %6897 = vmatpush1.bf16.msra.mxu0 %v6704
  %6898 = vmatprep.subr.bf16.mxu0 %v6707
  %6899 = vmatpush1.bf16.msra.mxu0 %v6706
  %6900 = vmatprep.subr.bf16.mxu0 %v6709
  %6901 = vmatpush1.bf16.msra.mxu0 %v6708
  %6902 = vmatprep.subr.bf16.mxu0 %v6711
  %6903 = vmatpush1.bf16.msra.mxu0 %v6710
  %6904 = vmatprep.subr.bf16.mxu0 %v6713
  %6905 = vmatpush1.bf16.msra.mxu0 %v6712
  %6906 = vmatprep.subr.bf16.mxu0 %v6715
  %6907 = vmatpush1.bf16.msra.mxu0 %v6714
  %6908 = vmatprep.subr.bf16.mxu0 %v6717
  %6909 = vmatpush1.bf16.msra.mxu0 %v6716
  %6910 = vmatprep.subr.bf16.mxu0 %v6719
  %6911 = vmatpush1.bf16.msra.mxu0 %v6718
  %6912 = vmatprep.subr.bf16.mxu0 %v6721
  %6913 = vmatpush1.bf16.msra.mxu0 %v6720
  %6914 = vmatprep.subr.bf16.mxu0 %v6723
  %6915 = vmatpush1.bf16.msra.mxu0 %v6722
  %6916 = vmatprep.subr.bf16.mxu0 %v6725
  %6917 = vmatpush1.bf16.msra.mxu0 %v6724
  %6918 = vmatprep.subr.bf16.mxu0 %v6727
  %6919 = vmatpush1.bf16.msra.mxu0 %v6726
  %6920 = vmatprep.subr.bf16.mxu0 %v6729
  %6921 = vmatpush1.bf16.msra.mxu0 %v6728
  %6922 = vmatprep.mubr.bf16.mxu0 %v6267
  %6923 = vmatmul.mubr.bf16.gmra.mrb[0].mxu0 %v6266
  %v6924 = vpop.f32.mrb[0].mxu0
  %v6925 = vadd.f32 0.0, %v6924
  %v6926 = vpop.f32.mrb[0].mxu0
  %v6927 = vadd.f32 0.0, %v6926
  %v6928 = vpop.f32.mrb[0].mxu0
  %v6929 = vadd.f32 0.0, %v6928
  %v6930 = vpop.f32.mrb[0].mxu0
  %v6931 = vadd.f32 0.0, %v6930
  %6932 = vmatprep.mubr.bf16.mxu0 %v6273
  %6933 = vmatmul.mubr.bf16.gmra.mrb[0].mxu0 %v6272
  %v6934 = vpop.f32.mrb[0].mxu0
  %v6935 = vadd.f32 0.0, %v6934
  %v6936 = vpop.f32.mrb[0].mxu0
  %v6937 = vadd.f32 0.0, %v6936
  %v6938 = vpop.f32.mrb[0].mxu0
  %v6939 = vadd.f32 0.0, %v6938
  %v6940 = vpop.f32.mrb[0].mxu0
  %v6941 = vadd.f32 0.0, %v6940
  %6942 = vmatprep.mubr.bf16.mxu0 %v6279
  %6943 = vmatmul.mubr.bf16.gmra.mrb[0].mxu0 %v6278
  %v6944 = vpop.f32.mrb[0].mxu0
  %v6945 = vadd.f32 0.0, %v6944
  %v6946 = vpop.f32.mrb[0].mxu0
  %v6947 = vadd.f32 0.0, %v6946
  %v6948 = vpop.f32.mrb[0].mxu0
  %v6949 = vadd.f32 0.0, %v6948
  %v6950 = vpop.f32.mrb[0].mxu0
  %v6951 = vadd.f32 0.0, %v6950
  %6952 = vmatprep.mubr.bf16.mxu0 %v6285
  %6953 = vmatmul.mubr.bf16.gmra.mrb[0].mxu0 %v6284
  %v6954 = vpop.f32.mrb[0].mxu0
  %v6955 = vadd.f32 0.0, %v6954
  %v6956 = vpop.f32.mrb[0].mxu0
  %v6957 = vadd.f32 0.0, %v6956
  %v6958 = vpop.f32.mrb[0].mxu0
  %v6959 = vadd.f32 0.0, %v6958
  %v6960 = vpop.f32.mrb[0].mxu0
  %v6961 = vadd.f32 0.0, %v6960
  %6962 = vmatprep.mubr.bf16.mxu0 %v6291
  %6963 = vmatmul.mubr.bf16.gmra.mrb[0].mxu0 %v6290
  %v6964 = vpop.f32.mrb[0].mxu0
  %v6965 = vadd.f32 0.0, %v6964
  %v6966 = vpop.f32.mrb[0].mxu0
  %v6967 = vadd.f32 0.0, %v6966
  %v6968 = vpop.f32.mrb[0].mxu0
  %v6969 = vadd.f32 0.0, %v6968
  %v6970 = vpop.f32.mrb[0].mxu0
  %v6971 = vadd.f32 0.0, %v6970
  %6972 = vmatprep.mubr.bf16.mxu0 %v6297
  %6973 = vmatmul.mubr.bf16.gmra.mrb[0].mxu0 %v6296
  %v6974 = vpop.f32.mrb[0].mxu0
  %v6975 = vadd.f32 0.0, %v6974
  %v6976 = vpop.f32.mrb[0].mxu0
  %v6977 = vadd.f32 0.0, %v6976
  %v6978 = vpop.f32.mrb[0].mxu0
  %v6979 = vadd.f32 0.0, %v6978
  %v6980 = vpop.f32.mrb[0].mxu0
  %v6981 = vadd.f32 0.0, %v6980
  %6982 = vmatprep.mubr.bf16.mxu0 %v6303
  %6983 = vmatmul.mubr.bf16.gmra.mrb[0].mxu0 %v6302
  %v6984 = vpop.f32.mrb[0].mxu0
  %v6985 = vadd.f32 0.0, %v6984
  %v6986 = vpop.f32.mrb[0].mxu0
  %v6987 = vadd.f32 0.0, %v6986
  %v6988 = vpop.f32.mrb[0].mxu0
  %v6989 = vadd.f32 0.0, %v6988
  %v6990 = vpop.f32.mrb[0].mxu0
  %v6991 = vadd.f32 0.0, %v6990
  %6992 = vmatprep.mubr.bf16.mxu0 %v6309
  %6993 = vmatmul.mubr.bf16.gmra.mrb[0].mxu0 %v6308
  %v6994 = vpop.f32.mrb[0].mxu0
  %v6995 = vadd.f32 0.0, %v6994
  %v6996 = vpop.f32.mrb[0].mxu0
  %v6997 = vadd.f32 0.0, %v6996
  %v6998 = vpop.f32.mrb[0].mxu0
  %v6999 = vadd.f32 0.0, %v6998
  %v7000 = vpop.f32.mrb[0].mxu0
  %v7001 = vadd.f32 0.0, %v7000
  %7002 = vdwg.mxu0
  %7003 = vmatprep.subr.bf16.mxu0 %v6731
  %7004 = vmatpush1.bf16.msra.mxu0 %v6730
  %7005 = vmatprep.subr.bf16.mxu0 %v6733
  %7006 = vmatpush1.bf16.msra.mxu0 %v6732
  %7007 = vmatprep.subr.bf16.mxu0 %v6735
  %7008 = vmatpush1.bf16.msra.mxu0 %v6734
  %7009 = vmatprep.subr.bf16.mxu0 %v6737
  %7010 = vmatpush1.bf16.msra.mxu0 %v6736
  %7011 = vmatprep.subr.bf16.mxu0 %v6739
  %7012 = vmatpush1.bf16.msra.mxu0 %v6738
  %7013 = vmatprep.subr.bf16.mxu0 %v6741
  %7014 = vmatpush1.bf16.msra.mxu0 %v6740
  %7015 = vmatprep.subr.bf16.mxu0 %v6743
  %7016 = vmatpush1.bf16.msra.mxu0 %v6742
  %7017 = vmatprep.subr.bf16.mxu0 %v6745
  %7018 = vmatpush1.bf16.msra.mxu0 %v6744
  %7019 = vmatprep.subr.bf16.mxu0 %v6747
  %7020 = vmatpush1.bf16.msra.mxu0 %v6746
  %7021 = vmatprep.subr.bf16.mxu0 %v6749
  %7022 = vmatpush1.bf16.msra.mxu0 %v6748
  %7023 = vmatprep.subr.bf16.mxu0 %v6751
  %7024 = vmatpush1.bf16.msra.mxu0 %v6750
  %7025 = vmatprep.subr.bf16.mxu0 %v6753
  %7026 = vmatpush1.bf16.msra.mxu0 %v6752
  %7027 = vmatprep.subr.bf16.mxu0 %v6755
  %7028 = vmatpush1.bf16.msra.mxu0 %v6754
  %7029 = vmatprep.subr.bf16.mxu0 %v6757
  %7030 = vmatpush1.bf16.msra.mxu0 %v6756
  %7031 = vmatprep.subr.bf16.mxu0 %v6759
  %7032 = vmatpush1.bf16.msra.mxu0 %v6758
  %7033 = vmatprep.subr.bf16.mxu0 %v6761
  %7034 = vmatpush1.bf16.msra.mxu0 %v6760
  %7035 = vmatprep.mubr.bf16.mxu0 %v6269
  %7036 = vmatmul.mubr.bf16.gmra.mrb[0].mxu0 %v6268
  %v7037 = vpop.f32.mrb[0].mxu0
  %v7038 = vadd.f32 %v6925, %v7037
  %v7039 = vpop.f32.mrb[0].mxu0
  %v7040 = vadd.f32 %v6927, %v7039
  %v7041 = vpop.f32.mrb[0].mxu0
  %v7042 = vadd.f32 %v6929, %v7041
  %v7043 = vpop.f32.mrb[0].mxu0
  %v7044 = vadd.f32 %v6931, %v7043
  %7045 = vmatprep.mubr.bf16.mxu0 %v6275
  %7046 = vmatmul.mubr.bf16.gmra.mrb[0].mxu0 %v6274
  %v7047 = vpop.f32.mrb[0].mxu0
  %v7048 = vadd.f32 %v6935, %v7047
  %v7049 = vpop.f32.mrb[0].mxu0
  %v7050 = vadd.f32 %v6937, %v7049
  %v7051 = vpop.f32.mrb[0].mxu0
  %v7052 = vadd.f32 %v6939, %v7051
  %v7053 = vpop.f32.mrb[0].mxu0
  %v7054 = vadd.f32 %v6941, %v7053
  %7055 = vmatprep.mubr.bf16.mxu0 %v6281
  %7056 = vmatmul.mubr.bf16.gmra.mrb[0].mxu0 %v6280
  %v7057 = vpop.f32.mrb[0].mxu0
  %v7058 = vadd.f32 %v6945, %v7057
  %v7059 = vpop.f32.mrb[0].mxu0
  %v7060 = vadd.f32 %v6947, %v7059
  %v7061 = vpop.f32.mrb[0].mxu0
  %v7062 = vadd.f32 %v6949, %v7061
  %v7063 = vpop.f32.mrb[0].mxu0
  %v7064 = vadd.f32 %v6951, %v7063
  %7065 = vmatprep.mubr.bf16.mxu0 %v6287
  %7066 = vmatmul.mubr.bf16.gmra.mrb[0].mxu0 %v6286
  %v7067 = vpop.f32.mrb[0].mxu0
  %v7068 = vadd.f32 %v6955, %v7067
  %v7069 = vpop.f32.mrb[0].mxu0
  %v7070 = vadd.f32 %v6957, %v7069
  %v7071 = vpop.f32.mrb[0].mxu0
  %v7072 = vadd.f32 %v6959, %v7071
  %v7073 = vpop.f32.mrb[0].mxu0
  %v7074 = vadd.f32 %v6961, %v7073
  %7075 = vmatprep.mubr.bf16.mxu0 %v6293
  %7076 = vmatmul.mubr.bf16.gmra.mrb[0].mxu0 %v6292
  %v7077 = vpop.f32.mrb[0].mxu0
  %v7078 = vadd.f32 %v6965, %v7077
  %v7079 = vpop.f32.mrb[0].mxu0
  %v7080 = vadd.f32 %v6967, %v7079
  %v7081 = vpop.f32.mrb[0].mxu0
  %v7082 = vadd.f32 %v6969, %v7081
  %v7083 = vpop.f32.mrb[0].mxu0
  %v7084 = vadd.f32 %v6971, %v7083
  %7085 = vmatprep.mubr.bf16.mxu0 %v6299
  %7086 = vmatmul.mubr.bf16.gmra.mrb[0].mxu0 %v6298
  %v7087 = vpop.f32.mrb[0].mxu0
  %v7088 = vadd.f32 %v6975, %v7087
  %v7089 = vpop.f32.mrb[0].mxu0
  %v7090 = vadd.f32 %v6977, %v7089
  %v7091 = vpop.f32.mrb[0].mxu0
  %v7092 = vadd.f32 %v6979, %v7091
  %v7093 = vpop.f32.mrb[0].mxu0
  %v7094 = vadd.f32 %v6981, %v7093
  %7095 = vmatprep.mubr.bf16.mxu0 %v6305
  %7096 = vmatmul.mubr.bf16.gmra.mrb[0].mxu0 %v6304
  %v7097 = vpop.f32.mrb[0].mxu0
  %v7098 = vadd.f32 %v6985, %v7097
  %v7099 = vpop.f32.mrb[0].mxu0
  %v7100 = vadd.f32 %v6987, %v7099
  %v7101 = vpop.f32.mrb[0].mxu0
  %v7102 = vadd.f32 %v6989, %v7101
  %v7103 = vpop.f32.mrb[0].mxu0
  %v7104 = vadd.f32 %v6991, %v7103
  %7105 = vmatprep.mubr.bf16.mxu0 %v6311
  %7106 = vmatmul.mubr.bf16.gmra.mrb[0].mxu0 %v6310
  %v7107 = vpop.f32.mrb[0].mxu0
  %v7108 = vadd.f32 %v6995, %v7107
  %v7109 = vpop.f32.mrb[0].mxu0
  %v7110 = vadd.f32 %v6997, %v7109
  %v7111 = vpop.f32.mrb[0].mxu0
  %v7112 = vadd.f32 %v6999, %v7111
  %v7113 = vpop.f32.mrb[0].mxu0
  %v7114 = vadd.f32 %v7001, %v7113
  %7115 = vdwg.mxu0
  %7116 = vmatprep.subr.bf16.mxu0 %v6763
  %7117 = vmatpush1.bf16.msra.mxu0 %v6762
  %7118 = vmatprep.subr.bf16.mxu0 %v6765
  %7119 = vmatpush1.bf16.msra.mxu0 %v6764
  %7120 = vmatprep.subr.bf16.mxu0 %v6767
  %7121 = vmatpush1.bf16.msra.mxu0 %v6766
  %7122 = vmatprep.subr.bf16.mxu0 %v6769
  %7123 = vmatpush1.bf16.msra.mxu0 %v6768
  %7124 = vmatprep.subr.bf16.mxu0 %v6771
  %7125 = vmatpush1.bf16.msra.mxu0 %v6770
  %7126 = vmatprep.subr.bf16.mxu0 %v6773
  %7127 = vmatpush1.bf16.msra.mxu0 %v6772
  %7128 = vmatprep.subr.bf16.mxu0 %v6775
  %7129 = vmatpush1.bf16.msra.mxu0 %v6774
  %7130 = vmatprep.subr.bf16.mxu0 %v6777
  %7131 = vmatpush1.bf16.msra.mxu0 %v6776
  %7132 = vmatprep.subr.bf16.mxu0 %v6779
  %7133 = vmatpush1.bf16.msra.mxu0 %v6778
  %7134 = vmatprep.subr.bf16.mxu0 %v6781
  %7135 = vmatpush1.bf16.msra.mxu0 %v6780
  %7136 = vmatprep.subr.bf16.mxu0 %v6783
  %7137 = vmatpush1.bf16.msra.mxu0 %v6782
  %7138 = vmatprep.subr.bf16.mxu0 %v6785
  %7139 = vmatpush1.bf16.msra.mxu0 %v6784
  %7140 = vmatprep.subr.bf16.mxu0 %v6787
  %7141 = vmatpush1.bf16.msra.mxu0 %v6786
  %7142 = vmatprep.subr.bf16.mxu0 %v6789
  %7143 = vmatpush1.bf16.msra.mxu0 %v6788
  %7144 = vmatprep.subr.bf16.mxu0 %v6791
  %7145 = vmatpush1.bf16.msra.mxu0 %v6790
  %7146 = vmatprep.subr.bf16.mxu0 %v6793
  %7147 = vmatpush1.bf16.msra.mxu0 %v6792
  %7148 = vmatprep.mubr.bf16.mxu0 %v6271
  %7149 = vmatmul.mubr.bf16.gmra.mrb[0].mxu0 %v6270
  %v7150 = vpop.f32.mrb[0].mxu0
  %v7151 = vadd.f32 %v7038, %v7150
  %v7152 = vpop.f32.mrb[0].mxu0
  %v7153 = vadd.f32 %v7040, %v7152
  %v7154 = vpop.f32.mrb[0].mxu0
  %v7155 = vadd.f32 %v7042, %v7154
  %v7156 = vpop.f32.mrb[0].mxu0
  %v7157 = vadd.f32 %v7044, %v7156
  %7158 = vmatprep.mubr.bf16.mxu0 %v6277
  %7159 = vmatmul.mubr.bf16.gmra.mrb[0].mxu0 %v6276
  %v7160 = vpop.f32.mrb[0].mxu0
  %v7161 = vadd.f32 %v7048, %v7160
  %v7162 = vpop.f32.mrb[0].mxu0
  %v7163 = vadd.f32 %v7050, %v7162
  %v7164 = vpop.f32.mrb[0].mxu0
  %v7165 = vadd.f32 %v7052, %v7164
  %v7166 = vpop.f32.mrb[0].mxu0
  %v7167 = vadd.f32 %v7054, %v7166
  %7168 = vmatprep.mubr.bf16.mxu0 %v6283
  %7169 = vmatmul.mubr.bf16.gmra.mrb[0].mxu0 %v6282
  %v7170 = vpop.f32.mrb[0].mxu0
  %v7171 = vadd.f32 %v7058, %v7170
  %v7172 = vpop.f32.mrb[0].mxu0
  %v7173 = vadd.f32 %v7060, %v7172
  %v7174 = vpop.f32.mrb[0].mxu0
  %v7175 = vadd.f32 %v7062, %v7174
  %v7176 = vpop.f32.mrb[0].mxu0
  %v7177 = vadd.f32 %v7064, %v7176
  %7178 = vmatprep.mubr.bf16.mxu0 %v6289
  %7179 = vmatmul.mubr.bf16.gmra.mrb[0].mxu0 %v6288
  %v7180 = vpop.f32.mrb[0].mxu0
  %v7181 = vadd.f32 %v7068, %v7180
  %v7182 = vpop.f32.mrb[0].mxu0
  %v7183 = vadd.f32 %v7070, %v7182
  %v7184 = vpop.f32.mrb[0].mxu0
  %v7185 = vadd.f32 %v7072, %v7184
  %v7186 = vpop.f32.mrb[0].mxu0
  %v7187 = vadd.f32 %v7074, %v7186
  %7188 = vmatprep.mubr.bf16.mxu0 %v6295
  %7189 = vmatmul.mubr.bf16.gmra.mrb[0].mxu0 %v6294
  %v7190 = vpop.f32.mrb[0].mxu0
  %v7191 = vadd.f32 %v7078, %v7190
  %v7192 = vpop.f32.mrb[0].mxu0
  %v7193 = vadd.f32 %v7080, %v7192
  %v7194 = vpop.f32.mrb[0].mxu0
  %v7195 = vadd.f32 %v7082, %v7194
  %v7196 = vpop.f32.mrb[0].mxu0
  %v7197 = vadd.f32 %v7084, %v7196
  %7198 = vmatprep.mubr.bf16.mxu0 %v6301
  %7199 = vmatmul.mubr.bf16.gmra.mrb[0].mxu0 %v6300
  %v7200 = vpop.f32.mrb[0].mxu0
  %v7201 = vadd.f32 %v7088, %v7200
  %v7202 = vpop.f32.mrb[0].mxu0
  %v7203 = vadd.f32 %v7090, %v7202
  %v7204 = vpop.f32.mrb[0].mxu0
  %v7205 = vadd.f32 %v7092, %v7204
  %v7206 = vpop.f32.mrb[0].mxu0
  %v7207 = vadd.f32 %v7094, %v7206
  %7208 = vmatprep.mubr.bf16.mxu0 %v6307
  %7209 = vmatmul.mubr.bf16.gmra.mrb[0].mxu0 %v6306
  %v7210 = vpop.f32.mrb[0].mxu0
  %v7211 = vadd.f32 %v7098, %v7210
  %v7212 = vpop.f32.mrb[0].mxu0
  %v7213 = vadd.f32 %v7100, %v7212
  %v7214 = vpop.f32.mrb[0].mxu0
  %v7215 = vadd.f32 %v7102, %v7214
  %v7216 = vpop.f32.mrb[0].mxu0
  %v7217 = vadd.f32 %v7104, %v7216
  %7218 = vmatprep.mubr.bf16.mxu0 %v6313
  %7219 = vmatmul.mubr.bf16.gmra.mrb[0].mxu0 %v6312
  %v7220 = vpop.f32.mrb[0].mxu0
  %v7221 = vadd.f32 %v7108, %v7220
  %v7222 = vpop.f32.mrb[0].mxu0
  %v7223 = vadd.f32 %v7110, %v7222
  %v7224 = vpop.f32.mrb[0].mxu0
  %v7225 = vadd.f32 %v7112, %v7224
  %v7226 = vpop.f32.mrb[0].mxu0
  %v7227 = vadd.f32 %v7114, %v7226
  %7228 = vdwg.mxu0
  %v7229 = vpack.c.bf16 %v7155, %v7151
  %v7230 = vpack.c.bf16 %v7157, %v7153
  %v7231 = vpack.c.bf16 %v7165, %v7161
  %v7232 = vpack.c.bf16 %v7167, %v7163
  %v7233 = vpack.c.bf16 %v7175, %v7171
  %v7234 = vpack.c.bf16 %v7177, %v7173
  %v7235 = vpack.c.bf16 %v7185, %v7181
  %v7236 = vpack.c.bf16 %v7187, %v7183
  %v7237 = vpack.c.bf16 %v7195, %v7191
  %v7238 = vpack.c.bf16 %v7197, %v7193
  %v7239 = vpack.c.bf16 %v7205, %v7201
  %v7240 = vpack.c.bf16 %v7207, %v7203
  %v7241 = vpack.c.bf16 %v7215, %v7211
  %v7242 = vpack.c.bf16 %v7217, %v7213
  %v7243 = vpack.c.bf16 %v7225, %v7221
  %v7244 = vpack.c.bf16 %v7227, %v7223
  %v7245 = vld [vmem:[%s7] sm:$0x3]
  %v7247 = vlaneseq
  %v7248 = vshrl.u32 %v7247, 7
  %v7249 = vsub.s32 0, %v7248
  %v7250 = vrot.slane %v7245, %v7249
  %v7251 = vlaneseq
  %v7252 = vshrl.u32 %v7251, 7
  %v7253 = vsub.s32 1, %v7252
  %v7254 = vrot.slane %v7245, %v7253
  %v7273 = vunpack.c.l.b16 %v56
  %v7274 = vunpack.c.l.b16 %v57
  %v7275 = vunpack.c.l.b16 %v58
  %v7276 = vunpack.c.l.b16 %v59
  %v7277 = vunpack.c.l.b16 %v60
  %v7278 = vunpack.c.l.b16 %v61
  %v7279 = vunpack.c.l.b16 %v62
  %v7280 = vunpack.c.l.b16 %v63
  %v7281 = vunpack.c.l.b16 %v64
  %v7282 = vunpack.c.l.b16 %v65
  %v7283 = vunpack.c.l.b16 %v66
  %v7284 = vunpack.c.l.b16 %v67
  %v7285 = vunpack.c.l.b16 %v68
  %v7286 = vunpack.c.l.b16 %v69
  %v7287 = vunpack.c.l.b16 %v70
  %v7288 = vunpack.c.l.b16 %v71
  %v7289 = vpack.c.b16 %v7274, %v7273
  %v7290 = vpack.c.b16 %v7276, %v7275
  %v7291 = vpack.c.b16 %v7278, %v7277
  %v7292 = vpack.c.b16 %v7280, %v7279
  %v7293 = vpack.c.b16 %v7282, %v7281
  %v7294 = vpack.c.b16 %v7284, %v7283
  %v7295 = vpack.c.b16 %v7286, %v7285
  %v7296 = vpack.c.b16 %v7288, %v7287
  %7305 = vmatprep.subr.bf16.mxu0 %v7230
  %7306 = vmatpush1.bf16.msra.mxu0 %v7229
  %7307 = vmatprep.subr.bf16.mxu0 %v7232
  %7308 = vmatpush1.bf16.msra.mxu0 %v7231
  %7309 = vmatprep.subr.bf16.mxu0 %v7234
  %7310 = vmatpush1.bf16.msra.mxu0 %v7233
  %7311 = vmatprep.subr.bf16.mxu0 %v7236
  %7312 = vmatpush1.bf16.msra.mxu0 %v7235
  %7313 = vmatprep.subr.bf16.mxu0 %v7238
  %7314 = vmatpush1.bf16.msra.mxu0 %v7237
  %7315 = vmatprep.subr.bf16.mxu0 %v7240
  %7316 = vmatpush1.bf16.msra.mxu0 %v7239
  %7317 = vmatprep.subr.bf16.mxu0 %v7242
  %7318 = vmatpush1.bf16.msra.mxu0 %v7241
  %7319 = vmatprep.subr.bf16.mxu0 %v7244
  %7320 = vmatpush1.bf16.msra.mxu0 %v7243
  %7321 = vmatprep.subr.bf16.mxu0 0
  %7322 = vmatpush1.bf16.msra.mxu0 0
  %7323 = vmatprep.subr.bf16.mxu0 0
  %7324 = vmatpush1.bf16.msra.mxu0 0
  %7325 = vmatprep.subr.bf16.mxu0 0
  %7326 = vmatpush1.bf16.msra.mxu0 0
  %7327 = vmatprep.subr.bf16.mxu0 0
  %7328 = vmatpush1.bf16.msra.mxu0 0
  %7329 = vmatprep.subr.bf16.mxu0 0
  %7330 = vmatpush1.bf16.msra.mxu0 0
  %7331 = vmatprep.subr.bf16.mxu0 0
  %7332 = vmatpush1.bf16.msra.mxu0 0
  %7333 = vmatprep.subr.bf16.mxu0 0
  %7334 = vmatpush1.bf16.msra.mxu0 0
  %7335 = vmatprep.subr.bf16.mxu0 0
  %7336 = vmatpush1.bf16.msra.mxu0 0
  %7337 = vmatprep.mubr.bf16.mxu0 0
  %7338 = vmatmul.mubr.bf16.gmra.mrb[0].mxu0 %v7289
  %v7339 = vpop.f32.mrb[0].mxu0
  %v7340 = vadd.f32 %v7250, %v7339
  %v7341 = vpop.f32.mrb[0].mxu0
  %v7342 = vadd.f32 %v7254, %v7341
  %v7343 = vpop.f32.mrb[0].mxu0
  %v7344 = vadd.f32 %v7250, %v7343
  %v7345 = vpop.f32.mrb[0].mxu0
  %v7346 = vadd.f32 %v7254, %v7345
  %7347 = vmatprep.mubr.bf16.mxu0 0
  %7348 = vmatmul.mubr.bf16.gmra.mrb[0].mxu0 %v7290
  %v7349 = vpop.f32.mrb[0].mxu0
  %v7350 = vadd.f32 %v7250, %v7349
  %v7351 = vpop.f32.mrb[0].mxu0
  %v7352 = vadd.f32 %v7254, %v7351
  %v7353 = vpop.f32.mrb[0].mxu0
  %v7354 = vadd.f32 %v7250, %v7353
  %v7355 = vpop.f32.mrb[0].mxu0
  %v7356 = vadd.f32 %v7254, %v7355
  %7357 = vmatprep.mubr.bf16.mxu0 0
  %7358 = vmatmul.mubr.bf16.gmra.mrb[0].mxu0 %v7291
  %v7359 = vpop.f32.mrb[0].mxu0
  %v7360 = vadd.f32 %v7250, %v7359
  %v7361 = vpop.f32.mrb[0].mxu0
  %v7362 = vadd.f32 %v7254, %v7361
  %v7363 = vpop.f32.mrb[0].mxu0
  %v7364 = vadd.f32 %v7250, %v7363
  %v7365 = vpop.f32.mrb[0].mxu0
  %v7366 = vadd.f32 %v7254, %v7365
  %7367 = vmatprep.mubr.bf16.mxu0 0
  %7368 = vmatmul.mubr.bf16.gmra.mrb[0].mxu0 %v7292
  %v7369 = vpop.f32.mrb[0].mxu0
  %v7370 = vadd.f32 %v7250, %v7369
  %v7371 = vpop.f32.mrb[0].mxu0
  %v7372 = vadd.f32 %v7254, %v7371
  %v7373 = vpop.f32.mrb[0].mxu0
  %v7374 = vadd.f32 %v7250, %v7373
  %v7375 = vpop.f32.mrb[0].mxu0
  %v7376 = vadd.f32 %v7254, %v7375
  %7377 = vmatprep.mubr.bf16.mxu0 0
  %7378 = vmatmul.mubr.bf16.gmra.mrb[0].mxu0 %v7293
  %v7379 = vpop.f32.mrb[0].mxu0
  %v7380 = vadd.f32 %v7250, %v7379
  %v7381 = vpop.f32.mrb[0].mxu0
  %v7382 = vadd.f32 %v7254, %v7381
  %v7383 = vpop.f32.mrb[0].mxu0
  %v7384 = vadd.f32 %v7250, %v7383
  %v7385 = vpop.f32.mrb[0].mxu0
  %v7386 = vadd.f32 %v7254, %v7385
  %7387 = vmatprep.mubr.bf16.mxu0 0
  %7388 = vmatmul.mubr.bf16.gmra.mrb[0].mxu0 %v7294
  %v7389 = vpop.f32.mrb[0].mxu0
  %v7390 = vadd.f32 %v7250, %v7389
  %v7391 = vpop.f32.mrb[0].mxu0
  %v7392 = vadd.f32 %v7254, %v7391
  %v7393 = vpop.f32.mrb[0].mxu0
  %v7394 = vadd.f32 %v7250, %v7393
  %v7395 = vpop.f32.mrb[0].mxu0
  %v7396 = vadd.f32 %v7254, %v7395
  %7397 = vmatprep.mubr.bf16.mxu0 0
  %7398 = vmatmul.mubr.bf16.gmra.mrb[0].mxu0 %v7295
  %v7399 = vpop.f32.mrb[0].mxu0
  %v7400 = vadd.f32 %v7250, %v7399
  %v7401 = vpop.f32.mrb[0].mxu0
  %v7402 = vadd.f32 %v7254, %v7401
  %v7403 = vpop.f32.mrb[0].mxu0
  %v7404 = vadd.f32 %v7250, %v7403
  %v7405 = vpop.f32.mrb[0].mxu0
  %v7406 = vadd.f32 %v7254, %v7405
  %7407 = vmatprep.mubr.bf16.mxu0 0
  %7408 = vmatmul.mubr.bf16.gmra.mrb[0].mxu0 %v7296
  %v7409 = vpop.f32.mrb[0].mxu0
  %v7410 = vadd.f32 %v7250, %v7409
  %v7411 = vpop.f32.mrb[0].mxu0
  %v7412 = vadd.f32 %v7254, %v7411
  %v7413 = vpop.f32.mrb[0].mxu0
  %v7414 = vadd.f32 %v7250, %v7413
  %v7415 = vpop.f32.mrb[0].mxu0
  %v7416 = vadd.f32 %v7254, %v7415
  %7417 = vdwg.mxu0
  %v7418 = vmax.f32 %v7340, 0.0
  %v7419 = vmax.f32 %v7342, 0.0
  %v7420 = vmax.f32 %v7344, 0.0
  %v7421 = vmax.f32 %v7346, 0.0
  %v7422 = vmax.f32 %v7350, 0.0
  %v7423 = vmax.f32 %v7352, 0.0
  %v7424 = vmax.f32 %v7354, 0.0
  %v7425 = vmax.f32 %v7356, 0.0
  %v7426 = vmax.f32 %v7360, 0.0
  %v7427 = vmax.f32 %v7362, 0.0
  %v7428 = vmax.f32 %v7364, 0.0
  %v7429 = vmax.f32 %v7366, 0.0
  %v7430 = vmax.f32 %v7370, 0.0
  %v7431 = vmax.f32 %v7372, 0.0
  %v7432 = vmax.f32 %v7374, 0.0
  %v7433 = vmax.f32 %v7376, 0.0
  %v7434 = vmax.f32 %v7380, 0.0
  %v7435 = vmax.f32 %v7382, 0.0
  %v7436 = vmax.f32 %v7384, 0.0
  %v7437 = vmax.f32 %v7386, 0.0
  %v7438 = vmax.f32 %v7390, 0.0
  %v7439 = vmax.f32 %v7392, 0.0
  %v7440 = vmax.f32 %v7394, 0.0
  %v7441 = vmax.f32 %v7396, 0.0
  %v7442 = vmax.f32 %v7400, 0.0
  %v7443 = vmax.f32 %v7402, 0.0
  %v7444 = vmax.f32 %v7404, 0.0
  %v7445 = vmax.f32 %v7406, 0.0
  %v7446 = vmax.f32 %v7410, 0.0
  %v7447 = vmax.f32 %v7412, 0.0
  %v7448 = vmax.f32 %v7414, 0.0
  %v7449 = vmax.f32 %v7416, 0.0
  %v7450 = vpack.c.bf16 %v7420, %v7418
  %v7451 = vpack.c.bf16 %v7421, %v7419
  %v7452 = vpack.c.bf16 %v7424, %v7422
  %v7453 = vpack.c.bf16 %v7425, %v7423
  %v7454 = vpack.c.bf16 %v7428, %v7426
  %v7455 = vpack.c.bf16 %v7429, %v7427
  %v7456 = vpack.c.bf16 %v7432, %v7430
  %v7457 = vpack.c.bf16 %v7433, %v7431
  %v7458 = vpack.c.bf16 %v7436, %v7434
  %v7459 = vpack.c.bf16 %v7437, %v7435
  %v7460 = vpack.c.bf16 %v7440, %v7438
  %v7461 = vpack.c.bf16 %v7441, %v7439
  %v7462 = vpack.c.bf16 %v7444, %v7442
  %v7463 = vpack.c.bf16 %v7445, %v7443
  %v7464 = vpack.c.bf16 %v7448, %v7446
  %v7465 = vpack.c.bf16 %v7449, %v7447
  %7466 = vst [vmem:[#allocation2] sm:$0xff] %v7450
  %7467 = vst [vmem:[#allocation2 + $0x8] sm:$0xff] %v7451
  %7468 = vst [vmem:[#allocation2 + $0x30] sm:$0xff] %v7452
  %7469 = vst [vmem:[#allocation2 + $0x38] sm:$0xff] %v7453
  %7470 = vst [vmem:[#allocation2 + $0x60] sm:$0xff] %v7454
  %7471 = vst [vmem:[#allocation2 + $0x68] sm:$0xff] %v7455
  %7472 = vst [vmem:[#allocation2 + $0x90] sm:$0xff] %v7456
  %7473 = vst [vmem:[#allocation2 + $0x98] sm:$0xff] %v7457
  %7474 = vst [vmem:[#allocation2 + $0xc0] sm:$0xff] %v7458
  %7475 = vst [vmem:[#allocation2 + $0xc8] sm:$0xff] %v7459
  %7476 = vst [vmem:[#allocation2 + $0xf0] sm:$0xff] %v7460
  %7477 = vst [vmem:[#allocation2 + $0xf8] sm:$0xff] %v7461
  %7478 = vst [vmem:[#allocation2 + $0x120] sm:$0xff] %v7462
  %7479 = vst [vmem:[#allocation2 + $0x128] sm:$0xff] %v7463
  %7480 = vst [vmem:[#allocation2 + $0x150] sm:$0xff] %v7464
  %7481 = vst [vmem:[#allocation2 + $0x158] sm:$0xff] %v7465
  %v7482 = vld [vmem:[%s8] sm:$0xff]
  %v7483 = vld [vmem:[%s8 + $0x8] sm:$0xff]
  %v7484 = vld [vmem:[%s8 + $0x10] sm:$0xff]
  %v7485 = vld [vmem:[%s8 + $0x18] sm:$0xff]
  %v7486 = vld [vmem:[%s8 + $0x20] sm:$0xff]
  %v7487 = vld [vmem:[%s8 + $0x28] sm:$0xff]
  %v7488 = vld [vmem:[%s8 + $0x30] sm:$0xff]
  %v7489 = vld [vmem:[%s8 + $0x38] sm:$0xff]
  %v7490 = vld [vmem:[%s8 + $0x40] sm:$0xff]
  %v7491 = vld [vmem:[%s8 + $0x48] sm:$0xff]
  %v7492 = vld [vmem:[%s8 + $0x50] sm:$0xff]
  %v7493 = vld [vmem:[%s8 + $0x58] sm:$0xff]
  %v7494 = vld [vmem:[%s8 + $0x60] sm:$0xff]
  %v7495 = vld [vmem:[%s8 + $0x68] sm:$0xff]
  %v7496 = vld [vmem:[%s8 + $0x70] sm:$0xff]
  %v7497 = vld [vmem:[%s8 + $0x78] sm:$0xff]
  %v7498 = vld [vmem:[%s8 + $0x80] sm:$0xff]
  %v7499 = vld [vmem:[%s8 + $0x88] sm:$0xff]
  %v7500 = vld [vmem:[%s8 + $0x90] sm:$0xff]
  %v7501 = vld [vmem:[%s8 + $0x98] sm:$0xff]
  %v7502 = vld [vmem:[%s8 + $0xa0] sm:$0xff]
  %v7503 = vld [vmem:[%s8 + $0xa8] sm:$0xff]
  %v7504 = vld [vmem:[%s8 + $0xb0] sm:$0xff]
  %v7505 = vld [vmem:[%s8 + $0xb8] sm:$0xff]
  %v7506 = vld [vmem:[%s8 + $0xc0] sm:$0xff]
  %v7507 = vld [vmem:[%s8 + $0xc8] sm:$0xff]
  %v7508 = vld [vmem:[%s8 + $0xd0] sm:$0xff]
  %v7509 = vld [vmem:[%s8 + $0xd8] sm:$0xff]
  %v7510 = vld [vmem:[%s8 + $0xe0] sm:$0xff]
  %v7511 = vld [vmem:[%s8 + $0xe8] sm:$0xff]
  %v7512 = vld [vmem:[%s8 + $0xf0] sm:$0xff]
  %v7513 = vld [vmem:[%s8 + $0xf8] sm:$0xff]
  %v7546 = vunpack.c.l.b16 %v7482
  %v7547 = vunpack.c.h.b16 %v7482
  %v7548 = vunpack.c.l.b16 %v7483
  %v7549 = vunpack.c.h.b16 %v7483
  %v7550 = vunpack.c.l.b16 %v7484
  %v7551 = vunpack.c.h.b16 %v7484
  %v7552 = vunpack.c.l.b16 %v7485
  %v7553 = vunpack.c.h.b16 %v7485
  %v7554 = vunpack.c.l.b16 %v7486
  %v7555 = vunpack.c.h.b16 %v7486
  %v7556 = vunpack.c.l.b16 %v7487
  %v7557 = vunpack.c.h.b16 %v7487
  %v7558 = vunpack.c.l.b16 %v7488
  %v7559 = vunpack.c.h.b16 %v7488
  %v7560 = vunpack.c.l.b16 %v7489
  %v7561 = vunpack.c.h.b16 %v7489
  %v7562 = vunpack.c.l.b16 %v7490
  %v7563 = vunpack.c.h.b16 %v7490
  %v7564 = vunpack.c.l.b16 %v7491
  %v7565 = vunpack.c.h.b16 %v7491
  %v7566 = vunpack.c.l.b16 %v7492
  %v7567 = vunpack.c.h.b16 %v7492
  %v7568 = vunpack.c.l.b16 %v7493
  %v7569 = vunpack.c.h.b16 %v7493
  %v7570 = vunpack.c.l.b16 %v7494
  %v7571 = vunpack.c.h.b16 %v7494
  %v7572 = vunpack.c.l.b16 %v7495
  %v7573 = vunpack.c.h.b16 %v7495
  %v7574 = vunpack.c.l.b16 %v7496
  %v7575 = vunpack.c.h.b16 %v7496
  %v7576 = vunpack.c.l.b16 %v7497
  %v7577 = vunpack.c.h.b16 %v7497
  %v7578 = vunpack.c.l.b16 %v7498
  %v7579 = vunpack.c.h.b16 %v7498
  %v7580 = vunpack.c.l.b16 %v7499
  %v7581 = vunpack.c.h.b16 %v7499
  %v7582 = vunpack.c.l.b16 %v7500
  %v7583 = vunpack.c.h.b16 %v7500
  %v7584 = vunpack.c.l.b16 %v7501
  %v7585 = vunpack.c.h.b16 %v7501
  %v7586 = vunpack.c.l.b16 %v7502
  %v7587 = vunpack.c.h.b16 %v7502
  %v7588 = vunpack.c.l.b16 %v7503
  %v7589 = vunpack.c.h.b16 %v7503
  %v7590 = vunpack.c.l.b16 %v7504
  %v7591 = vunpack.c.h.b16 %v7504
  %v7592 = vunpack.c.l.b16 %v7505
  %v7593 = vunpack.c.h.b16 %v7505
  %v7594 = vunpack.c.l.b16 %v7506
  %v7595 = vunpack.c.h.b16 %v7506
  %v7596 = vunpack.c.l.b16 %v7507
  %v7597 = vunpack.c.h.b16 %v7507
  %v7598 = vunpack.c.l.b16 %v7508
  %v7599 = vunpack.c.h.b16 %v7508
  %v7600 = vunpack.c.l.b16 %v7509
  %v7601 = vunpack.c.h.b16 %v7509
  %v7602 = vunpack.c.l.b16 %v7510
  %v7603 = vunpack.c.h.b16 %v7510
  %v7604 = vunpack.c.l.b16 %v7511
  %v7605 = vunpack.c.h.b16 %v7511
  %v7606 = vunpack.c.l.b16 %v7512
  %v7607 = vunpack.c.h.b16 %v7512
  %v7608 = vunpack.c.l.b16 %v7513
  %v7609 = vunpack.c.h.b16 %v7513
  %v7610 = vpack.c.b16 %v7548, %v7546
  %v7611 = vpack.c.b16 %v7549, %v7547
  %v7612 = vpack.c.b16 %v7552, %v7550
  %v7613 = vpack.c.b16 %v7553, %v7551
  %v7614 = vpack.c.b16 %v7556, %v7554
  %v7615 = vpack.c.b16 %v7557, %v7555
  %v7616 = vpack.c.b16 %v7560, %v7558
  %v7617 = vpack.c.b16 %v7561, %v7559
  %v7618 = vpack.c.b16 %v7564, %v7562
  %v7619 = vpack.c.b16 %v7565, %v7563
  %v7620 = vpack.c.b16 %v7568, %v7566
  %v7621 = vpack.c.b16 %v7569, %v7567
  %v7622 = vpack.c.b16 %v7572, %v7570
  %v7623 = vpack.c.b16 %v7573, %v7571
  %v7624 = vpack.c.b16 %v7576, %v7574
  %v7625 = vpack.c.b16 %v7577, %v7575
  %v7626 = vpack.c.b16 %v7580, %v7578
  %v7627 = vpack.c.b16 %v7581, %v7579
  %v7628 = vpack.c.b16 %v7584, %v7582
  %v7629 = vpack.c.b16 %v7585, %v7583
  %v7630 = vpack.c.b16 %v7588, %v7586
  %v7631 = vpack.c.b16 %v7589, %v7587
  %v7632 = vpack.c.b16 %v7592, %v7590
  %v7633 = vpack.c.b16 %v7593, %v7591
  %v7634 = vpack.c.b16 %v7596, %v7594
  %v7635 = vpack.c.b16 %v7597, %v7595
  %v7636 = vpack.c.b16 %v7600, %v7598
  %v7637 = vpack.c.b16 %v7601, %v7599
  %v7638 = vpack.c.b16 %v7604, %v7602
  %v7639 = vpack.c.b16 %v7605, %v7603
  %v7640 = vpack.c.b16 %v7608, %v7606
  %v7641 = vpack.c.b16 %v7609, %v7607
  %7674 = vmatprep.subr.bf16.mxu0 %v7611
  %7675 = vmatpush1.bf16.msra.mxu0 %v7610
  %7676 = vmatprep.subr.bf16.mxu0 %v7613
  %7677 = vmatpush1.bf16.msra.mxu0 %v7612
  %7678 = vmatprep.subr.bf16.mxu0 %v7615
  %7679 = vmatpush1.bf16.msra.mxu0 %v7614
  %7680 = vmatprep.subr.bf16.mxu0 %v7617
  %7681 = vmatpush1.bf16.msra.mxu0 %v7616
  %7682 = vmatprep.subr.bf16.mxu0 %v7619
  %7683 = vmatpush1.bf16.msra.mxu0 %v7618
  %7684 = vmatprep.subr.bf16.mxu0 %v7621
  %7685 = vmatpush1.bf16.msra.mxu0 %v7620
  %7686 = vmatprep.subr.bf16.mxu0 %v7623
  %7687 = vmatpush1.bf16.msra.mxu0 %v7622
  %7688 = vmatprep.subr.bf16.mxu0 %v7625
  %7689 = vmatpush1.bf16.msra.mxu0 %v7624
  %7690 = vmatprep.subr.bf16.mxu0 %v7627
  %7691 = vmatpush1.bf16.msra.mxu0 %v7626
  %7692 = vmatprep.subr.bf16.mxu0 %v7629
  %7693 = vmatpush1.bf16.msra.mxu0 %v7628
  %7694 = vmatprep.subr.bf16.mxu0 %v7631
  %7695 = vmatpush1.bf16.msra.mxu0 %v7630
  %7696 = vmatprep.subr.bf16.mxu0 %v7633
  %7697 = vmatpush1.bf16.msra.mxu0 %v7632
  %7698 = vmatprep.subr.bf16.mxu0 %v7635
  %7699 = vmatpush1.bf16.msra.mxu0 %v7634
  %7700 = vmatprep.subr.bf16.mxu0 %v7637
  %7701 = vmatpush1.bf16.msra.mxu0 %v7636
  %7702 = vmatprep.subr.bf16.mxu0 %v7639
  %7703 = vmatpush1.bf16.msra.mxu0 %v7638
  %7704 = vmatprep.subr.bf16.mxu0 %v7641
  %7705 = vmatpush1.bf16.msra.mxu0 %v7640
  %7706 = vmatprep.mubr.bf16.mxu0 %v7451
  %7707 = vmatmul.mubr.bf16.gmra.mrb[0].mxu0 %v7450
  %v7708 = vpop.f32.mrb[0].mxu0
  %v7709 = vadd.f32 0.0, %v7708
  %v7710 = vpop.f32.mrb[0].mxu0
  %v7711 = vadd.f32 0.0, %v7710
  %v7712 = vpop.f32.mrb[0].mxu0
  %v7713 = vadd.f32 0.0, %v7712
  %v7714 = vpop.f32.mrb[0].mxu0
  %v7715 = vadd.f32 0.0, %v7714
  %7716 = vmatprep.mubr.bf16.mxu0 %v7453
  %7717 = vmatmul.mubr.bf16.gmra.mrb[0].mxu0 %v7452
  %v7718 = vpop.f32.mrb[0].mxu0
  %v7719 = vadd.f32 0.0, %v7718
  %v7720 = vpop.f32.mrb[0].mxu0
  %v7721 = vadd.f32 0.0, %v7720
  %v7722 = vpop.f32.mrb[0].mxu0
  %v7723 = vadd.f32 0.0, %v7722
  %v7724 = vpop.f32.mrb[0].mxu0
  %v7725 = vadd.f32 0.0, %v7724
  %7726 = vmatprep.mubr.bf16.mxu0 %v7455
  %7727 = vmatmul.mubr.bf16.gmra.mrb[0].mxu0 %v7454
  %v7728 = vpop.f32.mrb[0].mxu0
  %v7729 = vadd.f32 0.0, %v7728
  %v7730 = vpop.f32.mrb[0].mxu0
  %v7731 = vadd.f32 0.0, %v7730
  %v7732 = vpop.f32.mrb[0].mxu0
  %v7733 = vadd.f32 0.0, %v7732
  %v7734 = vpop.f32.mrb[0].mxu0
  %v7735 = vadd.f32 0.0, %v7734
  %7736 = vmatprep.mubr.bf16.mxu0 %v7457
  %7737 = vmatmul.mubr.bf16.gmra.mrb[0].mxu0 %v7456
  %v7738 = vpop.f32.mrb[0].mxu0
  %v7739 = vadd.f32 0.0, %v7738
  %v7740 = vpop.f32.mrb[0].mxu0
  %v7741 = vadd.f32 0.0, %v7740
  %v7742 = vpop.f32.mrb[0].mxu0
  %v7743 = vadd.f32 0.0, %v7742
  %v7744 = vpop.f32.mrb[0].mxu0
  %v7745 = vadd.f32 0.0, %v7744
  %7746 = vmatprep.mubr.bf16.mxu0 %v7459
  %7747 = vmatmul.mubr.bf16.gmra.mrb[0].mxu0 %v7458
  %v7748 = vpop.f32.mrb[0].mxu0
  %v7749 = vadd.f32 0.0, %v7748
  %v7750 = vpop.f32.mrb[0].mxu0
  %v7751 = vadd.f32 0.0, %v7750
  %v7752 = vpop.f32.mrb[0].mxu0
  %v7753 = vadd.f32 0.0, %v7752
  %v7754 = vpop.f32.mrb[0].mxu0
  %v7755 = vadd.f32 0.0, %v7754
  %7756 = vmatprep.mubr.bf16.mxu0 %v7461
  %7757 = vmatmul.mubr.bf16.gmra.mrb[0].mxu0 %v7460
  %v7758 = vpop.f32.mrb[0].mxu0
  %v7759 = vadd.f32 0.0, %v7758
  %v7760 = vpop.f32.mrb[0].mxu0
  %v7761 = vadd.f32 0.0, %v7760
  %v7762 = vpop.f32.mrb[0].mxu0
  %v7763 = vadd.f32 0.0, %v7762
  %v7764 = vpop.f32.mrb[0].mxu0
  %v7765 = vadd.f32 0.0, %v7764
  %7766 = vmatprep.mubr.bf16.mxu0 %v7463
  %7767 = vmatmul.mubr.bf16.gmra.mrb[0].mxu0 %v7462
  %v7768 = vpop.f32.mrb[0].mxu0
  %v7769 = vadd.f32 0.0, %v7768
  %v7770 = vpop.f32.mrb[0].mxu0
  %v7771 = vadd.f32 0.0, %v7770
  %v7772 = vpop.f32.mrb[0].mxu0
  %v7773 = vadd.f32 0.0, %v7772
  %v7774 = vpop.f32.mrb[0].mxu0
  %v7775 = vadd.f32 0.0, %v7774
  %7776 = vmatprep.mubr.bf16.mxu0 %v7465
  %7777 = vmatmul.mubr.bf16.gmra.mrb[0].mxu0 %v7464
  %v7778 = vpop.f32.mrb[0].mxu0
  %v7779 = vadd.f32 0.0, %v7778
  %v7780 = vpop.f32.mrb[0].mxu0
  %v7781 = vadd.f32 0.0, %v7780
  %v7782 = vpop.f32.mrb[0].mxu0
  %v7783 = vadd.f32 0.0, %v7782
  %v7784 = vpop.f32.mrb[0].mxu0
  %v7785 = vadd.f32 0.0, %v7784
  %7786 = vdwg.mxu0
  %v7787 = vpack.c.bf16 %v7713, %v7709
  %v7788 = vpack.c.bf16 %v7715, %v7711
  %v7789 = vpack.c.bf16 %v7723, %v7719
  %v7790 = vpack.c.bf16 %v7725, %v7721
  %v7791 = vpack.c.bf16 %v7733, %v7729
  %v7792 = vpack.c.bf16 %v7735, %v7731
  %v7793 = vpack.c.bf16 %v7743, %v7739
  %v7794 = vpack.c.bf16 %v7745, %v7741
  %v7795 = vpack.c.bf16 %v7753, %v7749
  %v7796 = vpack.c.bf16 %v7755, %v7751
  %v7797 = vpack.c.bf16 %v7763, %v7759
  %v7798 = vpack.c.bf16 %v7765, %v7761
  %v7799 = vpack.c.bf16 %v7773, %v7769
  %v7800 = vpack.c.bf16 %v7775, %v7771
  %v7801 = vpack.c.bf16 %v7783, %v7779
  %v7802 = vpack.c.bf16 %v7785, %v7781
  %v7803 = vld [vmem:[%s9] sm:$0x3]
  %v7805 = vlaneseq
  %v7806 = vshrl.u32 %v7805, 7
  %v7807 = vsub.s32 0, %v7806
  %v7808 = vrot.slane %v7803, %v7807
  %v7809 = vlaneseq
  %v7810 = vshrl.u32 %v7809, 7
  %v7811 = vsub.s32 1, %v7810
  %v7812 = vrot.slane %v7803, %v7811
  %7815 = vmatprep.subr.bf16.mxu0 %v7788
  %7816 = vmatpush1.bf16.msra.mxu0 %v7787
  %7817 = vmatprep.subr.bf16.mxu0 %v7790
  %7818 = vmatpush1.bf16.msra.mxu0 %v7789
  %7819 = vmatprep.subr.bf16.mxu0 %v7792
  %7820 = vmatpush1.bf16.msra.mxu0 %v7791
  %7821 = vmatprep.subr.bf16.mxu0 %v7794
  %7822 = vmatpush1.bf16.msra.mxu0 %v7793
  %7823 = vmatprep.subr.bf16.mxu0 %v7796
  %7824 = vmatpush1.bf16.msra.mxu0 %v7795
  %7825 = vmatprep.subr.bf16.mxu0 %v7798
  %7826 = vmatpush1.bf16.msra.mxu0 %v7797
  %7827 = vmatprep.subr.bf16.mxu0 %v7800
  %7828 = vmatpush1.bf16.msra.mxu0 %v7799
  %7829 = vmatprep.subr.bf16.mxu0 %v7802
  %7830 = vmatpush1.bf16.msra.mxu0 %v7801
  %7831 = vmatprep.subr.bf16.mxu0 0
  %7832 = vmatpush1.bf16.msra.mxu0 0
  %7833 = vmatprep.subr.bf16.mxu0 0
  %7834 = vmatpush1.bf16.msra.mxu0 0
  %7835 = vmatprep.subr.bf16.mxu0 0
  %7836 = vmatpush1.bf16.msra.mxu0 0
  %7837 = vmatprep.subr.bf16.mxu0 0
  %7838 = vmatpush1.bf16.msra.mxu0 0
  %7839 = vmatprep.subr.bf16.mxu0 0
  %7840 = vmatpush1.bf16.msra.mxu0 0
  %7841 = vmatprep.subr.bf16.mxu0 0
  %7842 = vmatpush1.bf16.msra.mxu0 0
  %7843 = vmatprep.subr.bf16.mxu0 0
  %7844 = vmatpush1.bf16.msra.mxu0 0
  %7845 = vmatprep.subr.bf16.mxu0 0
  %7846 = vmatpush1.bf16.msra.mxu0 0
  %7847 = vmatprep.mubr.bf16.mxu0 0
  %7848 = vmatmul.mubr.bf16.gmra.mrb[0].mxu0 %v7289
  %v7849 = vpop.f32.mrb[0].mxu0
  %v7850 = vadd.f32 %v7808, %v7849
  %v7851 = vpop.f32.mrb[0].mxu0
  %v7852 = vadd.f32 %v7812, %v7851
  %v7853 = vpop.f32.mrb[0].mxu0
  %v7854 = vadd.f32 %v7808, %v7853
  %v7855 = vpop.f32.mrb[0].mxu0
  %v7856 = vadd.f32 %v7812, %v7855
  %7857 = vmatprep.mubr.bf16.mxu0 0
  %7858 = vmatmul.mubr.bf16.gmra.mrb[0].mxu0 %v7290
  %v7859 = vpop.f32.mrb[0].mxu0
  %v7860 = vadd.f32 %v7808, %v7859
  %v7861 = vpop.f32.mrb[0].mxu0
  %v7862 = vadd.f32 %v7812, %v7861
  %v7863 = vpop.f32.mrb[0].mxu0
  %v7864 = vadd.f32 %v7808, %v7863
  %v7865 = vpop.f32.mrb[0].mxu0
  %v7866 = vadd.f32 %v7812, %v7865
  %7867 = vmatprep.mubr.bf16.mxu0 0
  %7868 = vmatmul.mubr.bf16.gmra.mrb[0].mxu0 %v7291
  %v7869 = vpop.f32.mrb[0].mxu0
  %v7870 = vadd.f32 %v7808, %v7869
  %v7871 = vpop.f32.mrb[0].mxu0
  %v7872 = vadd.f32 %v7812, %v7871
  %v7873 = vpop.f32.mrb[0].mxu0
  %v7874 = vadd.f32 %v7808, %v7873
  %v7875 = vpop.f32.mrb[0].mxu0
  %v7876 = vadd.f32 %v7812, %v7875
  %7877 = vmatprep.mubr.bf16.mxu0 0
  %7878 = vmatmul.mubr.bf16.gmra.mrb[0].mxu0 %v7292
  %v7879 = vpop.f32.mrb[0].mxu0
  %v7880 = vadd.f32 %v7808, %v7879
  %v7881 = vpop.f32.mrb[0].mxu0
  %v7882 = vadd.f32 %v7812, %v7881
  %v7883 = vpop.f32.mrb[0].mxu0
  %v7884 = vadd.f32 %v7808, %v7883
  %v7885 = vpop.f32.mrb[0].mxu0
  %v7886 = vadd.f32 %v7812, %v7885
  %7887 = vmatprep.mubr.bf16.mxu0 0
  %7888 = vmatmul.mubr.bf16.gmra.mrb[0].mxu0 %v7293
  %v7889 = vpop.f32.mrb[0].mxu0
  %v7890 = vadd.f32 %v7808, %v7889
  %v7891 = vpop.f32.mrb[0].mxu0
  %v7892 = vadd.f32 %v7812, %v7891
  %v7893 = vpop.f32.mrb[0].mxu0
  %v7894 = vadd.f32 %v7808, %v7893
  %v7895 = vpop.f32.mrb[0].mxu0
  %v7896 = vadd.f32 %v7812, %v7895
  %7897 = vmatprep.mubr.bf16.mxu0 0
  %7898 = vmatmul.mubr.bf16.gmra.mrb[0].mxu0 %v7294
  %v7899 = vpop.f32.mrb[0].mxu0
  %v7900 = vadd.f32 %v7808, %v7899
  %v7901 = vpop.f32.mrb[0].mxu0
  %v7902 = vadd.f32 %v7812, %v7901
  %v7903 = vpop.f32.mrb[0].mxu0
  %v7904 = vadd.f32 %v7808, %v7903
  %v7905 = vpop.f32.mrb[0].mxu0
  %v7906 = vadd.f32 %v7812, %v7905
  %7907 = vmatprep.mubr.bf16.mxu0 0
  %7908 = vmatmul.mubr.bf16.gmra.mrb[0].mxu0 %v7295
  %v7909 = vpop.f32.mrb[0].mxu0
  %v7910 = vadd.f32 %v7808, %v7909
  %v7911 = vpop.f32.mrb[0].mxu0
  %v7912 = vadd.f32 %v7812, %v7911
  %v7913 = vpop.f32.mrb[0].mxu0
  %v7914 = vadd.f32 %v7808, %v7913
  %v7915 = vpop.f32.mrb[0].mxu0
  %v7916 = vadd.f32 %v7812, %v7915
  %7917 = vmatprep.mubr.bf16.mxu0 0
  %7918 = vmatmul.mubr.bf16.gmra.mrb[0].mxu0 %v7296
  %v7919 = vpop.f32.mrb[0].mxu0
  %v7920 = vadd.f32 %v7808, %v7919
  %v7921 = vpop.f32.mrb[0].mxu0
  %v7922 = vadd.f32 %v7812, %v7921
  %v7923 = vpop.f32.mrb[0].mxu0
  %v7924 = vadd.f32 %v7808, %v7923
  %v7925 = vpop.f32.mrb[0].mxu0
  %v7926 = vadd.f32 %v7812, %v7925
  %7927 = vdwg.mxu0
  %v7928 = vmax.f32 %v7850, 0.0
  %v7929 = vmax.f32 %v7852, 0.0
  %v7930 = vmax.f32 %v7854, 0.0
  %v7931 = vmax.f32 %v7856, 0.0
  %v7932 = vmax.f32 %v7860, 0.0
  %v7933 = vmax.f32 %v7862, 0.0
  %v7934 = vmax.f32 %v7864, 0.0
  %v7935 = vmax.f32 %v7866, 0.0
  %v7936 = vmax.f32 %v7870, 0.0
  %v7937 = vmax.f32 %v7872, 0.0
  %v7938 = vmax.f32 %v7874, 0.0
  %v7939 = vmax.f32 %v7876, 0.0
  %v7940 = vmax.f32 %v7880, 0.0
  %v7941 = vmax.f32 %v7882, 0.0
  %v7942 = vmax.f32 %v7884, 0.0
  %v7943 = vmax.f32 %v7886, 0.0
  %v7944 = vmax.f32 %v7890, 0.0
  %v7945 = vmax.f32 %v7892, 0.0
  %v7946 = vmax.f32 %v7894, 0.0
  %v7947 = vmax.f32 %v7896, 0.0
  %v7948 = vmax.f32 %v7900, 0.0
  %v7949 = vmax.f32 %v7902, 0.0
  %v7950 = vmax.f32 %v7904, 0.0
  %v7951 = vmax.f32 %v7906, 0.0
  %v7952 = vmax.f32 %v7910, 0.0
  %v7953 = vmax.f32 %v7912, 0.0
  %v7954 = vmax.f32 %v7914, 0.0
  %v7955 = vmax.f32 %v7916, 0.0
  %v7956 = vmax.f32 %v7920, 0.0
  %v7957 = vmax.f32 %v7922, 0.0
  %v7958 = vmax.f32 %v7924, 0.0
  %v7959 = vmax.f32 %v7926, 0.0
  %v7960 = vpack.c.bf16 %v7930, %v7928
  %v7961 = vpack.c.bf16 %v7931, %v7929
  %v7962 = vpack.c.bf16 %v7934, %v7932
  %v7963 = vpack.c.bf16 %v7935, %v7933
  %v7964 = vpack.c.bf16 %v7938, %v7936
  %v7965 = vpack.c.bf16 %v7939, %v7937
  %v7966 = vpack.c.bf16 %v7942, %v7940
  %v7967 = vpack.c.bf16 %v7943, %v7941
  %v7968 = vpack.c.bf16 %v7946, %v7944
  %v7969 = vpack.c.bf16 %v7947, %v7945
  %v7970 = vpack.c.bf16 %v7950, %v7948
  %v7971 = vpack.c.bf16 %v7951, %v7949
  %v7972 = vpack.c.bf16 %v7954, %v7952
  %v7973 = vpack.c.bf16 %v7955, %v7953
  %v7974 = vpack.c.bf16 %v7958, %v7956
  %v7975 = vpack.c.bf16 %v7959, %v7957
  %7976 = vst [vmem:[#allocation2 + $0x10] sm:$0xff] %v7960
  %7977 = vst [vmem:[#allocation2 + $0x18] sm:$0xff] %v7961
  %7978 = vst [vmem:[#allocation2 + $0x40] sm:$0xff] %v7962
  %7979 = vst [vmem:[#allocation2 + $0x48] sm:$0xff] %v7963
  %7980 = vst [vmem:[#allocation2 + $0x70] sm:$0xff] %v7964
  %7981 = vst [vmem:[#allocation2 + $0x78] sm:$0xff] %v7965
  %7982 = vst [vmem:[#allocation2 + $0xa0] sm:$0xff] %v7966
  %7983 = vst [vmem:[#allocation2 + $0xa8] sm:$0xff] %v7967
  %7984 = vst [vmem:[#allocation2 + $0xd0] sm:$0xff] %v7968
  %7985 = vst [vmem:[#allocation2 + $0xd8] sm:$0xff] %v7969
  %7986 = vst [vmem:[#allocation2 + $0x100] sm:$0xff] %v7970
  %7987 = vst [vmem:[#allocation2 + $0x108] sm:$0xff] %v7971
  %7988 = vst [vmem:[#allocation2 + $0x130] sm:$0xff] %v7972
  %7989 = vst [vmem:[#allocation2 + $0x138] sm:$0xff] %v7973
  %7990 = vst [vmem:[#allocation2 + $0x160] sm:$0xff] %v7974
  %7991 = vst [vmem:[#allocation2 + $0x168] sm:$0xff] %v7975
  %v7992 = vld [vmem:[%s10] sm:$0xff]
  %v7993 = vld [vmem:[%s10 + $0x8] sm:$0xff]
  %v7994 = vld [vmem:[%s10 + $0x10] sm:$0xff]
  %v7995 = vld [vmem:[%s10 + $0x18] sm:$0xff]
  %v7996 = vld [vmem:[%s10 + $0x20] sm:$0xff]
  %v7997 = vld [vmem:[%s10 + $0x28] sm:$0xff]
  %v7998 = vld [vmem:[%s10 + $0x30] sm:$0xff]
  %v7999 = vld [vmem:[%s10 + $0x38] sm:$0xff]
  %v8000 = vld [vmem:[%s10 + $0x40] sm:$0xff]
  %v8001 = vld [vmem:[%s10 + $0x48] sm:$0xff]
  %v8002 = vld [vmem:[%s10 + $0x50] sm:$0xff]
  %v8003 = vld [vmem:[%s10 + $0x58] sm:$0xff]
  %v8004 = vld [vmem:[%s10 + $0x60] sm:$0xff]
  %v8005 = vld [vmem:[%s10 + $0x68] sm:$0xff]
  %v8006 = vld [vmem:[%s10 + $0x70] sm:$0xff]
  %v8007 = vld [vmem:[%s10 + $0x78] sm:$0xff]
  %v8008 = vld [vmem:[%s10 + $0x80] sm:$0xff]
  %v8009 = vld [vmem:[%s10 + $0x88] sm:$0xff]
  %v8010 = vld [vmem:[%s10 + $0x90] sm:$0xff]
  %v8011 = vld [vmem:[%s10 + $0x98] sm:$0xff]
  %v8012 = vld [vmem:[%s10 + $0xa0] sm:$0xff]
  %v8013 = vld [vmem:[%s10 + $0xa8] sm:$0xff]
  %v8014 = vld [vmem:[%s10 + $0xb0] sm:$0xff]
  %v8015 = vld [vmem:[%s10 + $0xb8] sm:$0xff]
  %v8016 = vld [vmem:[%s10 + $0xc0] sm:$0xff]
  %v8017 = vld [vmem:[%s10 + $0xc8] sm:$0xff]
  %v8018 = vld [vmem:[%s10 + $0xd0] sm:$0xff]
  %v8019 = vld [vmem:[%s10 + $0xd8] sm:$0xff]
  %v8020 = vld [vmem:[%s10 + $0xe0] sm:$0xff]
  %v8021 = vld [vmem:[%s10 + $0xe8] sm:$0xff]
  %v8022 = vld [vmem:[%s10 + $0xf0] sm:$0xff]
  %v8023 = vld [vmem:[%s10 + $0xf8] sm:$0xff]
  %v8056 = vunpack.c.l.b16 %v7992
  %v8057 = vunpack.c.h.b16 %v7992
  %v8058 = vunpack.c.l.b16 %v7993
  %v8059 = vunpack.c.h.b16 %v7993
  %v8060 = vunpack.c.l.b16 %v7994
  %v8061 = vunpack.c.h.b16 %v7994
  %v8062 = vunpack.c.l.b16 %v7995
  %v8063 = vunpack.c.h.b16 %v7995
  %v8064 = vunpack.c.l.b16 %v7996
  %v8065 = vunpack.c.h.b16 %v7996
  %v8066 = vunpack.c.l.b16 %v7997
  %v8067 = vunpack.c.h.b16 %v7997
  %v8068 = vunpack.c.l.b16 %v7998
  %v8069 = vunpack.c.h.b16 %v7998
  %v8070 = vunpack.c.l.b16 %v7999
  %v8071 = vunpack.c.h.b16 %v7999
  %v8072 = vunpack.c.l.b16 %v8000
  %v8073 = vunpack.c.h.b16 %v8000
  %v8074 = vunpack.c.l.b16 %v8001
  %v8075 = vunpack.c.h.b16 %v8001
  %v8076 = vunpack.c.l.b16 %v8002
  %v8077 = vunpack.c.h.b16 %v8002
  %v8078 = vunpack.c.l.b16 %v8003
  %v8079 = vunpack.c.h.b16 %v8003
  %v8080 = vunpack.c.l.b16 %v8004
  %v8081 = vunpack.c.h.b16 %v8004
  %v8082 = vunpack.c.l.b16 %v8005
  %v8083 = vunpack.c.h.b16 %v8005
  %v8084 = vunpack.c.l.b16 %v8006
  %v8085 = vunpack.c.h.b16 %v8006
  %v8086 = vunpack.c.l.b16 %v8007
  %v8087 = vunpack.c.h.b16 %v8007
  %v8088 = vunpack.c.l.b16 %v8008
  %v8089 = vunpack.c.h.b16 %v8008
  %v8090 = vunpack.c.l.b16 %v8009
  %v8091 = vunpack.c.h.b16 %v8009
  %v8092 = vunpack.c.l.b16 %v8010
  %v8093 = vunpack.c.h.b16 %v8010
  %v8094 = vunpack.c.l.b16 %v8011
  %v8095 = vunpack.c.h.b16 %v8011
  %v8096 = vunpack.c.l.b16 %v8012
  %v8097 = vunpack.c.h.b16 %v8012
  %v8098 = vunpack.c.l.b16 %v8013
  %v8099 = vunpack.c.h.b16 %v8013
  %v8100 = vunpack.c.l.b16 %v8014
  %v8101 = vunpack.c.h.b16 %v8014
  %v8102 = vunpack.c.l.b16 %v8015
  %v8103 = vunpack.c.h.b16 %v8015
  %v8104 = vunpack.c.l.b16 %v8016
  %v8105 = vunpack.c.h.b16 %v8016
  %v8106 = vunpack.c.l.b16 %v8017
  %v8107 = vunpack.c.h.b16 %v8017
  %v8108 = vunpack.c.l.b16 %v8018
  %v8109 = vunpack.c.h.b16 %v8018
  %v8110 = vunpack.c.l.b16 %v8019
  %v8111 = vunpack.c.h.b16 %v8019
  %v8112 = vunpack.c.l.b16 %v8020
  %v8113 = vunpack.c.h.b16 %v8020
  %v8114 = vunpack.c.l.b16 %v8021
  %v8115 = vunpack.c.h.b16 %v8021
  %v8116 = vunpack.c.l.b16 %v8022
  %v8117 = vunpack.c.h.b16 %v8022
  %v8118 = vunpack.c.l.b16 %v8023
  %v8119 = vunpack.c.h.b16 %v8023
  %v8120 = vpack.c.b16 %v8058, %v8056
  %v8121 = vpack.c.b16 %v8059, %v8057
  %v8122 = vpack.c.b16 %v8062, %v8060
  %v8123 = vpack.c.b16 %v8063, %v8061
  %v8124 = vpack.c.b16 %v8066, %v8064
  %v8125 = vpack.c.b16 %v8067, %v8065
  %v8126 = vpack.c.b16 %v8070, %v8068
  %v8127 = vpack.c.b16 %v8071, %v8069
  %v8128 = vpack.c.b16 %v8074, %v8072
  %v8129 = vpack.c.b16 %v8075, %v8073
  %v8130 = vpack.c.b16 %v8078, %v8076
  %v8131 = vpack.c.b16 %v8079, %v8077
  %v8132 = vpack.c.b16 %v8082, %v8080
  %v8133 = vpack.c.b16 %v8083, %v8081
  %v8134 = vpack.c.b16 %v8086, %v8084
  %v8135 = vpack.c.b16 %v8087, %v8085
  %v8136 = vpack.c.b16 %v8090, %v8088
  %v8137 = vpack.c.b16 %v8091, %v8089
  %v8138 = vpack.c.b16 %v8094, %v8092
  %v8139 = vpack.c.b16 %v8095, %v8093
  %v8140 = vpack.c.b16 %v8098, %v8096
  %v8141 = vpack.c.b16 %v8099, %v8097
  %v8142 = vpack.c.b16 %v8102, %v8100
  %v8143 = vpack.c.b16 %v8103, %v8101
  %v8144 = vpack.c.b16 %v8106, %v8104
  %v8145 = vpack.c.b16 %v8107, %v8105
  %v8146 = vpack.c.b16 %v8110, %v8108
  %v8147 = vpack.c.b16 %v8111, %v8109
  %v8148 = vpack.c.b16 %v8114, %v8112
  %v8149 = vpack.c.b16 %v8115, %v8113
  %v8150 = vpack.c.b16 %v8118, %v8116
  %v8151 = vpack.c.b16 %v8119, %v8117
  %8184 = vmatprep.subr.bf16.mxu0 %v8121
  %8185 = vmatpush1.bf16.msra.mxu0 %v8120
  %8186 = vmatprep.subr.bf16.mxu0 %v8123
  %8187 = vmatpush1.bf16.msra.mxu0 %v8122
  %8188 = vmatprep.subr.bf16.mxu0 %v8125
  %8189 = vmatpush1.bf16.msra.mxu0 %v8124
  %8190 = vmatprep.subr.bf16.mxu0 %v8127
  %8191 = vmatpush1.bf16.msra.mxu0 %v8126
  %8192 = vmatprep.subr.bf16.mxu0 %v8129
  %8193 = vmatpush1.bf16.msra.mxu0 %v8128
  %8194 = vmatprep.subr.bf16.mxu0 %v8131
  %8195 = vmatpush1.bf16.msra.mxu0 %v8130
  %8196 = vmatprep.subr.bf16.mxu0 %v8133
  %8197 = vmatpush1.bf16.msra.mxu0 %v8132
  %8198 = vmatprep.subr.bf16.mxu0 %v8135
  %8199 = vmatpush1.bf16.msra.mxu0 %v8134
  %8200 = vmatprep.subr.bf16.mxu0 %v8137
  %8201 = vmatpush1.bf16.msra.mxu0 %v8136
  %8202 = vmatprep.subr.bf16.mxu0 %v8139
  %8203 = vmatpush1.bf16.msra.mxu0 %v8138
  %8204 = vmatprep.subr.bf16.mxu0 %v8141
  %8205 = vmatpush1.bf16.msra.mxu0 %v8140
  %8206 = vmatprep.subr.bf16.mxu0 %v8143
  %8207 = vmatpush1.bf16.msra.mxu0 %v8142
  %8208 = vmatprep.subr.bf16.mxu0 %v8145
  %8209 = vmatpush1.bf16.msra.mxu0 %v8144
  %8210 = vmatprep.subr.bf16.mxu0 %v8147
  %8211 = vmatpush1.bf16.msra.mxu0 %v8146
  %8212 = vmatprep.subr.bf16.mxu0 %v8149
  %8213 = vmatpush1.bf16.msra.mxu0 %v8148
  %8214 = vmatprep.subr.bf16.mxu0 %v8151
  %8215 = vmatpush1.bf16.msra.mxu0 %v8150
  %8216 = vmatprep.mubr.bf16.mxu0 %v7961
  %8217 = vmatmul.mubr.bf16.gmra.mrb[0].mxu0 %v7960
  %v8218 = vpop.f32.mrb[0].mxu0
  %v8219 = vadd.f32 0.0, %v8218
  %v8220 = vpop.f32.mrb[0].mxu0
  %v8221 = vadd.f32 0.0, %v8220
  %v8222 = vpop.f32.mrb[0].mxu0
  %v8223 = vadd.f32 0.0, %v8222
  %v8224 = vpop.f32.mrb[0].mxu0
  %v8225 = vadd.f32 0.0, %v8224
  %8226 = vmatprep.mubr.bf16.mxu0 %v7963
  %8227 = vmatmul.mubr.bf16.gmra.mrb[0].mxu0 %v7962
  %v8228 = vpop.f32.mrb[0].mxu0
  %v8229 = vadd.f32 0.0, %v8228
  %v8230 = vpop.f32.mrb[0].mxu0
  %v8231 = vadd.f32 0.0, %v8230
  %v8232 = vpop.f32.mrb[0].mxu0
  %v8233 = vadd.f32 0.0, %v8232
  %v8234 = vpop.f32.mrb[0].mxu0
  %v8235 = vadd.f32 0.0, %v8234
  %8236 = vmatprep.mubr.bf16.mxu0 %v7965
  %8237 = vmatmul.mubr.bf16.gmra.mrb[0].mxu0 %v7964
  %v8238 = vpop.f32.mrb[0].mxu0
  %v8239 = vadd.f32 0.0, %v8238
  %v8240 = vpop.f32.mrb[0].mxu0
  %v8241 = vadd.f32 0.0, %v8240
  %v8242 = vpop.f32.mrb[0].mxu0
  %v8243 = vadd.f32 0.0, %v8242
  %v8244 = vpop.f32.mrb[0].mxu0
  %v8245 = vadd.f32 0.0, %v8244
  %8246 = vmatprep.mubr.bf16.mxu0 %v7967
  %8247 = vmatmul.mubr.bf16.gmra.mrb[0].mxu0 %v7966
  %v8248 = vpop.f32.mrb[0].mxu0
  %v8249 = vadd.f32 0.0, %v8248
  %v8250 = vpop.f32.mrb[0].mxu0
  %v8251 = vadd.f32 0.0, %v8250
  %v8252 = vpop.f32.mrb[0].mxu0
  %v8253 = vadd.f32 0.0, %v8252
  %v8254 = vpop.f32.mrb[0].mxu0
  %v8255 = vadd.f32 0.0, %v8254
  %8256 = vmatprep.mubr.bf16.mxu0 %v7969
  %8257 = vmatmul.mubr.bf16.gmra.mrb[0].mxu0 %v7968
  %v8258 = vpop.f32.mrb[0].mxu0
  %v8259 = vadd.f32 0.0, %v8258
  %v8260 = vpop.f32.mrb[0].mxu0
  %v8261 = vadd.f32 0.0, %v8260
  %v8262 = vpop.f32.mrb[0].mxu0
  %v8263 = vadd.f32 0.0, %v8262
  %v8264 = vpop.f32.mrb[0].mxu0
  %v8265 = vadd.f32 0.0, %v8264
  %8266 = vmatprep.mubr.bf16.mxu0 %v7971
  %8267 = vmatmul.mubr.bf16.gmra.mrb[0].mxu0 %v7970
  %v8268 = vpop.f32.mrb[0].mxu0
  %v8269 = vadd.f32 0.0, %v8268
  %v8270 = vpop.f32.mrb[0].mxu0
  %v8271 = vadd.f32 0.0, %v8270
  %v8272 = vpop.f32.mrb[0].mxu0
  %v8273 = vadd.f32 0.0, %v8272
  %v8274 = vpop.f32.mrb[0].mxu0
  %v8275 = vadd.f32 0.0, %v8274
  %8276 = vmatprep.mubr.bf16.mxu0 %v7973
  %8277 = vmatmul.mubr.bf16.gmra.mrb[0].mxu0 %v7972
  %v8278 = vpop.f32.mrb[0].mxu0
  %v8279 = vadd.f32 0.0, %v8278
  %v8280 = vpop.f32.mrb[0].mxu0
  %v8281 = vadd.f32 0.0, %v8280
  %v8282 = vpop.f32.mrb[0].mxu0
  %v8283 = vadd.f32 0.0, %v8282
  %v8284 = vpop.f32.mrb[0].mxu0
  %v8285 = vadd.f32 0.0, %v8284
  %8286 = vmatprep.mubr.bf16.mxu0 %v7975
  %8287 = vmatmul.mubr.bf16.gmra.mrb[0].mxu0 %v7974
  %v8288 = vpop.f32.mrb[0].mxu0
  %v8289 = vadd.f32 0.0, %v8288
  %v8290 = vpop.f32.mrb[0].mxu0
  %v8291 = vadd.f32 0.0, %v8290
  %v8292 = vpop.f32.mrb[0].mxu0
  %v8293 = vadd.f32 0.0, %v8292
  %v8294 = vpop.f32.mrb[0].mxu0
  %v8295 = vadd.f32 0.0, %v8294
  %8296 = vdwg.mxu0
  %v8297 = vpack.c.bf16 %v8223, %v8219
  %v8298 = vpack.c.bf16 %v8225, %v8221
  %v8299 = vpack.c.bf16 %v8233, %v8229
  %v8300 = vpack.c.bf16 %v8235, %v8231
  %v8301 = vpack.c.bf16 %v8243, %v8239
  %v8302 = vpack.c.bf16 %v8245, %v8241
  %v8303 = vpack.c.bf16 %v8253, %v8249
  %v8304 = vpack.c.bf16 %v8255, %v8251
  %v8305 = vpack.c.bf16 %v8263, %v8259
  %v8306 = vpack.c.bf16 %v8265, %v8261
  %v8307 = vpack.c.bf16 %v8273, %v8269
  %v8308 = vpack.c.bf16 %v8275, %v8271
  %v8309 = vpack.c.bf16 %v8283, %v8279
  %v8310 = vpack.c.bf16 %v8285, %v8281
  %v8311 = vpack.c.bf16 %v8293, %v8289
  %v8312 = vpack.c.bf16 %v8295, %v8291
  %v8313 = vld [vmem:[%s11] sm:$0x3]
  %v8315 = vlaneseq
  %v8316 = vshrl.u32 %v8315, 7
  %v8317 = vsub.s32 0, %v8316
  %v8318 = vrot.slane %v8313, %v8317
  %v8319 = vlaneseq
  %v8320 = vshrl.u32 %v8319, 7
  %v8321 = vsub.s32 1, %v8320
  %v8322 = vrot.slane %v8313, %v8321
  %8325 = vmatprep.subr.bf16.mxu0 %v8298
  %8326 = vmatpush1.bf16.msra.mxu0 %v8297
  %8327 = vmatprep.subr.bf16.mxu0 %v8300
  %8328 = vmatpush1.bf16.msra.mxu0 %v8299
  %8329 = vmatprep.subr.bf16.mxu0 %v8302
  %8330 = vmatpush1.bf16.msra.mxu0 %v8301
  %8331 = vmatprep.subr.bf16.mxu0 %v8304
  %8332 = vmatpush1.bf16.msra.mxu0 %v8303
  %8333 = vmatprep.subr.bf16.mxu0 %v8306
  %8334 = vmatpush1.bf16.msra.mxu0 %v8305
  %8335 = vmatprep.subr.bf16.mxu0 %v8308
  %8336 = vmatpush1.bf16.msra.mxu0 %v8307
  %8337 = vmatprep.subr.bf16.mxu0 %v8310
  %8338 = vmatpush1.bf16.msra.mxu0 %v8309
  %8339 = vmatprep.subr.bf16.mxu0 %v8312
  %8340 = vmatpush1.bf16.msra.mxu0 %v8311
  %8341 = vmatprep.subr.bf16.mxu0 0
  %8342 = vmatpush1.bf16.msra.mxu0 0
  %8343 = vmatprep.subr.bf16.mxu0 0
  %8344 = vmatpush1.bf16.msra.mxu0 0
  %8345 = vmatprep.subr.bf16.mxu0 0
  %8346 = vmatpush1.bf16.msra.mxu0 0
  %8347 = vmatprep.subr.bf16.mxu0 0
  %8348 = vmatpush1.bf16.msra.mxu0 0
  %8349 = vmatprep.subr.bf16.mxu0 0
  %8350 = vmatpush1.bf16.msra.mxu0 0
  %8351 = vmatprep.subr.bf16.mxu0 0
  %8352 = vmatpush1.bf16.msra.mxu0 0
  %8353 = vmatprep.subr.bf16.mxu0 0
  %8354 = vmatpush1.bf16.msra.mxu0 0
  %8355 = vmatprep.subr.bf16.mxu0 0
  %8356 = vmatpush1.bf16.msra.mxu0 0
  %8357 = vmatprep.mubr.bf16.mxu0 0
  %8358 = vmatmul.mubr.bf16.gmra.mrb[0].mxu0 %v7289
  %v8359 = vpop.f32.mrb[0].mxu0
  %v8360 = vadd.f32 %v8318, %v8359
  %v8361 = vpop.f32.mrb[0].mxu0
  %v8362 = vadd.f32 %v8322, %v8361
  %v8363 = vpop.f32.mrb[0].mxu0
  %v8364 = vadd.f32 %v8318, %v8363
  %v8365 = vpop.f32.mrb[0].mxu0
  %v8366 = vadd.f32 %v8322, %v8365
  %8367 = vmatprep.mubr.bf16.mxu0 0
  %8368 = vmatmul.mubr.bf16.gmra.mrb[0].mxu0 %v7290
  %v8369 = vpop.f32.mrb[0].mxu0
  %v8370 = vadd.f32 %v8318, %v8369
  %v8371 = vpop.f32.mrb[0].mxu0
  %v8372 = vadd.f32 %v8322, %v8371
  %v8373 = vpop.f32.mrb[0].mxu0
  %v8374 = vadd.f32 %v8318, %v8373
  %v8375 = vpop.f32.mrb[0].mxu0
  %v8376 = vadd.f32 %v8322, %v8375
  %8377 = vmatprep.mubr.bf16.mxu0 0
  %8378 = vmatmul.mubr.bf16.gmra.mrb[0].mxu0 %v7291
  %v8379 = vpop.f32.mrb[0].mxu0
  %v8380 = vadd.f32 %v8318, %v8379
  %v8381 = vpop.f32.mrb[0].mxu0
  %v8382 = vadd.f32 %v8322, %v8381
  %v8383 = vpop.f32.mrb[0].mxu0
  %v8384 = vadd.f32 %v8318, %v8383
  %v8385 = vpop.f32.mrb[0].mxu0
  %v8386 = vadd.f32 %v8322, %v8385
  %8387 = vmatprep.mubr.bf16.mxu0 0
  %8388 = vmatmul.mubr.bf16.gmra.mrb[0].mxu0 %v7292
  %v8389 = vpop.f32.mrb[0].mxu0
  %v8390 = vadd.f32 %v8318, %v8389
  %v8391 = vpop.f32.mrb[0].mxu0
  %v8392 = vadd.f32 %v8322, %v8391
  %v8393 = vpop.f32.mrb[0].mxu0
  %v8394 = vadd.f32 %v8318, %v8393
  %v8395 = vpop.f32.mrb[0].mxu0
  %v8396 = vadd.f32 %v8322, %v8395
  %8397 = vmatprep.mubr.bf16.mxu0 0
  %8398 = vmatmul.mubr.bf16.gmra.mrb[0].mxu0 %v7293
  %v8399 = vpop.f32.mrb[0].mxu0
  %v8400 = vadd.f32 %v8318, %v8399
  %v8401 = vpop.f32.mrb[0].mxu0
  %v8402 = vadd.f32 %v8322, %v8401
  %v8403 = vpop.f32.mrb[0].mxu0
  %v8404 = vadd.f32 %v8318, %v8403
  %v8405 = vpop.f32.mrb[0].mxu0
  %v8406 = vadd.f32 %v8322, %v8405
  %8407 = vmatprep.mubr.bf16.mxu0 0
  %8408 = vmatmul.mubr.bf16.gmra.mrb[0].mxu0 %v7294
  %v8409 = vpop.f32.mrb[0].mxu0
  %v8410 = vadd.f32 %v8318, %v8409
  %v8411 = vpop.f32.mrb[0].mxu0
  %v8412 = vadd.f32 %v8322, %v8411
  %v8413 = vpop.f32.mrb[0].mxu0
  %v8414 = vadd.f32 %v8318, %v8413
  %v8415 = vpop.f32.mrb[0].mxu0
  %v8416 = vadd.f32 %v8322, %v8415
  %8417 = vmatprep.mubr.bf16.mxu0 0
  %8418 = vmatmul.mubr.bf16.gmra.mrb[0].mxu0 %v7295
  %v8419 = vpop.f32.mrb[0].mxu0
  %v8420 = vadd.f32 %v8318, %v8419
  %v8421 = vpop.f32.mrb[0].mxu0
  %v8422 = vadd.f32 %v8322, %v8421
  %v8423 = vpop.f32.mrb[0].mxu0
  %v8424 = vadd.f32 %v8318, %v8423
  %v8425 = vpop.f32.mrb[0].mxu0
  %v8426 = vadd.f32 %v8322, %v8425
  %8427 = vmatprep.mubr.bf16.mxu0 0
  %8428 = vmatmul.mubr.bf16.gmra.mrb[0].mxu0 %v7296
  %v8429 = vpop.f32.mrb[0].mxu0
  %v8430 = vadd.f32 %v8318, %v8429
  %v8431 = vpop.f32.mrb[0].mxu0
  %v8432 = vadd.f32 %v8322, %v8431
  %v8433 = vpop.f32.mrb[0].mxu0
  %v8434 = vadd.f32 %v8318, %v8433
  %v8435 = vpop.f32.mrb[0].mxu0
  %v8436 = vadd.f32 %v8322, %v8435
  %8437 = vdwg.mxu0
  %v8438 = vmax.f32 %v8360, 0.0
  %v8439 = vmax.f32 %v8362, 0.0
  %v8440 = vmax.f32 %v8364, 0.0
  %v8441 = vmax.f32 %v8366, 0.0
  %v8442 = vmax.f32 %v8370, 0.0
  %v8443 = vmax.f32 %v8372, 0.0
  %v8444 = vmax.f32 %v8374, 0.0
  %v8445 = vmax.f32 %v8376, 0.0
  %v8446 = vmax.f32 %v8380, 0.0
  %v8447 = vmax.f32 %v8382, 0.0
  %v8448 = vmax.f32 %v8384, 0.0
  %v8449 = vmax.f32 %v8386, 0.0
  %v8450 = vmax.f32 %v8390, 0.0
  %v8451 = vmax.f32 %v8392, 0.0
  %v8452 = vmax.f32 %v8394, 0.0
  %v8453 = vmax.f32 %v8396, 0.0
  %v8454 = vmax.f32 %v8400, 0.0
  %v8455 = vmax.f32 %v8402, 0.0
  %v8456 = vmax.f32 %v8404, 0.0
  %v8457 = vmax.f32 %v8406, 0.0
  %v8458 = vmax.f32 %v8410, 0.0
  %v8459 = vmax.f32 %v8412, 0.0
  %v8460 = vmax.f32 %v8414, 0.0
  %v8461 = vmax.f32 %v8416, 0.0
  %v8462 = vmax.f32 %v8420, 0.0
  %v8463 = vmax.f32 %v8422, 0.0
  %v8464 = vmax.f32 %v8424, 0.0
  %v8465 = vmax.f32 %v8426, 0.0
  %v8466 = vmax.f32 %v8430, 0.0
  %v8467 = vmax.f32 %v8432, 0.0
  %v8468 = vmax.f32 %v8434, 0.0
  %v8469 = vmax.f32 %v8436, 0.0
  %v8470 = vpack.c.bf16 %v8440, %v8438
  %v8471 = vpack.c.bf16 %v8441, %v8439
  %v8472 = vpack.c.bf16 %v8444, %v8442
  %v8473 = vpack.c.bf16 %v8445, %v8443
  %v8474 = vpack.c.bf16 %v8448, %v8446
  %v8475 = vpack.c.bf16 %v8449, %v8447
  %v8476 = vpack.c.bf16 %v8452, %v8450
  %v8477 = vpack.c.bf16 %v8453, %v8451
  %v8478 = vpack.c.bf16 %v8456, %v8454
  %v8479 = vpack.c.bf16 %v8457, %v8455
  %v8480 = vpack.c.bf16 %v8460, %v8458
  %v8481 = vpack.c.bf16 %v8461, %v8459
  %v8482 = vpack.c.bf16 %v8464, %v8462
  %v8483 = vpack.c.bf16 %v8465, %v8463
  %v8484 = vpack.c.bf16 %v8468, %v8466
  %v8485 = vpack.c.bf16 %v8469, %v8467
  %8486 = vst [vmem:[#allocation2 + $0x20] sm:$0xff] %v8470
  %8487 = vst [vmem:[#allocation2 + $0x28] sm:$0xff] %v8471
  %8488 = vst [vmem:[#allocation2 + $0x50] sm:$0xff] %v8472
  %8489 = vst [vmem:[#allocation2 + $0x58] sm:$0xff] %v8473
  %8490 = vst [vmem:[#allocation2 + $0x80] sm:$0xff] %v8474
  %8491 = vst [vmem:[#allocation2 + $0x88] sm:$0xff] %v8475
  %8492 = vst [vmem:[#allocation2 + $0xb0] sm:$0xff] %v8476
  %8493 = vst [vmem:[#allocation2 + $0xb8] sm:$0xff] %v8477
  %8494 = vst [vmem:[#allocation2 + $0xe0] sm:$0xff] %v8478
  %8495 = vst [vmem:[#allocation2 + $0xe8] sm:$0xff] %v8479
  %8496 = vst [vmem:[#allocation2 + $0x110] sm:$0xff] %v8480
  %8497 = vst [vmem:[#allocation2 + $0x118] sm:$0xff] %v8481
  %8498 = vst [vmem:[#allocation2 + $0x140] sm:$0xff] %v8482
  %8499 = vst [vmem:[#allocation2 + $0x148] sm:$0xff] %v8483
  %8500 = vst [vmem:[#allocation2 + $0x170] sm:$0xff] %v8484
  %8501 = vst [vmem:[#allocation2 + $0x178] sm:$0xff] %v8485
  %v8502 = vld [vmem:[#allocation2] sm:$0xff]
  %v8503 = vld [vmem:[#allocation2 + $0x8] sm:$0xff]
  %v8504 = vld [vmem:[#allocation2 + $0x10] sm:$0xff]
  %v8505 = vld [vmem:[#allocation2 + $0x18] sm:$0xff]
  %v8506 = vld [vmem:[#allocation2 + $0x20] sm:$0xff]
  %v8507 = vld [vmem:[#allocation2 + $0x28] sm:$0xff]
  %v8508 = vld [vmem:[#allocation2 + $0x30] sm:$0xff]
  %v8509 = vld [vmem:[#allocation2 + $0x38] sm:$0xff]
  %v8510 = vld [vmem:[#allocation2 + $0x40] sm:$0xff]
  %v8511 = vld [vmem:[#allocation2 + $0x48] sm:$0xff]
  %v8512 = vld [vmem:[#allocation2 + $0x50] sm:$0xff]
  %v8513 = vld [vmem:[#allocation2 + $0x58] sm:$0xff]
  %v8514 = vld [vmem:[#allocation2 + $0x60] sm:$0xff]
  %v8515 = vld [vmem:[#allocation2 + $0x68] sm:$0xff]
  %v8516 = vld [vmem:[#allocation2 + $0x70] sm:$0xff]
  %v8517 = vld [vmem:[#allocation2 + $0x78] sm:$0xff]
  %v8518 = vld [vmem:[#allocation2 + $0x80] sm:$0xff]
  %v8519 = vld [vmem:[#allocation2 + $0x88] sm:$0xff]
  %v8520 = vld [vmem:[#allocation2 + $0x90] sm:$0xff]
  %v8521 = vld [vmem:[#allocation2 + $0x98] sm:$0xff]
  %v8522 = vld [vmem:[#allocation2 + $0xa0] sm:$0xff]
  %v8523 = vld [vmem:[#allocation2 + $0xa8] sm:$0xff]
  %v8524 = vld [vmem:[#allocation2 + $0xb0] sm:$0xff]
  %v8525 = vld [vmem:[#allocation2 + $0xb8] sm:$0xff]
  %v8526 = vld [vmem:[#allocation2 + $0xc0] sm:$0xff]
  %v8527 = vld [vmem:[#allocation2 + $0xc8] sm:$0xff]
  %v8528 = vld [vmem:[#allocation2 + $0xd0] sm:$0xff]
  %v8529 = vld [vmem:[#allocation2 + $0xd8] sm:$0xff]
  %v8530 = vld [vmem:[#allocation2 + $0xe0] sm:$0xff]
  %v8531 = vld [vmem:[#allocation2 + $0xe8] sm:$0xff]
  %v8532 = vld [vmem:[#allocation2 + $0xf0] sm:$0xff]
  %v8533 = vld [vmem:[#allocation2 + $0xf8] sm:$0xff]
  %v8534 = vld [vmem:[#allocation2 + $0x100] sm:$0xff]
  %v8535 = vld [vmem:[#allocation2 + $0x108] sm:$0xff]
  %v8536 = vld [vmem:[#allocation2 + $0x110] sm:$0xff]
  %v8537 = vld [vmem:[#allocation2 + $0x118] sm:$0xff]
  %v8538 = vld [vmem:[#allocation2 + $0x120] sm:$0xff]
  %v8539 = vld [vmem:[#allocation2 + $0x128] sm:$0xff]
  %v8540 = vld [vmem:[#allocation2 + $0x130] sm:$0xff]
  %v8541 = vld [vmem:[#allocation2 + $0x138] sm:$0xff]
  %v8542 = vld [vmem:[#allocation2 + $0x140] sm:$0xff]
  %v8543 = vld [vmem:[#allocation2 + $0x148] sm:$0xff]
  %v8544 = vld [vmem:[#allocation2 + $0x150] sm:$0xff]
  %v8545 = vld [vmem:[#allocation2 + $0x158] sm:$0xff]
  %v8546 = vld [vmem:[#allocation2 + $0x160] sm:$0xff]
  %v8547 = vld [vmem:[#allocation2 + $0x168] sm:$0xff]
  %v8548 = vld [vmem:[#allocation2 + $0x170] sm:$0xff]
  %v8549 = vld [vmem:[#allocation2 + $0x178] sm:$0xff]
  %v8550 = vld [vmem:[%s12] sm:$0xff]
  %v8551 = vld [vmem:[%s12 + $0x8] sm:$0xff]
  %v8552 = vld [vmem:[%s12 + $0x10] sm:$0xff]
  %v8553 = vld [vmem:[%s12 + $0x18] sm:$0xff]
  %v8554 = vld [vmem:[%s12 + $0x20] sm:$0xff]
  %v8555 = vld [vmem:[%s12 + $0x28] sm:$0xff]
  %v8556 = vld [vmem:[%s12 + $0x30] sm:$0xff]
  %v8557 = vld [vmem:[%s12 + $0x38] sm:$0xff]
  %v8558 = vld [vmem:[%s12 + $0x40] sm:$0xff]
  %v8559 = vld [vmem:[%s12 + $0x48] sm:$0xff]
  %v8560 = vld [vmem:[%s12 + $0x50] sm:$0xff]
  %v8561 = vld [vmem:[%s12 + $0x58] sm:$0xff]
  %v8562 = vld [vmem:[%s12 + $0x60] sm:$0xff]
  %v8563 = vld [vmem:[%s12 + $0x68] sm:$0xff]
  %v8564 = vld [vmem:[%s12 + $0x70] sm:$0xff]
  %v8565 = vld [vmem:[%s12 + $0x78] sm:$0xff]
  %v8566 = vld [vmem:[%s12 + $0x80] sm:$0xff]
  %v8567 = vld [vmem:[%s12 + $0x88] sm:$0xff]
  %v8568 = vld [vmem:[%s12 + $0x90] sm:$0xff]
  %v8569 = vld [vmem:[%s12 + $0x98] sm:$0xff]
  %v8570 = vld [vmem:[%s12 + $0xa0] sm:$0xff]
  %v8571 = vld [vmem:[%s12 + $0xa8] sm:$0xff]
  %v8572 = vld [vmem:[%s12 + $0xb0] sm:$0xff]
  %v8573 = vld [vmem:[%s12 + $0xb8] sm:$0xff]
  %v8574 = vld [vmem:[%s12 + $0xc0] sm:$0xff]
  %v8575 = vld [vmem:[%s12 + $0xc8] sm:$0xff]
  %v8576 = vld [vmem:[%s12 + $0xd0] sm:$0xff]
  %v8577 = vld [vmem:[%s12 + $0xd8] sm:$0xff]
  %v8578 = vld [vmem:[%s12 + $0xe0] sm:$0xff]
  %v8579 = vld [vmem:[%s12 + $0xe8] sm:$0xff]
  %v8580 = vld [vmem:[%s12 + $0xf0] sm:$0xff]
  %v8581 = vld [vmem:[%s12 + $0xf8] sm:$0xff]
  %v8582 = vld [vmem:[%s12 + $0x100] sm:$0xff]
  %v8583 = vld [vmem:[%s12 + $0x108] sm:$0xff]
  %v8584 = vld [vmem:[%s12 + $0x110] sm:$0xff]
  %v8585 = vld [vmem:[%s12 + $0x118] sm:$0xff]
  %v8586 = vld [vmem:[%s12 + $0x120] sm:$0xff]
  %v8587 = vld [vmem:[%s12 + $0x128] sm:$0xff]
  %v8588 = vld [vmem:[%s12 + $0x130] sm:$0xff]
  %v8589 = vld [vmem:[%s12 + $0x138] sm:$0xff]
  %v8590 = vld [vmem:[%s12 + $0x140] sm:$0xff]
  %v8591 = vld [vmem:[%s12 + $0x148] sm:$0xff]
  %v8592 = vld [vmem:[%s12 + $0x150] sm:$0xff]
  %v8593 = vld [vmem:[%s12 + $0x158] sm:$0xff]
  %v8594 = vld [vmem:[%s12 + $0x160] sm:$0xff]
  %v8595 = vld [vmem:[%s12 + $0x168] sm:$0xff]
  %v8596 = vld [vmem:[%s12 + $0x170] sm:$0xff]
  %v8597 = vld [vmem:[%s12 + $0x178] sm:$0xff]
  %v8598 = vld [vmem:[%s12 + $0x180] sm:$0xff]
  %v8599 = vld [vmem:[%s12 + $0x188] sm:$0xff]
  %v8600 = vld [vmem:[%s12 + $0x190] sm:$0xff]
  %v8601 = vld [vmem:[%s12 + $0x198] sm:$0xff]
  %v8602 = vld [vmem:[%s12 + $0x1a0] sm:$0xff]
  %v8603 = vld [vmem:[%s12 + $0x1a8] sm:$0xff]
  %v8604 = vld [vmem:[%s12 + $0x1b0] sm:$0xff]
  %v8605 = vld [vmem:[%s12 + $0x1b8] sm:$0xff]
  %v8606 = vld [vmem:[%s12 + $0x1c0] sm:$0xff]
  %v8607 = vld [vmem:[%s12 + $0x1c8] sm:$0xff]
  %v8608 = vld [vmem:[%s12 + $0x1d0] sm:$0xff]
  %v8609 = vld [vmem:[%s12 + $0x1d8] sm:$0xff]
  %v8610 = vld [vmem:[%s12 + $0x1e0] sm:$0xff]
  %v8611 = vld [vmem:[%s12 + $0x1e8] sm:$0xff]
  %v8612 = vld [vmem:[%s12 + $0x1f0] sm:$0xff]
  %v8613 = vld [vmem:[%s12 + $0x1f8] sm:$0xff]
  %v8614 = vld [vmem:[%s12 + $0x200] sm:$0xff]
  %v8615 = vld [vmem:[%s12 + $0x208] sm:$0xff]
  %v8616 = vld [vmem:[%s12 + $0x210] sm:$0xff]
  %v8617 = vld [vmem:[%s12 + $0x218] sm:$0xff]
  %v8618 = vld [vmem:[%s12 + $0x220] sm:$0xff]
  %v8619 = vld [vmem:[%s12 + $0x228] sm:$0xff]
  %v8620 = vld [vmem:[%s12 + $0x230] sm:$0xff]
  %v8621 = vld [vmem:[%s12 + $0x238] sm:$0xff]
  %v8622 = vld [vmem:[%s12 + $0x240] sm:$0xff]
  %v8623 = vld [vmem:[%s12 + $0x248] sm:$0xff]
  %v8624 = vld [vmem:[%s12 + $0x250] sm:$0xff]
  %v8625 = vld [vmem:[%s12 + $0x258] sm:$0xff]
  %v8626 = vld [vmem:[%s12 + $0x260] sm:$0xff]
  %v8627 = vld [vmem:[%s12 + $0x268] sm:$0xff]
  %v8628 = vld [vmem:[%s12 + $0x270] sm:$0xff]
  %v8629 = vld [vmem:[%s12 + $0x278] sm:$0xff]
  %v8630 = vld [vmem:[%s12 + $0x280] sm:$0xff]
  %v8631 = vld [vmem:[%s12 + $0x288] sm:$0xff]
  %v8632 = vld [vmem:[%s12 + $0x290] sm:$0xff]
  %v8633 = vld [vmem:[%s12 + $0x298] sm:$0xff]
  %v8634 = vld [vmem:[%s12 + $0x2a0] sm:$0xff]
  %v8635 = vld [vmem:[%s12 + $0x2a8] sm:$0xff]
  %v8636 = vld [vmem:[%s12 + $0x2b0] sm:$0xff]
  %v8637 = vld [vmem:[%s12 + $0x2b8] sm:$0xff]
  %v8638 = vld [vmem:[%s12 + $0x2c0] sm:$0xff]
  %v8639 = vld [vmem:[%s12 + $0x2c8] sm:$0xff]
  %v8640 = vld [vmem:[%s12 + $0x2d0] sm:$0xff]
  %v8641 = vld [vmem:[%s12 + $0x2d8] sm:$0xff]
  %v8642 = vld [vmem:[%s12 + $0x2e0] sm:$0xff]
  %v8643 = vld [vmem:[%s12 + $0x2e8] sm:$0xff]
  %v8644 = vld [vmem:[%s12 + $0x2f0] sm:$0xff]
  %v8645 = vld [vmem:[%s12 + $0x2f8] sm:$0xff]
  %v8646 = vld [vmem:[%s13] sm:$0x3]
  %v8648 = vlaneseq
  %v8649 = vshrl.u32 %v8648, 7
  %v8650 = vsub.s32 0, %v8649
  %v8651 = vrot.slane %v8646, %v8650
  %v8652 = vlaneseq
  %v8653 = vshrl.u32 %v8652, 7
  %v8654 = vsub.s32 1, %v8653
  %v8655 = vrot.slane %v8646, %v8654
  %v8754 = vunpack.c.l.b16 %v8550
  %v8755 = vunpack.c.h.b16 %v8550
  %v8756 = vunpack.c.l.b16 %v8551
  %v8757 = vunpack.c.h.b16 %v8551
  %v8758 = vunpack.c.l.b16 %v8552
  %v8759 = vunpack.c.h.b16 %v8552
  %v8760 = vunpack.c.l.b16 %v8553
  %v8761 = vunpack.c.h.b16 %v8553
  %v8762 = vunpack.c.l.b16 %v8554
  %v8763 = vunpack.c.h.b16 %v8554
  %v8764 = vunpack.c.l.b16 %v8555
  %v8765 = vunpack.c.h.b16 %v8555
  %v8766 = vunpack.c.l.b16 %v8556
  %v8767 = vunpack.c.h.b16 %v8556
  %v8768 = vunpack.c.l.b16 %v8557
  %v8769 = vunpack.c.h.b16 %v8557
  %v8770 = vunpack.c.l.b16 %v8558
  %v8771 = vunpack.c.h.b16 %v8558
  %v8772 = vunpack.c.l.b16 %v8559
  %v8773 = vunpack.c.h.b16 %v8559
  %v8774 = vunpack.c.l.b16 %v8560
  %v8775 = vunpack.c.h.b16 %v8560
  %v8776 = vunpack.c.l.b16 %v8561
  %v8777 = vunpack.c.h.b16 %v8561
  %v8778 = vunpack.c.l.b16 %v8562
  %v8779 = vunpack.c.h.b16 %v8562
  %v8780 = vunpack.c.l.b16 %v8563
  %v8781 = vunpack.c.h.b16 %v8563
  %v8782 = vunpack.c.l.b16 %v8564
  %v8783 = vunpack.c.h.b16 %v8564
  %v8784 = vunpack.c.l.b16 %v8565
  %v8785 = vunpack.c.h.b16 %v8565
  %v8786 = vunpack.c.l.b16 %v8566
  %v8787 = vunpack.c.h.b16 %v8566
  %v8788 = vunpack.c.l.b16 %v8567
  %v8789 = vunpack.c.h.b16 %v8567
  %v8790 = vunpack.c.l.b16 %v8568
  %v8791 = vunpack.c.h.b16 %v8568
  %v8792 = vunpack.c.l.b16 %v8569
  %v8793 = vunpack.c.h.b16 %v8569
  %v8794 = vunpack.c.l.b16 %v8570
  %v8795 = vunpack.c.h.b16 %v8570
  %v8796 = vunpack.c.l.b16 %v8571
  %v8797 = vunpack.c.h.b16 %v8571
  %v8798 = vunpack.c.l.b16 %v8572
  %v8799 = vunpack.c.h.b16 %v8572
  %v8800 = vunpack.c.l.b16 %v8573
  %v8801 = vunpack.c.h.b16 %v8573
  %v8802 = vunpack.c.l.b16 %v8574
  %v8803 = vunpack.c.h.b16 %v8574
  %v8804 = vunpack.c.l.b16 %v8575
  %v8805 = vunpack.c.h.b16 %v8575
  %v8806 = vunpack.c.l.b16 %v8576
  %v8807 = vunpack.c.h.b16 %v8576
  %v8808 = vunpack.c.l.b16 %v8577
  %v8809 = vunpack.c.h.b16 %v8577
  %v8810 = vunpack.c.l.b16 %v8578
  %v8811 = vunpack.c.h.b16 %v8578
  %v8812 = vunpack.c.l.b16 %v8579
  %v8813 = vunpack.c.h.b16 %v8579
  %v8814 = vunpack.c.l.b16 %v8580
  %v8815 = vunpack.c.h.b16 %v8580
  %v8816 = vunpack.c.l.b16 %v8581
  %v8817 = vunpack.c.h.b16 %v8581
  %v8818 = vunpack.c.l.b16 %v8582
  %v8819 = vunpack.c.h.b16 %v8582
  %v8820 = vunpack.c.l.b16 %v8583
  %v8821 = vunpack.c.h.b16 %v8583
  %v8822 = vunpack.c.l.b16 %v8584
  %v8823 = vunpack.c.h.b16 %v8584
  %v8824 = vunpack.c.l.b16 %v8585
  %v8825 = vunpack.c.h.b16 %v8585
  %v8826 = vunpack.c.l.b16 %v8586
  %v8827 = vunpack.c.h.b16 %v8586
  %v8828 = vunpack.c.l.b16 %v8587
  %v8829 = vunpack.c.h.b16 %v8587
  %v8830 = vunpack.c.l.b16 %v8588
  %v8831 = vunpack.c.h.b16 %v8588
  %v8832 = vunpack.c.l.b16 %v8589
  %v8833 = vunpack.c.h.b16 %v8589
  %v8834 = vunpack.c.l.b16 %v8590
  %v8835 = vunpack.c.h.b16 %v8590
  %v8836 = vunpack.c.l.b16 %v8591
  %v8837 = vunpack.c.h.b16 %v8591
  %v8838 = vunpack.c.l.b16 %v8592
  %v8839 = vunpack.c.h.b16 %v8592
  %v8840 = vunpack.c.l.b16 %v8593
  %v8841 = vunpack.c.h.b16 %v8593
  %v8842 = vunpack.c.l.b16 %v8594
  %v8843 = vunpack.c.h.b16 %v8594
  %v8844 = vunpack.c.l.b16 %v8595
  %v8845 = vunpack.c.h.b16 %v8595
  %v8846 = vunpack.c.l.b16 %v8596
  %v8847 = vunpack.c.h.b16 %v8596
  %v8848 = vunpack.c.l.b16 %v8597
  %v8849 = vunpack.c.h.b16 %v8597
  %v8850 = vunpack.c.l.b16 %v8598
  %v8851 = vunpack.c.h.b16 %v8598
  %v8852 = vunpack.c.l.b16 %v8599
  %v8853 = vunpack.c.h.b16 %v8599
  %v8854 = vunpack.c.l.b16 %v8600
  %v8855 = vunpack.c.h.b16 %v8600
  %v8856 = vunpack.c.l.b16 %v8601
  %v8857 = vunpack.c.h.b16 %v8601
  %v8858 = vunpack.c.l.b16 %v8602
  %v8859 = vunpack.c.h.b16 %v8602
  %v8860 = vunpack.c.l.b16 %v8603
  %v8861 = vunpack.c.h.b16 %v8603
  %v8862 = vunpack.c.l.b16 %v8604
  %v8863 = vunpack.c.h.b16 %v8604
  %v8864 = vunpack.c.l.b16 %v8605
  %v8865 = vunpack.c.h.b16 %v8605
  %v8866 = vunpack.c.l.b16 %v8606
  %v8867 = vunpack.c.h.b16 %v8606
  %v8868 = vunpack.c.l.b16 %v8607
  %v8869 = vunpack.c.h.b16 %v8607
  %v8870 = vunpack.c.l.b16 %v8608
  %v8871 = vunpack.c.h.b16 %v8608
  %v8872 = vunpack.c.l.b16 %v8609
  %v8873 = vunpack.c.h.b16 %v8609
  %v8874 = vunpack.c.l.b16 %v8610
  %v8875 = vunpack.c.h.b16 %v8610
  %v8876 = vunpack.c.l.b16 %v8611
  %v8877 = vunpack.c.h.b16 %v8611
  %v8878 = vunpack.c.l.b16 %v8612
  %v8879 = vunpack.c.h.b16 %v8612
  %v8880 = vunpack.c.l.b16 %v8613
  %v8881 = vunpack.c.h.b16 %v8613
  %v8882 = vunpack.c.l.b16 %v8614
  %v8883 = vunpack.c.h.b16 %v8614
  %v8884 = vunpack.c.l.b16 %v8615
  %v8885 = vunpack.c.h.b16 %v8615
  %v8886 = vunpack.c.l.b16 %v8616
  %v8887 = vunpack.c.h.b16 %v8616
  %v8888 = vunpack.c.l.b16 %v8617
  %v8889 = vunpack.c.h.b16 %v8617
  %v8890 = vunpack.c.l.b16 %v8618
  %v8891 = vunpack.c.h.b16 %v8618
  %v8892 = vunpack.c.l.b16 %v8619
  %v8893 = vunpack.c.h.b16 %v8619
  %v8894 = vunpack.c.l.b16 %v8620
  %v8895 = vunpack.c.h.b16 %v8620
  %v8896 = vunpack.c.l.b16 %v8621
  %v8897 = vunpack.c.h.b16 %v8621
  %v8898 = vunpack.c.l.b16 %v8622
  %v8899 = vunpack.c.h.b16 %v8622
  %v8900 = vunpack.c.l.b16 %v8623
  %v8901 = vunpack.c.h.b16 %v8623
  %v8902 = vunpack.c.l.b16 %v8624
  %v8903 = vunpack.c.h.b16 %v8624
  %v8904 = vunpack.c.l.b16 %v8625
  %v8905 = vunpack.c.h.b16 %v8625
  %v8906 = vunpack.c.l.b16 %v8626
  %v8907 = vunpack.c.h.b16 %v8626
  %v8908 = vunpack.c.l.b16 %v8627
  %v8909 = vunpack.c.h.b16 %v8627
  %v8910 = vunpack.c.l.b16 %v8628
  %v8911 = vunpack.c.h.b16 %v8628
  %v8912 = vunpack.c.l.b16 %v8629
  %v8913 = vunpack.c.h.b16 %v8629
  %v8914 = vunpack.c.l.b16 %v8630
  %v8915 = vunpack.c.h.b16 %v8630
  %v8916 = vunpack.c.l.b16 %v8631
  %v8917 = vunpack.c.h.b16 %v8631
  %v8918 = vunpack.c.l.b16 %v8632
  %v8919 = vunpack.c.h.b16 %v8632
  %v8920 = vunpack.c.l.b16 %v8633
  %v8921 = vunpack.c.h.b16 %v8633
  %v8922 = vunpack.c.l.b16 %v8634
  %v8923 = vunpack.c.h.b16 %v8634
  %v8924 = vunpack.c.l.b16 %v8635
  %v8925 = vunpack.c.h.b16 %v8635
  %v8926 = vunpack.c.l.b16 %v8636
  %v8927 = vunpack.c.h.b16 %v8636
  %v8928 = vunpack.c.l.b16 %v8637
  %v8929 = vunpack.c.h.b16 %v8637
  %v8930 = vunpack.c.l.b16 %v8638
  %v8931 = vunpack.c.h.b16 %v8638
  %v8932 = vunpack.c.l.b16 %v8639
  %v8933 = vunpack.c.h.b16 %v8639
  %v8934 = vunpack.c.l.b16 %v8640
  %v8935 = vunpack.c.h.b16 %v8640
  %v8936 = vunpack.c.l.b16 %v8641
  %v8937 = vunpack.c.h.b16 %v8641
  %v8938 = vunpack.c.l.b16 %v8642
  %v8939 = vunpack.c.h.b16 %v8642
  %v8940 = vunpack.c.l.b16 %v8643
  %v8941 = vunpack.c.h.b16 %v8643
  %v8942 = vunpack.c.l.b16 %v8644
  %v8943 = vunpack.c.h.b16 %v8644
  %v8944 = vunpack.c.l.b16 %v8645
  %v8945 = vunpack.c.h.b16 %v8645
  %v8946 = vpack.c.b16 %v8756, %v8754
  %v8947 = vpack.c.b16 %v8757, %v8755
  %v8948 = vpack.c.b16 %v8760, %v8758
  %v8949 = vpack.c.b16 %v8761, %v8759
  %v8950 = vpack.c.b16 %v8764, %v8762
  %v8951 = vpack.c.b16 %v8765, %v8763
  %v8952 = vpack.c.b16 %v8768, %v8766
  %v8953 = vpack.c.b16 %v8769, %v8767
  %v8954 = vpack.c.b16 %v8772, %v8770
  %v8955 = vpack.c.b16 %v8773, %v8771
  %v8956 = vpack.c.b16 %v8776, %v8774
  %v8957 = vpack.c.b16 %v8777, %v8775
  %v8958 = vpack.c.b16 %v8780, %v8778
  %v8959 = vpack.c.b16 %v8781, %v8779
  %v8960 = vpack.c.b16 %v8784, %v8782
  %v8961 = vpack.c.b16 %v8785, %v8783
  %v8962 = vpack.c.b16 %v8788, %v8786
  %v8963 = vpack.c.b16 %v8789, %v8787
  %v8964 = vpack.c.b16 %v8792, %v8790
  %v8965 = vpack.c.b16 %v8793, %v8791
  %v8966 = vpack.c.b16 %v8796, %v8794
  %v8967 = vpack.c.b16 %v8797, %v8795
  %v8968 = vpack.c.b16 %v8800, %v8798
  %v8969 = vpack.c.b16 %v8801, %v8799
  %v8970 = vpack.c.b16 %v8804, %v8802
  %v8971 = vpack.c.b16 %v8805, %v8803
  %v8972 = vpack.c.b16 %v8808, %v8806
  %v8973 = vpack.c.b16 %v8809, %v8807
  %v8974 = vpack.c.b16 %v8812, %v8810
  %v8975 = vpack.c.b16 %v8813, %v8811
  %v8976 = vpack.c.b16 %v8816, %v8814
  %v8977 = vpack.c.b16 %v8817, %v8815
  %v8978 = vpack.c.b16 %v8820, %v8818
  %v8979 = vpack.c.b16 %v8821, %v8819
  %v8980 = vpack.c.b16 %v8824, %v8822
  %v8981 = vpack.c.b16 %v8825, %v8823
  %v8982 = vpack.c.b16 %v8828, %v8826
  %v8983 = vpack.c.b16 %v8829, %v8827
  %v8984 = vpack.c.b16 %v8832, %v8830
  %v8985 = vpack.c.b16 %v8833, %v8831
  %v8986 = vpack.c.b16 %v8836, %v8834
  %v8987 = vpack.c.b16 %v8837, %v8835
  %v8988 = vpack.c.b16 %v8840, %v8838
  %v8989 = vpack.c.b16 %v8841, %v8839
  %v8990 = vpack.c.b16 %v8844, %v8842
  %v8991 = vpack.c.b16 %v8845, %v8843
  %v8992 = vpack.c.b16 %v8848, %v8846
  %v8993 = vpack.c.b16 %v8849, %v8847
  %v8994 = vpack.c.b16 %v8852, %v8850
  %v8995 = vpack.c.b16 %v8853, %v8851
  %v8996 = vpack.c.b16 %v8856, %v8854
  %v8997 = vpack.c.b16 %v8857, %v8855
  %v8998 = vpack.c.b16 %v8860, %v8858
  %v8999 = vpack.c.b16 %v8861, %v8859
  %v9000 = vpack.c.b16 %v8864, %v8862
  %v9001 = vpack.c.b16 %v8865, %v8863
  %v9002 = vpack.c.b16 %v8868, %v8866
  %v9003 = vpack.c.b16 %v8869, %v8867
  %v9004 = vpack.c.b16 %v8872, %v8870
  %v9005 = vpack.c.b16 %v8873, %v8871
  %v9006 = vpack.c.b16 %v8876, %v8874
  %v9007 = vpack.c.b16 %v8877, %v8875
  %v9008 = vpack.c.b16 %v8880, %v8878
  %v9009 = vpack.c.b16 %v8881, %v8879
  %v9010 = vpack.c.b16 %v8884, %v8882
  %v9011 = vpack.c.b16 %v8885, %v8883
  %v9012 = vpack.c.b16 %v8888, %v8886
  %v9013 = vpack.c.b16 %v8889, %v8887
  %v9014 = vpack.c.b16 %v8892, %v8890
  %v9015 = vpack.c.b16 %v8893, %v8891
  %v9016 = vpack.c.b16 %v8896, %v8894
  %v9017 = vpack.c.b16 %v8897, %v8895
  %v9018 = vpack.c.b16 %v8900, %v8898
  %v9019 = vpack.c.b16 %v8901, %v8899
  %v9020 = vpack.c.b16 %v8904, %v8902
  %v9021 = vpack.c.b16 %v8905, %v8903
  %v9022 = vpack.c.b16 %v8908, %v8906
  %v9023 = vpack.c.b16 %v8909, %v8907
  %v9024 = vpack.c.b16 %v8912, %v8910
  %v9025 = vpack.c.b16 %v8913, %v8911
  %v9026 = vpack.c.b16 %v8916, %v8914
  %v9027 = vpack.c.b16 %v8917, %v8915
  %v9028 = vpack.c.b16 %v8920, %v8918
  %v9029 = vpack.c.b16 %v8921, %v8919
  %v9030 = vpack.c.b16 %v8924, %v8922
  %v9031 = vpack.c.b16 %v8925, %v8923
  %v9032 = vpack.c.b16 %v8928, %v8926
  %v9033 = vpack.c.b16 %v8929, %v8927
  %v9034 = vpack.c.b16 %v8932, %v8930
  %v9035 = vpack.c.b16 %v8933, %v8931
  %v9036 = vpack.c.b16 %v8936, %v8934
  %v9037 = vpack.c.b16 %v8937, %v8935
  %v9038 = vpack.c.b16 %v8940, %v8938
  %v9039 = vpack.c.b16 %v8941, %v8939
  %v9040 = vpack.c.b16 %v8944, %v8942
  %v9041 = vpack.c.b16 %v8945, %v8943
  %9138 = vmatprep.subr.bf16.mxu0 %v8947
  %9139 = vmatpush1.bf16.msra.mxu0 %v8946
  %9140 = vmatprep.subr.bf16.mxu0 %v8949
  %9141 = vmatpush1.bf16.msra.mxu0 %v8948
  %9142 = vmatprep.subr.bf16.mxu0 %v8951
  %9143 = vmatpush1.bf16.msra.mxu0 %v8950
  %9144 = vmatprep.subr.bf16.mxu0 %v8953
  %9145 = vmatpush1.bf16.msra.mxu0 %v8952
  %9146 = vmatprep.subr.bf16.mxu0 %v8955
  %9147 = vmatpush1.bf16.msra.mxu0 %v8954
  %9148 = vmatprep.subr.bf16.mxu0 %v8957
  %9149 = vmatpush1.bf16.msra.mxu0 %v8956
  %9150 = vmatprep.subr.bf16.mxu0 %v8959
  %9151 = vmatpush1.bf16.msra.mxu0 %v8958
  %9152 = vmatprep.subr.bf16.mxu0 %v8961
  %9153 = vmatpush1.bf16.msra.mxu0 %v8960
  %9154 = vmatprep.subr.bf16.mxu0 %v8963
  %9155 = vmatpush1.bf16.msra.mxu0 %v8962
  %9156 = vmatprep.subr.bf16.mxu0 %v8965
  %9157 = vmatpush1.bf16.msra.mxu0 %v8964
  %9158 = vmatprep.subr.bf16.mxu0 %v8967
  %9159 = vmatpush1.bf16.msra.mxu0 %v8966
  %9160 = vmatprep.subr.bf16.mxu0 %v8969
  %9161 = vmatpush1.bf16.msra.mxu0 %v8968
  %9162 = vmatprep.subr.bf16.mxu0 %v8971
  %9163 = vmatpush1.bf16.msra.mxu0 %v8970
  %9164 = vmatprep.subr.bf16.mxu0 %v8973
  %9165 = vmatpush1.bf16.msra.mxu0 %v8972
  %9166 = vmatprep.subr.bf16.mxu0 %v8975
  %9167 = vmatpush1.bf16.msra.mxu0 %v8974
  %9168 = vmatprep.subr.bf16.mxu0 %v8977
  %9169 = vmatpush1.bf16.msra.mxu0 %v8976
  %9170 = vmatprep.mubr.bf16.mxu0 %v8503
  %9171 = vmatmul.mubr.bf16.gmra.mrb[0].mxu0 %v8502
  %v9172 = vpop.f32.mrb[0].mxu0
  %v9173 = vadd.f32 %v8651, %v9172
  %v9174 = vpop.f32.mrb[0].mxu0
  %v9175 = vadd.f32 %v8655, %v9174
  %v9176 = vpop.f32.mrb[0].mxu0
  %v9177 = vadd.f32 %v8651, %v9176
  %v9178 = vpop.f32.mrb[0].mxu0
  %v9179 = vadd.f32 %v8655, %v9178
  %9180 = vmatprep.mubr.bf16.mxu0 %v8509
  %9181 = vmatmul.mubr.bf16.gmra.mrb[0].mxu0 %v8508
  %v9182 = vpop.f32.mrb[0].mxu0
  %v9183 = vadd.f32 %v8651, %v9182
  %v9184 = vpop.f32.mrb[0].mxu0
  %v9185 = vadd.f32 %v8655, %v9184
  %v9186 = vpop.f32.mrb[0].mxu0
  %v9187 = vadd.f32 %v8651, %v9186
  %v9188 = vpop.f32.mrb[0].mxu0
  %v9189 = vadd.f32 %v8655, %v9188
  %9190 = vmatprep.mubr.bf16.mxu0 %v8515
  %9191 = vmatmul.mubr.bf16.gmra.mrb[0].mxu0 %v8514
  %v9192 = vpop.f32.mrb[0].mxu0
  %v9193 = vadd.f32 %v8651, %v9192
  %v9194 = vpop.f32.mrb[0].mxu0
  %v9195 = vadd.f32 %v8655, %v9194
  %v9196 = vpop.f32.mrb[0].mxu0
  %v9197 = vadd.f32 %v8651, %v9196
  %v9198 = vpop.f32.mrb[0].mxu0
  %v9199 = vadd.f32 %v8655, %v9198
  %9200 = vmatprep.mubr.bf16.mxu0 %v8521
  %9201 = vmatmul.mubr.bf16.gmra.mrb[0].mxu0 %v8520
  %v9202 = vpop.f32.mrb[0].mxu0
  %v9203 = vadd.f32 %v8651, %v9202
  %v9204 = vpop.f32.mrb[0].mxu0
  %v9205 = vadd.f32 %v8655, %v9204
  %v9206 = vpop.f32.mrb[0].mxu0
  %v9207 = vadd.f32 %v8651, %v9206
  %v9208 = vpop.f32.mrb[0].mxu0
  %v9209 = vadd.f32 %v8655, %v9208
  %9210 = vmatprep.mubr.bf16.mxu0 %v8527
  %9211 = vmatmul.mubr.bf16.gmra.mrb[0].mxu0 %v8526
  %v9212 = vpop.f32.mrb[0].mxu0
  %v9213 = vadd.f32 %v8651, %v9212
  %v9214 = vpop.f32.mrb[0].mxu0
  %v9215 = vadd.f32 %v8655, %v9214
  %v9216 = vpop.f32.mrb[0].mxu0
  %v9217 = vadd.f32 %v8651, %v9216
  %v9218 = vpop.f32.mrb[0].mxu0
  %v9219 = vadd.f32 %v8655, %v9218
  %9220 = vmatprep.mubr.bf16.mxu0 %v8533
  %9221 = vmatmul.mubr.bf16.gmra.mrb[0].mxu0 %v8532
  %v9222 = vpop.f32.mrb[0].mxu0
  %v9223 = vadd.f32 %v8651, %v9222
  %v9224 = vpop.f32.mrb[0].mxu0
  %v9225 = vadd.f32 %v8655, %v9224
  %v9226 = vpop.f32.mrb[0].mxu0
  %v9227 = vadd.f32 %v8651, %v9226
  %v9228 = vpop.f32.mrb[0].mxu0
  %v9229 = vadd.f32 %v8655, %v9228
  %9230 = vmatprep.mubr.bf16.mxu0 %v8539
  %9231 = vmatmul.mubr.bf16.gmra.mrb[0].mxu0 %v8538
  %v9232 = vpop.f32.mrb[0].mxu0
  %v9233 = vadd.f32 %v8651, %v9232
  %v9234 = vpop.f32.mrb[0].mxu0
  %v9235 = vadd.f32 %v8655, %v9234
  %v9236 = vpop.f32.mrb[0].mxu0
  %v9237 = vadd.f32 %v8651, %v9236
  %v9238 = vpop.f32.mrb[0].mxu0
  %v9239 = vadd.f32 %v8655, %v9238
  %9240 = vmatprep.mubr.bf16.mxu0 %v8545
  %9241 = vmatmul.mubr.bf16.gmra.mrb[0].mxu0 %v8544
  %v9242 = vpop.f32.mrb[0].mxu0
  %v9243 = vadd.f32 %v8651, %v9242
  %v9244 = vpop.f32.mrb[0].mxu0
  %v9245 = vadd.f32 %v8655, %v9244
  %v9246 = vpop.f32.mrb[0].mxu0
  %v9247 = vadd.f32 %v8651, %v9246
  %v9248 = vpop.f32.mrb[0].mxu0
  %v9249 = vadd.f32 %v8655, %v9248
  %9250 = vdwg.mxu0
  %9251 = vmatprep.subr.bf16.mxu0 %v8979
  %9252 = vmatpush1.bf16.msra.mxu0 %v8978
  %9253 = vmatprep.subr.bf16.mxu0 %v8981
  %9254 = vmatpush1.bf16.msra.mxu0 %v8980
  %9255 = vmatprep.subr.bf16.mxu0 %v8983
  %9256 = vmatpush1.bf16.msra.mxu0 %v8982
  %9257 = vmatprep.subr.bf16.mxu0 %v8985
  %9258 = vmatpush1.bf16.msra.mxu0 %v8984
  %9259 = vmatprep.subr.bf16.mxu0 %v8987
  %9260 = vmatpush1.bf16.msra.mxu0 %v8986
  %9261 = vmatprep.subr.bf16.mxu0 %v8989
  %9262 = vmatpush1.bf16.msra.mxu0 %v8988
  %9263 = vmatprep.subr.bf16.mxu0 %v8991
  %9264 = vmatpush1.bf16.msra.mxu0 %v8990
  %9265 = vmatprep.subr.bf16.mxu0 %v8993
  %9266 = vmatpush1.bf16.msra.mxu0 %v8992
  %9267 = vmatprep.subr.bf16.mxu0 %v8995
  %9268 = vmatpush1.bf16.msra.mxu0 %v8994
  %9269 = vmatprep.subr.bf16.mxu0 %v8997
  %9270 = vmatpush1.bf16.msra.mxu0 %v8996
  %9271 = vmatprep.subr.bf16.mxu0 %v8999
  %9272 = vmatpush1.bf16.msra.mxu0 %v8998
  %9273 = vmatprep.subr.bf16.mxu0 %v9001
  %9274 = vmatpush1.bf16.msra.mxu0 %v9000
  %9275 = vmatprep.subr.bf16.mxu0 %v9003
  %9276 = vmatpush1.bf16.msra.mxu0 %v9002
  %9277 = vmatprep.subr.bf16.mxu0 %v9005
  %9278 = vmatpush1.bf16.msra.mxu0 %v9004
  %9279 = vmatprep.subr.bf16.mxu0 %v9007
  %9280 = vmatpush1.bf16.msra.mxu0 %v9006
  %9281 = vmatprep.subr.bf16.mxu0 %v9009
  %9282 = vmatpush1.bf16.msra.mxu0 %v9008
  %9283 = vmatprep.mubr.bf16.mxu0 %v8505
  %9284 = vmatmul.mubr.bf16.gmra.mrb[0].mxu0 %v8504
  %v9285 = vpop.f32.mrb[0].mxu0
  %v9286 = vadd.f32 %v9173, %v9285
  %v9287 = vpop.f32.mrb[0].mxu0
  %v9288 = vadd.f32 %v9175, %v9287
  %v9289 = vpop.f32.mrb[0].mxu0
  %v9290 = vadd.f32 %v9177, %v9289
  %v9291 = vpop.f32.mrb[0].mxu0
  %v9292 = vadd.f32 %v9179, %v9291
  %9293 = vmatprep.mubr.bf16.mxu0 %v8511
  %9294 = vmatmul.mubr.bf16.gmra.mrb[0].mxu0 %v8510
  %v9295 = vpop.f32.mrb[0].mxu0
  %v9296 = vadd.f32 %v9183, %v9295
  %v9297 = vpop.f32.mrb[0].mxu0
  %v9298 = vadd.f32 %v9185, %v9297
  %v9299 = vpop.f32.mrb[0].mxu0
  %v9300 = vadd.f32 %v9187, %v9299
  %v9301 = vpop.f32.mrb[0].mxu0
  %v9302 = vadd.f32 %v9189, %v9301
  %9303 = vmatprep.mubr.bf16.mxu0 %v8517
  %9304 = vmatmul.mubr.bf16.gmra.mrb[0].mxu0 %v8516
  %v9305 = vpop.f32.mrb[0].mxu0
  %v9306 = vadd.f32 %v9193, %v9305
  %v9307 = vpop.f32.mrb[0].mxu0
  %v9308 = vadd.f32 %v9195, %v9307
  %v9309 = vpop.f32.mrb[0].mxu0
  %v9310 = vadd.f32 %v9197, %v9309
  %v9311 = vpop.f32.mrb[0].mxu0
  %v9312 = vadd.f32 %v9199, %v9311
  %9313 = vmatprep.mubr.bf16.mxu0 %v8523
  %9314 = vmatmul.mubr.bf16.gmra.mrb[0].mxu0 %v8522
  %v9315 = vpop.f32.mrb[0].mxu0
  %v9316 = vadd.f32 %v9203, %v9315
  %v9317 = vpop.f32.mrb[0].mxu0
  %v9318 = vadd.f32 %v9205, %v9317
  %v9319 = vpop.f32.mrb[0].mxu0
  %v9320 = vadd.f32 %v9207, %v9319
  %v9321 = vpop.f32.mrb[0].mxu0
  %v9322 = vadd.f32 %v9209, %v9321
  %9323 = vmatprep.mubr.bf16.mxu0 %v8529
  %9324 = vmatmul.mubr.bf16.gmra.mrb[0].mxu0 %v8528
  %v9325 = vpop.f32.mrb[0].mxu0
  %v9326 = vadd.f32 %v9213, %v9325
  %v9327 = vpop.f32.mrb[0].mxu0
  %v9328 = vadd.f32 %v9215, %v9327
  %v9329 = vpop.f32.mrb[0].mxu0
  %v9330 = vadd.f32 %v9217, %v9329
  %v9331 = vpop.f32.mrb[0].mxu0
  %v9332 = vadd.f32 %v9219, %v9331
  %9333 = vmatprep.mubr.bf16.mxu0 %v8535
  %9334 = vmatmul.mubr.bf16.gmra.mrb[0].mxu0 %v8534
  %v9335 = vpop.f32.mrb[0].mxu0
  %v9336 = vadd.f32 %v9223, %v9335
  %v9337 = vpop.f32.mrb[0].mxu0
  %v9338 = vadd.f32 %v9225, %v9337
  %v9339 = vpop.f32.mrb[0].mxu0
  %v9340 = vadd.f32 %v9227, %v9339
  %v9341 = vpop.f32.mrb[0].mxu0
  %v9342 = vadd.f32 %v9229, %v9341
  %9343 = vmatprep.mubr.bf16.mxu0 %v8541
  %9344 = vmatmul.mubr.bf16.gmra.mrb[0].mxu0 %v8540
  %v9345 = vpop.f32.mrb[0].mxu0
  %v9346 = vadd.f32 %v9233, %v9345
  %v9347 = vpop.f32.mrb[0].mxu0
  %v9348 = vadd.f32 %v9235, %v9347
  %v9349 = vpop.f32.mrb[0].mxu0
  %v9350 = vadd.f32 %v9237, %v9349
  %v9351 = vpop.f32.mrb[0].mxu0
  %v9352 = vadd.f32 %v9239, %v9351
  %9353 = vmatprep.mubr.bf16.mxu0 %v8547
  %9354 = vmatmul.mubr.bf16.gmra.mrb[0].mxu0 %v8546
  %v9355 = vpop.f32.mrb[0].mxu0
  %v9356 = vadd.f32 %v9243, %v9355
  %v9357 = vpop.f32.mrb[0].mxu0
  %v9358 = vadd.f32 %v9245, %v9357
  %v9359 = vpop.f32.mrb[0].mxu0
  %v9360 = vadd.f32 %v9247, %v9359
  %v9361 = vpop.f32.mrb[0].mxu0
  %v9362 = vadd.f32 %v9249, %v9361
  %9363 = vdwg.mxu0
  %9364 = vmatprep.subr.bf16.mxu0 %v9011
  %9365 = vmatpush1.bf16.msra.mxu0 %v9010
  %9366 = vmatprep.subr.bf16.mxu0 %v9013
  %9367 = vmatpush1.bf16.msra.mxu0 %v9012
  %9368 = vmatprep.subr.bf16.mxu0 %v9015
  %9369 = vmatpush1.bf16.msra.mxu0 %v9014
  %9370 = vmatprep.subr.bf16.mxu0 %v9017
  %9371 = vmatpush1.bf16.msra.mxu0 %v9016
  %9372 = vmatprep.subr.bf16.mxu0 %v9019
  %9373 = vmatpush1.bf16.msra.mxu0 %v9018
  %9374 = vmatprep.subr.bf16.mxu0 %v9021
  %9375 = vmatpush1.bf16.msra.mxu0 %v9020
  %9376 = vmatprep.subr.bf16.mxu0 %v9023
  %9377 = vmatpush1.bf16.msra.mxu0 %v9022
  %9378 = vmatprep.subr.bf16.mxu0 %v9025
  %9379 = vmatpush1.bf16.msra.mxu0 %v9024
  %9380 = vmatprep.subr.bf16.mxu0 %v9027
  %9381 = vmatpush1.bf16.msra.mxu0 %v9026
  %9382 = vmatprep.subr.bf16.mxu0 %v9029
  %9383 = vmatpush1.bf16.msra.mxu0 %v9028
  %9384 = vmatprep.subr.bf16.mxu0 %v9031
  %9385 = vmatpush1.bf16.msra.mxu0 %v9030
  %9386 = vmatprep.subr.bf16.mxu0 %v9033
  %9387 = vmatpush1.bf16.msra.mxu0 %v9032
  %9388 = vmatprep.subr.bf16.mxu0 %v9035
  %9389 = vmatpush1.bf16.msra.mxu0 %v9034
  %9390 = vmatprep.subr.bf16.mxu0 %v9037
  %9391 = vmatpush1.bf16.msra.mxu0 %v9036
  %9392 = vmatprep.subr.bf16.mxu0 %v9039
  %9393 = vmatpush1.bf16.msra.mxu0 %v9038
  %9394 = vmatprep.subr.bf16.mxu0 %v9041
  %9395 = vmatpush1.bf16.msra.mxu0 %v9040
  %9396 = vmatprep.mubr.bf16.mxu0 %v8507
  %9397 = vmatmul.mubr.bf16.gmra.mrb[0].mxu0 %v8506
  %v9398 = vpop.f32.mrb[0].mxu0
  %v9399 = vadd.f32 %v9286, %v9398
  %v9400 = vpop.f32.mrb[0].mxu0
  %v9401 = vadd.f32 %v9288, %v9400
  %v9402 = vpop.f32.mrb[0].mxu0
  %v9403 = vadd.f32 %v9290, %v9402
  %v9404 = vpop.f32.mrb[0].mxu0
  %v9405 = vadd.f32 %v9292, %v9404
  %9406 = vmatprep.mubr.bf16.mxu0 %v8513
  %9407 = vmatmul.mubr.bf16.gmra.mrb[0].mxu0 %v8512
  %v9408 = vpop.f32.mrb[0].mxu0
  %v9409 = vadd.f32 %v9296, %v9408
  %v9410 = vpop.f32.mrb[0].mxu0
  %v9411 = vadd.f32 %v9298, %v9410
  %v9412 = vpop.f32.mrb[0].mxu0
  %v9413 = vadd.f32 %v9300, %v9412
  %v9414 = vpop.f32.mrb[0].mxu0
  %v9415 = vadd.f32 %v9302, %v9414
  %9416 = vmatprep.mubr.bf16.mxu0 %v8519
  %9417 = vmatmul.mubr.bf16.gmra.mrb[0].mxu0 %v8518
  %v9418 = vpop.f32.mrb[0].mxu0
  %v9419 = vadd.f32 %v9306, %v9418
  %v9420 = vpop.f32.mrb[0].mxu0
  %v9421 = vadd.f32 %v9308, %v9420
  %v9422 = vpop.f32.mrb[0].mxu0
  %v9423 = vadd.f32 %v9310, %v9422
  %v9424 = vpop.f32.mrb[0].mxu0
  %v9425 = vadd.f32 %v9312, %v9424
  %9426 = vmatprep.mubr.bf16.mxu0 %v8525
  %9427 = vmatmul.mubr.bf16.gmra.mrb[0].mxu0 %v8524
  %v9428 = vpop.f32.mrb[0].mxu0
  %v9429 = vadd.f32 %v9316, %v9428
  %v9430 = vpop.f32.mrb[0].mxu0
  %v9431 = vadd.f32 %v9318, %v9430
  %v9432 = vpop.f32.mrb[0].mxu0
  %v9433 = vadd.f32 %v9320, %v9432
  %v9434 = vpop.f32.mrb[0].mxu0
  %v9435 = vadd.f32 %v9322, %v9434
  %9436 = vmatprep.mubr.bf16.mxu0 %v8531
  %9437 = vmatmul.mubr.bf16.gmra.mrb[0].mxu0 %v8530
  %v9438 = vpop.f32.mrb[0].mxu0
  %v9439 = vadd.f32 %v9326, %v9438
  %v9440 = vpop.f32.mrb[0].mxu0
  %v9441 = vadd.f32 %v9328, %v9440
  %v9442 = vpop.f32.mrb[0].mxu0
  %v9443 = vadd.f32 %v9330, %v9442
  %v9444 = vpop.f32.mrb[0].mxu0
  %v9445 = vadd.f32 %v9332, %v9444
  %9446 = vmatprep.mubr.bf16.mxu0 %v8537
  %9447 = vmatmul.mubr.bf16.gmra.mrb[0].mxu0 %v8536
  %v9448 = vpop.f32.mrb[0].mxu0
  %v9449 = vadd.f32 %v9336, %v9448
  %v9450 = vpop.f32.mrb[0].mxu0
  %v9451 = vadd.f32 %v9338, %v9450
  %v9452 = vpop.f32.mrb[0].mxu0
  %v9453 = vadd.f32 %v9340, %v9452
  %v9454 = vpop.f32.mrb[0].mxu0
  %v9455 = vadd.f32 %v9342, %v9454
  %9456 = vmatprep.mubr.bf16.mxu0 %v8543
  %9457 = vmatmul.mubr.bf16.gmra.mrb[0].mxu0 %v8542
  %v9458 = vpop.f32.mrb[0].mxu0
  %v9459 = vadd.f32 %v9346, %v9458
  %v9460 = vpop.f32.mrb[0].mxu0
  %v9461 = vadd.f32 %v9348, %v9460
  %v9462 = vpop.f32.mrb[0].mxu0
  %v9463 = vadd.f32 %v9350, %v9462
  %v9464 = vpop.f32.mrb[0].mxu0
  %v9465 = vadd.f32 %v9352, %v9464
  %9466 = vmatprep.mubr.bf16.mxu0 %v8549
  %9467 = vmatmul.mubr.bf16.gmra.mrb[0].mxu0 %v8548
  %v9468 = vpop.f32.mrb[0].mxu0
  %v9469 = vadd.f32 %v9356, %v9468
  %v9470 = vpop.f32.mrb[0].mxu0
  %v9471 = vadd.f32 %v9358, %v9470
  %v9472 = vpop.f32.mrb[0].mxu0
  %v9473 = vadd.f32 %v9360, %v9472
  %v9474 = vpop.f32.mrb[0].mxu0
  %v9475 = vadd.f32 %v9362, %v9474
  %9476 = vdwg.mxu0
  %v9477 = vmax.f32 %v9399, 0.0
  %v9478 = vmax.f32 %v9401, 0.0
  %v9479 = vmax.f32 %v9403, 0.0
  %v9480 = vmax.f32 %v9405, 0.0
  %v9481 = vmax.f32 %v9409, 0.0
  %v9482 = vmax.f32 %v9411, 0.0
  %v9483 = vmax.f32 %v9413, 0.0
  %v9484 = vmax.f32 %v9415, 0.0
  %v9485 = vmax.f32 %v9419, 0.0
  %v9486 = vmax.f32 %v9421, 0.0
  %v9487 = vmax.f32 %v9423, 0.0
  %v9488 = vmax.f32 %v9425, 0.0
  %v9489 = vmax.f32 %v9429, 0.0
  %v9490 = vmax.f32 %v9431, 0.0
  %v9491 = vmax.f32 %v9433, 0.0
  %v9492 = vmax.f32 %v9435, 0.0
  %v9493 = vmax.f32 %v9439, 0.0
  %v9494 = vmax.f32 %v9441, 0.0
  %v9495 = vmax.f32 %v9443, 0.0
  %v9496 = vmax.f32 %v9445, 0.0
  %v9497 = vmax.f32 %v9449, 0.0
  %v9498 = vmax.f32 %v9451, 0.0
  %v9499 = vmax.f32 %v9453, 0.0
  %v9500 = vmax.f32 %v9455, 0.0
  %v9501 = vmax.f32 %v9459, 0.0
  %v9502 = vmax.f32 %v9461, 0.0
  %v9503 = vmax.f32 %v9463, 0.0
  %v9504 = vmax.f32 %v9465, 0.0
  %v9505 = vmax.f32 %v9469, 0.0
  %v9506 = vmax.f32 %v9471, 0.0
  %v9507 = vmax.f32 %v9473, 0.0
  %v9508 = vmax.f32 %v9475, 0.0
  %v9509 = vpack.c.bf16 %v9479, %v9477
  %v9510 = vpack.c.bf16 %v9480, %v9478
  %v9511 = vpack.c.bf16 %v9483, %v9481
  %v9512 = vpack.c.bf16 %v9484, %v9482
  %v9513 = vpack.c.bf16 %v9487, %v9485
  %v9514 = vpack.c.bf16 %v9488, %v9486
  %v9515 = vpack.c.bf16 %v9491, %v9489
  %v9516 = vpack.c.bf16 %v9492, %v9490
  %v9517 = vpack.c.bf16 %v9495, %v9493
  %v9518 = vpack.c.bf16 %v9496, %v9494
  %v9519 = vpack.c.bf16 %v9499, %v9497
  %v9520 = vpack.c.bf16 %v9500, %v9498
  %v9521 = vpack.c.bf16 %v9503, %v9501
  %v9522 = vpack.c.bf16 %v9504, %v9502
  %v9523 = vpack.c.bf16 %v9507, %v9505
  %v9524 = vpack.c.bf16 %v9508, %v9506
  %v9525 = vld [vmem:[%s14] sm:$0xff]
  %v9526 = vld [vmem:[%s14 + $0x8] sm:$0xff]
  %v9527 = vld [vmem:[%s14 + $0x10] sm:$0xff]
  %v9528 = vld [vmem:[%s14 + $0x18] sm:$0xff]
  %v9529 = vld [vmem:[%s14 + $0x20] sm:$0xff]
  %v9530 = vld [vmem:[%s14 + $0x28] sm:$0xff]
  %v9531 = vld [vmem:[%s14 + $0x30] sm:$0xff]
  %v9532 = vld [vmem:[%s14 + $0x38] sm:$0xff]
  %v9533 = vld [vmem:[%s14 + $0x40] sm:$0xff]
  %v9534 = vld [vmem:[%s14 + $0x48] sm:$0xff]
  %v9535 = vld [vmem:[%s14 + $0x50] sm:$0xff]
  %v9536 = vld [vmem:[%s14 + $0x58] sm:$0xff]
  %v9537 = vld [vmem:[%s14 + $0x60] sm:$0xff]
  %v9538 = vld [vmem:[%s14 + $0x68] sm:$0xff]
  %v9539 = vld [vmem:[%s14 + $0x70] sm:$0xff]
  %v9540 = vld [vmem:[%s14 + $0x78] sm:$0xff]
  %v9541 = vld [vmem:[%s14 + $0x80] sm:$0xff]
  %v9542 = vld [vmem:[%s14 + $0x88] sm:$0xff]
  %v9543 = vld [vmem:[%s14 + $0x90] sm:$0xff]
  %v9544 = vld [vmem:[%s14 + $0x98] sm:$0xff]
  %v9545 = vld [vmem:[%s14 + $0xa0] sm:$0xff]
  %v9546 = vld [vmem:[%s14 + $0xa8] sm:$0xff]
  %v9547 = vld [vmem:[%s14 + $0xb0] sm:$0xff]
  %v9548 = vld [vmem:[%s14 + $0xb8] sm:$0xff]
  %v9549 = vld [vmem:[%s14 + $0xc0] sm:$0xff]
  %v9550 = vld [vmem:[%s14 + $0xc8] sm:$0xff]
  %v9551 = vld [vmem:[%s14 + $0xd0] sm:$0xff]
  %v9552 = vld [vmem:[%s14 + $0xd8] sm:$0xff]
  %v9553 = vld [vmem:[%s14 + $0xe0] sm:$0xff]
  %v9554 = vld [vmem:[%s14 + $0xe8] sm:$0xff]
  %v9555 = vld [vmem:[%s14 + $0xf0] sm:$0xff]
  %v9556 = vld [vmem:[%s14 + $0xf8] sm:$0xff]
  %v9557 = vld [vmem:[%s14 + $0x100] sm:$0xff]
  %v9558 = vld [vmem:[%s14 + $0x108] sm:$0xff]
  %v9559 = vld [vmem:[%s14 + $0x110] sm:$0xff]
  %v9560 = vld [vmem:[%s14 + $0x118] sm:$0xff]
  %v9561 = vld [vmem:[%s14 + $0x120] sm:$0xff]
  %v9562 = vld [vmem:[%s14 + $0x128] sm:$0xff]
  %v9563 = vld [vmem:[%s14 + $0x130] sm:$0xff]
  %v9564 = vld [vmem:[%s14 + $0x138] sm:$0xff]
  %v9565 = vld [vmem:[%s14 + $0x140] sm:$0xff]
  %v9566 = vld [vmem:[%s14 + $0x148] sm:$0xff]
  %v9567 = vld [vmem:[%s14 + $0x150] sm:$0xff]
  %v9568 = vld [vmem:[%s14 + $0x158] sm:$0xff]
  %v9569 = vld [vmem:[%s14 + $0x160] sm:$0xff]
  %v9570 = vld [vmem:[%s14 + $0x168] sm:$0xff]
  %v9571 = vld [vmem:[%s14 + $0x170] sm:$0xff]
  %v9572 = vld [vmem:[%s14 + $0x178] sm:$0xff]
  %v9573 = vld [vmem:[%s14 + $0x180] sm:$0xff]
  %v9574 = vld [vmem:[%s14 + $0x188] sm:$0xff]
  %v9575 = vld [vmem:[%s14 + $0x190] sm:$0xff]
  %v9576 = vld [vmem:[%s14 + $0x198] sm:$0xff]
  %v9577 = vld [vmem:[%s14 + $0x1a0] sm:$0xff]
  %v9578 = vld [vmem:[%s14 + $0x1a8] sm:$0xff]
  %v9579 = vld [vmem:[%s14 + $0x1b0] sm:$0xff]
  %v9580 = vld [vmem:[%s14 + $0x1b8] sm:$0xff]
  %v9581 = vld [vmem:[%s14 + $0x1c0] sm:$0xff]
  %v9582 = vld [vmem:[%s14 + $0x1c8] sm:$0xff]
  %v9583 = vld [vmem:[%s14 + $0x1d0] sm:$0xff]
  %v9584 = vld [vmem:[%s14 + $0x1d8] sm:$0xff]
  %v9585 = vld [vmem:[%s14 + $0x1e0] sm:$0xff]
  %v9586 = vld [vmem:[%s14 + $0x1e8] sm:$0xff]
  %v9587 = vld [vmem:[%s14 + $0x1f0] sm:$0xff]
  %v9588 = vld [vmem:[%s14 + $0x1f8] sm:$0xff]
  %v9589 = vld [vmem:[%s14 + $0x200] sm:$0xff]
  %v9590 = vld [vmem:[%s14 + $0x208] sm:$0xff]
  %v9591 = vld [vmem:[%s14 + $0x210] sm:$0xff]
  %v9592 = vld [vmem:[%s14 + $0x218] sm:$0xff]
  %v9593 = vld [vmem:[%s14 + $0x220] sm:$0xff]
  %v9594 = vld [vmem:[%s14 + $0x228] sm:$0xff]
  %v9595 = vld [vmem:[%s14 + $0x230] sm:$0xff]
  %v9596 = vld [vmem:[%s14 + $0x238] sm:$0xff]
  %v9597 = vld [vmem:[%s14 + $0x240] sm:$0xff]
  %v9598 = vld [vmem:[%s14 + $0x248] sm:$0xff]
  %v9599 = vld [vmem:[%s14 + $0x250] sm:$0xff]
  %v9600 = vld [vmem:[%s14 + $0x258] sm:$0xff]
  %v9601 = vld [vmem:[%s14 + $0x260] sm:$0xff]
  %v9602 = vld [vmem:[%s14 + $0x268] sm:$0xff]
  %v9603 = vld [vmem:[%s14 + $0x270] sm:$0xff]
  %v9604 = vld [vmem:[%s14 + $0x278] sm:$0xff]
  %v9605 = vld [vmem:[%s14 + $0x280] sm:$0xff]
  %v9606 = vld [vmem:[%s14 + $0x288] sm:$0xff]
  %v9607 = vld [vmem:[%s14 + $0x290] sm:$0xff]
  %v9608 = vld [vmem:[%s14 + $0x298] sm:$0xff]
  %v9609 = vld [vmem:[%s14 + $0x2a0] sm:$0xff]
  %v9610 = vld [vmem:[%s14 + $0x2a8] sm:$0xff]
  %v9611 = vld [vmem:[%s14 + $0x2b0] sm:$0xff]
  %v9612 = vld [vmem:[%s14 + $0x2b8] sm:$0xff]
  %v9613 = vld [vmem:[%s14 + $0x2c0] sm:$0xff]
  %v9614 = vld [vmem:[%s14 + $0x2c8] sm:$0xff]
  %v9615 = vld [vmem:[%s14 + $0x2d0] sm:$0xff]
  %v9616 = vld [vmem:[%s14 + $0x2d8] sm:$0xff]
  %v9617 = vld [vmem:[%s14 + $0x2e0] sm:$0xff]
  %v9618 = vld [vmem:[%s14 + $0x2e8] sm:$0xff]
  %v9619 = vld [vmem:[%s14 + $0x2f0] sm:$0xff]
  %v9620 = vld [vmem:[%s14 + $0x2f8] sm:$0xff]
  %v9621 = vld [vmem:[%s15] sm:$0x3f]
  %v9623 = vlaneseq
  %v9624 = vshrl.u32 %v9623, 7
  %v9625 = vsub.s32 0, %v9624
  %v9626 = vrot.slane %v9621, %v9625
  %v9627 = vlaneseq
  %v9628 = vshrl.u32 %v9627, 7
  %v9629 = vsub.s32 1, %v9628
  %v9630 = vrot.slane %v9621, %v9629
  %v9631 = vlaneseq
  %v9632 = vshrl.u32 %v9631, 7
  %v9633 = vsub.s32 2, %v9632
  %v9634 = vrot.slane %v9621, %v9633
  %v9635 = vlaneseq
  %v9636 = vshrl.u32 %v9635, 7
  %v9637 = vsub.s32 3, %v9636
  %v9638 = vrot.slane %v9621, %v9637
  %v9639 = vlaneseq
  %v9640 = vshrl.u32 %v9639, 7
  %v9641 = vsub.s32 4, %v9640
  %v9642 = vrot.slane %v9621, %v9641
  %v9643 = vlaneseq
  %v9644 = vshrl.u32 %v9643, 7
  %v9645 = vsub.s32 5, %v9644
  %v9646 = vrot.slane %v9621, %v9645
  %v9749 = vunpack.c.l.b16 %v9525
  %v9750 = vunpack.c.h.b16 %v9525
  %v9751 = vunpack.c.l.b16 %v9526
  %v9752 = vunpack.c.h.b16 %v9526
  %v9753 = vunpack.c.l.b16 %v9527
  %v9754 = vunpack.c.h.b16 %v9527
  %v9755 = vunpack.c.l.b16 %v9528
  %v9756 = vunpack.c.h.b16 %v9528
  %v9757 = vunpack.c.l.b16 %v9529
  %v9758 = vunpack.c.h.b16 %v9529
  %v9759 = vunpack.c.l.b16 %v9530
  %v9760 = vunpack.c.h.b16 %v9530
  %v9761 = vunpack.c.l.b16 %v9531
  %v9762 = vunpack.c.h.b16 %v9531
  %v9763 = vunpack.c.l.b16 %v9532
  %v9764 = vunpack.c.h.b16 %v9532
  %v9765 = vunpack.c.l.b16 %v9533
  %v9766 = vunpack.c.h.b16 %v9533
  %v9767 = vunpack.c.l.b16 %v9534
  %v9768 = vunpack.c.h.b16 %v9534
  %v9769 = vunpack.c.l.b16 %v9535
  %v9770 = vunpack.c.h.b16 %v9535
  %v9771 = vunpack.c.l.b16 %v9536
  %v9772 = vunpack.c.h.b16 %v9536
  %v9773 = vunpack.c.l.b16 %v9537
  %v9774 = vunpack.c.h.b16 %v9537
  %v9775 = vunpack.c.l.b16 %v9538
  %v9776 = vunpack.c.h.b16 %v9538
  %v9777 = vunpack.c.l.b16 %v9539
  %v9778 = vunpack.c.h.b16 %v9539
  %v9779 = vunpack.c.l.b16 %v9540
  %v9780 = vunpack.c.h.b16 %v9540
  %v9781 = vunpack.c.l.b16 %v9541
  %v9782 = vunpack.c.h.b16 %v9541
  %v9783 = vunpack.c.l.b16 %v9542
  %v9784 = vunpack.c.h.b16 %v9542
  %v9785 = vunpack.c.l.b16 %v9543
  %v9786 = vunpack.c.h.b16 %v9543
  %v9787 = vunpack.c.l.b16 %v9544
  %v9788 = vunpack.c.h.b16 %v9544
  %v9789 = vunpack.c.l.b16 %v9545
  %v9790 = vunpack.c.h.b16 %v9545
  %v9791 = vunpack.c.l.b16 %v9546
  %v9792 = vunpack.c.h.b16 %v9546
  %v9793 = vunpack.c.l.b16 %v9547
  %v9794 = vunpack.c.h.b16 %v9547
  %v9795 = vunpack.c.l.b16 %v9548
  %v9796 = vunpack.c.h.b16 %v9548
  %v9797 = vunpack.c.l.b16 %v9549
  %v9798 = vunpack.c.h.b16 %v9549
  %v9799 = vunpack.c.l.b16 %v9550
  %v9800 = vunpack.c.h.b16 %v9550
  %v9801 = vunpack.c.l.b16 %v9551
  %v9802 = vunpack.c.h.b16 %v9551
  %v9803 = vunpack.c.l.b16 %v9552
  %v9804 = vunpack.c.h.b16 %v9552
  %v9805 = vunpack.c.l.b16 %v9553
  %v9806 = vunpack.c.h.b16 %v9553
  %v9807 = vunpack.c.l.b16 %v9554
  %v9808 = vunpack.c.h.b16 %v9554
  %v9809 = vunpack.c.l.b16 %v9555
  %v9810 = vunpack.c.h.b16 %v9555
  %v9811 = vunpack.c.l.b16 %v9556
  %v9812 = vunpack.c.h.b16 %v9556
  %v9813 = vunpack.c.l.b16 %v9557
  %v9814 = vunpack.c.h.b16 %v9557
  %v9815 = vunpack.c.l.b16 %v9558
  %v9816 = vunpack.c.h.b16 %v9558
  %v9817 = vunpack.c.l.b16 %v9559
  %v9818 = vunpack.c.h.b16 %v9559
  %v9819 = vunpack.c.l.b16 %v9560
  %v9820 = vunpack.c.h.b16 %v9560
  %v9821 = vunpack.c.l.b16 %v9561
  %v9822 = vunpack.c.h.b16 %v9561
  %v9823 = vunpack.c.l.b16 %v9562
  %v9824 = vunpack.c.h.b16 %v9562
  %v9825 = vunpack.c.l.b16 %v9563
  %v9826 = vunpack.c.h.b16 %v9563
  %v9827 = vunpack.c.l.b16 %v9564
  %v9828 = vunpack.c.h.b16 %v9564
  %v9829 = vunpack.c.l.b16 %v9565
  %v9830 = vunpack.c.h.b16 %v9565
  %v9831 = vunpack.c.l.b16 %v9566
  %v9832 = vunpack.c.h.b16 %v9566
  %v9833 = vunpack.c.l.b16 %v9567
  %v9834 = vunpack.c.h.b16 %v9567
  %v9835 = vunpack.c.l.b16 %v9568
  %v9836 = vunpack.c.h.b16 %v9568
  %v9837 = vunpack.c.l.b16 %v9569
  %v9838 = vunpack.c.h.b16 %v9569
  %v9839 = vunpack.c.l.b16 %v9570
  %v9840 = vunpack.c.h.b16 %v9570
  %v9841 = vunpack.c.l.b16 %v9571
  %v9842 = vunpack.c.h.b16 %v9571
  %v9843 = vunpack.c.l.b16 %v9572
  %v9844 = vunpack.c.h.b16 %v9572
  %v9845 = vunpack.c.l.b16 %v9573
  %v9846 = vunpack.c.h.b16 %v9573
  %v9847 = vunpack.c.l.b16 %v9574
  %v9848 = vunpack.c.h.b16 %v9574
  %v9849 = vunpack.c.l.b16 %v9575
  %v9850 = vunpack.c.h.b16 %v9575
  %v9851 = vunpack.c.l.b16 %v9576
  %v9852 = vunpack.c.h.b16 %v9576
  %v9853 = vunpack.c.l.b16 %v9577
  %v9854 = vunpack.c.h.b16 %v9577
  %v9855 = vunpack.c.l.b16 %v9578
  %v9856 = vunpack.c.h.b16 %v9578
  %v9857 = vunpack.c.l.b16 %v9579
  %v9858 = vunpack.c.h.b16 %v9579
  %v9859 = vunpack.c.l.b16 %v9580
  %v9860 = vunpack.c.h.b16 %v9580
  %v9861 = vunpack.c.l.b16 %v9581
  %v9862 = vunpack.c.h.b16 %v9581
  %v9863 = vunpack.c.l.b16 %v9582
  %v9864 = vunpack.c.h.b16 %v9582
  %v9865 = vunpack.c.l.b16 %v9583
  %v9866 = vunpack.c.h.b16 %v9583
  %v9867 = vunpack.c.l.b16 %v9584
  %v9868 = vunpack.c.h.b16 %v9584
  %v9869 = vunpack.c.l.b16 %v9585
  %v9870 = vunpack.c.h.b16 %v9585
  %v9871 = vunpack.c.l.b16 %v9586
  %v9872 = vunpack.c.h.b16 %v9586
  %v9873 = vunpack.c.l.b16 %v9587
  %v9874 = vunpack.c.h.b16 %v9587
  %v9875 = vunpack.c.l.b16 %v9588
  %v9876 = vunpack.c.h.b16 %v9588
  %v9877 = vunpack.c.l.b16 %v9589
  %v9878 = vunpack.c.h.b16 %v9589
  %v9879 = vunpack.c.l.b16 %v9590
  %v9880 = vunpack.c.h.b16 %v9590
  %v9881 = vunpack.c.l.b16 %v9591
  %v9882 = vunpack.c.h.b16 %v9591
  %v9883 = vunpack.c.l.b16 %v9592
  %v9884 = vunpack.c.h.b16 %v9592
  %v9885 = vunpack.c.l.b16 %v9593
  %v9886 = vunpack.c.h.b16 %v9593
  %v9887 = vunpack.c.l.b16 %v9594
  %v9888 = vunpack.c.h.b16 %v9594
  %v9889 = vunpack.c.l.b16 %v9595
  %v9890 = vunpack.c.h.b16 %v9595
  %v9891 = vunpack.c.l.b16 %v9596
  %v9892 = vunpack.c.h.b16 %v9596
  %v9893 = vunpack.c.l.b16 %v9597
  %v9894 = vunpack.c.h.b16 %v9597
  %v9895 = vunpack.c.l.b16 %v9598
  %v9896 = vunpack.c.h.b16 %v9598
  %v9897 = vunpack.c.l.b16 %v9599
  %v9898 = vunpack.c.h.b16 %v9599
  %v9899 = vunpack.c.l.b16 %v9600
  %v9900 = vunpack.c.h.b16 %v9600
  %v9901 = vunpack.c.l.b16 %v9601
  %v9902 = vunpack.c.h.b16 %v9601
  %v9903 = vunpack.c.l.b16 %v9602
  %v9904 = vunpack.c.h.b16 %v9602
  %v9905 = vunpack.c.l.b16 %v9603
  %v9906 = vunpack.c.h.b16 %v9603
  %v9907 = vunpack.c.l.b16 %v9604
  %v9908 = vunpack.c.h.b16 %v9604
  %v9909 = vunpack.c.l.b16 %v9605
  %v9910 = vunpack.c.h.b16 %v9605
  %v9911 = vunpack.c.l.b16 %v9606
  %v9912 = vunpack.c.h.b16 %v9606
  %v9913 = vunpack.c.l.b16 %v9607
  %v9914 = vunpack.c.h.b16 %v9607
  %v9915 = vunpack.c.l.b16 %v9608
  %v9916 = vunpack.c.h.b16 %v9608
  %v9917 = vunpack.c.l.b16 %v9609
  %v9918 = vunpack.c.h.b16 %v9609
  %v9919 = vunpack.c.l.b16 %v9610
  %v9920 = vunpack.c.h.b16 %v9610
  %v9921 = vunpack.c.l.b16 %v9611
  %v9922 = vunpack.c.h.b16 %v9611
  %v9923 = vunpack.c.l.b16 %v9612
  %v9924 = vunpack.c.h.b16 %v9612
  %v9925 = vunpack.c.l.b16 %v9613
  %v9926 = vunpack.c.h.b16 %v9613
  %v9927 = vunpack.c.l.b16 %v9614
  %v9928 = vunpack.c.h.b16 %v9614
  %v9929 = vunpack.c.l.b16 %v9615
  %v9930 = vunpack.c.h.b16 %v9615
  %v9931 = vunpack.c.l.b16 %v9616
  %v9932 = vunpack.c.h.b16 %v9616
  %v9933 = vunpack.c.l.b16 %v9617
  %v9934 = vunpack.c.h.b16 %v9617
  %v9935 = vunpack.c.l.b16 %v9618
  %v9936 = vunpack.c.h.b16 %v9618
  %v9937 = vunpack.c.l.b16 %v9619
  %v9938 = vunpack.c.h.b16 %v9619
  %v9939 = vunpack.c.l.b16 %v9620
  %v9940 = vunpack.c.h.b16 %v9620
  %v9941 = vpack.c.b16 %v9755, %v9749
  %v9942 = vpack.c.b16 %v9756, %v9750
  %v9943 = vpack.c.b16 %v9757, %v9751
  %v9944 = vpack.c.b16 %v9758, %v9752
  %v9945 = vpack.c.b16 %v9759, %v9753
  %v9946 = vpack.c.b16 %v9760, %v9754
  %v9947 = vpack.c.b16 %v9767, %v9761
  %v9948 = vpack.c.b16 %v9768, %v9762
  %v9949 = vpack.c.b16 %v9769, %v9763
  %v9950 = vpack.c.b16 %v9770, %v9764
  %v9951 = vpack.c.b16 %v9771, %v9765
  %v9952 = vpack.c.b16 %v9772, %v9766
  %v9953 = vpack.c.b16 %v9779, %v9773
  %v9954 = vpack.c.b16 %v9780, %v9774
  %v9955 = vpack.c.b16 %v9781, %v9775
  %v9956 = vpack.c.b16 %v9782, %v9776
  %v9957 = vpack.c.b16 %v9783, %v9777
  %v9958 = vpack.c.b16 %v9784, %v9778
  %v9959 = vpack.c.b16 %v9791, %v9785
  %v9960 = vpack.c.b16 %v9792, %v9786
  %v9961 = vpack.c.b16 %v9793, %v9787
  %v9962 = vpack.c.b16 %v9794, %v9788
  %v9963 = vpack.c.b16 %v9795, %v9789
  %v9964 = vpack.c.b16 %v9796, %v9790
  %v9965 = vpack.c.b16 %v9803, %v9797
  %v9966 = vpack.c.b16 %v9804, %v9798
  %v9967 = vpack.c.b16 %v9805, %v9799
  %v9968 = vpack.c.b16 %v9806, %v9800
  %v9969 = vpack.c.b16 %v9807, %v9801
  %v9970 = vpack.c.b16 %v9808, %v9802
  %v9971 = vpack.c.b16 %v9815, %v9809
  %v9972 = vpack.c.b16 %v9816, %v9810
  %v9973 = vpack.c.b16 %v9817, %v9811
  %v9974 = vpack.c.b16 %v9818, %v9812
  %v9975 = vpack.c.b16 %v9819, %v9813
  %v9976 = vpack.c.b16 %v9820, %v9814
  %v9977 = vpack.c.b16 %v9827, %v9821
  %v9978 = vpack.c.b16 %v9828, %v9822
  %v9979 = vpack.c.b16 %v9829, %v9823
  %v9980 = vpack.c.b16 %v9830, %v9824
  %v9981 = vpack.c.b16 %v9831, %v9825
  %v9982 = vpack.c.b16 %v9832, %v9826
  %v9983 = vpack.c.b16 %v9839, %v9833
  %v9984 = vpack.c.b16 %v9840, %v9834
  %v9985 = vpack.c.b16 %v9841, %v9835
  %v9986 = vpack.c.b16 %v9842, %v9836
  %v9987 = vpack.c.b16 %v9843, %v9837
  %v9988 = vpack.c.b16 %v9844, %v9838
  %v9989 = vpack.c.b16 %v9851, %v9845
  %v9990 = vpack.c.b16 %v9852, %v9846
  %v9991 = vpack.c.b16 %v9853, %v9847
  %v9992 = vpack.c.b16 %v9854, %v9848
  %v9993 = vpack.c.b16 %v9855, %v9849
  %v9994 = vpack.c.b16 %v9856, %v9850
  %v9995 = vpack.c.b16 %v9863, %v9857
  %v9996 = vpack.c.b16 %v9864, %v9858
  %v9997 = vpack.c.b16 %v9865, %v9859
  %v9998 = vpack.c.b16 %v9866, %v9860
  %v9999 = vpack.c.b16 %v9867, %v9861
  %v10000 = vpack.c.b16 %v9868, %v9862
  %v10001 = vpack.c.b16 %v9875, %v9869
  %v10002 = vpack.c.b16 %v9876, %v9870
  %v10003 = vpack.c.b16 %v9877, %v9871
  %v10004 = vpack.c.b16 %v9878, %v9872
  %v10005 = vpack.c.b16 %v9879, %v9873
  %v10006 = vpack.c.b16 %v9880, %v9874
  %v10007 = vpack.c.b16 %v9887, %v9881
  %v10008 = vpack.c.b16 %v9888, %v9882
  %v10009 = vpack.c.b16 %v9889, %v9883
  %v10010 = vpack.c.b16 %v9890, %v9884
  %v10011 = vpack.c.b16 %v9891, %v9885
  %v10012 = vpack.c.b16 %v9892, %v9886
  %v10013 = vpack.c.b16 %v9899, %v9893
  %v10014 = vpack.c.b16 %v9900, %v9894
  %v10015 = vpack.c.b16 %v9901, %v9895
  %v10016 = vpack.c.b16 %v9902, %v9896
  %v10017 = vpack.c.b16 %v9903, %v9897
  %v10018 = vpack.c.b16 %v9904, %v9898
  %v10019 = vpack.c.b16 %v9911, %v9905
  %v10020 = vpack.c.b16 %v9912, %v9906
  %v10021 = vpack.c.b16 %v9913, %v9907
  %v10022 = vpack.c.b16 %v9914, %v9908
  %v10023 = vpack.c.b16 %v9915, %v9909
  %v10024 = vpack.c.b16 %v9916, %v9910
  %v10025 = vpack.c.b16 %v9923, %v9917
  %v10026 = vpack.c.b16 %v9924, %v9918
  %v10027 = vpack.c.b16 %v9925, %v9919
  %v10028 = vpack.c.b16 %v9926, %v9920
  %v10029 = vpack.c.b16 %v9927, %v9921
  %v10030 = vpack.c.b16 %v9928, %v9922
  %v10031 = vpack.c.b16 %v9935, %v9929
  %v10032 = vpack.c.b16 %v9936, %v9930
  %v10033 = vpack.c.b16 %v9937, %v9931
  %v10034 = vpack.c.b16 %v9938, %v9932
  %v10035 = vpack.c.b16 %v9939, %v9933
  %v10036 = vpack.c.b16 %v9940, %v9934
  %10133 = vmatprep.subr.bf16.mxu0 %v9942
  %10134 = vmatpush1.bf16.msra.mxu0 %v9941
  %10135 = vmatprep.subr.bf16.mxu0 %v9948
  %10136 = vmatpush1.bf16.msra.mxu0 %v9947
  %10137 = vmatprep.subr.bf16.mxu0 %v9954
  %10138 = vmatpush1.bf16.msra.mxu0 %v9953
  %10139 = vmatprep.subr.bf16.mxu0 %v9960
  %10140 = vmatpush1.bf16.msra.mxu0 %v9959
  %10141 = vmatprep.subr.bf16.mxu0 %v9966
  %10142 = vmatpush1.bf16.msra.mxu0 %v9965
  %10143 = vmatprep.subr.bf16.mxu0 %v9972
  %10144 = vmatpush1.bf16.msra.mxu0 %v9971
  %10145 = vmatprep.subr.bf16.mxu0 %v9978
  %10146 = vmatpush1.bf16.msra.mxu0 %v9977
  %10147 = vmatprep.subr.bf16.mxu0 %v9984
  %10148 = vmatpush1.bf16.msra.mxu0 %v9983
  %10149 = vmatprep.subr.bf16.mxu0 %v9990
  %10150 = vmatpush1.bf16.msra.mxu0 %v9989
  %10151 = vmatprep.subr.bf16.mxu0 %v9996
  %10152 = vmatpush1.bf16.msra.mxu0 %v9995
  %10153 = vmatprep.subr.bf16.mxu0 %v10002
  %10154 = vmatpush1.bf16.msra.mxu0 %v10001
  %10155 = vmatprep.subr.bf16.mxu0 %v10008
  %10156 = vmatpush1.bf16.msra.mxu0 %v10007
  %10157 = vmatprep.subr.bf16.mxu0 %v10014
  %10158 = vmatpush1.bf16.msra.mxu0 %v10013
  %10159 = vmatprep.subr.bf16.mxu0 %v10020
  %10160 = vmatpush1.bf16.msra.mxu0 %v10019
  %10161 = vmatprep.subr.bf16.mxu0 %v10026
  %10162 = vmatpush1.bf16.msra.mxu0 %v10025
  %10163 = vmatprep.subr.bf16.mxu0 %v10032
  %10164 = vmatpush1.bf16.msra.mxu0 %v10031
  %10165 = vmatprep.mubr.bf16.mxu0 %v9510
  %10166 = vmatmul.mubr.bf16.gmra.mrb[0].mxu0 %v9509
  %v10167 = vpop.f32.mrb[0].mxu0
  %v10168 = vadd.f32 %v9626, %v10167
  %v10169 = vpop.f32.mrb[0].mxu0
  %v10170 = vadd.f32 %v9630, %v10169
  %v10171 = vpop.f32.mrb[0].mxu0
  %v10172 = vadd.f32 %v9626, %v10171
  %v10173 = vpop.f32.mrb[0].mxu0
  %v10174 = vadd.f32 %v9630, %v10173
  %10175 = vmatprep.mubr.bf16.mxu0 %v9512
  %10176 = vmatmul.mubr.bf16.gmra.mrb[0].mxu0 %v9511
  %v10177 = vpop.f32.mrb[0].mxu0
  %v10178 = vadd.f32 %v9626, %v10177
  %v10179 = vpop.f32.mrb[0].mxu0
  %v10180 = vadd.f32 %v9630, %v10179
  %v10181 = vpop.f32.mrb[0].mxu0
  %v10182 = vadd.f32 %v9626, %v10181
  %v10183 = vpop.f32.mrb[0].mxu0
  %v10184 = vadd.f32 %v9630, %v10183
  %10185 = vmatprep.mubr.bf16.mxu0 %v9514
  %10186 = vmatmul.mubr.bf16.gmra.mrb[0].mxu0 %v9513
  %v10187 = vpop.f32.mrb[0].mxu0
  %v10188 = vadd.f32 %v9626, %v10187
  %v10189 = vpop.f32.mrb[0].mxu0
  %v10190 = vadd.f32 %v9630, %v10189
  %v10191 = vpop.f32.mrb[0].mxu0
  %v10192 = vadd.f32 %v9626, %v10191
  %v10193 = vpop.f32.mrb[0].mxu0
  %v10194 = vadd.f32 %v9630, %v10193
  %10195 = vmatprep.mubr.bf16.mxu0 %v9516
  %10196 = vmatmul.mubr.bf16.gmra.mrb[0].mxu0 %v9515
  %v10197 = vpop.f32.mrb[0].mxu0
  %v10198 = vadd.f32 %v9626, %v10197
  %v10199 = vpop.f32.mrb[0].mxu0
  %v10200 = vadd.f32 %v9630, %v10199
  %v10201 = vpop.f32.mrb[0].mxu0
  %v10202 = vadd.f32 %v9626, %v10201
  %v10203 = vpop.f32.mrb[0].mxu0
  %v10204 = vadd.f32 %v9630, %v10203
  %10205 = vmatprep.mubr.bf16.mxu0 %v9518
  %10206 = vmatmul.mubr.bf16.gmra.mrb[0].mxu0 %v9517
  %v10207 = vpop.f32.mrb[0].mxu0
  %v10208 = vadd.f32 %v9626, %v10207
  %v10209 = vpop.f32.mrb[0].mxu0
  %v10210 = vadd.f32 %v9630, %v10209
  %v10211 = vpop.f32.mrb[0].mxu0
  %v10212 = vadd.f32 %v9626, %v10211
  %v10213 = vpop.f32.mrb[0].mxu0
  %v10214 = vadd.f32 %v9630, %v10213
  %10215 = vmatprep.mubr.bf16.mxu0 %v9520
  %10216 = vmatmul.mubr.bf16.gmra.mrb[0].mxu0 %v9519
  %v10217 = vpop.f32.mrb[0].mxu0
  %v10218 = vadd.f32 %v9626, %v10217
  %v10219 = vpop.f32.mrb[0].mxu0
  %v10220 = vadd.f32 %v9630, %v10219
  %v10221 = vpop.f32.mrb[0].mxu0
  %v10222 = vadd.f32 %v9626, %v10221
  %v10223 = vpop.f32.mrb[0].mxu0
  %v10224 = vadd.f32 %v9630, %v10223
  %10225 = vmatprep.mubr.bf16.mxu0 %v9522
  %10226 = vmatmul.mubr.bf16.gmra.mrb[0].mxu0 %v9521
  %v10227 = vpop.f32.mrb[0].mxu0
  %v10228 = vadd.f32 %v9626, %v10227
  %v10229 = vpop.f32.mrb[0].mxu0
  %v10230 = vadd.f32 %v9630, %v10229
  %v10231 = vpop.f32.mrb[0].mxu0
  %v10232 = vadd.f32 %v9626, %v10231
  %v10233 = vpop.f32.mrb[0].mxu0
  %v10234 = vadd.f32 %v9630, %v10233
  %10235 = vmatprep.mubr.bf16.mxu0 %v9524
  %10236 = vmatmul.mubr.bf16.gmra.mrb[0].mxu0 %v9523
  %v10237 = vpop.f32.mrb[0].mxu0
  %v10238 = vadd.f32 %v9626, %v10237
  %v10239 = vpop.f32.mrb[0].mxu0
  %v10240 = vadd.f32 %v9630, %v10239
  %v10241 = vpop.f32.mrb[0].mxu0
  %v10242 = vadd.f32 %v9626, %v10241
  %v10243 = vpop.f32.mrb[0].mxu0
  %v10244 = vadd.f32 %v9630, %v10243
  %10245 = vdwg.mxu0
  %10246 = vmatprep.subr.bf16.mxu0 %v9944
  %10247 = vmatpush1.bf16.msra.mxu0 %v9943
  %10248 = vmatprep.subr.bf16.mxu0 %v9950
  %10249 = vmatpush1.bf16.msra.mxu0 %v9949
  %10250 = vmatprep.subr.bf16.mxu0 %v9956
  %10251 = vmatpush1.bf16.msra.mxu0 %v9955
  %10252 = vmatprep.subr.bf16.mxu0 %v9962
  %10253 = vmatpush1.bf16.msra.mxu0 %v9961
  %10254 = vmatprep.subr.bf16.mxu0 %v9968
  %10255 = vmatpush1.bf16.msra.mxu0 %v9967
  %10256 = vmatprep.subr.bf16.mxu0 %v9974
  %10257 = vmatpush1.bf16.msra.mxu0 %v9973
  %10258 = vmatprep.subr.bf16.mxu0 %v9980
  %10259 = vmatpush1.bf16.msra.mxu0 %v9979
  %10260 = vmatprep.subr.bf16.mxu0 %v9986
  %10261 = vmatpush1.bf16.msra.mxu0 %v9985
  %10262 = vmatprep.subr.bf16.mxu0 %v9992
  %10263 = vmatpush1.bf16.msra.mxu0 %v9991
  %10264 = vmatprep.subr.bf16.mxu0 %v9998
  %10265 = vmatpush1.bf16.msra.mxu0 %v9997
  %10266 = vmatprep.subr.bf16.mxu0 %v10004
  %10267 = vmatpush1.bf16.msra.mxu0 %v10003
  %10268 = vmatprep.subr.bf16.mxu0 %v10010
  %10269 = vmatpush1.bf16.msra.mxu0 %v10009
  %10270 = vmatprep.subr.bf16.mxu0 %v10016
  %10271 = vmatpush1.bf16.msra.mxu0 %v10015
  %10272 = vmatprep.subr.bf16.mxu0 %v10022
  %10273 = vmatpush1.bf16.msra.mxu0 %v10021
  %10274 = vmatprep.subr.bf16.mxu0 %v10028
  %10275 = vmatpush1.bf16.msra.mxu0 %v10027
  %10276 = vmatprep.subr.bf16.mxu0 %v10034
  %10277 = vmatpush1.bf16.msra.mxu0 %v10033
  %10278 = vmatprep.mubr.bf16.mxu0 %v9510
  %10279 = vmatmul.mubr.bf16.gmra.mrb[0].mxu0 %v9509
  %v10280 = vpop.f32.mrb[0].mxu0
  %v10281 = vadd.f32 %v9634, %v10280
  %v10282 = vpop.f32.mrb[0].mxu0
  %v10283 = vadd.f32 %v9638, %v10282
  %v10284 = vpop.f32.mrb[0].mxu0
  %v10285 = vadd.f32 %v9634, %v10284
  %v10286 = vpop.f32.mrb[0].mxu0
  %v10287 = vadd.f32 %v9638, %v10286
  %10288 = vmatprep.mubr.bf16.mxu0 %v9512
  %10289 = vmatmul.mubr.bf16.gmra.mrb[0].mxu0 %v9511
  %v10290 = vpop.f32.mrb[0].mxu0
  %v10291 = vadd.f32 %v9634, %v10290
  %v10292 = vpop.f32.mrb[0].mxu0
  %v10293 = vadd.f32 %v9638, %v10292
  %v10294 = vpop.f32.mrb[0].mxu0
  %v10295 = vadd.f32 %v9634, %v10294
  %v10296 = vpop.f32.mrb[0].mxu0
  %v10297 = vadd.f32 %v9638, %v10296
  %10298 = vmatprep.mubr.bf16.mxu0 %v9514
  %10299 = vmatmul.mubr.bf16.gmra.mrb[0].mxu0 %v9513
  %v10300 = vpop.f32.mrb[0].mxu0
  %v10301 = vadd.f32 %v9634, %v10300
  %v10302 = vpop.f32.mrb[0].mxu0
  %v10303 = vadd.f32 %v9638, %v10302
  %v10304 = vpop.f32.mrb[0].mxu0
  %v10305 = vadd.f32 %v9634, %v10304
  %v10306 = vpop.f32.mrb[0].mxu0
  %v10307 = vadd.f32 %v9638, %v10306
  %10308 = vmatprep.mubr.bf16.mxu0 %v9516
  %10309 = vmatmul.mubr.bf16.gmra.mrb[0].mxu0 %v9515
  %v10310 = vpop.f32.mrb[0].mxu0
  %v10311 = vadd.f32 %v9634, %v10310
  %v10312 = vpop.f32.mrb[0].mxu0
  %v10313 = vadd.f32 %v9638, %v10312
  %v10314 = vpop.f32.mrb[0].mxu0
  %v10315 = vadd.f32 %v9634, %v10314
  %v10316 = vpop.f32.mrb[0].mxu0
  %v10317 = vadd.f32 %v9638, %v10316
  %10318 = vmatprep.mubr.bf16.mxu0 %v9518
  %10319 = vmatmul.mubr.bf16.gmra.mrb[0].mxu0 %v9517
  %v10320 = vpop.f32.mrb[0].mxu0
  %v10321 = vadd.f32 %v9634, %v10320
  %v10322 = vpop.f32.mrb[0].mxu0
  %v10323 = vadd.f32 %v9638, %v10322
  %v10324 = vpop.f32.mrb[0].mxu0
  %v10325 = vadd.f32 %v9634, %v10324
  %v10326 = vpop.f32.mrb[0].mxu0
  %v10327 = vadd.f32 %v9638, %v10326
  %10328 = vmatprep.mubr.bf16.mxu0 %v9520
  %10329 = vmatmul.mubr.bf16.gmra.mrb[0].mxu0 %v9519
  %v10330 = vpop.f32.mrb[0].mxu0
  %v10331 = vadd.f32 %v9634, %v10330
  %v10332 = vpop.f32.mrb[0].mxu0
  %v10333 = vadd.f32 %v9638, %v10332
  %v10334 = vpop.f32.mrb[0].mxu0
  %v10335 = vadd.f32 %v9634, %v10334
  %v10336 = vpop.f32.mrb[0].mxu0
  %v10337 = vadd.f32 %v9638, %v10336
  %10338 = vmatprep.mubr.bf16.mxu0 %v9522
  %10339 = vmatmul.mubr.bf16.gmra.mrb[0].mxu0 %v9521
  %v10340 = vpop.f32.mrb[0].mxu0
  %v10341 = vadd.f32 %v9634, %v10340
  %v10342 = vpop.f32.mrb[0].mxu0
  %v10343 = vadd.f32 %v9638, %v10342
  %v10344 = vpop.f32.mrb[0].mxu0
  %v10345 = vadd.f32 %v9634, %v10344
  %v10346 = vpop.f32.mrb[0].mxu0
  %v10347 = vadd.f32 %v9638, %v10346
  %10348 = vmatprep.mubr.bf16.mxu0 %v9524
  %10349 = vmatmul.mubr.bf16.gmra.mrb[0].mxu0 %v9523
  %v10350 = vpop.f32.mrb[0].mxu0
  %v10351 = vadd.f32 %v9634, %v10350
  %v10352 = vpop.f32.mrb[0].mxu0
  %v10353 = vadd.f32 %v9638, %v10352
  %v10354 = vpop.f32.mrb[0].mxu0
  %v10355 = vadd.f32 %v9634, %v10354
  %v10356 = vpop.f32.mrb[0].mxu0
  %v10357 = vadd.f32 %v9638, %v10356
  %10358 = vdwg.mxu0
  %10359 = vmatprep.subr.bf16.mxu0 %v9946
  %10360 = vmatpush1.bf16.msra.mxu0 %v9945
  %10361 = vmatprep.subr.bf16.mxu0 %v9952
  %10362 = vmatpush1.bf16.msra.mxu0 %v9951
  %10363 = vmatprep.subr.bf16.mxu0 %v9958
  %10364 = vmatpush1.bf16.msra.mxu0 %v9957
  %10365 = vmatprep.subr.bf16.mxu0 %v9964
  %10366 = vmatpush1.bf16.msra.mxu0 %v9963
  %10367 = vmatprep.subr.bf16.mxu0 %v9970
  %10368 = vmatpush1.bf16.msra.mxu0 %v9969
  %10369 = vmatprep.subr.bf16.mxu0 %v9976
  %10370 = vmatpush1.bf16.msra.mxu0 %v9975
  %10371 = vmatprep.subr.bf16.mxu0 %v9982
  %10372 = vmatpush1.bf16.msra.mxu0 %v9981
  %10373 = vmatprep.subr.bf16.mxu0 %v9988
  %10374 = vmatpush1.bf16.msra.mxu0 %v9987
  %10375 = vmatprep.subr.bf16.mxu0 %v9994
  %10376 = vmatpush1.bf16.msra.mxu0 %v9993
  %10377 = vmatprep.subr.bf16.mxu0 %v10000
  %10378 = vmatpush1.bf16.msra.mxu0 %v9999
  %10379 = vmatprep.subr.bf16.mxu0 %v10006
  %10380 = vmatpush1.bf16.msra.mxu0 %v10005
  %10381 = vmatprep.subr.bf16.mxu0 %v10012
  %10382 = vmatpush1.bf16.msra.mxu0 %v10011
  %10383 = vmatprep.subr.bf16.mxu0 %v10018
  %10384 = vmatpush1.bf16.msra.mxu0 %v10017
  %10385 = vmatprep.subr.bf16.mxu0 %v10024
  %10386 = vmatpush1.bf16.msra.mxu0 %v10023
  %10387 = vmatprep.subr.bf16.mxu0 %v10030
  %10388 = vmatpush1.bf16.msra.mxu0 %v10029
  %10389 = vmatprep.subr.bf16.mxu0 %v10036
  %10390 = vmatpush1.bf16.msra.mxu0 %v10035
  %10391 = vmatprep.mubr.bf16.mxu0 %v9510
  %10392 = vmatmul.mubr.bf16.gmra.mrb[0].mxu0 %v9509
  %v10393 = vpop.f32.mrb[0].mxu0
  %v10394 = vadd.f32 %v9642, %v10393
  %v10395 = vpop.f32.mrb[0].mxu0
  %v10396 = vadd.f32 %v9646, %v10395
  %v10397 = vpop.f32.mrb[0].mxu0
  %v10398 = vadd.f32 %v9642, %v10397
  %v10399 = vpop.f32.mrb[0].mxu0
  %v10400 = vadd.f32 %v9646, %v10399
  %10401 = vmatprep.mubr.bf16.mxu0 %v9512
  %10402 = vmatmul.mubr.bf16.gmra.mrb[0].mxu0 %v9511
  %v10403 = vpop.f32.mrb[0].mxu0
  %v10404 = vadd.f32 %v9642, %v10403
  %v10405 = vpop.f32.mrb[0].mxu0
  %v10406 = vadd.f32 %v9646, %v10405
  %v10407 = vpop.f32.mrb[0].mxu0
  %v10408 = vadd.f32 %v9642, %v10407
  %v10409 = vpop.f32.mrb[0].mxu0
  %v10410 = vadd.f32 %v9646, %v10409
  %10411 = vmatprep.mubr.bf16.mxu0 %v9514
  %10412 = vmatmul.mubr.bf16.gmra.mrb[0].mxu0 %v9513
  %v10413 = vpop.f32.mrb[0].mxu0
  %v10414 = vadd.f32 %v9642, %v10413
  %v10415 = vpop.f32.mrb[0].mxu0
  %v10416 = vadd.f32 %v9646, %v10415
  %v10417 = vpop.f32.mrb[0].mxu0
  %v10418 = vadd.f32 %v9642, %v10417
  %v10419 = vpop.f32.mrb[0].mxu0
  %v10420 = vadd.f32 %v9646, %v10419
  %10421 = vmatprep.mubr.bf16.mxu0 %v9516
  %10422 = vmatmul.mubr.bf16.gmra.mrb[0].mxu0 %v9515
  %v10423 = vpop.f32.mrb[0].mxu0
  %v10424 = vadd.f32 %v9642, %v10423
  %v10425 = vpop.f32.mrb[0].mxu0
  %v10426 = vadd.f32 %v9646, %v10425
  %v10427 = vpop.f32.mrb[0].mxu0
  %v10428 = vadd.f32 %v9642, %v10427
  %v10429 = vpop.f32.mrb[0].mxu0
  %v10430 = vadd.f32 %v9646, %v10429
  %10431 = vmatprep.mubr.bf16.mxu0 %v9518
  %10432 = vmatmul.mubr.bf16.gmra.mrb[0].mxu0 %v9517
  %v10433 = vpop.f32.mrb[0].mxu0
  %v10434 = vadd.f32 %v9642, %v10433
  %v10435 = vpop.f32.mrb[0].mxu0
  %v10436 = vadd.f32 %v9646, %v10435
  %v10437 = vpop.f32.mrb[0].mxu0
  %v10438 = vadd.f32 %v9642, %v10437
  %v10439 = vpop.f32.mrb[0].mxu0
  %v10440 = vadd.f32 %v9646, %v10439
  %10441 = vmatprep.mubr.bf16.mxu0 %v9520
  %10442 = vmatmul.mubr.bf16.gmra.mrb[0].mxu0 %v9519
  %v10443 = vpop.f32.mrb[0].mxu0
  %v10444 = vadd.f32 %v9642, %v10443
  %v10445 = vpop.f32.mrb[0].mxu0
  %v10446 = vadd.f32 %v9646, %v10445
  %v10447 = vpop.f32.mrb[0].mxu0
  %v10448 = vadd.f32 %v9642, %v10447
  %v10449 = vpop.f32.mrb[0].mxu0
  %v10450 = vadd.f32 %v9646, %v10449
  %10451 = vmatprep.mubr.bf16.mxu0 %v9522
  %10452 = vmatmul.mubr.bf16.gmra.mrb[0].mxu0 %v9521
  %v10453 = vpop.f32.mrb[0].mxu0
  %v10454 = vadd.f32 %v9642, %v10453
  %v10455 = vpop.f32.mrb[0].mxu0
  %v10456 = vadd.f32 %v9646, %v10455
  %v10457 = vpop.f32.mrb[0].mxu0
  %v10458 = vadd.f32 %v9642, %v10457
  %v10459 = vpop.f32.mrb[0].mxu0
  %v10460 = vadd.f32 %v9646, %v10459
  %10461 = vmatprep.mubr.bf16.mxu0 %v9524
  %10462 = vmatmul.mubr.bf16.gmra.mrb[0].mxu0 %v9523
  %v10463 = vpop.f32.mrb[0].mxu0
  %v10464 = vadd.f32 %v9642, %v10463
  %v10465 = vpop.f32.mrb[0].mxu0
  %v10466 = vadd.f32 %v9646, %v10465
  %v10467 = vpop.f32.mrb[0].mxu0
  %v10468 = vadd.f32 %v9642, %v10467
  %v10469 = vpop.f32.mrb[0].mxu0
  %v10470 = vadd.f32 %v9646, %v10469
  %10471 = vdwg.mxu0
  %v10472 = vld [vmem:[%s3] sm:$0xf]
  %v10473 = vpack.c.bf16 %v10172, %v10168
  %v10474 = vpack.c.bf16 %v10174, %v10170
  %v10475 = vpack.c.bf16 %v10285, %v10281
  %v10476 = vpack.c.bf16 %v10287, %v10283
  %v10477 = vpack.c.bf16 %v10398, %v10394
  %v10478 = vpack.c.bf16 %v10400, %v10396
  %v10479 = vpack.c.bf16 %v10182, %v10178
  %v10480 = vpack.c.bf16 %v10184, %v10180
  %v10481 = vpack.c.bf16 %v10295, %v10291
  %v10482 = vpack.c.bf16 %v10297, %v10293
  %v10483 = vpack.c.bf16 %v10408, %v10404
  %v10484 = vpack.c.bf16 %v10410, %v10406
  %v10485 = vpack.c.bf16 %v10192, %v10188
  %v10486 = vpack.c.bf16 %v10194, %v10190
  %v10487 = vpack.c.bf16 %v10305, %v10301
  %v10488 = vpack.c.bf16 %v10307, %v10303
  %v10489 = vpack.c.bf16 %v10418, %v10414
  %v10490 = vpack.c.bf16 %v10420, %v10416
  %v10491 = vpack.c.bf16 %v10202, %v10198
  %v10492 = vpack.c.bf16 %v10204, %v10200
  %v10493 = vpack.c.bf16 %v10315, %v10311
  %v10494 = vpack.c.bf16 %v10317, %v10313
  %v10495 = vpack.c.bf16 %v10428, %v10424
  %v10496 = vpack.c.bf16 %v10430, %v10426
  %v10497 = vpack.c.bf16 %v10212, %v10208
  %v10498 = vpack.c.bf16 %v10214, %v10210
  %v10499 = vpack.c.bf16 %v10325, %v10321
  %v10500 = vpack.c.bf16 %v10327, %v10323
  %v10501 = vpack.c.bf16 %v10438, %v10434
  %v10502 = vpack.c.bf16 %v10440, %v10436
  %v10503 = vpack.c.bf16 %v10222, %v10218
  %v10504 = vpack.c.bf16 %v10224, %v10220
  %v10505 = vpack.c.bf16 %v10335, %v10331
  %v10506 = vpack.c.bf16 %v10337, %v10333
  %v10507 = vpack.c.bf16 %v10448, %v10444
  %v10508 = vpack.c.bf16 %v10450, %v10446
  %v10509 = vpack.c.bf16 %v10232, %v10228
  %v10510 = vpack.c.bf16 %v10234, %v10230
  %v10511 = vpack.c.bf16 %v10345, %v10341
  %v10512 = vpack.c.bf16 %v10347, %v10343
  %v10513 = vpack.c.bf16 %v10458, %v10454
  %v10514 = vpack.c.bf16 %v10460, %v10456
  %v10515 = vpack.c.bf16 %v10242, %v10238
  %v10516 = vpack.c.bf16 %v10244, %v10240
  %v10517 = vpack.c.bf16 %v10355, %v10351
  %v10518 = vpack.c.bf16 %v10357, %v10353
  %v10519 = vpack.c.bf16 %v10468, %v10464
  %v10520 = vpack.c.bf16 %v10470, %v10466
  %10521 = vmatprep.subr.bf16.mxu0 %v10474
  %10522 = vmatpush1.bf16.msra.mxu0 %v10473
  %10523 = vmatprep.subr.bf16.mxu0 %v10480
  %10524 = vmatpush1.bf16.msra.mxu0 %v10479
  %10525 = vmatprep.subr.bf16.mxu0 %v10486
  %10526 = vmatpush1.bf16.msra.mxu0 %v10485
  %10527 = vmatprep.subr.bf16.mxu0 %v10492
  %10528 = vmatpush1.bf16.msra.mxu0 %v10491
  %10529 = vmatprep.subr.bf16.mxu0 %v10498
  %10530 = vmatpush1.bf16.msra.mxu0 %v10497
  %10531 = vmatprep.subr.bf16.mxu0 %v10504
  %10532 = vmatpush1.bf16.msra.mxu0 %v10503
  %10533 = vmatprep.subr.bf16.mxu0 %v10510
  %10534 = vmatpush1.bf16.msra.mxu0 %v10509
  %10535 = vmatprep.subr.bf16.mxu0 %v10516
  %10536 = vmatpush1.bf16.msra.mxu0 %v10515
  %10537 = vmatprep.subr.bf16.mxu0 0
  %10538 = vmatpush1.bf16.msra.mxu0 0
  %10539 = vmatprep.subr.bf16.mxu0 0
  %10540 = vmatpush1.bf16.msra.mxu0 0
  %10541 = vmatprep.subr.bf16.mxu0 0
  %10542 = vmatpush1.bf16.msra.mxu0 0
  %10543 = vmatprep.subr.bf16.mxu0 0
  %10544 = vmatpush1.bf16.msra.mxu0 0
  %10545 = vmatprep.subr.bf16.mxu0 0
  %10546 = vmatpush1.bf16.msra.mxu0 0
  %10547 = vmatprep.subr.bf16.mxu0 0
  %10548 = vmatpush1.bf16.msra.mxu0 0
  %10549 = vmatprep.subr.bf16.mxu0 0
  %10550 = vmatpush1.bf16.msra.mxu0 0
  %10551 = vmatprep.subr.bf16.mxu0 0
  %10552 = vmatpush1.bf16.msra.mxu0 0
  %10553 = vmatprep.mubr.bf16.mxu0 0
  %10554 = vmatmul.mubr.bf16.gmra.mrb[0].mxu0 %v10472
  %v10555 = vpop.f32.mrb[0].mxu0
  %v10556 = vadd.f32 0.0, %v10555
  %v10557 = vpop.f32.mrb[0].mxu0
  %v10558 = vadd.f32 0.0, %v10557
  %v10559 = vpop.f32.mrb[0].mxu0
  %v10560 = vpop.f32.mrb[0].mxu0
  %10561 = vdwg.mxu0
  %10562 = vmatprep.subr.bf16.mxu0 %v10476
  %10563 = vmatpush1.bf16.msra.mxu0 %v10475
  %10564 = vmatprep.subr.bf16.mxu0 %v10482
  %10565 = vmatpush1.bf16.msra.mxu0 %v10481
  %10566 = vmatprep.subr.bf16.mxu0 %v10488
  %10567 = vmatpush1.bf16.msra.mxu0 %v10487
  %10568 = vmatprep.subr.bf16.mxu0 %v10494
  %10569 = vmatpush1.bf16.msra.mxu0 %v10493
  %10570 = vmatprep.subr.bf16.mxu0 %v10500
  %10571 = vmatpush1.bf16.msra.mxu0 %v10499
  %10572 = vmatprep.subr.bf16.mxu0 %v10506
  %10573 = vmatpush1.bf16.msra.mxu0 %v10505
  %10574 = vmatprep.subr.bf16.mxu0 %v10512
  %10575 = vmatpush1.bf16.msra.mxu0 %v10511
  %10576 = vmatprep.subr.bf16.mxu0 %v10518
  %10577 = vmatpush1.bf16.msra.mxu0 %v10517
  %10578 = vmatprep.subr.bf16.mxu0 0
  %10579 = vmatpush1.bf16.msra.mxu0 0
  %10580 = vmatprep.subr.bf16.mxu0 0
  %10581 = vmatpush1.bf16.msra.mxu0 0
  %10582 = vmatprep.subr.bf16.mxu0 0
  %10583 = vmatpush1.bf16.msra.mxu0 0
  %10584 = vmatprep.subr.bf16.mxu0 0
  %10585 = vmatpush1.bf16.msra.mxu0 0
  %10586 = vmatprep.subr.bf16.mxu0 0
  %10587 = vmatpush1.bf16.msra.mxu0 0
  %10588 = vmatprep.subr.bf16.mxu0 0
  %10589 = vmatpush1.bf16.msra.mxu0 0
  %10590 = vmatprep.subr.bf16.mxu0 0
  %10591 = vmatpush1.bf16.msra.mxu0 0
  %10592 = vmatprep.subr.bf16.mxu0 0
  %10593 = vmatpush1.bf16.msra.mxu0 0
  %10594 = vmatprep.mubr.bf16.mxu0 0
  %10595 = vmatmul.mubr.bf16.gmra.mrb[0].mxu0 %v10472
  %v10596 = vpop.f32.mrb[0].mxu0
  %v10597 = vadd.f32 0.0, %v10596
  %v10598 = vpop.f32.mrb[0].mxu0
  %v10599 = vadd.f32 0.0, %v10598
  %v10600 = vpop.f32.mrb[0].mxu0
  %v10601 = vpop.f32.mrb[0].mxu0
  %10602 = vdwg.mxu0
  %10603 = vmatprep.subr.bf16.mxu0 %v10478
  %10604 = vmatpush1.bf16.msra.mxu0 %v10477
  %10605 = vmatprep.subr.bf16.mxu0 %v10484
  %10606 = vmatpush1.bf16.msra.mxu0 %v10483
  %10607 = vmatprep.subr.bf16.mxu0 %v10490
  %10608 = vmatpush1.bf16.msra.mxu0 %v10489
  %10609 = vmatprep.subr.bf16.mxu0 %v10496
  %10610 = vmatpush1.bf16.msra.mxu0 %v10495
  %10611 = vmatprep.subr.bf16.mxu0 %v10502
  %10612 = vmatpush1.bf16.msra.mxu0 %v10501
  %10613 = vmatprep.subr.bf16.mxu0 %v10508
  %10614 = vmatpush1.bf16.msra.mxu0 %v10507
  %10615 = vmatprep.subr.bf16.mxu0 %v10514
  %10616 = vmatpush1.bf16.msra.mxu0 %v10513
  %10617 = vmatprep.subr.bf16.mxu0 %v10520
  %10618 = vmatpush1.bf16.msra.mxu0 %v10519
  %10619 = vmatprep.subr.bf16.mxu0 0
  %10620 = vmatpush1.bf16.msra.mxu0 0
  %10621 = vmatprep.subr.bf16.mxu0 0
  %10622 = vmatpush1.bf16.msra.mxu0 0
  %10623 = vmatprep.subr.bf16.mxu0 0
  %10624 = vmatpush1.bf16.msra.mxu0 0
  %10625 = vmatprep.subr.bf16.mxu0 0
  %10626 = vmatpush1.bf16.msra.mxu0 0
  %10627 = vmatprep.subr.bf16.mxu0 0
  %10628 = vmatpush1.bf16.msra.mxu0 0
  %10629 = vmatprep.subr.bf16.mxu0 0
  %10630 = vmatpush1.bf16.msra.mxu0 0
  %10631 = vmatprep.subr.bf16.mxu0 0
  %10632 = vmatpush1.bf16.msra.mxu0 0
  %10633 = vmatprep.subr.bf16.mxu0 0
  %10634 = vmatpush1.bf16.msra.mxu0 0
  %10635 = vmatprep.mubr.bf16.mxu0 0
  %10636 = vmatmul.mubr.bf16.gmra.mrb[0].mxu0 %v10472
  %v10637 = vpop.f32.mrb[0].mxu0
  %v10638 = vadd.f32 0.0, %v10637
  %v10639 = vpop.f32.mrb[0].mxu0
  %v10640 = vadd.f32 0.0, %v10639
  %v10641 = vpop.f32.mrb[0].mxu0
  %v10642 = vpop.f32.mrb[0].mxu0
  %10643 = vdwg.mxu0
  %10644 = vst [vmem:[%s17] sm:$0xff] %v10556
  %10645 = vst [vmem:[%s17 + $0x8] sm:$0xff] %v10558
  %10646 = vst [vmem:[%s17 + $0x10] sm:$0xff] %v10597
  %10647 = vst [vmem:[%s17 + $0x18] sm:$0xff] %v10599
  %10648 = vst [vmem:[%s17 + $0x20] sm:$0xff] %v10638
  %10649 = vst [vmem:[%s17 + $0x28] sm:$0xff] %v10640
  %v10650 = vld [vmem:[%s1] sm:$0xff]
  %v10651 = vld [vmem:[%s1 + $0x8] sm:$0xff]
  %v10652 = vld [vmem:[%s1 + $0x10] sm:$0xff]
  %v10653 = vld [vmem:[%s1 + $0x18] sm:$0xff]
  %v10654 = vld [vmem:[%s1 + $0x20] sm:$0xff]
  %v10655 = vld [vmem:[%s1 + $0x28] sm:$0xff]
  %v10656 = vld [vmem:[%s1 + $0x30] sm:$0xff]
  %v10657 = vld [vmem:[%s1 + $0x38] sm:$0xff]
  %v10658 = vld [vmem:[%s1 + $0x40] sm:$0xff]
  %v10659 = vld [vmem:[%s1 + $0x48] sm:$0xff]
  %v10660 = vld [vmem:[%s1 + $0x50] sm:$0xff]
  %v10661 = vld [vmem:[%s1 + $0x58] sm:$0xff]
  %v10662 = vld [vmem:[%s1 + $0x60] sm:$0xff]
  %v10663 = vld [vmem:[%s1 + $0x68] sm:$0xff]
  %v10664 = vld [vmem:[%s1 + $0x70] sm:$0xff]
  %v10665 = vld [vmem:[%s1 + $0x78] sm:$0xff]
  %v10666 = vld [vmem:[%s1 + $0x80] sm:$0xff]
  %v10667 = vld [vmem:[%s1 + $0x88] sm:$0xff]
  %v10668 = vld [vmem:[%s1 + $0x90] sm:$0xff]
  %v10669 = vld [vmem:[%s1 + $0x98] sm:$0xff]
  %v10670 = vld [vmem:[%s1 + $0xa0] sm:$0xff]
  %v10671 = vld [vmem:[%s1 + $0xa8] sm:$0xff]
  %v10672 = vld [vmem:[%s1 + $0xb0] sm:$0xff]
  %v10673 = vld [vmem:[%s1 + $0xb8] sm:$0xff]
  %v10674 = vld [vmem:[%s1 + $0xc0] sm:$0xff]
  %v10675 = vld [vmem:[%s1 + $0xc8] sm:$0xff]
  %v10676 = vld [vmem:[%s1 + $0xd0] sm:$0xff]
  %v10677 = vld [vmem:[%s1 + $0xd8] sm:$0xff]
  %v10678 = vld [vmem:[%s1 + $0xe0] sm:$0xff]
  %v10679 = vld [vmem:[%s1 + $0xe8] sm:$0xff]
  %v10680 = vld [vmem:[%s1 + $0xf0] sm:$0xff]
  %v10681 = vld [vmem:[%s1 + $0xf8] sm:$0xff]
  %v10682 = vld [vmem:[%s1 + $0x100] sm:$0xff]
  %v10683 = vld [vmem:[%s1 + $0x108] sm:$0xff]
  %v10684 = vld [vmem:[%s1 + $0x110] sm:$0xff]
  %v10685 = vld [vmem:[%s1 + $0x118] sm:$0xff]
  %v10686 = vld [vmem:[%s1 + $0x120] sm:$0xff]
  %v10687 = vld [vmem:[%s1 + $0x128] sm:$0xff]
  %v10688 = vld [vmem:[%s1 + $0x130] sm:$0xff]
  %v10689 = vld [vmem:[%s1 + $0x138] sm:$0xff]
  %v10690 = vld [vmem:[%s1 + $0x140] sm:$0xff]
  %v10691 = vld [vmem:[%s1 + $0x148] sm:$0xff]
  %v10692 = vld [vmem:[%s1 + $0x150] sm:$0xff]
  %v10693 = vld [vmem:[%s1 + $0x158] sm:$0xff]
  %v10694 = vld [vmem:[%s1 + $0x160] sm:$0xff]
  %v10695 = vld [vmem:[%s1 + $0x168] sm:$0xff]
  %v10696 = vld [vmem:[%s1 + $0x170] sm:$0xff]
  %v10697 = vld [vmem:[%s1 + $0x178] sm:$0xff]
  %v10698 = vld [vmem:[%s1 + $0x180] sm:$0xff]
  %v10699 = vld [vmem:[%s1 + $0x188] sm:$0xff]
  %v10700 = vld [vmem:[%s1 + $0x190] sm:$0xff]
  %v10701 = vld [vmem:[%s1 + $0x198] sm:$0xff]
  %v10702 = vld [vmem:[%s1 + $0x1a0] sm:$0xff]
  %v10703 = vld [vmem:[%s1 + $0x1a8] sm:$0xff]
  %v10704 = vld [vmem:[%s1 + $0x1b0] sm:$0xff]
  %v10705 = vld [vmem:[%s1 + $0x1b8] sm:$0xff]
  %v10706 = vld [vmem:[%s1 + $0x1c0] sm:$0xff]
  %v10707 = vld [vmem:[%s1 + $0x1c8] sm:$0xff]
  %v10708 = vld [vmem:[%s1 + $0x1d0] sm:$0xff]
  %v10709 = vld [vmem:[%s1 + $0x1d8] sm:$0xff]
  %v10710 = vld [vmem:[%s1 + $0x1e0] sm:$0xff]
  %v10711 = vld [vmem:[%s1 + $0x1e8] sm:$0xff]
  %v10712 = vld [vmem:[%s1 + $0x1f0] sm:$0xff]
  %v10713 = vld [vmem:[%s1 + $0x1f8] sm:$0xff]
  %v10714 = vld [vmem:[%s1 + $0x200] sm:$0xff]
  %v10715 = vld [vmem:[%s1 + $0x208] sm:$0xff]
  %v10716 = vld [vmem:[%s1 + $0x210] sm:$0xff]
  %v10717 = vld [vmem:[%s1 + $0x218] sm:$0xff]
  %v10718 = vld [vmem:[%s1 + $0x220] sm:$0xff]
  %v10719 = vld [vmem:[%s1 + $0x228] sm:$0xff]
  %v10720 = vld [vmem:[%s1 + $0x230] sm:$0xff]
  %v10721 = vld [vmem:[%s1 + $0x238] sm:$0xff]
  %v10722 = vld [vmem:[%s1 + $0x240] sm:$0xff]
  %v10723 = vld [vmem:[%s1 + $0x248] sm:$0xff]
  %v10724 = vld [vmem:[%s1 + $0x250] sm:$0xff]
  %v10725 = vld [vmem:[%s1 + $0x258] sm:$0xff]
  %v10726 = vld [vmem:[%s1 + $0x260] sm:$0xff]
  %v10727 = vld [vmem:[%s1 + $0x268] sm:$0xff]
  %v10728 = vld [vmem:[%s1 + $0x270] sm:$0xff]
  %v10729 = vld [vmem:[%s1 + $0x278] sm:$0xff]
  %v10730 = vld [vmem:[%s1 + $0x280] sm:$0xff]
  %v10731 = vld [vmem:[%s1 + $0x288] sm:$0xff]
  %v10732 = vld [vmem:[%s1 + $0x290] sm:$0xff]
  %v10733 = vld [vmem:[%s1 + $0x298] sm:$0xff]
  %v10734 = vld [vmem:[%s1 + $0x2a0] sm:$0xff]
  %v10735 = vld [vmem:[%s1 + $0x2a8] sm:$0xff]
  %v10736 = vld [vmem:[%s1 + $0x2b0] sm:$0xff]
  %v10737 = vld [vmem:[%s1 + $0x2b8] sm:$0xff]
  %v10738 = vld [vmem:[%s1 + $0x2c0] sm:$0xff]
  %v10739 = vld [vmem:[%s1 + $0x2c8] sm:$0xff]
  %v10740 = vld [vmem:[%s1 + $0x2d0] sm:$0xff]
  %v10741 = vld [vmem:[%s1 + $0x2d8] sm:$0xff]
  %v10742 = vld [vmem:[%s1 + $0x2e0] sm:$0xff]
  %v10743 = vld [vmem:[%s1 + $0x2e8] sm:$0xff]
  %v10744 = vld [vmem:[%s1 + $0x2f0] sm:$0xff]
  %v10745 = vld [vmem:[%s1 + $0x2f8] sm:$0xff]
  %v10746 = vadd.f32 %v10168, %v10650
  %v10747 = vadd.f32 %v10170, %v10651
  %v10748 = vadd.f32 %v10281, %v10652
  %v10749 = vadd.f32 %v10283, %v10653
  %v10750 = vadd.f32 %v10394, %v10654
  %v10751 = vadd.f32 %v10396, %v10655
  %v10752 = vadd.f32 %v10172, %v10656
  %v10753 = vadd.f32 %v10174, %v10657
  %v10754 = vadd.f32 %v10285, %v10658
  %v10755 = vadd.f32 %v10287, %v10659
  %v10756 = vadd.f32 %v10398, %v10660
  %v10757 = vadd.f32 %v10400, %v10661
  %v10758 = vadd.f32 %v10178, %v10662
  %v10759 = vadd.f32 %v10180, %v10663
  %v10760 = vadd.f32 %v10291, %v10664
  %v10761 = vadd.f32 %v10293, %v10665
  %v10762 = vadd.f32 %v10404, %v10666
  %v10763 = vadd.f32 %v10406, %v10667
  %v10764 = vadd.f32 %v10182, %v10668
  %v10765 = vadd.f32 %v10184, %v10669
  %v10766 = vadd.f32 %v10295, %v10670
  %v10767 = vadd.f32 %v10297, %v10671
  %v10768 = vadd.f32 %v10408, %v10672
  %v10769 = vadd.f32 %v10410, %v10673
  %v10770 = vadd.f32 %v10188, %v10674
  %v10771 = vadd.f32 %v10190, %v10675
  %v10772 = vadd.f32 %v10301, %v10676
  %v10773 = vadd.f32 %v10303, %v10677
  %v10774 = vadd.f32 %v10414, %v10678
  %v10775 = vadd.f32 %v10416, %v10679
  %v10776 = vadd.f32 %v10192, %v10680
  %v10777 = vadd.f32 %v10194, %v10681
  %v10778 = vadd.f32 %v10305, %v10682
  %v10779 = vadd.f32 %v10307, %v10683
  %v10780 = vadd.f32 %v10418, %v10684
  %v10781 = vadd.f32 %v10420, %v10685
  %v10782 = vadd.f32 %v10198, %v10686
  %v10783 = vadd.f32 %v10200, %v10687
  %v10784 = vadd.f32 %v10311, %v10688
  %v10785 = vadd.f32 %v10313, %v10689
  %v10786 = vadd.f32 %v10424, %v10690
  %v10787 = vadd.f32 %v10426, %v10691
  %v10788 = vadd.f32 %v10202, %v10692
  %v10789 = vadd.f32 %v10204, %v10693
  %v10790 = vadd.f32 %v10315, %v10694
  %v10791 = vadd.f32 %v10317, %v10695
  %v10792 = vadd.f32 %v10428, %v10696
  %v10793 = vadd.f32 %v10430, %v10697
  %v10794 = vadd.f32 %v10208, %v10698
  %v10795 = vadd.f32 %v10210, %v10699
  %v10796 = vadd.f32 %v10321, %v10700
  %v10797 = vadd.f32 %v10323, %v10701
  %v10798 = vadd.f32 %v10434, %v10702
  %v10799 = vadd.f32 %v10436, %v10703
  %v10800 = vadd.f32 %v10212, %v10704
  %v10801 = vadd.f32 %v10214, %v10705
  %v10802 = vadd.f32 %v10325, %v10706
  %v10803 = vadd.f32 %v10327, %v10707
  %v10804 = vadd.f32 %v10438, %v10708
  %v10805 = vadd.f32 %v10440, %v10709
  %v10806 = vadd.f32 %v10218, %v10710
  %v10807 = vadd.f32 %v10220, %v10711
  %v10808 = vadd.f32 %v10331, %v10712
  %v10809 = vadd.f32 %v10333, %v10713
  %v10810 = vadd.f32 %v10444, %v10714
  %v10811 = vadd.f32 %v10446, %v10715
  %v10812 = vadd.f32 %v10222, %v10716
  %v10813 = vadd.f32 %v10224, %v10717
  %v10814 = vadd.f32 %v10335, %v10718
  %v10815 = vadd.f32 %v10337, %v10719
  %v10816 = vadd.f32 %v10448, %v10720
  %v10817 = vadd.f32 %v10450, %v10721
  %v10818 = vadd.f32 %v10228, %v10722
  %v10819 = vadd.f32 %v10230, %v10723
  %v10820 = vadd.f32 %v10341, %v10724
  %v10821 = vadd.f32 %v10343, %v10725
  %v10822 = vadd.f32 %v10454, %v10726
  %v10823 = vadd.f32 %v10456, %v10727
  %v10824 = vadd.f32 %v10232, %v10728
  %v10825 = vadd.f32 %v10234, %v10729
  %v10826 = vadd.f32 %v10345, %v10730
  %v10827 = vadd.f32 %v10347, %v10731
  %v10828 = vadd.f32 %v10458, %v10732
  %v10829 = vadd.f32 %v10460, %v10733
  %v10830 = vadd.f32 %v10238, %v10734
  %v10831 = vadd.f32 %v10240, %v10735
  %v10832 = vadd.f32 %v10351, %v10736
  %v10833 = vadd.f32 %v10353, %v10737
  %v10834 = vadd.f32 %v10464, %v10738
  %v10835 = vadd.f32 %v10466, %v10739
  %v10836 = vadd.f32 %v10242, %v10740
  %v10837 = vadd.f32 %v10244, %v10741
  %v10838 = vadd.f32 %v10355, %v10742
  %v10839 = vadd.f32 %v10357, %v10743
  %v10840 = vadd.f32 %v10468, %v10744
  %v10841 = vadd.f32 %v10470, %v10745
  %10842 = vst [vmem:[%s16] sm:$0xff] %v10746
  %10843 = vst [vmem:[%s16 + $0x8] sm:$0xff] %v10747
  %10844 = vst [vmem:[%s16 + $0x10] sm:$0xff] %v10748
  %10845 = vst [vmem:[%s16 + $0x18] sm:$0xff] %v10749
  %10846 = vst [vmem:[%s16 + $0x20] sm:$0xff] %v10750
  %10847 = vst [vmem:[%s16 + $0x28] sm:$0xff] %v10751
  %10848 = vst [vmem:[%s16 + $0x30] sm:$0xff] %v10752
  %10849 = vst [vmem:[%s16 + $0x38] sm:$0xff] %v10753
  %10850 = vst [vmem:[%s16 + $0x40] sm:$0xff] %v10754
  %10851 = vst [vmem:[%s16 + $0x48] sm:$0xff] %v10755
  %10852 = vst [vmem:[%s16 + $0x50] sm:$0xff] %v10756
  %10853 = vst [vmem:[%s16 + $0x58] sm:$0xff] %v10757
  %10854 = vst [vmem:[%s16 + $0x60] sm:$0xff] %v10758
  %10855 = vst [vmem:[%s16 + $0x68] sm:$0xff] %v10759
  %10856 = vst [vmem:[%s16 + $0x70] sm:$0xff] %v10760
  %10857 = vst [vmem:[%s16 + $0x78] sm:$0xff] %v10761
  %10858 = vst [vmem:[%s16 + $0x80] sm:$0xff] %v10762
  %10859 = vst [vmem:[%s16 + $0x88] sm:$0xff] %v10763
  %10860 = vst [vmem:[%s16 + $0x90] sm:$0xff] %v10764
  %10861 = vst [vmem:[%s16 + $0x98] sm:$0xff] %v10765
  %10862 = vst [vmem:[%s16 + $0xa0] sm:$0xff] %v10766
  %10863 = vst [vmem:[%s16 + $0xa8] sm:$0xff] %v10767
  %10864 = vst [vmem:[%s16 + $0xb0] sm:$0xff] %v10768
  %10865 = vst [vmem:[%s16 + $0xb8] sm:$0xff] %v10769
  %10866 = vst [vmem:[%s16 + $0xc0] sm:$0xff] %v10770
  %10867 = vst [vmem:[%s16 + $0xc8] sm:$0xff] %v10771
  %10868 = vst [vmem:[%s16 + $0xd0] sm:$0xff] %v10772
  %10869 = vst [vmem:[%s16 + $0xd8] sm:$0xff] %v10773
  %10870 = vst [vmem:[%s16 + $0xe0] sm:$0xff] %v10774
  %10871 = vst [vmem:[%s16 + $0xe8] sm:$0xff] %v10775
  %10872 = vst [vmem:[%s16 + $0xf0] sm:$0xff] %v10776
  %10873 = vst [vmem:[%s16 + $0xf8] sm:$0xff] %v10777
  %10874 = vst [vmem:[%s16 + $0x100] sm:$0xff] %v10778
  %10875 = vst [vmem:[%s16 + $0x108] sm:$0xff] %v10779
  %10876 = vst [vmem:[%s16 + $0x110] sm:$0xff] %v10780
  %10877 = vst [vmem:[%s16 + $0x118] sm:$0xff] %v10781
  %10878 = vst [vmem:[%s16 + $0x120] sm:$0xff] %v10782
  %10879 = vst [vmem:[%s16 + $0x128] sm:$0xff] %v10783
  %10880 = vst [vmem:[%s16 + $0x130] sm:$0xff] %v10784
  %10881 = vst [vmem:[%s16 + $0x138] sm:$0xff] %v10785
  %10882 = vst [vmem:[%s16 + $0x140] sm:$0xff] %v10786
  %10883 = vst [vmem:[%s16 + $0x148] sm:$0xff] %v10787
  %10884 = vst [vmem:[%s16 + $0x150] sm:$0xff] %v10788
  %10885 = vst [vmem:[%s16 + $0x158] sm:$0xff] %v10789
  %10886 = vst [vmem:[%s16 + $0x160] sm:$0xff] %v10790
  %10887 = vst [vmem:[%s16 + $0x168] sm:$0xff] %v10791
  %10888 = vst [vmem:[%s16 + $0x170] sm:$0xff] %v10792
  %10889 = vst [vmem:[%s16 + $0x178] sm:$0xff] %v10793
  %10890 = vst [vmem:[%s16 + $0x180] sm:$0xff] %v10794
  %10891 = vst [vmem:[%s16 + $0x188] sm:$0xff] %v10795
  %10892 = vst [vmem:[%s16 + $0x190] sm:$0xff] %v10796
  %10893 = vst [vmem:[%s16 + $0x198] sm:$0xff] %v10797
  %10894 = vst [vmem:[%s16 + $0x1a0] sm:$0xff] %v10798
  %10895 = vst [vmem:[%s16 + $0x1a8] sm:$0xff] %v10799
  %10896 = vst [vmem:[%s16 + $0x1b0] sm:$0xff] %v10800
  %10897 = vst [vmem:[%s16 + $0x1b8] sm:$0xff] %v10801
  %10898 = vst [vmem:[%s16 + $0x1c0] sm:$0xff] %v10802
  %10899 = vst [vmem:[%s16 + $0x1c8] sm:$0xff] %v10803
  %10900 = vst [vmem:[%s16 + $0x1d0] sm:$0xff] %v10804
  %10901 = vst [vmem:[%s16 + $0x1d8] sm:$0xff] %v10805
  %10902 = vst [vmem:[%s16 + $0x1e0] sm:$0xff] %v10806
  %10903 = vst [vmem:[%s16 + $0x1e8] sm:$0xff] %v10807
  %10904 = vst [vmem:[%s16 + $0x1f0] sm:$0xff] %v10808
  %10905 = vst [vmem:[%s16 + $0x1f8] sm:$0xff] %v10809
  %10906 = vst [vmem:[%s16 + $0x200] sm:$0xff] %v10810
  %10907 = vst [vmem:[%s16 + $0x208] sm:$0xff] %v10811
  %10908 = vst [vmem:[%s16 + $0x210] sm:$0xff] %v10812
  %10909 = vst [vmem:[%s16 + $0x218] sm:$0xff] %v10813
  %10910 = vst [vmem:[%s16 + $0x220] sm:$0xff] %v10814
  %10911 = vst [vmem:[%s16 + $0x228] sm:$0xff] %v10815
  %10912 = vst [vmem:[%s16 + $0x230] sm:$0xff] %v10816
  %10913 = vst [vmem:[%s16 + $0x238] sm:$0xff] %v10817
  %10914 = vst [vmem:[%s16 + $0x240] sm:$0xff] %v10818
  %10915 = vst [vmem:[%s16 + $0x248] sm:$0xff] %v10819
  %10916 = vst [vmem:[%s16 + $0x250] sm:$0xff] %v10820
  %10917 = vst [vmem:[%s16 + $0x258] sm:$0xff] %v10821
  %10918 = vst [vmem:[%s16 + $0x260] sm:$0xff] %v10822
  %10919 = vst [vmem:[%s16 + $0x268] sm:$0xff] %v10823
  %10920 = vst [vmem:[%s16 + $0x270] sm:$0xff] %v10824
  %10921 = vst [vmem:[%s16 + $0x278] sm:$0xff] %v10825
  %10922 = vst [vmem:[%s16 + $0x280] sm:$0xff] %v10826
  %10923 = vst [vmem:[%s16 + $0x288] sm:$0xff] %v10827
  %10924 = vst [vmem:[%s16 + $0x290] sm:$0xff] %v10828
  %10925 = vst [vmem:[%s16 + $0x298] sm:$0xff] %v10829
  %10926 = vst [vmem:[%s16 + $0x2a0] sm:$0xff] %v10830
  %10927 = vst [vmem:[%s16 + $0x2a8] sm:$0xff] %v10831
  %10928 = vst [vmem:[%s16 + $0x2b0] sm:$0xff] %v10832
  %10929 = vst [vmem:[%s16 + $0x2b8] sm:$0xff] %v10833
  %10930 = vst [vmem:[%s16 + $0x2c0] sm:$0xff] %v10834
  %10931 = vst [vmem:[%s16 + $0x2c8] sm:$0xff] %v10835
  %10932 = vst [vmem:[%s16 + $0x2d0] sm:$0xff] %v10836
  %10933 = vst [vmem:[%s16 + $0x2d8] sm:$0xff] %v10837
  %10934 = vst [vmem:[%s16 + $0x2e0] sm:$0xff] %v10838
  %10935 = vst [vmem:[%s16 + $0x2e8] sm:$0xff] %v10839
  %10936 = vst [vmem:[%s16 + $0x2f0] sm:$0xff] %v10840
  %10937 = vst [vmem:[%s16 + $0x2f8] sm:$0xff] %v10841
  // Predicated region
  $region66: #{gcn_forward.1} parent=0 // pred_check
    _
  $region67: #{gcn_forward.1} parent=0 // pred_check_branch
    %10939 = sbr.rel (0) target = $region69
  $region68: #{gcn_forward.1} parent=0 // pred_region
    _
  $region69: #{gcn_forward.1} parent=0 // pred_fallthru
    _
  // Predicated region
  $region70: #{gcn_forward.1} parent=0 // pred_check
    _
  $region71: #{gcn_forward.1} parent=0 // pred_check_branch
    %10941 = sbr.rel (0) target = $region73
  $region72: #{gcn_forward.1} parent=0 // pred_region
    _
  $region73: #{gcn_forward.1} parent=0 // pred_fallthru
    _
  // Predicated region
  $region74: #{gcn_forward.1} parent=0 // pred_check
    _
  $region75: #{gcn_forward.1} parent=0 // pred_check_branch
    %10943 = sbr.rel (0) target = $region77
  $region76: #{gcn_forward.1} parent=0 // pred_region
    _
  $region77: #{gcn_forward.1} parent=0 // pred_fallthru
    _
  // Predicated region
  $region78: #{gcn_forward.1} parent=0 // pred_check
    _
  $region79: #{gcn_forward.1} parent=0 // pred_check_branch
    %10945 = sbr.rel (0) target = $region81
  $region80: #{gcn_forward.1} parent=0 // pred_region
    _
  $region81: #{gcn_forward.1} parent=0 // pred_fallthru
    _

</llo_original>
